<compile_context>
chip_gen: v5e
topology: v5e:2x2
jax: 0.10.0
libtpu: 0.0.40
codegen_flags: <defaults>
</compile_context>

<pallas_src>
import functools

import jax
import jax.numpy as jnp
import numpy as np
from jax import lax
from jax.experimental import pallas as pl
from jax.experimental.pallas import tpu as pltpu


# ---------------------------------------------------------------------------
# Fused Pallas kernel: embed(stacked views), VICReg loss, single invocation
# ---------------------------------------------------------------------------

def make_vicreg_fused_kernel(n_hidden, B, sim_coeff, std_coeff, cov_coeff):
    """Ref layout (in order):
        xy,                         # [2B, In]  both views stacked along batch
        backbone_w,                 # [In, D0]
        hidden_w_0 .. _{n-1},       # [D_i, D_{i+1}]
        final_w,                    # [D_{n-1}, D_n] (no bias)
        small,                      # [1 + 3*n_hidden, max_D]: backbone_b, then (b, gamma, beta) per hidden layer
        loss_ref                    # output, SMEM (1,)
    """
    Bf = float(B)

    def kernel(*refs):
        xy_ref = refs[0]
        bb_w_ref = refs[1]
        hidden_w_refs = refs[2:2 + n_hidden]
        final_w_ref = refs[2 + n_hidden]
        small_ref = refs[3 + n_hidden]
        loss_ref = refs[4 + n_hidden]

        # ---- backbone placeholder: flatten (done in wrapper) + Linear ----
        # Weights loaded at point of use -> live range bounded to one layer.
        d0 = bb_w_ref.shape[1]
        h = jnp.dot(xy_ref[...], bb_w_ref[...], preferred_element_type=jnp.float32)
        h = h + small_ref[0:1, :d0]

        # ---- projection head: (Linear + BatchNorm1d + ReLU) * n_hidden ----
        srow = 1
        for li in range(n_hidden):
            w_ref = hidden_w_refs[li]
            dl = w_ref.shape[1]
            z = jnp.dot(h, w_ref[...], preferred_element_type=jnp.float32)
            z = z + small_ref[srow:srow + 1, :dl]
            g = small_ref[srow + 1:srow + 2, :dl]
            be = small_ref[srow + 2:srow + 3, :dl]
            srow += 3

            # BatchNorm1d (training mode) applied PER VIEW, exactly like running
            # the torch head separately on each view: biased batch var, eps=1e-5.
            # zc is hoisted and reused for both the variance and the normalization.
            def bn(zv):
                mu = jnp.mean(zv, axis=0, keepdims=True)
                zc = zv - mu
                var = jnp.mean(zc * zc, axis=0, keepdims=True)
                return zc * lax.rsqrt(var + 1e-5)          # rsqrt -> EUP slot

            zhat = jnp.concatenate([bn(z[:B]), bn(z[B:])], axis=0)
            h = jnp.maximum(zhat * g + be, 0.0)            # scale/shift/ReLU once on [2B, D]

        out = jnp.dot(h, final_w_ref[...], preferred_element_type=jnp.float32)
        D = out.shape[1]
        Df = float(D)

        x = out[:B]
        y = out[B:]

        # representation loss: F.mse_loss(x, y)
        repr_loss = jnp.mean((x - y) ** 2)

        # center per view
        xc = x - jnp.mean(x, axis=0, keepdims=True)
        yc = y - jnp.mean(y, axis=0, keepdims=True)

        # unbiased per-dim variance (torch.var default) == diag(cov) (same (B-1) norm)
        var_x = jnp.sum(xc * xc, axis=0, keepdims=True) / (Bf - 1.0)
        var_y = jnp.sum(yc * yc, axis=0, keepdims=True) / (Bf - 1.0)
        std_x = jnp.sqrt(var_x + 1e-4)
        std_y = jnp.sqrt(var_y + 1e-4)
        std_loss = (
            jnp.mean(jnp.maximum(1.0 - std_x, 0.0)) / 2.0
            + jnp.mean(jnp.maximum(1.0 - std_y, 0.0)) / 2.0
        )

        # covariance loss: Gram via dot_general contracting the batch dim (no
        # transpose); off-diagonal sum-of-squares = total - diagonal, and the
        # diagonal is exactly var_x / var_y computed above (no iota mask).
        dn = (((0,), (0,)), ((), ()))
        cov_x = lax.dot_general(xc, xc, dn, preferred_element_type=jnp.float32) / (Bf - 1.0)
        cov_y = lax.dot_general(yc, yc, dn, preferred_element_type=jnp.float32) / (Bf - 1.0)
        cov_loss = (
            jnp.sum(cov_x * cov_x) - jnp.sum(var_x * var_x)
            + jnp.sum(cov_y * cov_y) - jnp.sum(var_y * var_y)
        ) / Df

        loss_ref[0] = (
            sim_coeff * repr_loss + std_coeff * std_loss + cov_coeff * cov_loss
        )

    return kernel


# ---------------------------------------------------------------------------
# Wrapper
# ---------------------------------------------------------------------------

def _pack_small_params(params, max_d):
    """Pack backbone bias + every (b, gamma, beta) into one [R, max_d] array."""
    def pad_row(r):
        d = r.shape[1]
        if d == max_d:
            return r
        return jnp.pad(r, ((0, 0), (0, max_d - d)))

    rows = [pad_row(params["backbone_b"])]
    for (_, b, g, be) in params["hidden"]:
        rows += [pad_row(b), pad_row(g), pad_row(be)]
    return jnp.concatenate(rows, axis=0).astype(jnp.float32)


def vicreg_forward(params, x_img, y_img, sim_coeff, std_coeff, cov_coeff):
    B = x_img.shape[0]
    # Stack both augmented views along the batch dim: one matmul chain per layer,
    # weights touched once, M dim doubled for every MXU push.
    xy = jnp.concatenate(
        [x_img.reshape(B, -1), y_img.reshape(B, -1)], axis=0
    ).astype(jnp.float32)

    hidden = params["hidden"]
    n_hidden = len(hidden)
    dims = ([params["backbone_w"].shape[1]]
            + [w.shape[1] for (w, _, _, _) in hidden]
            + [params["final_w"].shape[1]])
    max_d = max(dims)
    small = _pack_small_params(params, max_d)

    inputs = [xy, params["backbone_w"]]
    inputs += [w for (w, _, _, _) in hidden]
    inputs += [params["final_w"], small]

    kernel = make_vicreg_fused_kernel(n_hidden, B, sim_coeff, std_coeff, cov_coeff)

    vmem_spec = pl.BlockSpec(memory_space=pltpu.MemorySpace.VMEM)
    out = pl.pallas_call(
        kernel,
        out_shape=jax.ShapeDtypeStruct((1,), jnp.float32),
        in_specs=[vmem_spec] * len(inputs),
        out_specs=pl.BlockSpec(memory_space=pltpu.MemorySpace.SMEM),
        # No vmem_limit_bytes override: total footprint is a few MiB, safely
        # inside the default scoped limit on v5e/v6e/v7x (v7x only has 64 MiB).
    )(*inputs)
    return out[0]


# ---------------------------------------------------------------------------
# Parameter init (mimics torch defaults: U(-1/sqrt(fan_in), +1/sqrt(fan_in)))
# ---------------------------------------------------------------------------

def init_params(key, in_features, backbone_out, head_sizes):
    params = {}
    sizes = [backbone_out] + list(head_sizes)

    def uni(k, shape, fan_in):
        bound = 1.0 / np.sqrt(fan_in)
        return jax.random.uniform(k, shape, jnp.float32, -bound, bound)

    keys = jax.random.split(key, 2 + 2 * (len(sizes) - 1))
    ki = 0
    # placeholder backbone: flatten + Linear(in_features, backbone_out)
    params["backbone_w"] = uni(keys[ki], (in_features, backbone_out), in_features); ki += 1
    params["backbone_b"] = uni(keys[ki], (1, backbone_out), in_features); ki += 1
    # head: (Linear + BN + ReLU) * (len-2), then Linear no bias
    hidden = []
    for i in range(len(sizes) - 2):
        w = uni(keys[ki], (sizes[i], sizes[i + 1]), sizes[i]); ki += 1
        b = uni(keys[ki], (1, sizes[i + 1]), sizes[i]); ki += 1
        gamma = jnp.ones((1, sizes[i + 1]), jnp.float32)
        beta = jnp.zeros((1, sizes[i + 1]), jnp.float32)
        hidden.append((w, b, gamma, beta))
    params["hidden"] = hidden
    params["final_w"] = uni(keys[ki], (sizes[-2], sizes[-1]), sizes[-2]); ki += 1
    return params


# ---------------------------------------------------------------------------
# Pure-JAX reference for validation (HIGHEST precision matmuls)
# ---------------------------------------------------------------------------

def vicreg_forward_ref(params, x_img, y_img, sim_coeff, std_coeff, cov_coeff):
    B = x_img.shape[0]
    hp = jax.lax.Precision.HIGHEST

    def embed(f):
        h = jnp.dot(f.reshape(B, -1), params["backbone_w"], precision=hp) + params["backbone_b"]
        for (w, b, g, be) in params["hidden"]:
            z = jnp.dot(h, w, precision=hp) + b
            mu = z.mean(0, keepdims=True)
            var = ((z - mu) ** 2).mean(0, keepdims=True)
            h = jnp.maximum((z - mu) / jnp.sqrt(var + 1e-5) * g + be, 0.0)
        return jnp.dot(h, params["final_w"], precision=hp)

    x = embed(x_img)
    y = embed(y_img)
    Bn, D = x.shape
    repr_loss = jnp.mean((x - y) ** 2)
    xc = x - x.mean(0)
    yc = y - y.mean(0)
    std_x = jnp.sqrt(xc.var(0, ddof=1) + 1e-4)
    std_y = jnp.sqrt(yc.var(0, ddof=1) + 1e-4)
    std_loss = jnp.mean(jnp.maximum(1 - std_x, 0)) / 2 + jnp.mean(jnp.maximum(1 - std_y, 0)) / 2
    cov_x = jnp.dot(xc.T, xc, precision=hp) / (Bn - 1)
    cov_y = jnp.dot(yc.T, yc, precision=hp) / (Bn - 1)
    off = lambda c: jnp.sum(c ** 2) - jnp.sum(jnp.diag(c) ** 2)
    cov_loss = off(cov_x) / D + off(cov_y) / D
    return sim_coeff * repr_loss + std_coeff * std_loss + cov_coeff * cov_loss


# ---------------------------------------------------------------------------
# Main
# ---------------------------------------------------------------------------

if __name__ == "__main__":
    # B=128 -> 2B=256 stacked rows fills the MXU M dim on all generations;
    # 256-wide feature dims fill the 256-lane MXU columns on v6e/v7x and are
    # two clean 128-lane tiles on v5e. B multiple of 8 (sublane-dense).
    B, C, H, W = 128, 4, 16, 16
    backbone_out = 256
    head_sizes = [256, 256, 256]
    sim_coeff, std_coeff, cov_coeff = 25.0, 25.0, 1.0

    key = jax.random.PRNGKey(0)
    kx, ky, kp = jax.random.split(key, 3)
    x_img = jax.random.normal(kx, (B, C, H, W), jnp.float32)
    y_img = jax.random.normal(ky, (B, C, H, W), jnp.float32)

    params = init_params(kp, C * H * W, backbone_out, head_sizes)

    fwd = jax.jit(
        functools.partial(
            vicreg_forward,
            sim_coeff=sim_coeff,
            std_coeff=std_coeff,
            cov_coeff=cov_coeff,
        )
    )
    loss = jax.block_until_ready(fwd(params, x_img, y_img))

    ref = vicreg_forward_ref(params, x_img, y_img, sim_coeff, std_coeff, cov_coeff)
    np.testing.assert_allclose(np.asarray(loss), np.asarray(ref), rtol=1e-2, atol=1e-3)

    print("KERNEL_OK")
</pallas_src>

<mosaic_0001>
module attributes {stable_mosaic.version = 11 : i64} {
  func.func @kernel(%arg0: memref<256x1024xf32, #tpu.memory_space<vmem>>, %arg1: memref<1024x256xf32, #tpu.memory_space<vmem>>, %arg2: memref<256x256xf32, #tpu.memory_space<vmem>>, %arg3: memref<256x256xf32, #tpu.memory_space<vmem>>, %arg4: memref<256x256xf32, #tpu.memory_space<vmem>>, %arg5: memref<7x256xf32, #tpu.memory_space<vmem>>, %arg6: memref<1xf32, #tpu.memory_space<smem>>) attributes {dimension_semantics = [], scalar_prefetch = 0 : i64, scratch_operands = 0 : i64, tpu.core_type = #tpu.core_type<tc>} {
    %c0 = arith.constant 0 : index
    %c0_0 = arith.constant 0 : index
    %0 = vector.load %arg0[%c0, %c0_0] : memref<256x1024xf32, #tpu.memory_space<vmem>>, vector<256x1024xf32>
    %c0_1 = arith.constant 0 : index
    %c0_2 = arith.constant 0 : index
    %1 = vector.load %arg1[%c0_1, %c0_2] : memref<1024x256xf32, #tpu.memory_space<vmem>>, vector<1024x256xf32>
    %cst = arith.constant dense<0.000000e+00> : vector<256x256xf32>
    %2 = tpu.matmul %0, %1, %cst {dimension_numbers = #tpu.dot_dimension_numbers<[1], [0], [0], [1], [0, 0, 1, 1], [], []>} : vector<256x1024xf32>, vector<1024x256xf32>, vector<256x256xf32> -> vector<256x256xf32>
    %c0_3 = arith.constant 0 : index
    %c0_4 = arith.constant 0 : index
    %3 = vector.load %arg5[%c0_3, %c0_4] : memref<7x256xf32, #tpu.memory_space<vmem>>, vector<1x256xf32>
    %4 = vector.broadcast %3 : vector<1x256xf32> to vector<256x256xf32>
    %5 = arith.addf %2, %4 : vector<256x256xf32>
    %c0_5 = arith.constant 0 : index
    %c0_6 = arith.constant 0 : index
    %6 = vector.load %arg2[%c0_5, %c0_6] : memref<256x256xf32, #tpu.memory_space<vmem>>, vector<256x256xf32>
    %cst_7 = arith.constant dense<0.000000e+00> : vector<256x256xf32>
    %7 = tpu.matmul %5, %6, %cst_7 {dimension_numbers = #tpu.dot_dimension_numbers<[1], [0], [0], [1], [0, 0, 1, 1], [], []>} : vector<256x256xf32>, vector<256x256xf32>, vector<256x256xf32> -> vector<256x256xf32>
    %c1 = arith.constant 1 : index
    %c0_8 = arith.constant 0 : index
    %8 = vector.load %arg5[%c1, %c0_8] : memref<7x256xf32, #tpu.memory_space<vmem>>, vector<1x256xf32>
    %9 = vector.broadcast %8 : vector<1x256xf32> to vector<256x256xf32>
    %10 = arith.addf %7, %9 : vector<256x256xf32>
    %c2 = arith.constant 2 : index
    %c0_9 = arith.constant 0 : index
    %11 = vector.load %arg5[%c2, %c0_9] : memref<7x256xf32, #tpu.memory_space<vmem>>, vector<1x256xf32>
    %c3 = arith.constant 3 : index
    %c0_10 = arith.constant 0 : index
    %12 = vector.load %arg5[%c3, %c0_10] : memref<7x256xf32, #tpu.memory_space<vmem>>, vector<1x256xf32>
    %13 = vector.extract_strided_slice %10 {offsets = [0, 0], sizes = [128, 256], strides = [1, 1]} : vector<256x256xf32> to vector<128x256xf32>
    %cst_11 = arith.constant dense<0.000000e+00> : vector<256xf32>
    %14 = vector.multi_reduction <add>, %13, %cst_11 [0] : vector<128x256xf32> to vector<256xf32>
    %15 = vector.shape_cast %14 : vector<256xf32> to vector<1x256xf32>
    %cst_12 = arith.constant 1.280000e+02 : f32
    %16 = vector.broadcast %cst_12 : f32 to vector<1x256xf32>
    %17 = arith.divf %15, %16 : vector<1x256xf32>
    %18 = vector.broadcast %17 : vector<1x256xf32> to vector<128x256xf32>
    %19 = arith.subf %13, %18 : vector<128x256xf32>
    %20 = arith.mulf %19, %19 : vector<128x256xf32>
    %cst_13 = arith.constant dense<0.000000e+00> : vector<256xf32>
    %21 = vector.multi_reduction <add>, %20, %cst_13 [0] : vector<128x256xf32> to vector<256xf32>
    %22 = vector.shape_cast %21 : vector<256xf32> to vector<1x256xf32>
    %cst_14 = arith.constant 1.280000e+02 : f32
    %23 = vector.broadcast %cst_14 : f32 to vector<1x256xf32>
    %24 = arith.divf %22, %23 : vector<1x256xf32>
    %cst_15 = arith.constant 9.99999974E-6 : f32
    %25 = vector.broadcast %cst_15 : f32 to vector<1x256xf32>
    %26 = arith.addf %24, %25 : vector<1x256xf32>
    %27 = math.rsqrt %26 : vector<1x256xf32>
    %28 = vector.broadcast %27 : vector<1x256xf32> to vector<128x256xf32>
    %29 = arith.mulf %19, %28 : vector<128x256xf32>
    %30 = vector.extract_strided_slice %10 {offsets = [128, 0], sizes = [128, 256], strides = [1, 1]} : vector<256x256xf32> to vector<128x256xf32>
    %cst_16 = arith.constant dense<0.000000e+00> : vector<256xf32>
    %31 = vector.multi_reduction <add>, %30, %cst_16 [0] : vector<128x256xf32> to vector<256xf32>
    %32 = vector.shape_cast %31 : vector<256xf32> to vector<1x256xf32>
    %cst_17 = arith.constant 1.280000e+02 : f32
    %33 = vector.broadcast %cst_17 : f32 to vector<1x256xf32>
    %34 = arith.divf %32, %33 : vector<1x256xf32>
    %35 = vector.broadcast %34 : vector<1x256xf32> to vector<128x256xf32>
    %36 = arith.subf %30, %35 : vector<128x256xf32>
    %37 = arith.mulf %36, %36 : vector<128x256xf32>
    %cst_18 = arith.constant dense<0.000000e+00> : vector<256xf32>
    %38 = vector.multi_reduction <add>, %37, %cst_18 [0] : vector<128x256xf32> to vector<256xf32>
    %39 = vector.shape_cast %38 : vector<256xf32> to vector<1x256xf32>
    %cst_19 = arith.constant 1.280000e+02 : f32
    %40 = vector.broadcast %cst_19 : f32 to vector<1x256xf32>
    %41 = arith.divf %39, %40 : vector<1x256xf32>
    %cst_20 = arith.constant 9.99999974E-6 : f32
    %42 = vector.broadcast %cst_20 : f32 to vector<1x256xf32>
    %43 = arith.addf %41, %42 : vector<1x256xf32>
    %44 = math.rsqrt %43 : vector<1x256xf32>
    %45 = vector.broadcast %44 : vector<1x256xf32> to vector<128x256xf32>
    %46 = arith.mulf %36, %45 : vector<128x256xf32>
    %47 = tpu.concatenate %29, %46 in 0 : vector<128x256xf32>, vector<128x256xf32> -> vector<256x256xf32>
    %48 = vector.broadcast %11 : vector<1x256xf32> to vector<256x256xf32>
    %49 = arith.mulf %47, %48 : vector<256x256xf32>
    %50 = vector.broadcast %12 : vector<1x256xf32> to vector<256x256xf32>
    %51 = arith.addf %49, %50 : vector<256x256xf32>
    %cst_21 = arith.constant 0.000000e+00 : f32
    %52 = vector.broadcast %cst_21 : f32 to vector<256x256xf32>
    %53 = arith.maximumf %51, %52 : vector<256x256xf32>
    %c0_22 = arith.constant 0 : index
    %c0_23 = arith.constant 0 : index
    %54 = vector.load %arg3[%c0_22, %c0_23] : memref<256x256xf32, #tpu.memory_space<vmem>>, vector<256x256xf32>
    %cst_24 = arith.constant dense<0.000000e+00> : vector<256x256xf32>
    %55 = tpu.matmul %53, %54, %cst_24 {dimension_numbers = #tpu.dot_dimension_numbers<[1], [0], [0], [1], [0, 0, 1, 1], [], []>} : vector<256x256xf32>, vector<256x256xf32>, vector<256x256xf32> -> vector<256x256xf32>
    %c4 = arith.constant 4 : index
    %c0_25 = arith.constant 0 : index
    %56 = vector.load %arg5[%c4, %c0_25] : memref<7x256xf32, #tpu.memory_space<vmem>>, vector<1x256xf32>
    %57 = vector.broadcast %56 : vector<1x256xf32> to vector<256x256xf32>
    %58 = arith.addf %55, %57 : vector<256x256xf32>
    %c5 = arith.constant 5 : index
    %c0_26 = arith.constant 0 : index
    %59 = vector.load %arg5[%c5, %c0_26] : memref<7x256xf32, #tpu.memory_space<vmem>>, vector<1x256xf32>
    %c6 = arith.constant 6 : index
    %c0_27 = arith.constant 0 : index
    %60 = vector.load %arg5[%c6, %c0_27] : memref<7x256xf32, #tpu.memory_space<vmem>>, vector<1x256xf32>
    %61 = vector.extract_strided_slice %58 {offsets = [0, 0], sizes = [128, 256], strides = [1, 1]} : vector<256x256xf32> to vector<128x256xf32>
    %cst_28 = arith.constant dense<0.000000e+00> : vector<256xf32>
    %62 = vector.multi_reduction <add>, %61, %cst_28 [0] : vector<128x256xf32> to vector<256xf32>
    %63 = vector.shape_cast %62 : vector<256xf32> to vector<1x256xf32>
    %cst_29 = arith.constant 1.280000e+02 : f32
    %64 = vector.broadcast %cst_29 : f32 to vector<1x256xf32>
    %65 = arith.divf %63, %64 : vector<1x256xf32>
    %66 = vector.broadcast %65 : vector<1x256xf32> to vector<128x256xf32>
    %67 = arith.subf %61, %66 : vector<128x256xf32>
    %68 = arith.mulf %67, %67 : vector<128x256xf32>
    %cst_30 = arith.constant dense<0.000000e+00> : vector<256xf32>
    %69 = vector.multi_reduction <add>, %68, %cst_30 [0] : vector<128x256xf32> to vector<256xf32>
    %70 = vector.shape_cast %69 : vector<256xf32> to vector<1x256xf32>
    %cst_31 = arith.constant 1.280000e+02 : f32
    %71 = vector.broadcast %cst_31 : f32 to vector<1x256xf32>
    %72 = arith.divf %70, %71 : vector<1x256xf32>
    %cst_32 = arith.constant 9.99999974E-6 : f32
    %73 = vector.broadcast %cst_32 : f32 to vector<1x256xf32>
    %74 = arith.addf %72, %73 : vector<1x256xf32>
    %75 = math.rsqrt %74 : vector<1x256xf32>
    %76 = vector.broadcast %75 : vector<1x256xf32> to vector<128x256xf32>
    %77 = arith.mulf %67, %76 : vector<128x256xf32>
    %78 = vector.extract_strided_slice %58 {offsets = [128, 0], sizes = [128, 256], strides = [1, 1]} : vector<256x256xf32> to vector<128x256xf32>
    %cst_33 = arith.constant dense<0.000000e+00> : vector<256xf32>
    %79 = vector.multi_reduction <add>, %78, %cst_33 [0] : vector<128x256xf32> to vector<256xf32>
    %80 = vector.shape_cast %79 : vector<256xf32> to vector<1x256xf32>
    %cst_34 = arith.constant 1.280000e+02 : f32
    %81 = vector.broadcast %cst_34 : f32 to vector<1x256xf32>
    %82 = arith.divf %80, %81 : vector<1x256xf32>
    %83 = vector.broadcast %82 : vector<1x256xf32> to vector<128x256xf32>
    %84 = arith.subf %78, %83 : vector<128x256xf32>
    %85 = arith.mulf %84, %84 : vector<128x256xf32>
    %cst_35 = arith.constant dense<0.000000e+00> : vector<256xf32>
    %86 = vector.multi_reduction <add>, %85, %cst_35 [0] : vector<128x256xf32> to vector<256xf32>
    %87 = vector.shape_cast %86 : vector<256xf32> to vector<1x256xf32>
    %cst_36 = arith.constant 1.280000e+02 : f32
    %88 = vector.broadcast %cst_36 : f32 to vector<1x256xf32>
    %89 = arith.divf %87, %88 : vector<1x256xf32>
    %cst_37 = arith.constant 9.99999974E-6 : f32
    %90 = vector.broadcast %cst_37 : f32 to vector<1x256xf32>
    %91 = arith.addf %89, %90 : vector<1x256xf32>
    %92 = math.rsqrt %91 : vector<1x256xf32>
    %93 = vector.broadcast %92 : vector<1x256xf32> to vector<128x256xf32>
    %94 = arith.mulf %84, %93 : vector<128x256xf32>
    %95 = tpu.concatenate %77, %94 in 0 : vector<128x256xf32>, vector<128x256xf32> -> vector<256x256xf32>
    %96 = vector.broadcast %59 : vector<1x256xf32> to vector<256x256xf32>
    %97 = arith.mulf %95, %96 : vector<256x256xf32>
    %98 = vector.broadcast %60 : vector<1x256xf32> to vector<256x256xf32>
    %99 = arith.addf %97, %98 : vector<256x256xf32>
    %cst_38 = arith.constant 0.000000e+00 : f32
    %100 = vector.broadcast %cst_38 : f32 to vector<256x256xf32>
    %101 = arith.maximumf %99, %100 : vector<256x256xf32>
    %c0_39 = arith.constant 0 : index
    %c0_40 = arith.constant 0 : index
    %102 = vector.load %arg4[%c0_39, %c0_40] : memref<256x256xf32, #tpu.memory_space<vmem>>, vector<256x256xf32>
    %cst_41 = arith.constant dense<0.000000e+00> : vector<256x256xf32>
    %103 = tpu.matmul %101, %102, %cst_41 {dimension_numbers = #tpu.dot_dimension_numbers<[1], [0], [0], [1], [0, 0, 1, 1], [], []>} : vector<256x256xf32>, vector<256x256xf32>, vector<256x256xf32> -> vector<256x256xf32>
    %104 = vector.extract_strided_slice %103 {offsets = [0, 0], sizes = [128, 256], strides = [1, 1]} : vector<256x256xf32> to vector<128x256xf32>
    %105 = vector.extract_strided_slice %103 {offsets = [128, 0], sizes = [128, 256], strides = [1, 1]} : vector<256x256xf32> to vector<128x256xf32>
    %106 = arith.subf %104, %105 : vector<128x256xf32>
    %107 = arith.mulf %106, %106 : vector<128x256xf32>
    %108 = vector.shape_cast %107 : vector<128x256xf32> to vector<1x128x256xf32>
    %cst_42 = arith.constant dense<0.000000e+00> : vector<1xf32>
    %109 = vector.multi_reduction <add>, %108, %cst_42 [1, 2] : vector<1x128x256xf32> to vector<1xf32>
    %110 = vector.shape_cast %109 : vector<1xf32> to vector<1x1x1xf32>
    %111 = vector.extract %110[0, 0, 0] : f32 from vector<1x1x1xf32>
    %cst_43 = arith.constant 3.276800e+04 : f32
    %112 = arith.divf %111, %cst_43 : f32
    %cst_44 = arith.constant dense<0.000000e+00> : vector<256xf32>
    %113 = vector.multi_reduction <add>, %104, %cst_44 [0] : vector<128x256xf32> to vector<256xf32>
    %114 = vector.shape_cast %113 : vector<256xf32> to vector<1x256xf32>
    %cst_45 = arith.constant 1.280000e+02 : f32
    %115 = vector.broadcast %cst_45 : f32 to vector<1x256xf32>
    %116 = arith.divf %114, %115 : vector<1x256xf32>
    %117 = vector.broadcast %116 : vector<1x256xf32> to vector<128x256xf32>
    %118 = arith.subf %104, %117 : vector<128x256xf32>
    %cst_46 = arith.constant dense<0.000000e+00> : vector<256xf32>
    %119 = vector.multi_reduction <add>, %105, %cst_46 [0] : vector<128x256xf32> to vector<256xf32>
    %120 = vector.shape_cast %119 : vector<256xf32> to vector<1x256xf32>
    %cst_47 = arith.constant 1.280000e+02 : f32
    %121 = vector.broadcast %cst_47 : f32 to vector<1x256xf32>
    %122 = arith.divf %120, %121 : vector<1x256xf32>
    %123 = vector.broadcast %122 : vector<1x256xf32> to vector<128x256xf32>
    %124 = arith.subf %105, %123 : vector<128x256xf32>
    %125 = arith.mulf %118, %118 : vector<128x256xf32>
    %cst_48 = arith.constant dense<0.000000e+00> : vector<256xf32>
    %126 = vector.multi_reduction <add>, %125, %cst_48 [0] : vector<128x256xf32> to vector<256xf32>
    %127 = vector.shape_cast %126 : vector<256xf32> to vector<1x256xf32>
    %cst_49 = arith.constant 1.270000e+02 : f32
    %128 = vector.broadcast %cst_49 : f32 to vector<1x256xf32>
    %129 = arith.divf %127, %128 : vector<1x256xf32>
    %130 = arith.mulf %124, %124 : vector<128x256xf32>
    %cst_50 = arith.constant dense<0.000000e+00> : vector<256xf32>
    %131 = vector.multi_reduction <add>, %130, %cst_50 [0] : vector<128x256xf32> to vector<256xf32>
    %132 = vector.shape_cast %131 : vector<256xf32> to vector<1x256xf32>
    %cst_51 = arith.constant 1.270000e+02 : f32
    %133 = vector.broadcast %cst_51 : f32 to vector<1x256xf32>
    %134 = arith.divf %132, %133 : vector<1x256xf32>
    %cst_52 = arith.constant 9.99999974E-5 : f32
    %135 = vector.broadcast %cst_52 : f32 to vector<1x256xf32>
    %136 = arith.addf %129, %135 : vector<1x256xf32>
    %137 = math.sqrt %136 : vector<1x256xf32>
    %cst_53 = arith.constant 9.99999974E-5 : f32
    %138 = vector.broadcast %cst_53 : f32 to vector<1x256xf32>
    %139 = arith.addf %134, %138 : vector<1x256xf32>
    %140 = math.sqrt %139 : vector<1x256xf32>
    %cst_54 = arith.constant 1.000000e+00 : f32
    %141 = vector.broadcast %cst_54 : f32 to vector<1x256xf32>
    %142 = arith.subf %141, %137 : vector<1x256xf32>
    %cst_55 = arith.constant 0.000000e+00 : f32
    %143 = vector.broadcast %cst_55 : f32 to vector<1x256xf32>
    %144 = arith.maximumf %142, %143 : vector<1x256xf32>
    %145 = vector.shape_cast %144 : vector<1x256xf32> to vector<1x1x256xf32>
    %cst_56 = arith.constant dense<0.000000e+00> : vector<1xf32>
    %146 = vector.multi_reduction <add>, %145, %cst_56 [1, 2] : vector<1x1x256xf32> to vector<1xf32>
    %147 = vector.shape_cast %146 : vector<1xf32> to vector<1x1x1xf32>
    %148 = vector.extract %147[0, 0, 0] : f32 from vector<1x1x1xf32>
    %cst_57 = arith.constant 2.560000e+02 : f32
    %149 = arith.divf %148, %cst_57 : f32
    %cst_58 = arith.constant 2.000000e+00 : f32
    %150 = arith.divf %149, %cst_58 : f32
    %cst_59 = arith.constant 1.000000e+00 : f32
    %151 = vector.broadcast %cst_59 : f32 to vector<1x256xf32>
    %152 = arith.subf %151, %140 : vector<1x256xf32>
    %cst_60 = arith.constant 0.000000e+00 : f32
    %153 = vector.broadcast %cst_60 : f32 to vector<1x256xf32>
    %154 = arith.maximumf %152, %153 : vector<1x256xf32>
    %155 = vector.shape_cast %154 : vector<1x256xf32> to vector<1x1x256xf32>
    %cst_61 = arith.constant dense<0.000000e+00> : vector<1xf32>
    %156 = vector.multi_reduction <add>, %155, %cst_61 [1, 2] : vector<1x1x256xf32> to vector<1xf32>
    %157 = vector.shape_cast %156 : vector<1xf32> to vector<1x1x1xf32>
    %158 = vector.extract %157[0, 0, 0] : f32 from vector<1x1x1xf32>
    %cst_62 = arith.constant 2.560000e+02 : f32
    %159 = arith.divf %158, %cst_62 : f32
    %cst_63 = arith.constant 2.000000e+00 : f32
    %160 = arith.divf %159, %cst_63 : f32
    %161 = arith.addf %150, %160 : f32
    %cst_64 = arith.constant dense<0.000000e+00> : vector<256x256xf32>
    %162 = tpu.matmul %118, %118, %cst_64 {dimension_numbers = #tpu.dot_dimension_numbers<[0], [0], [1], [1], [0, 1, 1, 1], [], []>} : vector<128x256xf32>, vector<128x256xf32>, vector<256x256xf32> -> vector<256x256xf32>
    %cst_65 = arith.constant 1.270000e+02 : f32
    %163 = vector.broadcast %cst_65 : f32 to vector<256x256xf32>
    %164 = arith.divf %162, %163 : vector<256x256xf32>
    %cst_66 = arith.constant dense<0.000000e+00> : vector<256x256xf32>
    %165 = tpu.matmul %124, %124, %cst_66 {dimension_numbers = #tpu.dot_dimension_numbers<[0], [0], [1], [1], [0, 1, 1, 1], [], []>} : vector<128x256xf32>, vector<128x256xf32>, vector<256x256xf32> -> vector<256x256xf32>
    %cst_67 = arith.constant 1.270000e+02 : f32
    %166 = vector.broadcast %cst_67 : f32 to vector<256x256xf32>
    %167 = arith.divf %165, %166 : vector<256x256xf32>
    %168 = arith.mulf %164, %164 : vector<256x256xf32>
    %169 = vector.shape_cast %168 : vector<256x256xf32> to vector<1x256x256xf32>
    %cst_68 = arith.constant dense<0.000000e+00> : vector<1xf32>
    %170 = vector.multi_reduction <add>, %169, %cst_68 [1, 2] : vector<1x256x256xf32> to vector<1xf32>
    %171 = vector.shape_cast %170 : vector<1xf32> to vector<1x1x1xf32>
    %172 = vector.extract %171[0, 0, 0] : f32 from vector<1x1x1xf32>
    %173 = arith.mulf %129, %129 : vector<1x256xf32>
    %174 = vector.shape_cast %173 : vector<1x256xf32> to vector<1x1x256xf32>
    %cst_69 = arith.constant dense<0.000000e+00> : vector<1xf32>
    %175 = vector.multi_reduction <add>, %174, %cst_69 [1, 2] : vector<1x1x256xf32> to vector<1xf32>
    %176 = vector.shape_cast %175 : vector<1xf32> to vector<1x1x1xf32>
    %177 = vector.extract %176[0, 0, 0] : f32 from vector<1x1x1xf32>
    %178 = arith.subf %172, %177 : f32
    %179 = arith.mulf %167, %167 : vector<256x256xf32>
    %180 = vector.shape_cast %179 : vector<256x256xf32> to vector<1x256x256xf32>
    %cst_70 = arith.constant dense<0.000000e+00> : vector<1xf32>
    %181 = vector.multi_reduction <add>, %180, %cst_70 [1, 2] : vector<1x256x256xf32> to vector<1xf32>
    %182 = vector.shape_cast %181 : vector<1xf32> to vector<1x1x1xf32>
    %183 = vector.extract %182[0, 0, 0] : f32 from vector<1x1x1xf32>
    %184 = arith.addf %178, %183 : f32
    %185 = arith.mulf %134, %134 : vector<1x256xf32>
    %186 = vector.shape_cast %185 : vector<1x256xf32> to vector<1x1x256xf32>
    %cst_71 = arith.constant dense<0.000000e+00> : vector<1xf32>
    %187 = vector.multi_reduction <add>, %186, %cst_71 [1, 2] : vector<1x1x256xf32> to vector<1xf32>
    %188 = vector.shape_cast %187 : vector<1xf32> to vector<1x1x1xf32>
    %189 = vector.extract %188[0, 0, 0] : f32 from vector<1x1x1xf32>
    %190 = arith.subf %184, %189 : f32
    %cst_72 = arith.constant 2.560000e+02 : f32
    %191 = arith.divf %190, %cst_72 : f32
    %cst_73 = arith.constant 2.500000e+01 : f32
    %192 = arith.mulf %cst_73, %112 : f32
    %cst_74 = arith.constant 2.500000e+01 : f32
    %193 = arith.mulf %cst_74, %161 : f32
    %194 = arith.addf %192, %193 : f32
    %cst_75 = arith.constant 1.000000e+00 : f32
    %195 = arith.mulf %cst_75, %191 : f32
    %196 = arith.addf %194, %195 : f32
    %c0_76 = arith.constant 0 : index
    %197 = memref.load %arg6[%c0_76] : memref<1xf32, #tpu.memory_space<smem>>
    memref.store %196, %arg6[%c0_76] : memref<1xf32, #tpu.memory_space<smem>>
    return
  }
}

</mosaic_0001>

<llo_original>
// kernel: vicreg_forward.1
$region0: #{vicreg_forward.1}
  #allocation0 [shape = 'u32[]', space=smem, size = 0x4, offset = 0x4, fixed_abs, tag = 'smem constant byte address 0x4 - core index']
  #allocation1 [shape = 'u32[72,128]{1,0:T(1,128)}', space=vmem, size = 0x9000, scoped, tag = 'internal scratch']
  %s0 = inlined_call_operand.vmem [shape: f32[256,1024], index: 0, kind: input, shape index: {}]
  %s1 = inlined_call_operand.vmem [shape: f32[1024,256], index: 1, kind: input, shape index: {}]
  %s2 = inlined_call_operand.vmem [shape: f32[256,256], index: 2, kind: input, shape index: {}]
  %s3 = inlined_call_operand.vmem [shape: f32[256,256], index: 3, kind: input, shape index: {}]
  %s4 = inlined_call_operand.vmem [shape: f32[256,256], index: 4, kind: input, shape index: {}]
  %s5 = inlined_call_operand.vmem [shape: f32[7,256], index: 5, kind: input, shape index: {}]
  %s6 = inlined_call_operand.hbm [shape: f32[1], index: 6, kind: output, shape index: {}]
  %s7 = sld [smem:[#allocation0]]
  $region34: #{vicreg_forward.1} parent=0
    _
  %s9 = ssub.s32 1, %s7
  %s10 = scalar_select 0, %s9, %s7
  $region1: #{vicreg_forward.1} parent=0
    #allocation2 [shape = 'u8[512]{0}', space=smem, size = 0x200, scoped, tag = 'output window, operand 0, single buffered']
    #allocation3 [shape = 's32[1]{0}', space=sflag, size = 0x4, scoped, tag = 'scoped memory for vicreg_forward.1']
    %11 = vsyncpa [#allocation3], 0
    // Predicated region
    $region2: #{vicreg_forward.1} parent=1 // pred_check
      _
    $region3: #{vicreg_forward.1} parent=1 // pred_check_branch
      %13 = sbr.rel (0) target = $region5
    $region4: #{vicreg_forward.1} parent=1 // pred_region
      _
    $region5: #{vicreg_forward.1} parent=1 // pred_fallthru
      _
    // Predicated region
    $region6: #{vicreg_forward.1} parent=1 // pred_check
      _
    $region7: #{vicreg_forward.1} parent=1 // pred_check_branch
      %15 = sbr.rel (0) target = $region9
    $region8: #{vicreg_forward.1} parent=1 // pred_region
      _
    $region9: #{vicreg_forward.1} parent=1 // pred_fallthru
      _
    // Predicated region
    $region10: #{vicreg_forward.1} parent=1 // pred_check
      _
    $region11: #{vicreg_forward.1} parent=1 // pred_check_branch
      %17 = sbr.rel (0) target = $region13
    $region12: #{vicreg_forward.1} parent=1 // pred_region
      _
    $region13: #{vicreg_forward.1} parent=1 // pred_fallthru
      _
    // Predicated region
    $region14: #{vicreg_forward.1} parent=1 // pred_check
      _
    $region15: #{vicreg_forward.1} parent=1 // pred_check_branch
      %19 = sbr.rel (0) target = $region17
    $region16: #{vicreg_forward.1} parent=1 // pred_region
      _
    $region17: #{vicreg_forward.1} parent=1 // pred_fallthru
      _
    // Predicated region
    $region18: #{vicreg_forward.1} parent=1 // pred_check
      _
    $region19: #{vicreg_forward.1} parent=1 // pred_check_branch
      %21 = sbr.rel (0) target = $region21
    $region20: #{vicreg_forward.1} parent=1 // pred_region
      _
    $region21: #{vicreg_forward.1} parent=1 // pred_fallthru
      _
    // Predicated region
    $region22: #{vicreg_forward.1} parent=1 // pred_check
      _
    $region23: #{vicreg_forward.1} parent=1 // pred_check_branch
      %23 = sbr.rel (0) target = $region25
    $region24: #{vicreg_forward.1} parent=1 // pred_region
      _
    $region25: #{vicreg_forward.1} parent=1 // pred_fallthru
      _
    %v24 = vld [vmem:[%s0] sm:$0xff]
    %v25 = vld [vmem:[%s0 + $0x8] sm:$0xff]
    %v26 = vld [vmem:[%s0 + $0x10] sm:$0xff]
    %v27 = vld [vmem:[%s0 + $0x18] sm:$0xff]
    %v28 = vld [vmem:[%s0 + $0x20] sm:$0xff]
    %v29 = vld [vmem:[%s0 + $0x28] sm:$0xff]
    %v30 = vld [vmem:[%s0 + $0x30] sm:$0xff]
    %v31 = vld [vmem:[%s0 + $0x38] sm:$0xff]
    %v32 = vld [vmem:[%s0 + $0x40] sm:$0xff]
    %v33 = vld [vmem:[%s0 + $0x48] sm:$0xff]
    %v34 = vld [vmem:[%s0 + $0x50] sm:$0xff]
    %v35 = vld [vmem:[%s0 + $0x58] sm:$0xff]
    %v36 = vld [vmem:[%s0 + $0x60] sm:$0xff]
    %v37 = vld [vmem:[%s0 + $0x68] sm:$0xff]
    %v38 = vld [vmem:[%s0 + $0x70] sm:$0xff]
    %v39 = vld [vmem:[%s0 + $0x78] sm:$0xff]
    %v40 = vld [vmem:[%s0 + $0x80] sm:$0xff]
    %v41 = vld [vmem:[%s0 + $0x88] sm:$0xff]
    %v42 = vld [vmem:[%s0 + $0x90] sm:$0xff]
    %v43 = vld [vmem:[%s0 + $0x98] sm:$0xff]
    %v44 = vld [vmem:[%s0 + $0xa0] sm:$0xff]
    %v45 = vld [vmem:[%s0 + $0xa8] sm:$0xff]
    %v46 = vld [vmem:[%s0 + $0xb0] sm:$0xff]
    %v47 = vld [vmem:[%s0 + $0xb8] sm:$0xff]
    %v48 = vld [vmem:[%s0 + $0xc0] sm:$0xff]
    %v49 = vld [vmem:[%s0 + $0xc8] sm:$0xff]
    %v50 = vld [vmem:[%s0 + $0xd0] sm:$0xff]
    %v51 = vld [vmem:[%s0 + $0xd8] sm:$0xff]
    %v52 = vld [vmem:[%s0 + $0xe0] sm:$0xff]
    %v53 = vld [vmem:[%s0 + $0xe8] sm:$0xff]
    %v54 = vld [vmem:[%s0 + $0xf0] sm:$0xff]
    %v55 = vld [vmem:[%s0 + $0xf8] sm:$0xff]
    %v56 = vld [vmem:[%s0 + $0x100] sm:$0xff]
    %v57 = vld [vmem:[%s0 + $0x108] sm:$0xff]
    %v58 = vld [vmem:[%s0 + $0x110] sm:$0xff]
    %v59 = vld [vmem:[%s0 + $0x118] sm:$0xff]
    %v60 = vld [vmem:[%s0 + $0x120] sm:$0xff]
    %v61 = vld [vmem:[%s0 + $0x128] sm:$0xff]
    %v62 = vld [vmem:[%s0 + $0x130] sm:$0xff]
    %v63 = vld [vmem:[%s0 + $0x138] sm:$0xff]
    %v64 = vld [vmem:[%s0 + $0x140] sm:$0xff]
    %v65 = vld [vmem:[%s0 + $0x148] sm:$0xff]
    %v66 = vld [vmem:[%s0 + $0x150] sm:$0xff]
    %v67 = vld [vmem:[%s0 + $0x158] sm:$0xff]
    %v68 = vld [vmem:[%s0 + $0x160] sm:$0xff]
    %v69 = vld [vmem:[%s0 + $0x168] sm:$0xff]
    %v70 = vld [vmem:[%s0 + $0x170] sm:$0xff]
    %v71 = vld [vmem:[%s0 + $0x178] sm:$0xff]
    %v72 = vld [vmem:[%s0 + $0x180] sm:$0xff]
    %v73 = vld [vmem:[%s0 + $0x188] sm:$0xff]
    %v74 = vld [vmem:[%s0 + $0x190] sm:$0xff]
    %v75 = vld [vmem:[%s0 + $0x198] sm:$0xff]
    %v76 = vld [vmem:[%s0 + $0x1a0] sm:$0xff]
    %v77 = vld [vmem:[%s0 + $0x1a8] sm:$0xff]
    %v78 = vld [vmem:[%s0 + $0x1b0] sm:$0xff]
    %v79 = vld [vmem:[%s0 + $0x1b8] sm:$0xff]
    %v80 = vld [vmem:[%s0 + $0x1c0] sm:$0xff]
    %v81 = vld [vmem:[%s0 + $0x1c8] sm:$0xff]
    %v82 = vld [vmem:[%s0 + $0x1d0] sm:$0xff]
    %v83 = vld [vmem:[%s0 + $0x1d8] sm:$0xff]
    %v84 = vld [vmem:[%s0 + $0x1e0] sm:$0xff]
    %v85 = vld [vmem:[%s0 + $0x1e8] sm:$0xff]
    %v86 = vld [vmem:[%s0 + $0x1f0] sm:$0xff]
    %v87 = vld [vmem:[%s0 + $0x1f8] sm:$0xff]
    %v88 = vld [vmem:[%s0 + $0x200] sm:$0xff]
    %v89 = vld [vmem:[%s0 + $0x208] sm:$0xff]
    %v90 = vld [vmem:[%s0 + $0x210] sm:$0xff]
    %v91 = vld [vmem:[%s0 + $0x218] sm:$0xff]
    %v92 = vld [vmem:[%s0 + $0x220] sm:$0xff]
    %v93 = vld [vmem:[%s0 + $0x228] sm:$0xff]
    %v94 = vld [vmem:[%s0 + $0x230] sm:$0xff]
    %v95 = vld [vmem:[%s0 + $0x238] sm:$0xff]
    %v96 = vld [vmem:[%s0 + $0x240] sm:$0xff]
    %v97 = vld [vmem:[%s0 + $0x248] sm:$0xff]
    %v98 = vld [vmem:[%s0 + $0x250] sm:$0xff]
    %v99 = vld [vmem:[%s0 + $0x258] sm:$0xff]
    %v100 = vld [vmem:[%s0 + $0x260] sm:$0xff]
    %v101 = vld [vmem:[%s0 + $0x268] sm:$0xff]
    %v102 = vld [vmem:[%s0 + $0x270] sm:$0xff]
    %v103 = vld [vmem:[%s0 + $0x278] sm:$0xff]
    %v104 = vld [vmem:[%s0 + $0x280] sm:$0xff]
    %v105 = vld [vmem:[%s0 + $0x288] sm:$0xff]
    %v106 = vld [vmem:[%s0 + $0x290] sm:$0xff]
    %v107 = vld [vmem:[%s0 + $0x298] sm:$0xff]
    %v108 = vld [vmem:[%s0 + $0x2a0] sm:$0xff]
    %v109 = vld [vmem:[%s0 + $0x2a8] sm:$0xff]
    %v110 = vld [vmem:[%s0 + $0x2b0] sm:$0xff]
    %v111 = vld [vmem:[%s0 + $0x2b8] sm:$0xff]
    %v112 = vld [vmem:[%s0 + $0x2c0] sm:$0xff]
    %v113 = vld [vmem:[%s0 + $0x2c8] sm:$0xff]
    %v114 = vld [vmem:[%s0 + $0x2d0] sm:$0xff]
    %v115 = vld [vmem:[%s0 + $0x2d8] sm:$0xff]
    %v116 = vld [vmem:[%s0 + $0x2e0] sm:$0xff]
    %v117 = vld [vmem:[%s0 + $0x2e8] sm:$0xff]
    %v118 = vld [vmem:[%s0 + $0x2f0] sm:$0xff]
    %v119 = vld [vmem:[%s0 + $0x2f8] sm:$0xff]
    %v120 = vld [vmem:[%s0 + $0x300] sm:$0xff]
    %v121 = vld [vmem:[%s0 + $0x308] sm:$0xff]
    %v122 = vld [vmem:[%s0 + $0x310] sm:$0xff]
    %v123 = vld [vmem:[%s0 + $0x318] sm:$0xff]
    %v124 = vld [vmem:[%s0 + $0x320] sm:$0xff]
    %v125 = vld [vmem:[%s0 + $0x328] sm:$0xff]
    %v126 = vld [vmem:[%s0 + $0x330] sm:$0xff]
    %v127 = vld [vmem:[%s0 + $0x338] sm:$0xff]
    %v128 = vld [vmem:[%s0 + $0x340] sm:$0xff]
    %v129 = vld [vmem:[%s0 + $0x348] sm:$0xff]
    %v130 = vld [vmem:[%s0 + $0x350] sm:$0xff]
    %v131 = vld [vmem:[%s0 + $0x358] sm:$0xff]
    %v132 = vld [vmem:[%s0 + $0x360] sm:$0xff]
    %v133 = vld [vmem:[%s0 + $0x368] sm:$0xff]
    %v134 = vld [vmem:[%s0 + $0x370] sm:$0xff]
    %v135 = vld [vmem:[%s0 + $0x378] sm:$0xff]
    %v136 = vld [vmem:[%s0 + $0x380] sm:$0xff]
    %v137 = vld [vmem:[%s0 + $0x388] sm:$0xff]
    %v138 = vld [vmem:[%s0 + $0x390] sm:$0xff]
    %v139 = vld [vmem:[%s0 + $0x398] sm:$0xff]
    %v140 = vld [vmem:[%s0 + $0x3a0] sm:$0xff]
    %v141 = vld [vmem:[%s0 + $0x3a8] sm:$0xff]
    %v142 = vld [vmem:[%s0 + $0x3b0] sm:$0xff]
    %v143 = vld [vmem:[%s0 + $0x3b8] sm:$0xff]
    %v144 = vld [vmem:[%s0 + $0x3c0] sm:$0xff]
    %v145 = vld [vmem:[%s0 + $0x3c8] sm:$0xff]
    %v146 = vld [vmem:[%s0 + $0x3d0] sm:$0xff]
    %v147 = vld [vmem:[%s0 + $0x3d8] sm:$0xff]
    %v148 = vld [vmem:[%s0 + $0x3e0] sm:$0xff]
    %v149 = vld [vmem:[%s0 + $0x3e8] sm:$0xff]
    %v150 = vld [vmem:[%s0 + $0x3f0] sm:$0xff]
    %v151 = vld [vmem:[%s0 + $0x3f8] sm:$0xff]
    %v152 = vld [vmem:[%s0 + $0x400] sm:$0xff]
    %v153 = vld [vmem:[%s0 + $0x408] sm:$0xff]
    %v154 = vld [vmem:[%s0 + $0x410] sm:$0xff]
    %v155 = vld [vmem:[%s0 + $0x418] sm:$0xff]
    %v156 = vld [vmem:[%s0 + $0x420] sm:$0xff]
    %v157 = vld [vmem:[%s0 + $0x428] sm:$0xff]
    %v158 = vld [vmem:[%s0 + $0x430] sm:$0xff]
    %v159 = vld [vmem:[%s0 + $0x438] sm:$0xff]
    %v160 = vld [vmem:[%s0 + $0x440] sm:$0xff]
    %v161 = vld [vmem:[%s0 + $0x448] sm:$0xff]
    %v162 = vld [vmem:[%s0 + $0x450] sm:$0xff]
    %v163 = vld [vmem:[%s0 + $0x458] sm:$0xff]
    %v164 = vld [vmem:[%s0 + $0x460] sm:$0xff]
    %v165 = vld [vmem:[%s0 + $0x468] sm:$0xff]
    %v166 = vld [vmem:[%s0 + $0x470] sm:$0xff]
    %v167 = vld [vmem:[%s0 + $0x478] sm:$0xff]
    %v168 = vld [vmem:[%s0 + $0x480] sm:$0xff]
    %v169 = vld [vmem:[%s0 + $0x488] sm:$0xff]
    %v170 = vld [vmem:[%s0 + $0x490] sm:$0xff]
    %v171 = vld [vmem:[%s0 + $0x498] sm:$0xff]
    %v172 = vld [vmem:[%s0 + $0x4a0] sm:$0xff]
    %v173 = vld [vmem:[%s0 + $0x4a8] sm:$0xff]
    %v174 = vld [vmem:[%s0 + $0x4b0] sm:$0xff]
    %v175 = vld [vmem:[%s0 + $0x4b8] sm:$0xff]
    %v176 = vld [vmem:[%s0 + $0x4c0] sm:$0xff]
    %v177 = vld [vmem:[%s0 + $0x4c8] sm:$0xff]
    %v178 = vld [vmem:[%s0 + $0x4d0] sm:$0xff]
    %v179 = vld [vmem:[%s0 + $0x4d8] sm:$0xff]
    %v180 = vld [vmem:[%s0 + $0x4e0] sm:$0xff]
    %v181 = vld [vmem:[%s0 + $0x4e8] sm:$0xff]
    %v182 = vld [vmem:[%s0 + $0x4f0] sm:$0xff]
    %v183 = vld [vmem:[%s0 + $0x4f8] sm:$0xff]
    %v184 = vld [vmem:[%s0 + $0x500] sm:$0xff]
    %v185 = vld [vmem:[%s0 + $0x508] sm:$0xff]
    %v186 = vld [vmem:[%s0 + $0x510] sm:$0xff]
    %v187 = vld [vmem:[%s0 + $0x518] sm:$0xff]
    %v188 = vld [vmem:[%s0 + $0x520] sm:$0xff]
    %v189 = vld [vmem:[%s0 + $0x528] sm:$0xff]
    %v190 = vld [vmem:[%s0 + $0x530] sm:$0xff]
    %v191 = vld [vmem:[%s0 + $0x538] sm:$0xff]
    %v192 = vld [vmem:[%s0 + $0x540] sm:$0xff]
    %v193 = vld [vmem:[%s0 + $0x548] sm:$0xff]
    %v194 = vld [vmem:[%s0 + $0x550] sm:$0xff]
    %v195 = vld [vmem:[%s0 + $0x558] sm:$0xff]
    %v196 = vld [vmem:[%s0 + $0x560] sm:$0xff]
    %v197 = vld [vmem:[%s0 + $0x568] sm:$0xff]
    %v198 = vld [vmem:[%s0 + $0x570] sm:$0xff]
    %v199 = vld [vmem:[%s0 + $0x578] sm:$0xff]
    %v200 = vld [vmem:[%s0 + $0x580] sm:$0xff]
    %v201 = vld [vmem:[%s0 + $0x588] sm:$0xff]
    %v202 = vld [vmem:[%s0 + $0x590] sm:$0xff]
    %v203 = vld [vmem:[%s0 + $0x598] sm:$0xff]
    %v204 = vld [vmem:[%s0 + $0x5a0] sm:$0xff]
    %v205 = vld [vmem:[%s0 + $0x5a8] sm:$0xff]
    %v206 = vld [vmem:[%s0 + $0x5b0] sm:$0xff]
    %v207 = vld [vmem:[%s0 + $0x5b8] sm:$0xff]
    %v208 = vld [vmem:[%s0 + $0x5c0] sm:$0xff]
    %v209 = vld [vmem:[%s0 + $0x5c8] sm:$0xff]
    %v210 = vld [vmem:[%s0 + $0x5d0] sm:$0xff]
    %v211 = vld [vmem:[%s0 + $0x5d8] sm:$0xff]
    %v212 = vld [vmem:[%s0 + $0x5e0] sm:$0xff]
    %v213 = vld [vmem:[%s0 + $0x5e8] sm:$0xff]
    %v214 = vld [vmem:[%s0 + $0x5f0] sm:$0xff]
    %v215 = vld [vmem:[%s0 + $0x5f8] sm:$0xff]
    %v216 = vld [vmem:[%s0 + $0x600] sm:$0xff]
    %v217 = vld [vmem:[%s0 + $0x608] sm:$0xff]
    %v218 = vld [vmem:[%s0 + $0x610] sm:$0xff]
    %v219 = vld [vmem:[%s0 + $0x618] sm:$0xff]
    %v220 = vld [vmem:[%s0 + $0x620] sm:$0xff]
    %v221 = vld [vmem:[%s0 + $0x628] sm:$0xff]
    %v222 = vld [vmem:[%s0 + $0x630] sm:$0xff]
    %v223 = vld [vmem:[%s0 + $0x638] sm:$0xff]
    %v224 = vld [vmem:[%s0 + $0x640] sm:$0xff]
    %v225 = vld [vmem:[%s0 + $0x648] sm:$0xff]
    %v226 = vld [vmem:[%s0 + $0x650] sm:$0xff]
    %v227 = vld [vmem:[%s0 + $0x658] sm:$0xff]
    %v228 = vld [vmem:[%s0 + $0x660] sm:$0xff]
    %v229 = vld [vmem:[%s0 + $0x668] sm:$0xff]
    %v230 = vld [vmem:[%s0 + $0x670] sm:$0xff]
    %v231 = vld [vmem:[%s0 + $0x678] sm:$0xff]
    %v232 = vld [vmem:[%s0 + $0x680] sm:$0xff]
    %v233 = vld [vmem:[%s0 + $0x688] sm:$0xff]
    %v234 = vld [vmem:[%s0 + $0x690] sm:$0xff]
    %v235 = vld [vmem:[%s0 + $0x698] sm:$0xff]
    %v236 = vld [vmem:[%s0 + $0x6a0] sm:$0xff]
    %v237 = vld [vmem:[%s0 + $0x6a8] sm:$0xff]
    %v238 = vld [vmem:[%s0 + $0x6b0] sm:$0xff]
    %v239 = vld [vmem:[%s0 + $0x6b8] sm:$0xff]
    %v240 = vld [vmem:[%s0 + $0x6c0] sm:$0xff]
    %v241 = vld [vmem:[%s0 + $0x6c8] sm:$0xff]
    %v242 = vld [vmem:[%s0 + $0x6d0] sm:$0xff]
    %v243 = vld [vmem:[%s0 + $0x6d8] sm:$0xff]
    %v244 = vld [vmem:[%s0 + $0x6e0] sm:$0xff]
    %v245 = vld [vmem:[%s0 + $0x6e8] sm:$0xff]
    %v246 = vld [vmem:[%s0 + $0x6f0] sm:$0xff]
    %v247 = vld [vmem:[%s0 + $0x6f8] sm:$0xff]
    %v248 = vld [vmem:[%s0 + $0x700] sm:$0xff]
    %v249 = vld [vmem:[%s0 + $0x708] sm:$0xff]
    %v250 = vld [vmem:[%s0 + $0x710] sm:$0xff]
    %v251 = vld [vmem:[%s0 + $0x718] sm:$0xff]
    %v252 = vld [vmem:[%s0 + $0x720] sm:$0xff]
    %v253 = vld [vmem:[%s0 + $0x728] sm:$0xff]
    %v254 = vld [vmem:[%s0 + $0x730] sm:$0xff]
    %v255 = vld [vmem:[%s0 + $0x738] sm:$0xff]
    %v256 = vld [vmem:[%s0 + $0x740] sm:$0xff]
    %v257 = vld [vmem:[%s0 + $0x748] sm:$0xff]
    %v258 = vld [vmem:[%s0 + $0x750] sm:$0xff]
    %v259 = vld [vmem:[%s0 + $0x758] sm:$0xff]
    %v260 = vld [vmem:[%s0 + $0x760] sm:$0xff]
    %v261 = vld [vmem:[%s0 + $0x768] sm:$0xff]
    %v262 = vld [vmem:[%s0 + $0x770] sm:$0xff]
    %v263 = vld [vmem:[%s0 + $0x778] sm:$0xff]
    %v264 = vld [vmem:[%s0 + $0x780] sm:$0xff]
    %v265 = vld [vmem:[%s0 + $0x788] sm:$0xff]
    %v266 = vld [vmem:[%s0 + $0x790] sm:$0xff]
    %v267 = vld [vmem:[%s0 + $0x798] sm:$0xff]
    %v268 = vld [vmem:[%s0 + $0x7a0] sm:$0xff]
    %v269 = vld [vmem:[%s0 + $0x7a8] sm:$0xff]
    %v270 = vld [vmem:[%s0 + $0x7b0] sm:$0xff]
    %v271 = vld [vmem:[%s0 + $0x7b8] sm:$0xff]
    %v272 = vld [vmem:[%s0 + $0x7c0] sm:$0xff]
    %v273 = vld [vmem:[%s0 + $0x7c8] sm:$0xff]
    %v274 = vld [vmem:[%s0 + $0x7d0] sm:$0xff]
    %v275 = vld [vmem:[%s0 + $0x7d8] sm:$0xff]
    %v276 = vld [vmem:[%s0 + $0x7e0] sm:$0xff]
    %v277 = vld [vmem:[%s0 + $0x7e8] sm:$0xff]
    %v278 = vld [vmem:[%s0 + $0x7f0] sm:$0xff]
    %v279 = vld [vmem:[%s0 + $0x7f8] sm:$0xff]
    %v280 = vld [vmem:[%s1] sm:$0xff]
    %v281 = vld [vmem:[%s1 + $0x8] sm:$0xff]
    %v282 = vld [vmem:[%s1 + $0x10] sm:$0xff]
    %v283 = vld [vmem:[%s1 + $0x18] sm:$0xff]
    %v284 = vld [vmem:[%s1 + $0x20] sm:$0xff]
    %v285 = vld [vmem:[%s1 + $0x28] sm:$0xff]
    %v286 = vld [vmem:[%s1 + $0x30] sm:$0xff]
    %v287 = vld [vmem:[%s1 + $0x38] sm:$0xff]
    %v288 = vld [vmem:[%s1 + $0x40] sm:$0xff]
    %v289 = vld [vmem:[%s1 + $0x48] sm:$0xff]
    %v290 = vld [vmem:[%s1 + $0x50] sm:$0xff]
    %v291 = vld [vmem:[%s1 + $0x58] sm:$0xff]
    %v292 = vld [vmem:[%s1 + $0x60] sm:$0xff]
    %v293 = vld [vmem:[%s1 + $0x68] sm:$0xff]
    %v294 = vld [vmem:[%s1 + $0x70] sm:$0xff]
    %v295 = vld [vmem:[%s1 + $0x78] sm:$0xff]
    %v296 = vld [vmem:[%s1 + $0x80] sm:$0xff]
    %v297 = vld [vmem:[%s1 + $0x88] sm:$0xff]
    %v298 = vld [vmem:[%s1 + $0x90] sm:$0xff]
    %v299 = vld [vmem:[%s1 + $0x98] sm:$0xff]
    %v300 = vld [vmem:[%s1 + $0xa0] sm:$0xff]
    %v301 = vld [vmem:[%s1 + $0xa8] sm:$0xff]
    %v302 = vld [vmem:[%s1 + $0xb0] sm:$0xff]
    %v303 = vld [vmem:[%s1 + $0xb8] sm:$0xff]
    %v304 = vld [vmem:[%s1 + $0xc0] sm:$0xff]
    %v305 = vld [vmem:[%s1 + $0xc8] sm:$0xff]
    %v306 = vld [vmem:[%s1 + $0xd0] sm:$0xff]
    %v307 = vld [vmem:[%s1 + $0xd8] sm:$0xff]
    %v308 = vld [vmem:[%s1 + $0xe0] sm:$0xff]
    %v309 = vld [vmem:[%s1 + $0xe8] sm:$0xff]
    %v310 = vld [vmem:[%s1 + $0xf0] sm:$0xff]
    %v311 = vld [vmem:[%s1 + $0xf8] sm:$0xff]
    %v312 = vld [vmem:[%s1 + $0x100] sm:$0xff]
    %v313 = vld [vmem:[%s1 + $0x108] sm:$0xff]
    %v314 = vld [vmem:[%s1 + $0x110] sm:$0xff]
    %v315 = vld [vmem:[%s1 + $0x118] sm:$0xff]
    %v316 = vld [vmem:[%s1 + $0x120] sm:$0xff]
    %v317 = vld [vmem:[%s1 + $0x128] sm:$0xff]
    %v318 = vld [vmem:[%s1 + $0x130] sm:$0xff]
    %v319 = vld [vmem:[%s1 + $0x138] sm:$0xff]
    %v320 = vld [vmem:[%s1 + $0x140] sm:$0xff]
    %v321 = vld [vmem:[%s1 + $0x148] sm:$0xff]
    %v322 = vld [vmem:[%s1 + $0x150] sm:$0xff]
    %v323 = vld [vmem:[%s1 + $0x158] sm:$0xff]
    %v324 = vld [vmem:[%s1 + $0x160] sm:$0xff]
    %v325 = vld [vmem:[%s1 + $0x168] sm:$0xff]
    %v326 = vld [vmem:[%s1 + $0x170] sm:$0xff]
    %v327 = vld [vmem:[%s1 + $0x178] sm:$0xff]
    %v328 = vld [vmem:[%s1 + $0x180] sm:$0xff]
    %v329 = vld [vmem:[%s1 + $0x188] sm:$0xff]
    %v330 = vld [vmem:[%s1 + $0x190] sm:$0xff]
    %v331 = vld [vmem:[%s1 + $0x198] sm:$0xff]
    %v332 = vld [vmem:[%s1 + $0x1a0] sm:$0xff]
    %v333 = vld [vmem:[%s1 + $0x1a8] sm:$0xff]
    %v334 = vld [vmem:[%s1 + $0x1b0] sm:$0xff]
    %v335 = vld [vmem:[%s1 + $0x1b8] sm:$0xff]
    %v336 = vld [vmem:[%s1 + $0x1c0] sm:$0xff]
    %v337 = vld [vmem:[%s1 + $0x1c8] sm:$0xff]
    %v338 = vld [vmem:[%s1 + $0x1d0] sm:$0xff]
    %v339 = vld [vmem:[%s1 + $0x1d8] sm:$0xff]
    %v340 = vld [vmem:[%s1 + $0x1e0] sm:$0xff]
    %v341 = vld [vmem:[%s1 + $0x1e8] sm:$0xff]
    %v342 = vld [vmem:[%s1 + $0x1f0] sm:$0xff]
    %v343 = vld [vmem:[%s1 + $0x1f8] sm:$0xff]
    %v344 = vld [vmem:[%s1 + $0x200] sm:$0xff]
    %v345 = vld [vmem:[%s1 + $0x208] sm:$0xff]
    %v346 = vld [vmem:[%s1 + $0x210] sm:$0xff]
    %v347 = vld [vmem:[%s1 + $0x218] sm:$0xff]
    %v348 = vld [vmem:[%s1 + $0x220] sm:$0xff]
    %v349 = vld [vmem:[%s1 + $0x228] sm:$0xff]
    %v350 = vld [vmem:[%s1 + $0x230] sm:$0xff]
    %v351 = vld [vmem:[%s1 + $0x238] sm:$0xff]
    %v352 = vld [vmem:[%s1 + $0x240] sm:$0xff]
    %v353 = vld [vmem:[%s1 + $0x248] sm:$0xff]
    %v354 = vld [vmem:[%s1 + $0x250] sm:$0xff]
    %v355 = vld [vmem:[%s1 + $0x258] sm:$0xff]
    %v356 = vld [vmem:[%s1 + $0x260] sm:$0xff]
    %v357 = vld [vmem:[%s1 + $0x268] sm:$0xff]
    %v358 = vld [vmem:[%s1 + $0x270] sm:$0xff]
    %v359 = vld [vmem:[%s1 + $0x278] sm:$0xff]
    %v360 = vld [vmem:[%s1 + $0x280] sm:$0xff]
    %v361 = vld [vmem:[%s1 + $0x288] sm:$0xff]
    %v362 = vld [vmem:[%s1 + $0x290] sm:$0xff]
    %v363 = vld [vmem:[%s1 + $0x298] sm:$0xff]
    %v364 = vld [vmem:[%s1 + $0x2a0] sm:$0xff]
    %v365 = vld [vmem:[%s1 + $0x2a8] sm:$0xff]
    %v366 = vld [vmem:[%s1 + $0x2b0] sm:$0xff]
    %v367 = vld [vmem:[%s1 + $0x2b8] sm:$0xff]
    %v368 = vld [vmem:[%s1 + $0x2c0] sm:$0xff]
    %v369 = vld [vmem:[%s1 + $0x2c8] sm:$0xff]
    %v370 = vld [vmem:[%s1 + $0x2d0] sm:$0xff]
    %v371 = vld [vmem:[%s1 + $0x2d8] sm:$0xff]
    %v372 = vld [vmem:[%s1 + $0x2e0] sm:$0xff]
    %v373 = vld [vmem:[%s1 + $0x2e8] sm:$0xff]
    %v374 = vld [vmem:[%s1 + $0x2f0] sm:$0xff]
    %v375 = vld [vmem:[%s1 + $0x2f8] sm:$0xff]
    %v376 = vld [vmem:[%s1 + $0x300] sm:$0xff]
    %v377 = vld [vmem:[%s1 + $0x308] sm:$0xff]
    %v378 = vld [vmem:[%s1 + $0x310] sm:$0xff]
    %v379 = vld [vmem:[%s1 + $0x318] sm:$0xff]
    %v380 = vld [vmem:[%s1 + $0x320] sm:$0xff]
    %v381 = vld [vmem:[%s1 + $0x328] sm:$0xff]
    %v382 = vld [vmem:[%s1 + $0x330] sm:$0xff]
    %v383 = vld [vmem:[%s1 + $0x338] sm:$0xff]
    %v384 = vld [vmem:[%s1 + $0x340] sm:$0xff]
    %v385 = vld [vmem:[%s1 + $0x348] sm:$0xff]
    %v386 = vld [vmem:[%s1 + $0x350] sm:$0xff]
    %v387 = vld [vmem:[%s1 + $0x358] sm:$0xff]
    %v388 = vld [vmem:[%s1 + $0x360] sm:$0xff]
    %v389 = vld [vmem:[%s1 + $0x368] sm:$0xff]
    %v390 = vld [vmem:[%s1 + $0x370] sm:$0xff]
    %v391 = vld [vmem:[%s1 + $0x378] sm:$0xff]
    %v392 = vld [vmem:[%s1 + $0x380] sm:$0xff]
    %v393 = vld [vmem:[%s1 + $0x388] sm:$0xff]
    %v394 = vld [vmem:[%s1 + $0x390] sm:$0xff]
    %v395 = vld [vmem:[%s1 + $0x398] sm:$0xff]
    %v396 = vld [vmem:[%s1 + $0x3a0] sm:$0xff]
    %v397 = vld [vmem:[%s1 + $0x3a8] sm:$0xff]
    %v398 = vld [vmem:[%s1 + $0x3b0] sm:$0xff]
    %v399 = vld [vmem:[%s1 + $0x3b8] sm:$0xff]
    %v400 = vld [vmem:[%s1 + $0x3c0] sm:$0xff]
    %v401 = vld [vmem:[%s1 + $0x3c8] sm:$0xff]
    %v402 = vld [vmem:[%s1 + $0x3d0] sm:$0xff]
    %v403 = vld [vmem:[%s1 + $0x3d8] sm:$0xff]
    %v404 = vld [vmem:[%s1 + $0x3e0] sm:$0xff]
    %v405 = vld [vmem:[%s1 + $0x3e8] sm:$0xff]
    %v406 = vld [vmem:[%s1 + $0x3f0] sm:$0xff]
    %v407 = vld [vmem:[%s1 + $0x3f8] sm:$0xff]
    %v408 = vld [vmem:[%s1 + $0x400] sm:$0xff]
    %v409 = vld [vmem:[%s1 + $0x408] sm:$0xff]
    %v410 = vld [vmem:[%s1 + $0x410] sm:$0xff]
    %v411 = vld [vmem:[%s1 + $0x418] sm:$0xff]
    %v412 = vld [vmem:[%s1 + $0x420] sm:$0xff]
    %v413 = vld [vmem:[%s1 + $0x428] sm:$0xff]
    %v414 = vld [vmem:[%s1 + $0x430] sm:$0xff]
    %v415 = vld [vmem:[%s1 + $0x438] sm:$0xff]
    %v416 = vld [vmem:[%s1 + $0x440] sm:$0xff]
    %v417 = vld [vmem:[%s1 + $0x448] sm:$0xff]
    %v418 = vld [vmem:[%s1 + $0x450] sm:$0xff]
    %v419 = vld [vmem:[%s1 + $0x458] sm:$0xff]
    %v420 = vld [vmem:[%s1 + $0x460] sm:$0xff]
    %v421 = vld [vmem:[%s1 + $0x468] sm:$0xff]
    %v422 = vld [vmem:[%s1 + $0x470] sm:$0xff]
    %v423 = vld [vmem:[%s1 + $0x478] sm:$0xff]
    %v424 = vld [vmem:[%s1 + $0x480] sm:$0xff]
    %v425 = vld [vmem:[%s1 + $0x488] sm:$0xff]
    %v426 = vld [vmem:[%s1 + $0x490] sm:$0xff]
    %v427 = vld [vmem:[%s1 + $0x498] sm:$0xff]
    %v428 = vld [vmem:[%s1 + $0x4a0] sm:$0xff]
    %v429 = vld [vmem:[%s1 + $0x4a8] sm:$0xff]
    %v430 = vld [vmem:[%s1 + $0x4b0] sm:$0xff]
    %v431 = vld [vmem:[%s1 + $0x4b8] sm:$0xff]
    %v432 = vld [vmem:[%s1 + $0x4c0] sm:$0xff]
    %v433 = vld [vmem:[%s1 + $0x4c8] sm:$0xff]
    %v434 = vld [vmem:[%s1 + $0x4d0] sm:$0xff]
    %v435 = vld [vmem:[%s1 + $0x4d8] sm:$0xff]
    %v436 = vld [vmem:[%s1 + $0x4e0] sm:$0xff]
    %v437 = vld [vmem:[%s1 + $0x4e8] sm:$0xff]
    %v438 = vld [vmem:[%s1 + $0x4f0] sm:$0xff]
    %v439 = vld [vmem:[%s1 + $0x4f8] sm:$0xff]
    %v440 = vld [vmem:[%s1 + $0x500] sm:$0xff]
    %v441 = vld [vmem:[%s1 + $0x508] sm:$0xff]
    %v442 = vld [vmem:[%s1 + $0x510] sm:$0xff]
    %v443 = vld [vmem:[%s1 + $0x518] sm:$0xff]
    %v444 = vld [vmem:[%s1 + $0x520] sm:$0xff]
    %v445 = vld [vmem:[%s1 + $0x528] sm:$0xff]
    %v446 = vld [vmem:[%s1 + $0x530] sm:$0xff]
    %v447 = vld [vmem:[%s1 + $0x538] sm:$0xff]
    %v448 = vld [vmem:[%s1 + $0x540] sm:$0xff]
    %v449 = vld [vmem:[%s1 + $0x548] sm:$0xff]
    %v450 = vld [vmem:[%s1 + $0x550] sm:$0xff]
    %v451 = vld [vmem:[%s1 + $0x558] sm:$0xff]
    %v452 = vld [vmem:[%s1 + $0x560] sm:$0xff]
    %v453 = vld [vmem:[%s1 + $0x568] sm:$0xff]
    %v454 = vld [vmem:[%s1 + $0x570] sm:$0xff]
    %v455 = vld [vmem:[%s1 + $0x578] sm:$0xff]
    %v456 = vld [vmem:[%s1 + $0x580] sm:$0xff]
    %v457 = vld [vmem:[%s1 + $0x588] sm:$0xff]
    %v458 = vld [vmem:[%s1 + $0x590] sm:$0xff]
    %v459 = vld [vmem:[%s1 + $0x598] sm:$0xff]
    %v460 = vld [vmem:[%s1 + $0x5a0] sm:$0xff]
    %v461 = vld [vmem:[%s1 + $0x5a8] sm:$0xff]
    %v462 = vld [vmem:[%s1 + $0x5b0] sm:$0xff]
    %v463 = vld [vmem:[%s1 + $0x5b8] sm:$0xff]
    %v464 = vld [vmem:[%s1 + $0x5c0] sm:$0xff]
    %v465 = vld [vmem:[%s1 + $0x5c8] sm:$0xff]
    %v466 = vld [vmem:[%s1 + $0x5d0] sm:$0xff]
    %v467 = vld [vmem:[%s1 + $0x5d8] sm:$0xff]
    %v468 = vld [vmem:[%s1 + $0x5e0] sm:$0xff]
    %v469 = vld [vmem:[%s1 + $0x5e8] sm:$0xff]
    %v470 = vld [vmem:[%s1 + $0x5f0] sm:$0xff]
    %v471 = vld [vmem:[%s1 + $0x5f8] sm:$0xff]
    %v472 = vld [vmem:[%s1 + $0x600] sm:$0xff]
    %v473 = vld [vmem:[%s1 + $0x608] sm:$0xff]
    %v474 = vld [vmem:[%s1 + $0x610] sm:$0xff]
    %v475 = vld [vmem:[%s1 + $0x618] sm:$0xff]
    %v476 = vld [vmem:[%s1 + $0x620] sm:$0xff]
    %v477 = vld [vmem:[%s1 + $0x628] sm:$0xff]
    %v478 = vld [vmem:[%s1 + $0x630] sm:$0xff]
    %v479 = vld [vmem:[%s1 + $0x638] sm:$0xff]
    %v480 = vld [vmem:[%s1 + $0x640] sm:$0xff]
    %v481 = vld [vmem:[%s1 + $0x648] sm:$0xff]
    %v482 = vld [vmem:[%s1 + $0x650] sm:$0xff]
    %v483 = vld [vmem:[%s1 + $0x658] sm:$0xff]
    %v484 = vld [vmem:[%s1 + $0x660] sm:$0xff]
    %v485 = vld [vmem:[%s1 + $0x668] sm:$0xff]
    %v486 = vld [vmem:[%s1 + $0x670] sm:$0xff]
    %v487 = vld [vmem:[%s1 + $0x678] sm:$0xff]
    %v488 = vld [vmem:[%s1 + $0x680] sm:$0xff]
    %v489 = vld [vmem:[%s1 + $0x688] sm:$0xff]
    %v490 = vld [vmem:[%s1 + $0x690] sm:$0xff]
    %v491 = vld [vmem:[%s1 + $0x698] sm:$0xff]
    %v492 = vld [vmem:[%s1 + $0x6a0] sm:$0xff]
    %v493 = vld [vmem:[%s1 + $0x6a8] sm:$0xff]
    %v494 = vld [vmem:[%s1 + $0x6b0] sm:$0xff]
    %v495 = vld [vmem:[%s1 + $0x6b8] sm:$0xff]
    %v496 = vld [vmem:[%s1 + $0x6c0] sm:$0xff]
    %v497 = vld [vmem:[%s1 + $0x6c8] sm:$0xff]
    %v498 = vld [vmem:[%s1 + $0x6d0] sm:$0xff]
    %v499 = vld [vmem:[%s1 + $0x6d8] sm:$0xff]
    %v500 = vld [vmem:[%s1 + $0x6e0] sm:$0xff]
    %v501 = vld [vmem:[%s1 + $0x6e8] sm:$0xff]
    %v502 = vld [vmem:[%s1 + $0x6f0] sm:$0xff]
    %v503 = vld [vmem:[%s1 + $0x6f8] sm:$0xff]
    %v504 = vld [vmem:[%s1 + $0x700] sm:$0xff]
    %v505 = vld [vmem:[%s1 + $0x708] sm:$0xff]
    %v506 = vld [vmem:[%s1 + $0x710] sm:$0xff]
    %v507 = vld [vmem:[%s1 + $0x718] sm:$0xff]
    %v508 = vld [vmem:[%s1 + $0x720] sm:$0xff]
    %v509 = vld [vmem:[%s1 + $0x728] sm:$0xff]
    %v510 = vld [vmem:[%s1 + $0x730] sm:$0xff]
    %v511 = vld [vmem:[%s1 + $0x738] sm:$0xff]
    %v512 = vld [vmem:[%s1 + $0x740] sm:$0xff]
    %v513 = vld [vmem:[%s1 + $0x748] sm:$0xff]
    %v514 = vld [vmem:[%s1 + $0x750] sm:$0xff]
    %v515 = vld [vmem:[%s1 + $0x758] sm:$0xff]
    %v516 = vld [vmem:[%s1 + $0x760] sm:$0xff]
    %v517 = vld [vmem:[%s1 + $0x768] sm:$0xff]
    %v518 = vld [vmem:[%s1 + $0x770] sm:$0xff]
    %v519 = vld [vmem:[%s1 + $0x778] sm:$0xff]
    %v520 = vld [vmem:[%s1 + $0x780] sm:$0xff]
    %v521 = vld [vmem:[%s1 + $0x788] sm:$0xff]
    %v522 = vld [vmem:[%s1 + $0x790] sm:$0xff]
    %v523 = vld [vmem:[%s1 + $0x798] sm:$0xff]
    %v524 = vld [vmem:[%s1 + $0x7a0] sm:$0xff]
    %v525 = vld [vmem:[%s1 + $0x7a8] sm:$0xff]
    %v526 = vld [vmem:[%s1 + $0x7b0] sm:$0xff]
    %v527 = vld [vmem:[%s1 + $0x7b8] sm:$0xff]
    %v528 = vld [vmem:[%s1 + $0x7c0] sm:$0xff]
    %v529 = vld [vmem:[%s1 + $0x7c8] sm:$0xff]
    %v530 = vld [vmem:[%s1 + $0x7d0] sm:$0xff]
    %v531 = vld [vmem:[%s1 + $0x7d8] sm:$0xff]
    %v532 = vld [vmem:[%s1 + $0x7e0] sm:$0xff]
    %v533 = vld [vmem:[%s1 + $0x7e8] sm:$0xff]
    %v534 = vld [vmem:[%s1 + $0x7f0] sm:$0xff]
    %v535 = vld [vmem:[%s1 + $0x7f8] sm:$0xff]
    %v536 = vld [vmem:[%s5] ss:$8 sm:$0x3]
    %v538 = vperm.slane %v536, 0
    %v539 = vperm.slane %v536, 1
    %542 = vmatpush.msra.mxu0 %v310
    %543 = vmatpush.msra.mxu0 %v308
    %544 = vmatpush.msra.mxu0 %v306
    %545 = vmatpush.msra.mxu0 %v304
    %546 = vmatpush.msra.mxu0 %v302
    %547 = vmatpush.msra.mxu0 %v300
    %548 = vmatpush.msra.mxu0 %v298
    %549 = vmatpush.msra.mxu0 %v296
    %550 = vmatpush.msra.mxu0 %v294
    %551 = vmatpush.msra.mxu0 %v292
    %552 = vmatpush.msra.mxu0 %v290
    %553 = vmatpush.msra.mxu0 %v288
    %554 = vmatpush.msra.mxu0 %v286
    %555 = vmatpush.msra.mxu0 %v284
    %556 = vmatpush.msra.mxu0 %v282
    %557 = vmatpush.msra.mxu0 %v280
    %558 = vmatmul.f32.gmra.mxu0 %v24
    %v559 = vpop.f32.mrf.mxu0
    %v560 = vadd.f32 %v538, %v559
    %561 = vmatmul.f32.gmra.mxu0 %v32
    %v562 = vpop.f32.mrf.mxu0
    %v563 = vadd.f32 %v538, %v562
    %564 = vmatmul.f32.gmra.mxu0 %v40
    %v565 = vpop.f32.mrf.mxu0
    %v566 = vadd.f32 %v538, %v565
    %567 = vmatmul.f32.gmra.mxu0 %v48
    %v568 = vpop.f32.mrf.mxu0
    %v569 = vadd.f32 %v538, %v568
    %570 = vmatmul.f32.gmra.mxu0 %v56
    %v571 = vpop.f32.mrf.mxu0
    %v572 = vadd.f32 %v538, %v571
    %573 = vmatmul.f32.gmra.mxu0 %v64
    %v574 = vpop.f32.mrf.mxu0
    %v575 = vadd.f32 %v538, %v574
    %576 = vmatmul.f32.gmra.mxu0 %v72
    %v577 = vpop.f32.mrf.mxu0
    %v578 = vadd.f32 %v538, %v577
    %579 = vmatmul.f32.gmra.mxu0 %v80
    %v580 = vpop.f32.mrf.mxu0
    %v581 = vadd.f32 %v538, %v580
    %582 = vmatmul.f32.gmra.mxu0 %v88
    %v583 = vpop.f32.mrf.mxu0
    %v584 = vadd.f32 %v538, %v583
    %585 = vmatmul.f32.gmra.mxu0 %v96
    %v586 = vpop.f32.mrf.mxu0
    %v587 = vadd.f32 %v538, %v586
    %588 = vmatmul.f32.gmra.mxu0 %v104
    %v589 = vpop.f32.mrf.mxu0
    %v590 = vadd.f32 %v538, %v589
    %591 = vmatmul.f32.gmra.mxu0 %v112
    %v592 = vpop.f32.mrf.mxu0
    %v593 = vadd.f32 %v538, %v592
    %594 = vmatmul.f32.gmra.mxu0 %v120
    %v595 = vpop.f32.mrf.mxu0
    %v596 = vadd.f32 %v538, %v595
    %597 = vmatmul.f32.gmra.mxu0 %v128
    %v598 = vpop.f32.mrf.mxu0
    %v599 = vadd.f32 %v538, %v598
    %600 = vmatmul.f32.gmra.mxu0 %v136
    %v601 = vpop.f32.mrf.mxu0
    %v602 = vadd.f32 %v538, %v601
    %603 = vmatmul.f32.gmra.mxu0 %v144
    %v604 = vpop.f32.mrf.mxu0
    %v605 = vadd.f32 %v538, %v604
    %606 = vmatmul.f32.gmra.mxu0 %v152
    %v607 = vpop.f32.mrf.mxu0
    %v608 = vadd.f32 %v538, %v607
    %609 = vmatmul.f32.gmra.mxu0 %v160
    %v610 = vpop.f32.mrf.mxu0
    %v611 = vadd.f32 %v538, %v610
    %612 = vmatmul.f32.gmra.mxu0 %v168
    %v613 = vpop.f32.mrf.mxu0
    %v614 = vadd.f32 %v538, %v613
    %615 = vmatmul.f32.gmra.mxu0 %v176
    %v616 = vpop.f32.mrf.mxu0
    %v617 = vadd.f32 %v538, %v616
    %618 = vmatmul.f32.gmra.mxu0 %v184
    %v619 = vpop.f32.mrf.mxu0
    %v620 = vadd.f32 %v538, %v619
    %621 = vmatmul.f32.gmra.mxu0 %v192
    %v622 = vpop.f32.mrf.mxu0
    %v623 = vadd.f32 %v538, %v622
    %624 = vmatmul.f32.gmra.mxu0 %v200
    %v625 = vpop.f32.mrf.mxu0
    %v626 = vadd.f32 %v538, %v625
    %627 = vmatmul.f32.gmra.mxu0 %v208
    %v628 = vpop.f32.mrf.mxu0
    %v629 = vadd.f32 %v538, %v628
    %630 = vmatmul.f32.gmra.mxu0 %v216
    %v631 = vpop.f32.mrf.mxu0
    %v632 = vadd.f32 %v538, %v631
    %633 = vmatmul.f32.gmra.mxu0 %v224
    %v634 = vpop.f32.mrf.mxu0
    %v635 = vadd.f32 %v538, %v634
    %636 = vmatmul.f32.gmra.mxu0 %v232
    %v637 = vpop.f32.mrf.mxu0
    %v638 = vadd.f32 %v538, %v637
    %639 = vmatmul.f32.gmra.mxu0 %v240
    %v640 = vpop.f32.mrf.mxu0
    %v641 = vadd.f32 %v538, %v640
    %642 = vmatmul.f32.gmra.mxu0 %v248
    %v643 = vpop.f32.mrf.mxu0
    %v644 = vadd.f32 %v538, %v643
    %645 = vmatmul.f32.gmra.mxu0 %v256
    %v646 = vpop.f32.mrf.mxu0
    %v647 = vadd.f32 %v538, %v646
    %648 = vmatmul.f32.gmra.mxu0 %v264
    %v649 = vpop.f32.mrf.mxu0
    %v650 = vadd.f32 %v538, %v649
    %651 = vmatmul.f32.gmra.mxu0 %v272
    %v652 = vpop.f32.mrf.mxu0
    %v653 = vadd.f32 %v538, %v652
    %654 = vdwg.mxu0
    %655 = vmatpush.msra.mxu0 %v342
    %656 = vmatpush.msra.mxu0 %v340
    %657 = vmatpush.msra.mxu0 %v338
    %658 = vmatpush.msra.mxu0 %v336
    %659 = vmatpush.msra.mxu0 %v334
    %660 = vmatpush.msra.mxu0 %v332
    %661 = vmatpush.msra.mxu0 %v330
    %662 = vmatpush.msra.mxu0 %v328
    %663 = vmatpush.msra.mxu0 %v326
    %664 = vmatpush.msra.mxu0 %v324
    %665 = vmatpush.msra.mxu0 %v322
    %666 = vmatpush.msra.mxu0 %v320
    %667 = vmatpush.msra.mxu0 %v318
    %668 = vmatpush.msra.mxu0 %v316
    %669 = vmatpush.msra.mxu0 %v314
    %670 = vmatpush.msra.mxu0 %v312
    %671 = vmatmul.f32.gmra.mxu0 %v25
    %v672 = vpop.f32.mrf.mxu0
    %v673 = vadd.f32 %v560, %v672
    %674 = vmatmul.f32.gmra.mxu0 %v33
    %v675 = vpop.f32.mrf.mxu0
    %v676 = vadd.f32 %v563, %v675
    %677 = vmatmul.f32.gmra.mxu0 %v41
    %v678 = vpop.f32.mrf.mxu0
    %v679 = vadd.f32 %v566, %v678
    %680 = vmatmul.f32.gmra.mxu0 %v49
    %v681 = vpop.f32.mrf.mxu0
    %v682 = vadd.f32 %v569, %v681
    %683 = vmatmul.f32.gmra.mxu0 %v57
    %v684 = vpop.f32.mrf.mxu0
    %v685 = vadd.f32 %v572, %v684
    %686 = vmatmul.f32.gmra.mxu0 %v65
    %v687 = vpop.f32.mrf.mxu0
    %v688 = vadd.f32 %v575, %v687
    %689 = vmatmul.f32.gmra.mxu0 %v73
    %v690 = vpop.f32.mrf.mxu0
    %v691 = vadd.f32 %v578, %v690
    %692 = vmatmul.f32.gmra.mxu0 %v81
    %v693 = vpop.f32.mrf.mxu0
    %v694 = vadd.f32 %v581, %v693
    %695 = vmatmul.f32.gmra.mxu0 %v89
    %v696 = vpop.f32.mrf.mxu0
    %v697 = vadd.f32 %v584, %v696
    %698 = vmatmul.f32.gmra.mxu0 %v97
    %v699 = vpop.f32.mrf.mxu0
    %v700 = vadd.f32 %v587, %v699
    %701 = vmatmul.f32.gmra.mxu0 %v105
    %v702 = vpop.f32.mrf.mxu0
    %v703 = vadd.f32 %v590, %v702
    %704 = vmatmul.f32.gmra.mxu0 %v113
    %v705 = vpop.f32.mrf.mxu0
    %v706 = vadd.f32 %v593, %v705
    %707 = vmatmul.f32.gmra.mxu0 %v121
    %v708 = vpop.f32.mrf.mxu0
    %v709 = vadd.f32 %v596, %v708
    %710 = vmatmul.f32.gmra.mxu0 %v129
    %v711 = vpop.f32.mrf.mxu0
    %v712 = vadd.f32 %v599, %v711
    %713 = vmatmul.f32.gmra.mxu0 %v137
    %v714 = vpop.f32.mrf.mxu0
    %v715 = vadd.f32 %v602, %v714
    %716 = vmatmul.f32.gmra.mxu0 %v145
    %v717 = vpop.f32.mrf.mxu0
    %v718 = vadd.f32 %v605, %v717
    %719 = vmatmul.f32.gmra.mxu0 %v153
    %v720 = vpop.f32.mrf.mxu0
    %v721 = vadd.f32 %v608, %v720
    %722 = vmatmul.f32.gmra.mxu0 %v161
    %v723 = vpop.f32.mrf.mxu0
    %v724 = vadd.f32 %v611, %v723
    %725 = vmatmul.f32.gmra.mxu0 %v169
    %v726 = vpop.f32.mrf.mxu0
    %v727 = vadd.f32 %v614, %v726
    %728 = vmatmul.f32.gmra.mxu0 %v177
    %v729 = vpop.f32.mrf.mxu0
    %v730 = vadd.f32 %v617, %v729
    %731 = vmatmul.f32.gmra.mxu0 %v185
    %v732 = vpop.f32.mrf.mxu0
    %v733 = vadd.f32 %v620, %v732
    %734 = vmatmul.f32.gmra.mxu0 %v193
    %v735 = vpop.f32.mrf.mxu0
    %v736 = vadd.f32 %v623, %v735
    %737 = vmatmul.f32.gmra.mxu0 %v201
    %v738 = vpop.f32.mrf.mxu0
    %v739 = vadd.f32 %v626, %v738
    %740 = vmatmul.f32.gmra.mxu0 %v209
    %v741 = vpop.f32.mrf.mxu0
    %v742 = vadd.f32 %v629, %v741
    %743 = vmatmul.f32.gmra.mxu0 %v217
    %v744 = vpop.f32.mrf.mxu0
    %v745 = vadd.f32 %v632, %v744
    %746 = vmatmul.f32.gmra.mxu0 %v225
    %v747 = vpop.f32.mrf.mxu0
    %v748 = vadd.f32 %v635, %v747
    %749 = vmatmul.f32.gmra.mxu0 %v233
    %v750 = vpop.f32.mrf.mxu0
    %v751 = vadd.f32 %v638, %v750
    %752 = vmatmul.f32.gmra.mxu0 %v241
    %v753 = vpop.f32.mrf.mxu0
    %v754 = vadd.f32 %v641, %v753
    %755 = vmatmul.f32.gmra.mxu0 %v249
    %v756 = vpop.f32.mrf.mxu0
    %v757 = vadd.f32 %v644, %v756
    %758 = vmatmul.f32.gmra.mxu0 %v257
    %v759 = vpop.f32.mrf.mxu0
    %v760 = vadd.f32 %v647, %v759
    %761 = vmatmul.f32.gmra.mxu0 %v265
    %v762 = vpop.f32.mrf.mxu0
    %v763 = vadd.f32 %v650, %v762
    %764 = vmatmul.f32.gmra.mxu0 %v273
    %v765 = vpop.f32.mrf.mxu0
    %v766 = vadd.f32 %v653, %v765
    %767 = vdwg.mxu0
    %768 = vmatpush.msra.mxu0 %v374
    %769 = vmatpush.msra.mxu0 %v372
    %770 = vmatpush.msra.mxu0 %v370
    %771 = vmatpush.msra.mxu0 %v368
    %772 = vmatpush.msra.mxu0 %v366
    %773 = vmatpush.msra.mxu0 %v364
    %774 = vmatpush.msra.mxu0 %v362
    %775 = vmatpush.msra.mxu0 %v360
    %776 = vmatpush.msra.mxu0 %v358
    %777 = vmatpush.msra.mxu0 %v356
    %778 = vmatpush.msra.mxu0 %v354
    %779 = vmatpush.msra.mxu0 %v352
    %780 = vmatpush.msra.mxu0 %v350
    %781 = vmatpush.msra.mxu0 %v348
    %782 = vmatpush.msra.mxu0 %v346
    %783 = vmatpush.msra.mxu0 %v344
    %784 = vmatmul.f32.gmra.mxu0 %v26
    %v785 = vpop.f32.mrf.mxu0
    %v786 = vadd.f32 %v673, %v785
    %787 = vmatmul.f32.gmra.mxu0 %v34
    %v788 = vpop.f32.mrf.mxu0
    %v789 = vadd.f32 %v676, %v788
    %790 = vmatmul.f32.gmra.mxu0 %v42
    %v791 = vpop.f32.mrf.mxu0
    %v792 = vadd.f32 %v679, %v791
    %793 = vmatmul.f32.gmra.mxu0 %v50
    %v794 = vpop.f32.mrf.mxu0
    %v795 = vadd.f32 %v682, %v794
    %796 = vmatmul.f32.gmra.mxu0 %v58
    %v797 = vpop.f32.mrf.mxu0
    %v798 = vadd.f32 %v685, %v797
    %799 = vmatmul.f32.gmra.mxu0 %v66
    %v800 = vpop.f32.mrf.mxu0
    %v801 = vadd.f32 %v688, %v800
    %802 = vmatmul.f32.gmra.mxu0 %v74
    %v803 = vpop.f32.mrf.mxu0
    %v804 = vadd.f32 %v691, %v803
    %805 = vmatmul.f32.gmra.mxu0 %v82
    %v806 = vpop.f32.mrf.mxu0
    %v807 = vadd.f32 %v694, %v806
    %808 = vmatmul.f32.gmra.mxu0 %v90
    %v809 = vpop.f32.mrf.mxu0
    %v810 = vadd.f32 %v697, %v809
    %811 = vmatmul.f32.gmra.mxu0 %v98
    %v812 = vpop.f32.mrf.mxu0
    %v813 = vadd.f32 %v700, %v812
    %814 = vmatmul.f32.gmra.mxu0 %v106
    %v815 = vpop.f32.mrf.mxu0
    %v816 = vadd.f32 %v703, %v815
    %817 = vmatmul.f32.gmra.mxu0 %v114
    %v818 = vpop.f32.mrf.mxu0
    %v819 = vadd.f32 %v706, %v818
    %820 = vmatmul.f32.gmra.mxu0 %v122
    %v821 = vpop.f32.mrf.mxu0
    %v822 = vadd.f32 %v709, %v821
    %823 = vmatmul.f32.gmra.mxu0 %v130
    %v824 = vpop.f32.mrf.mxu0
    %v825 = vadd.f32 %v712, %v824
    %826 = vmatmul.f32.gmra.mxu0 %v138
    %v827 = vpop.f32.mrf.mxu0
    %v828 = vadd.f32 %v715, %v827
    %829 = vmatmul.f32.gmra.mxu0 %v146
    %v830 = vpop.f32.mrf.mxu0
    %v831 = vadd.f32 %v718, %v830
    %832 = vmatmul.f32.gmra.mxu0 %v154
    %v833 = vpop.f32.mrf.mxu0
    %v834 = vadd.f32 %v721, %v833
    %835 = vmatmul.f32.gmra.mxu0 %v162
    %v836 = vpop.f32.mrf.mxu0
    %v837 = vadd.f32 %v724, %v836
    %838 = vmatmul.f32.gmra.mxu0 %v170
    %v839 = vpop.f32.mrf.mxu0
    %v840 = vadd.f32 %v727, %v839
    %841 = vmatmul.f32.gmra.mxu0 %v178
    %v842 = vpop.f32.mrf.mxu0
    %v843 = vadd.f32 %v730, %v842
    %844 = vmatmul.f32.gmra.mxu0 %v186
    %v845 = vpop.f32.mrf.mxu0
    %v846 = vadd.f32 %v733, %v845
    %847 = vmatmul.f32.gmra.mxu0 %v194
    %v848 = vpop.f32.mrf.mxu0
    %v849 = vadd.f32 %v736, %v848
    %850 = vmatmul.f32.gmra.mxu0 %v202
    %v851 = vpop.f32.mrf.mxu0
    %v852 = vadd.f32 %v739, %v851
    %853 = vmatmul.f32.gmra.mxu0 %v210
    %v854 = vpop.f32.mrf.mxu0
    %v855 = vadd.f32 %v742, %v854
    %856 = vmatmul.f32.gmra.mxu0 %v218
    %v857 = vpop.f32.mrf.mxu0
    %v858 = vadd.f32 %v745, %v857
    %859 = vmatmul.f32.gmra.mxu0 %v226
    %v860 = vpop.f32.mrf.mxu0
    %v861 = vadd.f32 %v748, %v860
    %862 = vmatmul.f32.gmra.mxu0 %v234
    %v863 = vpop.f32.mrf.mxu0
    %v864 = vadd.f32 %v751, %v863
    %865 = vmatmul.f32.gmra.mxu0 %v242
    %v866 = vpop.f32.mrf.mxu0
    %v867 = vadd.f32 %v754, %v866
    %868 = vmatmul.f32.gmra.mxu0 %v250
    %v869 = vpop.f32.mrf.mxu0
    %v870 = vadd.f32 %v757, %v869
    %871 = vmatmul.f32.gmra.mxu0 %v258
    %v872 = vpop.f32.mrf.mxu0
    %v873 = vadd.f32 %v760, %v872
    %874 = vmatmul.f32.gmra.mxu0 %v266
    %v875 = vpop.f32.mrf.mxu0
    %v876 = vadd.f32 %v763, %v875
    %877 = vmatmul.f32.gmra.mxu0 %v274
    %v878 = vpop.f32.mrf.mxu0
    %v879 = vadd.f32 %v766, %v878
    %880 = vdwg.mxu0
    %881 = vmatpush.msra.mxu0 %v406
    %882 = vmatpush.msra.mxu0 %v404
    %883 = vmatpush.msra.mxu0 %v402
    %884 = vmatpush.msra.mxu0 %v400
    %885 = vmatpush.msra.mxu0 %v398
    %886 = vmatpush.msra.mxu0 %v396
    %887 = vmatpush.msra.mxu0 %v394
    %888 = vmatpush.msra.mxu0 %v392
    %889 = vmatpush.msra.mxu0 %v390
    %890 = vmatpush.msra.mxu0 %v388
    %891 = vmatpush.msra.mxu0 %v386
    %892 = vmatpush.msra.mxu0 %v384
    %893 = vmatpush.msra.mxu0 %v382
    %894 = vmatpush.msra.mxu0 %v380
    %895 = vmatpush.msra.mxu0 %v378
    %896 = vmatpush.msra.mxu0 %v376
    %897 = vmatmul.f32.gmra.mxu0 %v27
    %v898 = vpop.f32.mrf.mxu0
    %v899 = vadd.f32 %v786, %v898
    %900 = vmatmul.f32.gmra.mxu0 %v35
    %v901 = vpop.f32.mrf.mxu0
    %v902 = vadd.f32 %v789, %v901
    %903 = vmatmul.f32.gmra.mxu0 %v43
    %v904 = vpop.f32.mrf.mxu0
    %v905 = vadd.f32 %v792, %v904
    %906 = vmatmul.f32.gmra.mxu0 %v51
    %v907 = vpop.f32.mrf.mxu0
    %v908 = vadd.f32 %v795, %v907
    %909 = vmatmul.f32.gmra.mxu0 %v59
    %v910 = vpop.f32.mrf.mxu0
    %v911 = vadd.f32 %v798, %v910
    %912 = vmatmul.f32.gmra.mxu0 %v67
    %v913 = vpop.f32.mrf.mxu0
    %v914 = vadd.f32 %v801, %v913
    %915 = vmatmul.f32.gmra.mxu0 %v75
    %v916 = vpop.f32.mrf.mxu0
    %v917 = vadd.f32 %v804, %v916
    %918 = vmatmul.f32.gmra.mxu0 %v83
    %v919 = vpop.f32.mrf.mxu0
    %v920 = vadd.f32 %v807, %v919
    %921 = vmatmul.f32.gmra.mxu0 %v91
    %v922 = vpop.f32.mrf.mxu0
    %v923 = vadd.f32 %v810, %v922
    %924 = vmatmul.f32.gmra.mxu0 %v99
    %v925 = vpop.f32.mrf.mxu0
    %v926 = vadd.f32 %v813, %v925
    %927 = vmatmul.f32.gmra.mxu0 %v107
    %v928 = vpop.f32.mrf.mxu0
    %v929 = vadd.f32 %v816, %v928
    %930 = vmatmul.f32.gmra.mxu0 %v115
    %v931 = vpop.f32.mrf.mxu0
    %v932 = vadd.f32 %v819, %v931
    %933 = vmatmul.f32.gmra.mxu0 %v123
    %v934 = vpop.f32.mrf.mxu0
    %v935 = vadd.f32 %v822, %v934
    %936 = vmatmul.f32.gmra.mxu0 %v131
    %v937 = vpop.f32.mrf.mxu0
    %v938 = vadd.f32 %v825, %v937
    %939 = vmatmul.f32.gmra.mxu0 %v139
    %v940 = vpop.f32.mrf.mxu0
    %v941 = vadd.f32 %v828, %v940
    %942 = vmatmul.f32.gmra.mxu0 %v147
    %v943 = vpop.f32.mrf.mxu0
    %v944 = vadd.f32 %v831, %v943
    %945 = vmatmul.f32.gmra.mxu0 %v155
    %v946 = vpop.f32.mrf.mxu0
    %v947 = vadd.f32 %v834, %v946
    %948 = vmatmul.f32.gmra.mxu0 %v163
    %v949 = vpop.f32.mrf.mxu0
    %v950 = vadd.f32 %v837, %v949
    %951 = vmatmul.f32.gmra.mxu0 %v171
    %v952 = vpop.f32.mrf.mxu0
    %v953 = vadd.f32 %v840, %v952
    %954 = vmatmul.f32.gmra.mxu0 %v179
    %v955 = vpop.f32.mrf.mxu0
    %v956 = vadd.f32 %v843, %v955
    %957 = vmatmul.f32.gmra.mxu0 %v187
    %v958 = vpop.f32.mrf.mxu0
    %v959 = vadd.f32 %v846, %v958
    %960 = vmatmul.f32.gmra.mxu0 %v195
    %v961 = vpop.f32.mrf.mxu0
    %v962 = vadd.f32 %v849, %v961
    %963 = vmatmul.f32.gmra.mxu0 %v203
    %v964 = vpop.f32.mrf.mxu0
    %v965 = vadd.f32 %v852, %v964
    %966 = vmatmul.f32.gmra.mxu0 %v211
    %v967 = vpop.f32.mrf.mxu0
    %v968 = vadd.f32 %v855, %v967
    %969 = vmatmul.f32.gmra.mxu0 %v219
    %v970 = vpop.f32.mrf.mxu0
    %v971 = vadd.f32 %v858, %v970
    %972 = vmatmul.f32.gmra.mxu0 %v227
    %v973 = vpop.f32.mrf.mxu0
    %v974 = vadd.f32 %v861, %v973
    %975 = vmatmul.f32.gmra.mxu0 %v235
    %v976 = vpop.f32.mrf.mxu0
    %v977 = vadd.f32 %v864, %v976
    %978 = vmatmul.f32.gmra.mxu0 %v243
    %v979 = vpop.f32.mrf.mxu0
    %v980 = vadd.f32 %v867, %v979
    %981 = vmatmul.f32.gmra.mxu0 %v251
    %v982 = vpop.f32.mrf.mxu0
    %v983 = vadd.f32 %v870, %v982
    %984 = vmatmul.f32.gmra.mxu0 %v259
    %v985 = vpop.f32.mrf.mxu0
    %v986 = vadd.f32 %v873, %v985
    %987 = vmatmul.f32.gmra.mxu0 %v267
    %v988 = vpop.f32.mrf.mxu0
    %v989 = vadd.f32 %v876, %v988
    %990 = vmatmul.f32.gmra.mxu0 %v275
    %v991 = vpop.f32.mrf.mxu0
    %v992 = vadd.f32 %v879, %v991
    %993 = vdwg.mxu0
    %994 = vmatpush.msra.mxu0 %v438
    %995 = vmatpush.msra.mxu0 %v436
    %996 = vmatpush.msra.mxu0 %v434
    %997 = vmatpush.msra.mxu0 %v432
    %998 = vmatpush.msra.mxu0 %v430
    %999 = vmatpush.msra.mxu0 %v428
    %1000 = vmatpush.msra.mxu0 %v426
    %1001 = vmatpush.msra.mxu0 %v424
    %1002 = vmatpush.msra.mxu0 %v422
    %1003 = vmatpush.msra.mxu0 %v420
    %1004 = vmatpush.msra.mxu0 %v418
    %1005 = vmatpush.msra.mxu0 %v416
    %1006 = vmatpush.msra.mxu0 %v414
    %1007 = vmatpush.msra.mxu0 %v412
    %1008 = vmatpush.msra.mxu0 %v410
    %1009 = vmatpush.msra.mxu0 %v408
    %1010 = vmatmul.f32.gmra.mxu0 %v28
    %v1011 = vpop.f32.mrf.mxu0
    %v1012 = vadd.f32 %v899, %v1011
    %1013 = vmatmul.f32.gmra.mxu0 %v36
    %v1014 = vpop.f32.mrf.mxu0
    %v1015 = vadd.f32 %v902, %v1014
    %1016 = vmatmul.f32.gmra.mxu0 %v44
    %v1017 = vpop.f32.mrf.mxu0
    %v1018 = vadd.f32 %v905, %v1017
    %1019 = vmatmul.f32.gmra.mxu0 %v52
    %v1020 = vpop.f32.mrf.mxu0
    %v1021 = vadd.f32 %v908, %v1020
    %1022 = vmatmul.f32.gmra.mxu0 %v60
    %v1023 = vpop.f32.mrf.mxu0
    %v1024 = vadd.f32 %v911, %v1023
    %1025 = vmatmul.f32.gmra.mxu0 %v68
    %v1026 = vpop.f32.mrf.mxu0
    %v1027 = vadd.f32 %v914, %v1026
    %1028 = vmatmul.f32.gmra.mxu0 %v76
    %v1029 = vpop.f32.mrf.mxu0
    %v1030 = vadd.f32 %v917, %v1029
    %1031 = vmatmul.f32.gmra.mxu0 %v84
    %v1032 = vpop.f32.mrf.mxu0
    %v1033 = vadd.f32 %v920, %v1032
    %1034 = vmatmul.f32.gmra.mxu0 %v92
    %v1035 = vpop.f32.mrf.mxu0
    %v1036 = vadd.f32 %v923, %v1035
    %1037 = vmatmul.f32.gmra.mxu0 %v100
    %v1038 = vpop.f32.mrf.mxu0
    %v1039 = vadd.f32 %v926, %v1038
    %1040 = vmatmul.f32.gmra.mxu0 %v108
    %v1041 = vpop.f32.mrf.mxu0
    %v1042 = vadd.f32 %v929, %v1041
    %1043 = vmatmul.f32.gmra.mxu0 %v116
    %v1044 = vpop.f32.mrf.mxu0
    %v1045 = vadd.f32 %v932, %v1044
    %1046 = vmatmul.f32.gmra.mxu0 %v124
    %v1047 = vpop.f32.mrf.mxu0
    %v1048 = vadd.f32 %v935, %v1047
    %1049 = vmatmul.f32.gmra.mxu0 %v132
    %v1050 = vpop.f32.mrf.mxu0
    %v1051 = vadd.f32 %v938, %v1050
    %1052 = vmatmul.f32.gmra.mxu0 %v140
    %v1053 = vpop.f32.mrf.mxu0
    %v1054 = vadd.f32 %v941, %v1053
    %1055 = vmatmul.f32.gmra.mxu0 %v148
    %v1056 = vpop.f32.mrf.mxu0
    %v1057 = vadd.f32 %v944, %v1056
    %1058 = vmatmul.f32.gmra.mxu0 %v156
    %v1059 = vpop.f32.mrf.mxu0
    %v1060 = vadd.f32 %v947, %v1059
    %1061 = vmatmul.f32.gmra.mxu0 %v164
    %v1062 = vpop.f32.mrf.mxu0
    %v1063 = vadd.f32 %v950, %v1062
    %1064 = vmatmul.f32.gmra.mxu0 %v172
    %v1065 = vpop.f32.mrf.mxu0
    %v1066 = vadd.f32 %v953, %v1065
    %1067 = vmatmul.f32.gmra.mxu0 %v180
    %v1068 = vpop.f32.mrf.mxu0
    %v1069 = vadd.f32 %v956, %v1068
    %1070 = vmatmul.f32.gmra.mxu0 %v188
    %v1071 = vpop.f32.mrf.mxu0
    %v1072 = vadd.f32 %v959, %v1071
    %1073 = vmatmul.f32.gmra.mxu0 %v196
    %v1074 = vpop.f32.mrf.mxu0
    %v1075 = vadd.f32 %v962, %v1074
    %1076 = vmatmul.f32.gmra.mxu0 %v204
    %v1077 = vpop.f32.mrf.mxu0
    %v1078 = vadd.f32 %v965, %v1077
    %1079 = vmatmul.f32.gmra.mxu0 %v212
    %v1080 = vpop.f32.mrf.mxu0
    %v1081 = vadd.f32 %v968, %v1080
    %1082 = vmatmul.f32.gmra.mxu0 %v220
    %v1083 = vpop.f32.mrf.mxu0
    %v1084 = vadd.f32 %v971, %v1083
    %1085 = vmatmul.f32.gmra.mxu0 %v228
    %v1086 = vpop.f32.mrf.mxu0
    %v1087 = vadd.f32 %v974, %v1086
    %1088 = vmatmul.f32.gmra.mxu0 %v236
    %v1089 = vpop.f32.mrf.mxu0
    %v1090 = vadd.f32 %v977, %v1089
    %1091 = vmatmul.f32.gmra.mxu0 %v244
    %v1092 = vpop.f32.mrf.mxu0
    %v1093 = vadd.f32 %v980, %v1092
    %1094 = vmatmul.f32.gmra.mxu0 %v252
    %v1095 = vpop.f32.mrf.mxu0
    %v1096 = vadd.f32 %v983, %v1095
    %1097 = vmatmul.f32.gmra.mxu0 %v260
    %v1098 = vpop.f32.mrf.mxu0
    %v1099 = vadd.f32 %v986, %v1098
    %1100 = vmatmul.f32.gmra.mxu0 %v268
    %v1101 = vpop.f32.mrf.mxu0
    %v1102 = vadd.f32 %v989, %v1101
    %1103 = vmatmul.f32.gmra.mxu0 %v276
    %v1104 = vpop.f32.mrf.mxu0
    %v1105 = vadd.f32 %v992, %v1104
    %1106 = vdwg.mxu0
    %1107 = vmatpush.msra.mxu0 %v470
    %1108 = vmatpush.msra.mxu0 %v468
    %1109 = vmatpush.msra.mxu0 %v466
    %1110 = vmatpush.msra.mxu0 %v464
    %1111 = vmatpush.msra.mxu0 %v462
    %1112 = vmatpush.msra.mxu0 %v460
    %1113 = vmatpush.msra.mxu0 %v458
    %1114 = vmatpush.msra.mxu0 %v456
    %1115 = vmatpush.msra.mxu0 %v454
    %1116 = vmatpush.msra.mxu0 %v452
    %1117 = vmatpush.msra.mxu0 %v450
    %1118 = vmatpush.msra.mxu0 %v448
    %1119 = vmatpush.msra.mxu0 %v446
    %1120 = vmatpush.msra.mxu0 %v444
    %1121 = vmatpush.msra.mxu0 %v442
    %1122 = vmatpush.msra.mxu0 %v440
    %1123 = vmatmul.f32.gmra.mxu0 %v29
    %v1124 = vpop.f32.mrf.mxu0
    %v1125 = vadd.f32 %v1012, %v1124
    %1126 = vmatmul.f32.gmra.mxu0 %v37
    %v1127 = vpop.f32.mrf.mxu0
    %v1128 = vadd.f32 %v1015, %v1127
    %1129 = vmatmul.f32.gmra.mxu0 %v45
    %v1130 = vpop.f32.mrf.mxu0
    %v1131 = vadd.f32 %v1018, %v1130
    %1132 = vmatmul.f32.gmra.mxu0 %v53
    %v1133 = vpop.f32.mrf.mxu0
    %v1134 = vadd.f32 %v1021, %v1133
    %1135 = vmatmul.f32.gmra.mxu0 %v61
    %v1136 = vpop.f32.mrf.mxu0
    %v1137 = vadd.f32 %v1024, %v1136
    %1138 = vmatmul.f32.gmra.mxu0 %v69
    %v1139 = vpop.f32.mrf.mxu0
    %v1140 = vadd.f32 %v1027, %v1139
    %1141 = vmatmul.f32.gmra.mxu0 %v77
    %v1142 = vpop.f32.mrf.mxu0
    %v1143 = vadd.f32 %v1030, %v1142
    %1144 = vmatmul.f32.gmra.mxu0 %v85
    %v1145 = vpop.f32.mrf.mxu0
    %v1146 = vadd.f32 %v1033, %v1145
    %1147 = vmatmul.f32.gmra.mxu0 %v93
    %v1148 = vpop.f32.mrf.mxu0
    %v1149 = vadd.f32 %v1036, %v1148
    %1150 = vmatmul.f32.gmra.mxu0 %v101
    %v1151 = vpop.f32.mrf.mxu0
    %v1152 = vadd.f32 %v1039, %v1151
    %1153 = vmatmul.f32.gmra.mxu0 %v109
    %v1154 = vpop.f32.mrf.mxu0
    %v1155 = vadd.f32 %v1042, %v1154
    %1156 = vmatmul.f32.gmra.mxu0 %v117
    %v1157 = vpop.f32.mrf.mxu0
    %v1158 = vadd.f32 %v1045, %v1157
    %1159 = vmatmul.f32.gmra.mxu0 %v125
    %v1160 = vpop.f32.mrf.mxu0
    %v1161 = vadd.f32 %v1048, %v1160
    %1162 = vmatmul.f32.gmra.mxu0 %v133
    %v1163 = vpop.f32.mrf.mxu0
    %v1164 = vadd.f32 %v1051, %v1163
    %1165 = vmatmul.f32.gmra.mxu0 %v141
    %v1166 = vpop.f32.mrf.mxu0
    %v1167 = vadd.f32 %v1054, %v1166
    %1168 = vmatmul.f32.gmra.mxu0 %v149
    %v1169 = vpop.f32.mrf.mxu0
    %v1170 = vadd.f32 %v1057, %v1169
    %1171 = vmatmul.f32.gmra.mxu0 %v157
    %v1172 = vpop.f32.mrf.mxu0
    %v1173 = vadd.f32 %v1060, %v1172
    %1174 = vmatmul.f32.gmra.mxu0 %v165
    %v1175 = vpop.f32.mrf.mxu0
    %v1176 = vadd.f32 %v1063, %v1175
    %1177 = vmatmul.f32.gmra.mxu0 %v173
    %v1178 = vpop.f32.mrf.mxu0
    %v1179 = vadd.f32 %v1066, %v1178
    %1180 = vmatmul.f32.gmra.mxu0 %v181
    %v1181 = vpop.f32.mrf.mxu0
    %v1182 = vadd.f32 %v1069, %v1181
    %1183 = vmatmul.f32.gmra.mxu0 %v189
    %v1184 = vpop.f32.mrf.mxu0
    %v1185 = vadd.f32 %v1072, %v1184
    %1186 = vmatmul.f32.gmra.mxu0 %v197
    %v1187 = vpop.f32.mrf.mxu0
    %v1188 = vadd.f32 %v1075, %v1187
    %1189 = vmatmul.f32.gmra.mxu0 %v205
    %v1190 = vpop.f32.mrf.mxu0
    %v1191 = vadd.f32 %v1078, %v1190
    %1192 = vmatmul.f32.gmra.mxu0 %v213
    %v1193 = vpop.f32.mrf.mxu0
    %v1194 = vadd.f32 %v1081, %v1193
    %1195 = vmatmul.f32.gmra.mxu0 %v221
    %v1196 = vpop.f32.mrf.mxu0
    %v1197 = vadd.f32 %v1084, %v1196
    %1198 = vmatmul.f32.gmra.mxu0 %v229
    %v1199 = vpop.f32.mrf.mxu0
    %v1200 = vadd.f32 %v1087, %v1199
    %1201 = vmatmul.f32.gmra.mxu0 %v237
    %v1202 = vpop.f32.mrf.mxu0
    %v1203 = vadd.f32 %v1090, %v1202
    %1204 = vmatmul.f32.gmra.mxu0 %v245
    %v1205 = vpop.f32.mrf.mxu0
    %v1206 = vadd.f32 %v1093, %v1205
    %1207 = vmatmul.f32.gmra.mxu0 %v253
    %v1208 = vpop.f32.mrf.mxu0
    %v1209 = vadd.f32 %v1096, %v1208
    %1210 = vmatmul.f32.gmra.mxu0 %v261
    %v1211 = vpop.f32.mrf.mxu0
    %v1212 = vadd.f32 %v1099, %v1211
    %1213 = vmatmul.f32.gmra.mxu0 %v269
    %v1214 = vpop.f32.mrf.mxu0
    %v1215 = vadd.f32 %v1102, %v1214
    %1216 = vmatmul.f32.gmra.mxu0 %v277
    %v1217 = vpop.f32.mrf.mxu0
    %v1218 = vadd.f32 %v1105, %v1217
    %1219 = vdwg.mxu0
    %1220 = vmatpush.msra.mxu0 %v502
    %1221 = vmatpush.msra.mxu0 %v500
    %1222 = vmatpush.msra.mxu0 %v498
    %1223 = vmatpush.msra.mxu0 %v496
    %1224 = vmatpush.msra.mxu0 %v494
    %1225 = vmatpush.msra.mxu0 %v492
    %1226 = vmatpush.msra.mxu0 %v490
    %1227 = vmatpush.msra.mxu0 %v488
    %1228 = vmatpush.msra.mxu0 %v486
    %1229 = vmatpush.msra.mxu0 %v484
    %1230 = vmatpush.msra.mxu0 %v482
    %1231 = vmatpush.msra.mxu0 %v480
    %1232 = vmatpush.msra.mxu0 %v478
    %1233 = vmatpush.msra.mxu0 %v476
    %1234 = vmatpush.msra.mxu0 %v474
    %1235 = vmatpush.msra.mxu0 %v472
    %1236 = vmatmul.f32.gmra.mxu0 %v30
    %v1237 = vpop.f32.mrf.mxu0
    %v1238 = vadd.f32 %v1125, %v1237
    %1239 = vmatmul.f32.gmra.mxu0 %v38
    %v1240 = vpop.f32.mrf.mxu0
    %v1241 = vadd.f32 %v1128, %v1240
    %1242 = vmatmul.f32.gmra.mxu0 %v46
    %v1243 = vpop.f32.mrf.mxu0
    %v1244 = vadd.f32 %v1131, %v1243
    %1245 = vmatmul.f32.gmra.mxu0 %v54
    %v1246 = vpop.f32.mrf.mxu0
    %v1247 = vadd.f32 %v1134, %v1246
    %1248 = vmatmul.f32.gmra.mxu0 %v62
    %v1249 = vpop.f32.mrf.mxu0
    %v1250 = vadd.f32 %v1137, %v1249
    %1251 = vmatmul.f32.gmra.mxu0 %v70
    %v1252 = vpop.f32.mrf.mxu0
    %v1253 = vadd.f32 %v1140, %v1252
    %1254 = vmatmul.f32.gmra.mxu0 %v78
    %v1255 = vpop.f32.mrf.mxu0
    %v1256 = vadd.f32 %v1143, %v1255
    %1257 = vmatmul.f32.gmra.mxu0 %v86
    %v1258 = vpop.f32.mrf.mxu0
    %v1259 = vadd.f32 %v1146, %v1258
    %1260 = vmatmul.f32.gmra.mxu0 %v94
    %v1261 = vpop.f32.mrf.mxu0
    %v1262 = vadd.f32 %v1149, %v1261
    %1263 = vmatmul.f32.gmra.mxu0 %v102
    %v1264 = vpop.f32.mrf.mxu0
    %v1265 = vadd.f32 %v1152, %v1264
    %1266 = vmatmul.f32.gmra.mxu0 %v110
    %v1267 = vpop.f32.mrf.mxu0
    %v1268 = vadd.f32 %v1155, %v1267
    %1269 = vmatmul.f32.gmra.mxu0 %v118
    %v1270 = vpop.f32.mrf.mxu0
    %v1271 = vadd.f32 %v1158, %v1270
    %1272 = vmatmul.f32.gmra.mxu0 %v126
    %v1273 = vpop.f32.mrf.mxu0
    %v1274 = vadd.f32 %v1161, %v1273
    %1275 = vmatmul.f32.gmra.mxu0 %v134
    %v1276 = vpop.f32.mrf.mxu0
    %v1277 = vadd.f32 %v1164, %v1276
    %1278 = vmatmul.f32.gmra.mxu0 %v142
    %v1279 = vpop.f32.mrf.mxu0
    %v1280 = vadd.f32 %v1167, %v1279
    %1281 = vmatmul.f32.gmra.mxu0 %v150
    %v1282 = vpop.f32.mrf.mxu0
    %v1283 = vadd.f32 %v1170, %v1282
    %1284 = vmatmul.f32.gmra.mxu0 %v158
    %v1285 = vpop.f32.mrf.mxu0
    %v1286 = vadd.f32 %v1173, %v1285
    %1287 = vmatmul.f32.gmra.mxu0 %v166
    %v1288 = vpop.f32.mrf.mxu0
    %v1289 = vadd.f32 %v1176, %v1288
    %1290 = vmatmul.f32.gmra.mxu0 %v174
    %v1291 = vpop.f32.mrf.mxu0
    %v1292 = vadd.f32 %v1179, %v1291
    %1293 = vmatmul.f32.gmra.mxu0 %v182
    %v1294 = vpop.f32.mrf.mxu0
    %v1295 = vadd.f32 %v1182, %v1294
    %1296 = vmatmul.f32.gmra.mxu0 %v190
    %v1297 = vpop.f32.mrf.mxu0
    %v1298 = vadd.f32 %v1185, %v1297
    %1299 = vmatmul.f32.gmra.mxu0 %v198
    %v1300 = vpop.f32.mrf.mxu0
    %v1301 = vadd.f32 %v1188, %v1300
    %1302 = vmatmul.f32.gmra.mxu0 %v206
    %v1303 = vpop.f32.mrf.mxu0
    %v1304 = vadd.f32 %v1191, %v1303
    %1305 = vmatmul.f32.gmra.mxu0 %v214
    %v1306 = vpop.f32.mrf.mxu0
    %v1307 = vadd.f32 %v1194, %v1306
    %1308 = vmatmul.f32.gmra.mxu0 %v222
    %v1309 = vpop.f32.mrf.mxu0
    %v1310 = vadd.f32 %v1197, %v1309
    %1311 = vmatmul.f32.gmra.mxu0 %v230
    %v1312 = vpop.f32.mrf.mxu0
    %v1313 = vadd.f32 %v1200, %v1312
    %1314 = vmatmul.f32.gmra.mxu0 %v238
    %v1315 = vpop.f32.mrf.mxu0
    %v1316 = vadd.f32 %v1203, %v1315
    %1317 = vmatmul.f32.gmra.mxu0 %v246
    %v1318 = vpop.f32.mrf.mxu0
    %v1319 = vadd.f32 %v1206, %v1318
    %1320 = vmatmul.f32.gmra.mxu0 %v254
    %v1321 = vpop.f32.mrf.mxu0
    %v1322 = vadd.f32 %v1209, %v1321
    %1323 = vmatmul.f32.gmra.mxu0 %v262
    %v1324 = vpop.f32.mrf.mxu0
    %v1325 = vadd.f32 %v1212, %v1324
    %1326 = vmatmul.f32.gmra.mxu0 %v270
    %v1327 = vpop.f32.mrf.mxu0
    %v1328 = vadd.f32 %v1215, %v1327
    %1329 = vmatmul.f32.gmra.mxu0 %v278
    %v1330 = vpop.f32.mrf.mxu0
    %v1331 = vadd.f32 %v1218, %v1330
    %1332 = vdwg.mxu0
    %1333 = vmatpush.msra.mxu0 %v534
    %1334 = vmatpush.msra.mxu0 %v532
    %1335 = vmatpush.msra.mxu0 %v530
    %1336 = vmatpush.msra.mxu0 %v528
    %1337 = vmatpush.msra.mxu0 %v526
    %1338 = vmatpush.msra.mxu0 %v524
    %1339 = vmatpush.msra.mxu0 %v522
    %1340 = vmatpush.msra.mxu0 %v520
    %1341 = vmatpush.msra.mxu0 %v518
    %1342 = vmatpush.msra.mxu0 %v516
    %1343 = vmatpush.msra.mxu0 %v514
    %1344 = vmatpush.msra.mxu0 %v512
    %1345 = vmatpush.msra.mxu0 %v510
    %1346 = vmatpush.msra.mxu0 %v508
    %1347 = vmatpush.msra.mxu0 %v506
    %1348 = vmatpush.msra.mxu0 %v504
    %1349 = vmatmul.f32.gmra.mxu0 %v31
    %v1350 = vpop.f32.mrf.mxu0
    %v1351 = vadd.f32 %v1238, %v1350
    %1352 = vmatmul.f32.gmra.mxu0 %v39
    %v1353 = vpop.f32.mrf.mxu0
    %v1354 = vadd.f32 %v1241, %v1353
    %1355 = vmatmul.f32.gmra.mxu0 %v47
    %v1356 = vpop.f32.mrf.mxu0
    %v1357 = vadd.f32 %v1244, %v1356
    %1358 = vmatmul.f32.gmra.mxu0 %v55
    %v1359 = vpop.f32.mrf.mxu0
    %v1360 = vadd.f32 %v1247, %v1359
    %1361 = vmatmul.f32.gmra.mxu0 %v63
    %v1362 = vpop.f32.mrf.mxu0
    %v1363 = vadd.f32 %v1250, %v1362
    %1364 = vmatmul.f32.gmra.mxu0 %v71
    %v1365 = vpop.f32.mrf.mxu0
    %v1366 = vadd.f32 %v1253, %v1365
    %1367 = vmatmul.f32.gmra.mxu0 %v79
    %v1368 = vpop.f32.mrf.mxu0
    %v1369 = vadd.f32 %v1256, %v1368
    %1370 = vmatmul.f32.gmra.mxu0 %v87
    %v1371 = vpop.f32.mrf.mxu0
    %v1372 = vadd.f32 %v1259, %v1371
    %1373 = vmatmul.f32.gmra.mxu0 %v95
    %v1374 = vpop.f32.mrf.mxu0
    %v1375 = vadd.f32 %v1262, %v1374
    %1376 = vmatmul.f32.gmra.mxu0 %v103
    %v1377 = vpop.f32.mrf.mxu0
    %v1378 = vadd.f32 %v1265, %v1377
    %1379 = vmatmul.f32.gmra.mxu0 %v111
    %v1380 = vpop.f32.mrf.mxu0
    %v1381 = vadd.f32 %v1268, %v1380
    %1382 = vmatmul.f32.gmra.mxu0 %v119
    %v1383 = vpop.f32.mrf.mxu0
    %v1384 = vadd.f32 %v1271, %v1383
    %1385 = vmatmul.f32.gmra.mxu0 %v127
    %v1386 = vpop.f32.mrf.mxu0
    %v1387 = vadd.f32 %v1274, %v1386
    %1388 = vmatmul.f32.gmra.mxu0 %v135
    %v1389 = vpop.f32.mrf.mxu0
    %v1390 = vadd.f32 %v1277, %v1389
    %1391 = vmatmul.f32.gmra.mxu0 %v143
    %v1392 = vpop.f32.mrf.mxu0
    %v1393 = vadd.f32 %v1280, %v1392
    %1394 = vmatmul.f32.gmra.mxu0 %v151
    %v1395 = vpop.f32.mrf.mxu0
    %v1396 = vadd.f32 %v1283, %v1395
    %1397 = vmatmul.f32.gmra.mxu0 %v159
    %v1398 = vpop.f32.mrf.mxu0
    %v1399 = vadd.f32 %v1286, %v1398
    %1400 = vmatmul.f32.gmra.mxu0 %v167
    %v1401 = vpop.f32.mrf.mxu0
    %v1402 = vadd.f32 %v1289, %v1401
    %1403 = vmatmul.f32.gmra.mxu0 %v175
    %v1404 = vpop.f32.mrf.mxu0
    %v1405 = vadd.f32 %v1292, %v1404
    %1406 = vmatmul.f32.gmra.mxu0 %v183
    %v1407 = vpop.f32.mrf.mxu0
    %v1408 = vadd.f32 %v1295, %v1407
    %1409 = vmatmul.f32.gmra.mxu0 %v191
    %v1410 = vpop.f32.mrf.mxu0
    %v1411 = vadd.f32 %v1298, %v1410
    %1412 = vmatmul.f32.gmra.mxu0 %v199
    %v1413 = vpop.f32.mrf.mxu0
    %v1414 = vadd.f32 %v1301, %v1413
    %1415 = vmatmul.f32.gmra.mxu0 %v207
    %v1416 = vpop.f32.mrf.mxu0
    %v1417 = vadd.f32 %v1304, %v1416
    %1418 = vmatmul.f32.gmra.mxu0 %v215
    %v1419 = vpop.f32.mrf.mxu0
    %v1420 = vadd.f32 %v1307, %v1419
    %1421 = vmatmul.f32.gmra.mxu0 %v223
    %v1422 = vpop.f32.mrf.mxu0
    %v1423 = vadd.f32 %v1310, %v1422
    %1424 = vmatmul.f32.gmra.mxu0 %v231
    %v1425 = vpop.f32.mrf.mxu0
    %v1426 = vadd.f32 %v1313, %v1425
    %1427 = vmatmul.f32.gmra.mxu0 %v239
    %v1428 = vpop.f32.mrf.mxu0
    %v1429 = vadd.f32 %v1316, %v1428
    %1430 = vmatmul.f32.gmra.mxu0 %v247
    %v1431 = vpop.f32.mrf.mxu0
    %v1432 = vadd.f32 %v1319, %v1431
    %1433 = vmatmul.f32.gmra.mxu0 %v255
    %v1434 = vpop.f32.mrf.mxu0
    %v1435 = vadd.f32 %v1322, %v1434
    %1436 = vmatmul.f32.gmra.mxu0 %v263
    %v1437 = vpop.f32.mrf.mxu0
    %v1438 = vadd.f32 %v1325, %v1437
    %1439 = vmatmul.f32.gmra.mxu0 %v271
    %v1440 = vpop.f32.mrf.mxu0
    %v1441 = vadd.f32 %v1328, %v1440
    %1442 = vmatmul.f32.gmra.mxu0 %v279
    %v1443 = vpop.f32.mrf.mxu0
    %v1444 = vadd.f32 %v1331, %v1443
    %1445 = vdwg.mxu0
    %1446 = vmatpush.msra.mxu0 %v311
    %1447 = vmatpush.msra.mxu0 %v309
    %1448 = vmatpush.msra.mxu0 %v307
    %1449 = vmatpush.msra.mxu0 %v305
    %1450 = vmatpush.msra.mxu0 %v303
    %1451 = vmatpush.msra.mxu0 %v301
    %1452 = vmatpush.msra.mxu0 %v299
    %1453 = vmatpush.msra.mxu0 %v297
    %1454 = vmatpush.msra.mxu0 %v295
    %1455 = vmatpush.msra.mxu0 %v293
    %1456 = vmatpush.msra.mxu0 %v291
    %1457 = vmatpush.msra.mxu0 %v289
    %1458 = vmatpush.msra.mxu0 %v287
    %1459 = vmatpush.msra.mxu0 %v285
    %1460 = vmatpush.msra.mxu0 %v283
    %1461 = vmatpush.msra.mxu0 %v281
    %1462 = vmatmul.f32.gmra.mxu0 %v24
    %v1463 = vpop.f32.mrf.mxu0
    %v1464 = vadd.f32 %v539, %v1463
    %1465 = vmatmul.f32.gmra.mxu0 %v32
    %v1466 = vpop.f32.mrf.mxu0
    %v1467 = vadd.f32 %v539, %v1466
    %1468 = vmatmul.f32.gmra.mxu0 %v40
    %v1469 = vpop.f32.mrf.mxu0
    %v1470 = vadd.f32 %v539, %v1469
    %1471 = vmatmul.f32.gmra.mxu0 %v48
    %v1472 = vpop.f32.mrf.mxu0
    %v1473 = vadd.f32 %v539, %v1472
    %1474 = vmatmul.f32.gmra.mxu0 %v56
    %v1475 = vpop.f32.mrf.mxu0
    %v1476 = vadd.f32 %v539, %v1475
    %1477 = vmatmul.f32.gmra.mxu0 %v64
    %v1478 = vpop.f32.mrf.mxu0
    %v1479 = vadd.f32 %v539, %v1478
    %1480 = vmatmul.f32.gmra.mxu0 %v72
    %v1481 = vpop.f32.mrf.mxu0
    %v1482 = vadd.f32 %v539, %v1481
    %1483 = vmatmul.f32.gmra.mxu0 %v80
    %v1484 = vpop.f32.mrf.mxu0
    %v1485 = vadd.f32 %v539, %v1484
    %1486 = vmatmul.f32.gmra.mxu0 %v88
    %v1487 = vpop.f32.mrf.mxu0
    %v1488 = vadd.f32 %v539, %v1487
    %1489 = vmatmul.f32.gmra.mxu0 %v96
    %v1490 = vpop.f32.mrf.mxu0
    %v1491 = vadd.f32 %v539, %v1490
    %1492 = vmatmul.f32.gmra.mxu0 %v104
    %v1493 = vpop.f32.mrf.mxu0
    %v1494 = vadd.f32 %v539, %v1493
    %1495 = vmatmul.f32.gmra.mxu0 %v112
    %v1496 = vpop.f32.mrf.mxu0
    %v1497 = vadd.f32 %v539, %v1496
    %1498 = vmatmul.f32.gmra.mxu0 %v120
    %v1499 = vpop.f32.mrf.mxu0
    %v1500 = vadd.f32 %v539, %v1499
    %1501 = vmatmul.f32.gmra.mxu0 %v128
    %v1502 = vpop.f32.mrf.mxu0
    %v1503 = vadd.f32 %v539, %v1502
    %1504 = vmatmul.f32.gmra.mxu0 %v136
    %v1505 = vpop.f32.mrf.mxu0
    %v1506 = vadd.f32 %v539, %v1505
    %1507 = vmatmul.f32.gmra.mxu0 %v144
    %v1508 = vpop.f32.mrf.mxu0
    %v1509 = vadd.f32 %v539, %v1508
    %1510 = vmatmul.f32.gmra.mxu0 %v152
    %v1511 = vpop.f32.mrf.mxu0
    %v1512 = vadd.f32 %v539, %v1511
    %1513 = vmatmul.f32.gmra.mxu0 %v160
    %v1514 = vpop.f32.mrf.mxu0
    %v1515 = vadd.f32 %v539, %v1514
    %1516 = vmatmul.f32.gmra.mxu0 %v168
    %v1517 = vpop.f32.mrf.mxu0
    %v1518 = vadd.f32 %v539, %v1517
    %1519 = vmatmul.f32.gmra.mxu0 %v176
    %v1520 = vpop.f32.mrf.mxu0
    %v1521 = vadd.f32 %v539, %v1520
    %1522 = vmatmul.f32.gmra.mxu0 %v184
    %v1523 = vpop.f32.mrf.mxu0
    %v1524 = vadd.f32 %v539, %v1523
    %1525 = vmatmul.f32.gmra.mxu0 %v192
    %v1526 = vpop.f32.mrf.mxu0
    %v1527 = vadd.f32 %v539, %v1526
    %1528 = vmatmul.f32.gmra.mxu0 %v200
    %v1529 = vpop.f32.mrf.mxu0
    %v1530 = vadd.f32 %v539, %v1529
    %1531 = vmatmul.f32.gmra.mxu0 %v208
    %v1532 = vpop.f32.mrf.mxu0
    %v1533 = vadd.f32 %v539, %v1532
    %1534 = vmatmul.f32.gmra.mxu0 %v216
    %v1535 = vpop.f32.mrf.mxu0
    %v1536 = vadd.f32 %v539, %v1535
    %1537 = vmatmul.f32.gmra.mxu0 %v224
    %v1538 = vpop.f32.mrf.mxu0
    %v1539 = vadd.f32 %v539, %v1538
    %1540 = vmatmul.f32.gmra.mxu0 %v232
    %v1541 = vpop.f32.mrf.mxu0
    %v1542 = vadd.f32 %v539, %v1541
    %1543 = vmatmul.f32.gmra.mxu0 %v240
    %v1544 = vpop.f32.mrf.mxu0
    %v1545 = vadd.f32 %v539, %v1544
    %1546 = vmatmul.f32.gmra.mxu0 %v248
    %v1547 = vpop.f32.mrf.mxu0
    %v1548 = vadd.f32 %v539, %v1547
    %1549 = vmatmul.f32.gmra.mxu0 %v256
    %v1550 = vpop.f32.mrf.mxu0
    %v1551 = vadd.f32 %v539, %v1550
    %1552 = vmatmul.f32.gmra.mxu0 %v264
    %v1553 = vpop.f32.mrf.mxu0
    %v1554 = vadd.f32 %v539, %v1553
    %1555 = vmatmul.f32.gmra.mxu0 %v272
    %v1556 = vpop.f32.mrf.mxu0
    %v1557 = vadd.f32 %v539, %v1556
    %1558 = vdwg.mxu0
    %1559 = vmatpush.msra.mxu0 %v343
    %1560 = vmatpush.msra.mxu0 %v341
    %1561 = vmatpush.msra.mxu0 %v339
    %1562 = vmatpush.msra.mxu0 %v337
    %1563 = vmatpush.msra.mxu0 %v335
    %1564 = vmatpush.msra.mxu0 %v333
    %1565 = vmatpush.msra.mxu0 %v331
    %1566 = vmatpush.msra.mxu0 %v329
    %1567 = vmatpush.msra.mxu0 %v327
    %1568 = vmatpush.msra.mxu0 %v325
    %1569 = vmatpush.msra.mxu0 %v323
    %1570 = vmatpush.msra.mxu0 %v321
    %1571 = vmatpush.msra.mxu0 %v319
    %1572 = vmatpush.msra.mxu0 %v317
    %1573 = vmatpush.msra.mxu0 %v315
    %1574 = vmatpush.msra.mxu0 %v313
    %1575 = vmatmul.f32.gmra.mxu0 %v25
    %v1576 = vpop.f32.mrf.mxu0
    %v1577 = vadd.f32 %v1464, %v1576
    %1578 = vmatmul.f32.gmra.mxu0 %v33
    %v1579 = vpop.f32.mrf.mxu0
    %v1580 = vadd.f32 %v1467, %v1579
    %1581 = vmatmul.f32.gmra.mxu0 %v41
    %v1582 = vpop.f32.mrf.mxu0
    %v1583 = vadd.f32 %v1470, %v1582
    %1584 = vmatmul.f32.gmra.mxu0 %v49
    %v1585 = vpop.f32.mrf.mxu0
    %v1586 = vadd.f32 %v1473, %v1585
    %1587 = vmatmul.f32.gmra.mxu0 %v57
    %v1588 = vpop.f32.mrf.mxu0
    %v1589 = vadd.f32 %v1476, %v1588
    %1590 = vmatmul.f32.gmra.mxu0 %v65
    %v1591 = vpop.f32.mrf.mxu0
    %v1592 = vadd.f32 %v1479, %v1591
    %1593 = vmatmul.f32.gmra.mxu0 %v73
    %v1594 = vpop.f32.mrf.mxu0
    %v1595 = vadd.f32 %v1482, %v1594
    %1596 = vmatmul.f32.gmra.mxu0 %v81
    %v1597 = vpop.f32.mrf.mxu0
    %v1598 = vadd.f32 %v1485, %v1597
    %1599 = vmatmul.f32.gmra.mxu0 %v89
    %v1600 = vpop.f32.mrf.mxu0
    %v1601 = vadd.f32 %v1488, %v1600
    %1602 = vmatmul.f32.gmra.mxu0 %v97
    %v1603 = vpop.f32.mrf.mxu0
    %v1604 = vadd.f32 %v1491, %v1603
    %1605 = vmatmul.f32.gmra.mxu0 %v105
    %v1606 = vpop.f32.mrf.mxu0
    %v1607 = vadd.f32 %v1494, %v1606
    %1608 = vmatmul.f32.gmra.mxu0 %v113
    %v1609 = vpop.f32.mrf.mxu0
    %v1610 = vadd.f32 %v1497, %v1609
    %1611 = vmatmul.f32.gmra.mxu0 %v121
    %v1612 = vpop.f32.mrf.mxu0
    %v1613 = vadd.f32 %v1500, %v1612
    %1614 = vmatmul.f32.gmra.mxu0 %v129
    %v1615 = vpop.f32.mrf.mxu0
    %v1616 = vadd.f32 %v1503, %v1615
    %1617 = vmatmul.f32.gmra.mxu0 %v137
    %v1618 = vpop.f32.mrf.mxu0
    %v1619 = vadd.f32 %v1506, %v1618
    %1620 = vmatmul.f32.gmra.mxu0 %v145
    %v1621 = vpop.f32.mrf.mxu0
    %v1622 = vadd.f32 %v1509, %v1621
    %1623 = vmatmul.f32.gmra.mxu0 %v153
    %v1624 = vpop.f32.mrf.mxu0
    %v1625 = vadd.f32 %v1512, %v1624
    %1626 = vmatmul.f32.gmra.mxu0 %v161
    %v1627 = vpop.f32.mrf.mxu0
    %v1628 = vadd.f32 %v1515, %v1627
    %1629 = vmatmul.f32.gmra.mxu0 %v169
    %v1630 = vpop.f32.mrf.mxu0
    %v1631 = vadd.f32 %v1518, %v1630
    %1632 = vmatmul.f32.gmra.mxu0 %v177
    %v1633 = vpop.f32.mrf.mxu0
    %v1634 = vadd.f32 %v1521, %v1633
    %1635 = vmatmul.f32.gmra.mxu0 %v185
    %v1636 = vpop.f32.mrf.mxu0
    %v1637 = vadd.f32 %v1524, %v1636
    %1638 = vmatmul.f32.gmra.mxu0 %v193
    %v1639 = vpop.f32.mrf.mxu0
    %v1640 = vadd.f32 %v1527, %v1639
    %1641 = vmatmul.f32.gmra.mxu0 %v201
    %v1642 = vpop.f32.mrf.mxu0
    %v1643 = vadd.f32 %v1530, %v1642
    %1644 = vmatmul.f32.gmra.mxu0 %v209
    %v1645 = vpop.f32.mrf.mxu0
    %v1646 = vadd.f32 %v1533, %v1645
    %1647 = vmatmul.f32.gmra.mxu0 %v217
    %v1648 = vpop.f32.mrf.mxu0
    %v1649 = vadd.f32 %v1536, %v1648
    %1650 = vmatmul.f32.gmra.mxu0 %v225
    %v1651 = vpop.f32.mrf.mxu0
    %v1652 = vadd.f32 %v1539, %v1651
    %1653 = vmatmul.f32.gmra.mxu0 %v233
    %v1654 = vpop.f32.mrf.mxu0
    %v1655 = vadd.f32 %v1542, %v1654
    %1656 = vmatmul.f32.gmra.mxu0 %v241
    %v1657 = vpop.f32.mrf.mxu0
    %v1658 = vadd.f32 %v1545, %v1657
    %1659 = vmatmul.f32.gmra.mxu0 %v249
    %v1660 = vpop.f32.mrf.mxu0
    %v1661 = vadd.f32 %v1548, %v1660
    %1662 = vmatmul.f32.gmra.mxu0 %v257
    %v1663 = vpop.f32.mrf.mxu0
    %v1664 = vadd.f32 %v1551, %v1663
    %1665 = vmatmul.f32.gmra.mxu0 %v265
    %v1666 = vpop.f32.mrf.mxu0
    %v1667 = vadd.f32 %v1554, %v1666
    %1668 = vmatmul.f32.gmra.mxu0 %v273
    %v1669 = vpop.f32.mrf.mxu0
    %v1670 = vadd.f32 %v1557, %v1669
    %1671 = vdwg.mxu0
    %1672 = vmatpush.msra.mxu0 %v375
    %1673 = vmatpush.msra.mxu0 %v373
    %1674 = vmatpush.msra.mxu0 %v371
    %1675 = vmatpush.msra.mxu0 %v369
    %1676 = vmatpush.msra.mxu0 %v367
    %1677 = vmatpush.msra.mxu0 %v365
    %1678 = vmatpush.msra.mxu0 %v363
    %1679 = vmatpush.msra.mxu0 %v361
    %1680 = vmatpush.msra.mxu0 %v359
    %1681 = vmatpush.msra.mxu0 %v357
    %1682 = vmatpush.msra.mxu0 %v355
    %1683 = vmatpush.msra.mxu0 %v353
    %1684 = vmatpush.msra.mxu0 %v351
    %1685 = vmatpush.msra.mxu0 %v349
    %1686 = vmatpush.msra.mxu0 %v347
    %1687 = vmatpush.msra.mxu0 %v345
    %1688 = vmatmul.f32.gmra.mxu0 %v26
    %v1689 = vpop.f32.mrf.mxu0
    %v1690 = vadd.f32 %v1577, %v1689
    %1691 = vmatmul.f32.gmra.mxu0 %v34
    %v1692 = vpop.f32.mrf.mxu0
    %v1693 = vadd.f32 %v1580, %v1692
    %1694 = vmatmul.f32.gmra.mxu0 %v42
    %v1695 = vpop.f32.mrf.mxu0
    %v1696 = vadd.f32 %v1583, %v1695
    %1697 = vmatmul.f32.gmra.mxu0 %v50
    %v1698 = vpop.f32.mrf.mxu0
    %v1699 = vadd.f32 %v1586, %v1698
    %1700 = vmatmul.f32.gmra.mxu0 %v58
    %v1701 = vpop.f32.mrf.mxu0
    %v1702 = vadd.f32 %v1589, %v1701
    %1703 = vmatmul.f32.gmra.mxu0 %v66
    %v1704 = vpop.f32.mrf.mxu0
    %v1705 = vadd.f32 %v1592, %v1704
    %1706 = vmatmul.f32.gmra.mxu0 %v74
    %v1707 = vpop.f32.mrf.mxu0
    %v1708 = vadd.f32 %v1595, %v1707
    %1709 = vmatmul.f32.gmra.mxu0 %v82
    %v1710 = vpop.f32.mrf.mxu0
    %v1711 = vadd.f32 %v1598, %v1710
    %1712 = vmatmul.f32.gmra.mxu0 %v90
    %v1713 = vpop.f32.mrf.mxu0
    %v1714 = vadd.f32 %v1601, %v1713
    %1715 = vmatmul.f32.gmra.mxu0 %v98
    %v1716 = vpop.f32.mrf.mxu0
    %v1717 = vadd.f32 %v1604, %v1716
    %1718 = vmatmul.f32.gmra.mxu0 %v106
    %v1719 = vpop.f32.mrf.mxu0
    %v1720 = vadd.f32 %v1607, %v1719
    %1721 = vmatmul.f32.gmra.mxu0 %v114
    %v1722 = vpop.f32.mrf.mxu0
    %v1723 = vadd.f32 %v1610, %v1722
    %1724 = vmatmul.f32.gmra.mxu0 %v122
    %v1725 = vpop.f32.mrf.mxu0
    %v1726 = vadd.f32 %v1613, %v1725
    %1727 = vmatmul.f32.gmra.mxu0 %v130
    %v1728 = vpop.f32.mrf.mxu0
    %v1729 = vadd.f32 %v1616, %v1728
    %1730 = vmatmul.f32.gmra.mxu0 %v138
    %v1731 = vpop.f32.mrf.mxu0
    %v1732 = vadd.f32 %v1619, %v1731
    %1733 = vmatmul.f32.gmra.mxu0 %v146
    %v1734 = vpop.f32.mrf.mxu0
    %v1735 = vadd.f32 %v1622, %v1734
    %1736 = vmatmul.f32.gmra.mxu0 %v154
    %v1737 = vpop.f32.mrf.mxu0
    %v1738 = vadd.f32 %v1625, %v1737
    %1739 = vmatmul.f32.gmra.mxu0 %v162
    %v1740 = vpop.f32.mrf.mxu0
    %v1741 = vadd.f32 %v1628, %v1740
    %1742 = vmatmul.f32.gmra.mxu0 %v170
    %v1743 = vpop.f32.mrf.mxu0
    %v1744 = vadd.f32 %v1631, %v1743
    %1745 = vmatmul.f32.gmra.mxu0 %v178
    %v1746 = vpop.f32.mrf.mxu0
    %v1747 = vadd.f32 %v1634, %v1746
    %1748 = vmatmul.f32.gmra.mxu0 %v186
    %v1749 = vpop.f32.mrf.mxu0
    %v1750 = vadd.f32 %v1637, %v1749
    %1751 = vmatmul.f32.gmra.mxu0 %v194
    %v1752 = vpop.f32.mrf.mxu0
    %v1753 = vadd.f32 %v1640, %v1752
    %1754 = vmatmul.f32.gmra.mxu0 %v202
    %v1755 = vpop.f32.mrf.mxu0
    %v1756 = vadd.f32 %v1643, %v1755
    %1757 = vmatmul.f32.gmra.mxu0 %v210
    %v1758 = vpop.f32.mrf.mxu0
    %v1759 = vadd.f32 %v1646, %v1758
    %1760 = vmatmul.f32.gmra.mxu0 %v218
    %v1761 = vpop.f32.mrf.mxu0
    %v1762 = vadd.f32 %v1649, %v1761
    %1763 = vmatmul.f32.gmra.mxu0 %v226
    %v1764 = vpop.f32.mrf.mxu0
    %v1765 = vadd.f32 %v1652, %v1764
    %1766 = vmatmul.f32.gmra.mxu0 %v234
    %v1767 = vpop.f32.mrf.mxu0
    %v1768 = vadd.f32 %v1655, %v1767
    %1769 = vmatmul.f32.gmra.mxu0 %v242
    %v1770 = vpop.f32.mrf.mxu0
    %v1771 = vadd.f32 %v1658, %v1770
    %1772 = vmatmul.f32.gmra.mxu0 %v250
    %v1773 = vpop.f32.mrf.mxu0
    %v1774 = vadd.f32 %v1661, %v1773
    %1775 = vmatmul.f32.gmra.mxu0 %v258
    %v1776 = vpop.f32.mrf.mxu0
    %v1777 = vadd.f32 %v1664, %v1776
    %1778 = vmatmul.f32.gmra.mxu0 %v266
    %v1779 = vpop.f32.mrf.mxu0
    %v1780 = vadd.f32 %v1667, %v1779
    %1781 = vmatmul.f32.gmra.mxu0 %v274
    %v1782 = vpop.f32.mrf.mxu0
    %v1783 = vadd.f32 %v1670, %v1782
    %1784 = vdwg.mxu0
    %1785 = vmatpush.msra.mxu0 %v407
    %1786 = vmatpush.msra.mxu0 %v405
    %1787 = vmatpush.msra.mxu0 %v403
    %1788 = vmatpush.msra.mxu0 %v401
    %1789 = vmatpush.msra.mxu0 %v399
    %1790 = vmatpush.msra.mxu0 %v397
    %1791 = vmatpush.msra.mxu0 %v395
    %1792 = vmatpush.msra.mxu0 %v393
    %1793 = vmatpush.msra.mxu0 %v391
    %1794 = vmatpush.msra.mxu0 %v389
    %1795 = vmatpush.msra.mxu0 %v387
    %1796 = vmatpush.msra.mxu0 %v385
    %1797 = vmatpush.msra.mxu0 %v383
    %1798 = vmatpush.msra.mxu0 %v381
    %1799 = vmatpush.msra.mxu0 %v379
    %1800 = vmatpush.msra.mxu0 %v377
    %1801 = vmatmul.f32.gmra.mxu0 %v27
    %v1802 = vpop.f32.mrf.mxu0
    %v1803 = vadd.f32 %v1690, %v1802
    %1804 = vmatmul.f32.gmra.mxu0 %v35
    %v1805 = vpop.f32.mrf.mxu0
    %v1806 = vadd.f32 %v1693, %v1805
    %1807 = vmatmul.f32.gmra.mxu0 %v43
    %v1808 = vpop.f32.mrf.mxu0
    %v1809 = vadd.f32 %v1696, %v1808
    %1810 = vmatmul.f32.gmra.mxu0 %v51
    %v1811 = vpop.f32.mrf.mxu0
    %v1812 = vadd.f32 %v1699, %v1811
    %1813 = vmatmul.f32.gmra.mxu0 %v59
    %v1814 = vpop.f32.mrf.mxu0
    %v1815 = vadd.f32 %v1702, %v1814
    %1816 = vmatmul.f32.gmra.mxu0 %v67
    %v1817 = vpop.f32.mrf.mxu0
    %v1818 = vadd.f32 %v1705, %v1817
    %1819 = vmatmul.f32.gmra.mxu0 %v75
    %v1820 = vpop.f32.mrf.mxu0
    %v1821 = vadd.f32 %v1708, %v1820
    %1822 = vmatmul.f32.gmra.mxu0 %v83
    %v1823 = vpop.f32.mrf.mxu0
    %v1824 = vadd.f32 %v1711, %v1823
    %1825 = vmatmul.f32.gmra.mxu0 %v91
    %v1826 = vpop.f32.mrf.mxu0
    %v1827 = vadd.f32 %v1714, %v1826
    %1828 = vmatmul.f32.gmra.mxu0 %v99
    %v1829 = vpop.f32.mrf.mxu0
    %v1830 = vadd.f32 %v1717, %v1829
    %1831 = vmatmul.f32.gmra.mxu0 %v107
    %v1832 = vpop.f32.mrf.mxu0
    %v1833 = vadd.f32 %v1720, %v1832
    %1834 = vmatmul.f32.gmra.mxu0 %v115
    %v1835 = vpop.f32.mrf.mxu0
    %v1836 = vadd.f32 %v1723, %v1835
    %1837 = vmatmul.f32.gmra.mxu0 %v123
    %v1838 = vpop.f32.mrf.mxu0
    %v1839 = vadd.f32 %v1726, %v1838
    %1840 = vmatmul.f32.gmra.mxu0 %v131
    %v1841 = vpop.f32.mrf.mxu0
    %v1842 = vadd.f32 %v1729, %v1841
    %1843 = vmatmul.f32.gmra.mxu0 %v139
    %v1844 = vpop.f32.mrf.mxu0
    %v1845 = vadd.f32 %v1732, %v1844
    %1846 = vmatmul.f32.gmra.mxu0 %v147
    %v1847 = vpop.f32.mrf.mxu0
    %v1848 = vadd.f32 %v1735, %v1847
    %1849 = vmatmul.f32.gmra.mxu0 %v155
    %v1850 = vpop.f32.mrf.mxu0
    %v1851 = vadd.f32 %v1738, %v1850
    %1852 = vmatmul.f32.gmra.mxu0 %v163
    %v1853 = vpop.f32.mrf.mxu0
    %v1854 = vadd.f32 %v1741, %v1853
    %1855 = vmatmul.f32.gmra.mxu0 %v171
    %v1856 = vpop.f32.mrf.mxu0
    %v1857 = vadd.f32 %v1744, %v1856
    %1858 = vmatmul.f32.gmra.mxu0 %v179
    %v1859 = vpop.f32.mrf.mxu0
    %v1860 = vadd.f32 %v1747, %v1859
    %1861 = vmatmul.f32.gmra.mxu0 %v187
    %v1862 = vpop.f32.mrf.mxu0
    %v1863 = vadd.f32 %v1750, %v1862
    %1864 = vmatmul.f32.gmra.mxu0 %v195
    %v1865 = vpop.f32.mrf.mxu0
    %v1866 = vadd.f32 %v1753, %v1865
    %1867 = vmatmul.f32.gmra.mxu0 %v203
    %v1868 = vpop.f32.mrf.mxu0
    %v1869 = vadd.f32 %v1756, %v1868
    %1870 = vmatmul.f32.gmra.mxu0 %v211
    %v1871 = vpop.f32.mrf.mxu0
    %v1872 = vadd.f32 %v1759, %v1871
    %1873 = vmatmul.f32.gmra.mxu0 %v219
    %v1874 = vpop.f32.mrf.mxu0
    %v1875 = vadd.f32 %v1762, %v1874
    %1876 = vmatmul.f32.gmra.mxu0 %v227
    %v1877 = vpop.f32.mrf.mxu0
    %v1878 = vadd.f32 %v1765, %v1877
    %1879 = vmatmul.f32.gmra.mxu0 %v235
    %v1880 = vpop.f32.mrf.mxu0
    %v1881 = vadd.f32 %v1768, %v1880
    %1882 = vmatmul.f32.gmra.mxu0 %v243
    %v1883 = vpop.f32.mrf.mxu0
    %v1884 = vadd.f32 %v1771, %v1883
    %1885 = vmatmul.f32.gmra.mxu0 %v251
    %v1886 = vpop.f32.mrf.mxu0
    %v1887 = vadd.f32 %v1774, %v1886
    %1888 = vmatmul.f32.gmra.mxu0 %v259
    %v1889 = vpop.f32.mrf.mxu0
    %v1890 = vadd.f32 %v1777, %v1889
    %1891 = vmatmul.f32.gmra.mxu0 %v267
    %v1892 = vpop.f32.mrf.mxu0
    %v1893 = vadd.f32 %v1780, %v1892
    %1894 = vmatmul.f32.gmra.mxu0 %v275
    %v1895 = vpop.f32.mrf.mxu0
    %v1896 = vadd.f32 %v1783, %v1895
    %1897 = vdwg.mxu0
    %1898 = vmatpush.msra.mxu0 %v439
    %1899 = vmatpush.msra.mxu0 %v437
    %1900 = vmatpush.msra.mxu0 %v435
    %1901 = vmatpush.msra.mxu0 %v433
    %1902 = vmatpush.msra.mxu0 %v431
    %1903 = vmatpush.msra.mxu0 %v429
    %1904 = vmatpush.msra.mxu0 %v427
    %1905 = vmatpush.msra.mxu0 %v425
    %1906 = vmatpush.msra.mxu0 %v423
    %1907 = vmatpush.msra.mxu0 %v421
    %1908 = vmatpush.msra.mxu0 %v419
    %1909 = vmatpush.msra.mxu0 %v417
    %1910 = vmatpush.msra.mxu0 %v415
    %1911 = vmatpush.msra.mxu0 %v413
    %1912 = vmatpush.msra.mxu0 %v411
    %1913 = vmatpush.msra.mxu0 %v409
    %1914 = vmatmul.f32.gmra.mxu0 %v28
    %v1915 = vpop.f32.mrf.mxu0
    %v1916 = vadd.f32 %v1803, %v1915
    %1917 = vmatmul.f32.gmra.mxu0 %v36
    %v1918 = vpop.f32.mrf.mxu0
    %v1919 = vadd.f32 %v1806, %v1918
    %1920 = vmatmul.f32.gmra.mxu0 %v44
    %v1921 = vpop.f32.mrf.mxu0
    %v1922 = vadd.f32 %v1809, %v1921
    %1923 = vmatmul.f32.gmra.mxu0 %v52
    %v1924 = vpop.f32.mrf.mxu0
    %v1925 = vadd.f32 %v1812, %v1924
    %1926 = vmatmul.f32.gmra.mxu0 %v60
    %v1927 = vpop.f32.mrf.mxu0
    %v1928 = vadd.f32 %v1815, %v1927
    %1929 = vmatmul.f32.gmra.mxu0 %v68
    %v1930 = vpop.f32.mrf.mxu0
    %v1931 = vadd.f32 %v1818, %v1930
    %1932 = vmatmul.f32.gmra.mxu0 %v76
    %v1933 = vpop.f32.mrf.mxu0
    %v1934 = vadd.f32 %v1821, %v1933
    %1935 = vmatmul.f32.gmra.mxu0 %v84
    %v1936 = vpop.f32.mrf.mxu0
    %v1937 = vadd.f32 %v1824, %v1936
    %1938 = vmatmul.f32.gmra.mxu0 %v92
    %v1939 = vpop.f32.mrf.mxu0
    %v1940 = vadd.f32 %v1827, %v1939
    %1941 = vmatmul.f32.gmra.mxu0 %v100
    %v1942 = vpop.f32.mrf.mxu0
    %v1943 = vadd.f32 %v1830, %v1942
    %1944 = vmatmul.f32.gmra.mxu0 %v108
    %v1945 = vpop.f32.mrf.mxu0
    %v1946 = vadd.f32 %v1833, %v1945
    %1947 = vmatmul.f32.gmra.mxu0 %v116
    %v1948 = vpop.f32.mrf.mxu0
    %v1949 = vadd.f32 %v1836, %v1948
    %1950 = vmatmul.f32.gmra.mxu0 %v124
    %v1951 = vpop.f32.mrf.mxu0
    %v1952 = vadd.f32 %v1839, %v1951
    %1953 = vmatmul.f32.gmra.mxu0 %v132
    %v1954 = vpop.f32.mrf.mxu0
    %v1955 = vadd.f32 %v1842, %v1954
    %1956 = vmatmul.f32.gmra.mxu0 %v140
    %v1957 = vpop.f32.mrf.mxu0
    %v1958 = vadd.f32 %v1845, %v1957
    %1959 = vmatmul.f32.gmra.mxu0 %v148
    %v1960 = vpop.f32.mrf.mxu0
    %v1961 = vadd.f32 %v1848, %v1960
    %1962 = vmatmul.f32.gmra.mxu0 %v156
    %v1963 = vpop.f32.mrf.mxu0
    %v1964 = vadd.f32 %v1851, %v1963
    %1965 = vmatmul.f32.gmra.mxu0 %v164
    %v1966 = vpop.f32.mrf.mxu0
    %v1967 = vadd.f32 %v1854, %v1966
    %1968 = vmatmul.f32.gmra.mxu0 %v172
    %v1969 = vpop.f32.mrf.mxu0
    %v1970 = vadd.f32 %v1857, %v1969
    %1971 = vmatmul.f32.gmra.mxu0 %v180
    %v1972 = vpop.f32.mrf.mxu0
    %v1973 = vadd.f32 %v1860, %v1972
    %1974 = vmatmul.f32.gmra.mxu0 %v188
    %v1975 = vpop.f32.mrf.mxu0
    %v1976 = vadd.f32 %v1863, %v1975
    %1977 = vmatmul.f32.gmra.mxu0 %v196
    %v1978 = vpop.f32.mrf.mxu0
    %v1979 = vadd.f32 %v1866, %v1978
    %1980 = vmatmul.f32.gmra.mxu0 %v204
    %v1981 = vpop.f32.mrf.mxu0
    %v1982 = vadd.f32 %v1869, %v1981
    %1983 = vmatmul.f32.gmra.mxu0 %v212
    %v1984 = vpop.f32.mrf.mxu0
    %v1985 = vadd.f32 %v1872, %v1984
    %1986 = vmatmul.f32.gmra.mxu0 %v220
    %v1987 = vpop.f32.mrf.mxu0
    %v1988 = vadd.f32 %v1875, %v1987
    %1989 = vmatmul.f32.gmra.mxu0 %v228
    %v1990 = vpop.f32.mrf.mxu0
    %v1991 = vadd.f32 %v1878, %v1990
    %1992 = vmatmul.f32.gmra.mxu0 %v236
    %v1993 = vpop.f32.mrf.mxu0
    %v1994 = vadd.f32 %v1881, %v1993
    %1995 = vmatmul.f32.gmra.mxu0 %v244
    %v1996 = vpop.f32.mrf.mxu0
    %v1997 = vadd.f32 %v1884, %v1996
    %1998 = vmatmul.f32.gmra.mxu0 %v252
    %v1999 = vpop.f32.mrf.mxu0
    %v2000 = vadd.f32 %v1887, %v1999
    %2001 = vmatmul.f32.gmra.mxu0 %v260
    %v2002 = vpop.f32.mrf.mxu0
    %v2003 = vadd.f32 %v1890, %v2002
    %2004 = vmatmul.f32.gmra.mxu0 %v268
    %v2005 = vpop.f32.mrf.mxu0
    %v2006 = vadd.f32 %v1893, %v2005
    %2007 = vmatmul.f32.gmra.mxu0 %v276
    %v2008 = vpop.f32.mrf.mxu0
    %v2009 = vadd.f32 %v1896, %v2008
    %2010 = vdwg.mxu0
    %2011 = vmatpush.msra.mxu0 %v471
    %2012 = vmatpush.msra.mxu0 %v469
    %2013 = vmatpush.msra.mxu0 %v467
    %2014 = vmatpush.msra.mxu0 %v465
    %2015 = vmatpush.msra.mxu0 %v463
    %2016 = vmatpush.msra.mxu0 %v461
    %2017 = vmatpush.msra.mxu0 %v459
    %2018 = vmatpush.msra.mxu0 %v457
    %2019 = vmatpush.msra.mxu0 %v455
    %2020 = vmatpush.msra.mxu0 %v453
    %2021 = vmatpush.msra.mxu0 %v451
    %2022 = vmatpush.msra.mxu0 %v449
    %2023 = vmatpush.msra.mxu0 %v447
    %2024 = vmatpush.msra.mxu0 %v445
    %2025 = vmatpush.msra.mxu0 %v443
    %2026 = vmatpush.msra.mxu0 %v441
    %2027 = vmatmul.f32.gmra.mxu0 %v29
    %v2028 = vpop.f32.mrf.mxu0
    %v2029 = vadd.f32 %v1916, %v2028
    %2030 = vmatmul.f32.gmra.mxu0 %v37
    %v2031 = vpop.f32.mrf.mxu0
    %v2032 = vadd.f32 %v1919, %v2031
    %2033 = vmatmul.f32.gmra.mxu0 %v45
    %v2034 = vpop.f32.mrf.mxu0
    %v2035 = vadd.f32 %v1922, %v2034
    %2036 = vmatmul.f32.gmra.mxu0 %v53
    %v2037 = vpop.f32.mrf.mxu0
    %v2038 = vadd.f32 %v1925, %v2037
    %2039 = vmatmul.f32.gmra.mxu0 %v61
    %v2040 = vpop.f32.mrf.mxu0
    %v2041 = vadd.f32 %v1928, %v2040
    %2042 = vmatmul.f32.gmra.mxu0 %v69
    %v2043 = vpop.f32.mrf.mxu0
    %v2044 = vadd.f32 %v1931, %v2043
    %2045 = vmatmul.f32.gmra.mxu0 %v77
    %v2046 = vpop.f32.mrf.mxu0
    %v2047 = vadd.f32 %v1934, %v2046
    %2048 = vmatmul.f32.gmra.mxu0 %v85
    %v2049 = vpop.f32.mrf.mxu0
    %v2050 = vadd.f32 %v1937, %v2049
    %2051 = vmatmul.f32.gmra.mxu0 %v93
    %v2052 = vpop.f32.mrf.mxu0
    %v2053 = vadd.f32 %v1940, %v2052
    %2054 = vmatmul.f32.gmra.mxu0 %v101
    %v2055 = vpop.f32.mrf.mxu0
    %v2056 = vadd.f32 %v1943, %v2055
    %2057 = vmatmul.f32.gmra.mxu0 %v109
    %v2058 = vpop.f32.mrf.mxu0
    %v2059 = vadd.f32 %v1946, %v2058
    %2060 = vmatmul.f32.gmra.mxu0 %v117
    %v2061 = vpop.f32.mrf.mxu0
    %v2062 = vadd.f32 %v1949, %v2061
    %2063 = vmatmul.f32.gmra.mxu0 %v125
    %v2064 = vpop.f32.mrf.mxu0
    %v2065 = vadd.f32 %v1952, %v2064
    %2066 = vmatmul.f32.gmra.mxu0 %v133
    %v2067 = vpop.f32.mrf.mxu0
    %v2068 = vadd.f32 %v1955, %v2067
    %2069 = vmatmul.f32.gmra.mxu0 %v141
    %v2070 = vpop.f32.mrf.mxu0
    %v2071 = vadd.f32 %v1958, %v2070
    %2072 = vmatmul.f32.gmra.mxu0 %v149
    %v2073 = vpop.f32.mrf.mxu0
    %v2074 = vadd.f32 %v1961, %v2073
    %2075 = vmatmul.f32.gmra.mxu0 %v157
    %v2076 = vpop.f32.mrf.mxu0
    %v2077 = vadd.f32 %v1964, %v2076
    %2078 = vmatmul.f32.gmra.mxu0 %v165
    %v2079 = vpop.f32.mrf.mxu0
    %v2080 = vadd.f32 %v1967, %v2079
    %2081 = vmatmul.f32.gmra.mxu0 %v173
    %v2082 = vpop.f32.mrf.mxu0
    %v2083 = vadd.f32 %v1970, %v2082
    %2084 = vmatmul.f32.gmra.mxu0 %v181
    %v2085 = vpop.f32.mrf.mxu0
    %v2086 = vadd.f32 %v1973, %v2085
    %2087 = vmatmul.f32.gmra.mxu0 %v189
    %v2088 = vpop.f32.mrf.mxu0
    %v2089 = vadd.f32 %v1976, %v2088
    %2090 = vmatmul.f32.gmra.mxu0 %v197
    %v2091 = vpop.f32.mrf.mxu0
    %v2092 = vadd.f32 %v1979, %v2091
    %2093 = vmatmul.f32.gmra.mxu0 %v205
    %v2094 = vpop.f32.mrf.mxu0
    %v2095 = vadd.f32 %v1982, %v2094
    %2096 = vmatmul.f32.gmra.mxu0 %v213
    %v2097 = vpop.f32.mrf.mxu0
    %v2098 = vadd.f32 %v1985, %v2097
    %2099 = vmatmul.f32.gmra.mxu0 %v221
    %v2100 = vpop.f32.mrf.mxu0
    %v2101 = vadd.f32 %v1988, %v2100
    %2102 = vmatmul.f32.gmra.mxu0 %v229
    %v2103 = vpop.f32.mrf.mxu0
    %v2104 = vadd.f32 %v1991, %v2103
    %2105 = vmatmul.f32.gmra.mxu0 %v237
    %v2106 = vpop.f32.mrf.mxu0
    %v2107 = vadd.f32 %v1994, %v2106
    %2108 = vmatmul.f32.gmra.mxu0 %v245
    %v2109 = vpop.f32.mrf.mxu0
    %v2110 = vadd.f32 %v1997, %v2109
    %2111 = vmatmul.f32.gmra.mxu0 %v253
    %v2112 = vpop.f32.mrf.mxu0
    %v2113 = vadd.f32 %v2000, %v2112
    %2114 = vmatmul.f32.gmra.mxu0 %v261
    %v2115 = vpop.f32.mrf.mxu0
    %v2116 = vadd.f32 %v2003, %v2115
    %2117 = vmatmul.f32.gmra.mxu0 %v269
    %v2118 = vpop.f32.mrf.mxu0
    %v2119 = vadd.f32 %v2006, %v2118
    %2120 = vmatmul.f32.gmra.mxu0 %v277
    %v2121 = vpop.f32.mrf.mxu0
    %v2122 = vadd.f32 %v2009, %v2121
    %2123 = vdwg.mxu0
    %2124 = vmatpush.msra.mxu0 %v503
    %2125 = vmatpush.msra.mxu0 %v501
    %2126 = vmatpush.msra.mxu0 %v499
    %2127 = vmatpush.msra.mxu0 %v497
    %2128 = vmatpush.msra.mxu0 %v495
    %2129 = vmatpush.msra.mxu0 %v493
    %2130 = vmatpush.msra.mxu0 %v491
    %2131 = vmatpush.msra.mxu0 %v489
    %2132 = vmatpush.msra.mxu0 %v487
    %2133 = vmatpush.msra.mxu0 %v485
    %2134 = vmatpush.msra.mxu0 %v483
    %2135 = vmatpush.msra.mxu0 %v481
    %2136 = vmatpush.msra.mxu0 %v479
    %2137 = vmatpush.msra.mxu0 %v477
    %2138 = vmatpush.msra.mxu0 %v475
    %2139 = vmatpush.msra.mxu0 %v473
    %2140 = vmatmul.f32.gmra.mxu0 %v30
    %v2141 = vpop.f32.mrf.mxu0
    %v2142 = vadd.f32 %v2029, %v2141
    %2143 = vmatmul.f32.gmra.mxu0 %v38
    %v2144 = vpop.f32.mrf.mxu0
    %v2145 = vadd.f32 %v2032, %v2144
    %2146 = vmatmul.f32.gmra.mxu0 %v46
    %v2147 = vpop.f32.mrf.mxu0
    %v2148 = vadd.f32 %v2035, %v2147
    %2149 = vmatmul.f32.gmra.mxu0 %v54
    %v2150 = vpop.f32.mrf.mxu0
    %v2151 = vadd.f32 %v2038, %v2150
    %2152 = vmatmul.f32.gmra.mxu0 %v62
    %v2153 = vpop.f32.mrf.mxu0
    %v2154 = vadd.f32 %v2041, %v2153
    %2155 = vmatmul.f32.gmra.mxu0 %v70
    %v2156 = vpop.f32.mrf.mxu0
    %v2157 = vadd.f32 %v2044, %v2156
    %2158 = vmatmul.f32.gmra.mxu0 %v78
    %v2159 = vpop.f32.mrf.mxu0
    %v2160 = vadd.f32 %v2047, %v2159
    %2161 = vmatmul.f32.gmra.mxu0 %v86
    %v2162 = vpop.f32.mrf.mxu0
    %v2163 = vadd.f32 %v2050, %v2162
    %2164 = vmatmul.f32.gmra.mxu0 %v94
    %v2165 = vpop.f32.mrf.mxu0
    %v2166 = vadd.f32 %v2053, %v2165
    %2167 = vmatmul.f32.gmra.mxu0 %v102
    %v2168 = vpop.f32.mrf.mxu0
    %v2169 = vadd.f32 %v2056, %v2168
    %2170 = vmatmul.f32.gmra.mxu0 %v110
    %v2171 = vpop.f32.mrf.mxu0
    %v2172 = vadd.f32 %v2059, %v2171
    %2173 = vmatmul.f32.gmra.mxu0 %v118
    %v2174 = vpop.f32.mrf.mxu0
    %v2175 = vadd.f32 %v2062, %v2174
    %2176 = vmatmul.f32.gmra.mxu0 %v126
    %v2177 = vpop.f32.mrf.mxu0
    %v2178 = vadd.f32 %v2065, %v2177
    %2179 = vmatmul.f32.gmra.mxu0 %v134
    %v2180 = vpop.f32.mrf.mxu0
    %v2181 = vadd.f32 %v2068, %v2180
    %2182 = vmatmul.f32.gmra.mxu0 %v142
    %v2183 = vpop.f32.mrf.mxu0
    %v2184 = vadd.f32 %v2071, %v2183
    %2185 = vmatmul.f32.gmra.mxu0 %v150
    %v2186 = vpop.f32.mrf.mxu0
    %v2187 = vadd.f32 %v2074, %v2186
    %2188 = vmatmul.f32.gmra.mxu0 %v158
    %v2189 = vpop.f32.mrf.mxu0
    %v2190 = vadd.f32 %v2077, %v2189
    %2191 = vmatmul.f32.gmra.mxu0 %v166
    %v2192 = vpop.f32.mrf.mxu0
    %v2193 = vadd.f32 %v2080, %v2192
    %2194 = vmatmul.f32.gmra.mxu0 %v174
    %v2195 = vpop.f32.mrf.mxu0
    %v2196 = vadd.f32 %v2083, %v2195
    %2197 = vmatmul.f32.gmra.mxu0 %v182
    %v2198 = vpop.f32.mrf.mxu0
    %v2199 = vadd.f32 %v2086, %v2198
    %2200 = vmatmul.f32.gmra.mxu0 %v190
    %v2201 = vpop.f32.mrf.mxu0
    %v2202 = vadd.f32 %v2089, %v2201
    %2203 = vmatmul.f32.gmra.mxu0 %v198
    %v2204 = vpop.f32.mrf.mxu0
    %v2205 = vadd.f32 %v2092, %v2204
    %2206 = vmatmul.f32.gmra.mxu0 %v206
    %v2207 = vpop.f32.mrf.mxu0
    %v2208 = vadd.f32 %v2095, %v2207
    %2209 = vmatmul.f32.gmra.mxu0 %v214
    %v2210 = vpop.f32.mrf.mxu0
    %v2211 = vadd.f32 %v2098, %v2210
    %2212 = vmatmul.f32.gmra.mxu0 %v222
    %v2213 = vpop.f32.mrf.mxu0
    %v2214 = vadd.f32 %v2101, %v2213
    %2215 = vmatmul.f32.gmra.mxu0 %v230
    %v2216 = vpop.f32.mrf.mxu0
    %v2217 = vadd.f32 %v2104, %v2216
    %2218 = vmatmul.f32.gmra.mxu0 %v238
    %v2219 = vpop.f32.mrf.mxu0
    %v2220 = vadd.f32 %v2107, %v2219
    %2221 = vmatmul.f32.gmra.mxu0 %v246
    %v2222 = vpop.f32.mrf.mxu0
    %v2223 = vadd.f32 %v2110, %v2222
    %2224 = vmatmul.f32.gmra.mxu0 %v254
    %v2225 = vpop.f32.mrf.mxu0
    %v2226 = vadd.f32 %v2113, %v2225
    %2227 = vmatmul.f32.gmra.mxu0 %v262
    %v2228 = vpop.f32.mrf.mxu0
    %v2229 = vadd.f32 %v2116, %v2228
    %2230 = vmatmul.f32.gmra.mxu0 %v270
    %v2231 = vpop.f32.mrf.mxu0
    %v2232 = vadd.f32 %v2119, %v2231
    %2233 = vmatmul.f32.gmra.mxu0 %v278
    %v2234 = vpop.f32.mrf.mxu0
    %v2235 = vadd.f32 %v2122, %v2234
    %2236 = vdwg.mxu0
    %2237 = vmatpush.msra.mxu0 %v535
    %2238 = vmatpush.msra.mxu0 %v533
    %2239 = vmatpush.msra.mxu0 %v531
    %2240 = vmatpush.msra.mxu0 %v529
    %2241 = vmatpush.msra.mxu0 %v527
    %2242 = vmatpush.msra.mxu0 %v525
    %2243 = vmatpush.msra.mxu0 %v523
    %2244 = vmatpush.msra.mxu0 %v521
    %2245 = vmatpush.msra.mxu0 %v519
    %2246 = vmatpush.msra.mxu0 %v517
    %2247 = vmatpush.msra.mxu0 %v515
    %2248 = vmatpush.msra.mxu0 %v513
    %2249 = vmatpush.msra.mxu0 %v511
    %2250 = vmatpush.msra.mxu0 %v509
    %2251 = vmatpush.msra.mxu0 %v507
    %2252 = vmatpush.msra.mxu0 %v505
    %2253 = vmatmul.f32.gmra.mxu0 %v31
    %v2254 = vpop.f32.mrf.mxu0
    %v2255 = vadd.f32 %v2142, %v2254
    %2256 = vmatmul.f32.gmra.mxu0 %v39
    %v2257 = vpop.f32.mrf.mxu0
    %v2258 = vadd.f32 %v2145, %v2257
    %2259 = vmatmul.f32.gmra.mxu0 %v47
    %v2260 = vpop.f32.mrf.mxu0
    %v2261 = vadd.f32 %v2148, %v2260
    %2262 = vmatmul.f32.gmra.mxu0 %v55
    %v2263 = vpop.f32.mrf.mxu0
    %v2264 = vadd.f32 %v2151, %v2263
    %2265 = vmatmul.f32.gmra.mxu0 %v63
    %v2266 = vpop.f32.mrf.mxu0
    %v2267 = vadd.f32 %v2154, %v2266
    %2268 = vmatmul.f32.gmra.mxu0 %v71
    %v2269 = vpop.f32.mrf.mxu0
    %v2270 = vadd.f32 %v2157, %v2269
    %2271 = vmatmul.f32.gmra.mxu0 %v79
    %v2272 = vpop.f32.mrf.mxu0
    %v2273 = vadd.f32 %v2160, %v2272
    %2274 = vmatmul.f32.gmra.mxu0 %v87
    %v2275 = vpop.f32.mrf.mxu0
    %v2276 = vadd.f32 %v2163, %v2275
    %2277 = vmatmul.f32.gmra.mxu0 %v95
    %v2278 = vpop.f32.mrf.mxu0
    %v2279 = vadd.f32 %v2166, %v2278
    %2280 = vmatmul.f32.gmra.mxu0 %v103
    %v2281 = vpop.f32.mrf.mxu0
    %v2282 = vadd.f32 %v2169, %v2281
    %2283 = vmatmul.f32.gmra.mxu0 %v111
    %v2284 = vpop.f32.mrf.mxu0
    %v2285 = vadd.f32 %v2172, %v2284
    %2286 = vmatmul.f32.gmra.mxu0 %v119
    %v2287 = vpop.f32.mrf.mxu0
    %v2288 = vadd.f32 %v2175, %v2287
    %2289 = vmatmul.f32.gmra.mxu0 %v127
    %v2290 = vpop.f32.mrf.mxu0
    %v2291 = vadd.f32 %v2178, %v2290
    %2292 = vmatmul.f32.gmra.mxu0 %v135
    %v2293 = vpop.f32.mrf.mxu0
    %v2294 = vadd.f32 %v2181, %v2293
    %2295 = vmatmul.f32.gmra.mxu0 %v143
    %v2296 = vpop.f32.mrf.mxu0
    %v2297 = vadd.f32 %v2184, %v2296
    %2298 = vmatmul.f32.gmra.mxu0 %v151
    %v2299 = vpop.f32.mrf.mxu0
    %v2300 = vadd.f32 %v2187, %v2299
    %2301 = vmatmul.f32.gmra.mxu0 %v159
    %v2302 = vpop.f32.mrf.mxu0
    %v2303 = vadd.f32 %v2190, %v2302
    %2304 = vmatmul.f32.gmra.mxu0 %v167
    %v2305 = vpop.f32.mrf.mxu0
    %v2306 = vadd.f32 %v2193, %v2305
    %2307 = vmatmul.f32.gmra.mxu0 %v175
    %v2308 = vpop.f32.mrf.mxu0
    %v2309 = vadd.f32 %v2196, %v2308
    %2310 = vmatmul.f32.gmra.mxu0 %v183
    %v2311 = vpop.f32.mrf.mxu0
    %v2312 = vadd.f32 %v2199, %v2311
    %2313 = vmatmul.f32.gmra.mxu0 %v191
    %v2314 = vpop.f32.mrf.mxu0
    %v2315 = vadd.f32 %v2202, %v2314
    %2316 = vmatmul.f32.gmra.mxu0 %v199
    %v2317 = vpop.f32.mrf.mxu0
    %v2318 = vadd.f32 %v2205, %v2317
    %2319 = vmatmul.f32.gmra.mxu0 %v207
    %v2320 = vpop.f32.mrf.mxu0
    %v2321 = vadd.f32 %v2208, %v2320
    %2322 = vmatmul.f32.gmra.mxu0 %v215
    %v2323 = vpop.f32.mrf.mxu0
    %v2324 = vadd.f32 %v2211, %v2323
    %2325 = vmatmul.f32.gmra.mxu0 %v223
    %v2326 = vpop.f32.mrf.mxu0
    %v2327 = vadd.f32 %v2214, %v2326
    %2328 = vmatmul.f32.gmra.mxu0 %v231
    %v2329 = vpop.f32.mrf.mxu0
    %v2330 = vadd.f32 %v2217, %v2329
    %2331 = vmatmul.f32.gmra.mxu0 %v239
    %v2332 = vpop.f32.mrf.mxu0
    %v2333 = vadd.f32 %v2220, %v2332
    %2334 = vmatmul.f32.gmra.mxu0 %v247
    %v2335 = vpop.f32.mrf.mxu0
    %v2336 = vadd.f32 %v2223, %v2335
    %2337 = vmatmul.f32.gmra.mxu0 %v255
    %v2338 = vpop.f32.mrf.mxu0
    %v2339 = vadd.f32 %v2226, %v2338
    %2340 = vmatmul.f32.gmra.mxu0 %v263
    %v2341 = vpop.f32.mrf.mxu0
    %v2342 = vadd.f32 %v2229, %v2341
    %2343 = vmatmul.f32.gmra.mxu0 %v271
    %v2344 = vpop.f32.mrf.mxu0
    %v2345 = vadd.f32 %v2232, %v2344
    %2346 = vmatmul.f32.gmra.mxu0 %v279
    %v2347 = vpop.f32.mrf.mxu0
    %v2348 = vadd.f32 %v2235, %v2347
    %2349 = vdwg.mxu0
    %v2350 = vld [vmem:[%s2] sm:$0xff]
    %v2351 = vld [vmem:[%s2 + $0x8] sm:$0xff]
    %v2352 = vld [vmem:[%s2 + $0x10] sm:$0xff]
    %v2353 = vld [vmem:[%s2 + $0x18] sm:$0xff]
    %v2354 = vld [vmem:[%s2 + $0x20] sm:$0xff]
    %v2355 = vld [vmem:[%s2 + $0x28] sm:$0xff]
    %v2356 = vld [vmem:[%s2 + $0x30] sm:$0xff]
    %v2357 = vld [vmem:[%s2 + $0x38] sm:$0xff]
    %v2358 = vld [vmem:[%s2 + $0x40] sm:$0xff]
    %v2359 = vld [vmem:[%s2 + $0x48] sm:$0xff]
    %v2360 = vld [vmem:[%s2 + $0x50] sm:$0xff]
    %v2361 = vld [vmem:[%s2 + $0x58] sm:$0xff]
    %v2362 = vld [vmem:[%s2 + $0x60] sm:$0xff]
    %v2363 = vld [vmem:[%s2 + $0x68] sm:$0xff]
    %v2364 = vld [vmem:[%s2 + $0x70] sm:$0xff]
    %v2365 = vld [vmem:[%s2 + $0x78] sm:$0xff]
    %v2366 = vld [vmem:[%s2 + $0x80] sm:$0xff]
    %v2367 = vld [vmem:[%s2 + $0x88] sm:$0xff]
    %v2368 = vld [vmem:[%s2 + $0x90] sm:$0xff]
    %v2369 = vld [vmem:[%s2 + $0x98] sm:$0xff]
    %v2370 = vld [vmem:[%s2 + $0xa0] sm:$0xff]
    %v2371 = vld [vmem:[%s2 + $0xa8] sm:$0xff]
    %v2372 = vld [vmem:[%s2 + $0xb0] sm:$0xff]
    %v2373 = vld [vmem:[%s2 + $0xb8] sm:$0xff]
    %v2374 = vld [vmem:[%s2 + $0xc0] sm:$0xff]
    %v2375 = vld [vmem:[%s2 + $0xc8] sm:$0xff]
    %v2376 = vld [vmem:[%s2 + $0xd0] sm:$0xff]
    %v2377 = vld [vmem:[%s2 + $0xd8] sm:$0xff]
    %v2378 = vld [vmem:[%s2 + $0xe0] sm:$0xff]
    %v2379 = vld [vmem:[%s2 + $0xe8] sm:$0xff]
    %v2380 = vld [vmem:[%s2 + $0xf0] sm:$0xff]
    %v2381 = vld [vmem:[%s2 + $0xf8] sm:$0xff]
    %v2382 = vld [vmem:[%s2 + $0x100] sm:$0xff]
    %v2383 = vld [vmem:[%s2 + $0x108] sm:$0xff]
    %v2384 = vld [vmem:[%s2 + $0x110] sm:$0xff]
    %v2385 = vld [vmem:[%s2 + $0x118] sm:$0xff]
    %v2386 = vld [vmem:[%s2 + $0x120] sm:$0xff]
    %v2387 = vld [vmem:[%s2 + $0x128] sm:$0xff]
    %v2388 = vld [vmem:[%s2 + $0x130] sm:$0xff]
    %v2389 = vld [vmem:[%s2 + $0x138] sm:$0xff]
    %v2390 = vld [vmem:[%s2 + $0x140] sm:$0xff]
    %v2391 = vld [vmem:[%s2 + $0x148] sm:$0xff]
    %v2392 = vld [vmem:[%s2 + $0x150] sm:$0xff]
    %v2393 = vld [vmem:[%s2 + $0x158] sm:$0xff]
    %v2394 = vld [vmem:[%s2 + $0x160] sm:$0xff]
    %v2395 = vld [vmem:[%s2 + $0x168] sm:$0xff]
    %v2396 = vld [vmem:[%s2 + $0x170] sm:$0xff]
    %v2397 = vld [vmem:[%s2 + $0x178] sm:$0xff]
    %v2398 = vld [vmem:[%s2 + $0x180] sm:$0xff]
    %v2399 = vld [vmem:[%s2 + $0x188] sm:$0xff]
    %v2400 = vld [vmem:[%s2 + $0x190] sm:$0xff]
    %v2401 = vld [vmem:[%s2 + $0x198] sm:$0xff]
    %v2402 = vld [vmem:[%s2 + $0x1a0] sm:$0xff]
    %v2403 = vld [vmem:[%s2 + $0x1a8] sm:$0xff]
    %v2404 = vld [vmem:[%s2 + $0x1b0] sm:$0xff]
    %v2405 = vld [vmem:[%s2 + $0x1b8] sm:$0xff]
    %v2406 = vld [vmem:[%s2 + $0x1c0] sm:$0xff]
    %v2407 = vld [vmem:[%s2 + $0x1c8] sm:$0xff]
    %v2408 = vld [vmem:[%s2 + $0x1d0] sm:$0xff]
    %v2409 = vld [vmem:[%s2 + $0x1d8] sm:$0xff]
    %v2410 = vld [vmem:[%s2 + $0x1e0] sm:$0xff]
    %v2411 = vld [vmem:[%s2 + $0x1e8] sm:$0xff]
    %v2412 = vld [vmem:[%s2 + $0x1f0] sm:$0xff]
    %v2413 = vld [vmem:[%s2 + $0x1f8] sm:$0xff]
    %s2414 = scalar_lea.vmem %s5, 1
    %v2415 = vld [vmem:[%s2414] ss:$8 sm:$0x3]
    %v2417 = vperm.slane %v2415, 0
    %v2418 = vperm.slane %v2415, 1
    %2421 = vmatpush.msra.mxu0 %v2380
    %2422 = vmatpush.msra.mxu0 %v2378
    %2423 = vmatpush.msra.mxu0 %v2376
    %2424 = vmatpush.msra.mxu0 %v2374
    %2425 = vmatpush.msra.mxu0 %v2372
    %2426 = vmatpush.msra.mxu0 %v2370
    %2427 = vmatpush.msra.mxu0 %v2368
    %2428 = vmatpush.msra.mxu0 %v2366
    %2429 = vmatpush.msra.mxu0 %v2364
    %2430 = vmatpush.msra.mxu0 %v2362
    %2431 = vmatpush.msra.mxu0 %v2360
    %2432 = vmatpush.msra.mxu0 %v2358
    %2433 = vmatpush.msra.mxu0 %v2356
    %2434 = vmatpush.msra.mxu0 %v2354
    %2435 = vmatpush.msra.mxu0 %v2352
    %2436 = vmatpush.msra.mxu0 %v2350
    %2437 = vmatmul.f32.gmra.mxu0 %v1351
    %v2438 = vpop.f32.mrf.mxu0
    %v2439 = vadd.f32 %v2417, %v2438
    %2440 = vmatmul.f32.gmra.mxu0 %v1354
    %v2441 = vpop.f32.mrf.mxu0
    %v2442 = vadd.f32 %v2417, %v2441
    %2443 = vmatmul.f32.gmra.mxu0 %v1357
    %v2444 = vpop.f32.mrf.mxu0
    %v2445 = vadd.f32 %v2417, %v2444
    %2446 = vmatmul.f32.gmra.mxu0 %v1360
    %v2447 = vpop.f32.mrf.mxu0
    %v2448 = vadd.f32 %v2417, %v2447
    %2449 = vmatmul.f32.gmra.mxu0 %v1363
    %v2450 = vpop.f32.mrf.mxu0
    %v2451 = vadd.f32 %v2417, %v2450
    %2452 = vmatmul.f32.gmra.mxu0 %v1366
    %v2453 = vpop.f32.mrf.mxu0
    %v2454 = vadd.f32 %v2417, %v2453
    %2455 = vmatmul.f32.gmra.mxu0 %v1369
    %v2456 = vpop.f32.mrf.mxu0
    %v2457 = vadd.f32 %v2417, %v2456
    %2458 = vmatmul.f32.gmra.mxu0 %v1372
    %v2459 = vpop.f32.mrf.mxu0
    %v2460 = vadd.f32 %v2417, %v2459
    %2461 = vmatmul.f32.gmra.mxu0 %v1375
    %v2462 = vpop.f32.mrf.mxu0
    %v2463 = vadd.f32 %v2417, %v2462
    %2464 = vmatmul.f32.gmra.mxu0 %v1378
    %v2465 = vpop.f32.mrf.mxu0
    %v2466 = vadd.f32 %v2417, %v2465
    %2467 = vmatmul.f32.gmra.mxu0 %v1381
    %v2468 = vpop.f32.mrf.mxu0
    %v2469 = vadd.f32 %v2417, %v2468
    %2470 = vmatmul.f32.gmra.mxu0 %v1384
    %v2471 = vpop.f32.mrf.mxu0
    %v2472 = vadd.f32 %v2417, %v2471
    %2473 = vmatmul.f32.gmra.mxu0 %v1387
    %v2474 = vpop.f32.mrf.mxu0
    %v2475 = vadd.f32 %v2417, %v2474
    %2476 = vmatmul.f32.gmra.mxu0 %v1390
    %v2477 = vpop.f32.mrf.mxu0
    %v2478 = vadd.f32 %v2417, %v2477
    %2479 = vmatmul.f32.gmra.mxu0 %v1393
    %v2480 = vpop.f32.mrf.mxu0
    %v2481 = vadd.f32 %v2417, %v2480
    %2482 = vmatmul.f32.gmra.mxu0 %v1396
    %v2483 = vpop.f32.mrf.mxu0
    %v2484 = vadd.f32 %v2417, %v2483
    %2485 = vmatmul.f32.gmra.mxu0 %v1399
    %v2486 = vpop.f32.mrf.mxu0
    %v2487 = vadd.f32 %v2417, %v2486
    %2488 = vmatmul.f32.gmra.mxu0 %v1402
    %v2489 = vpop.f32.mrf.mxu0
    %v2490 = vadd.f32 %v2417, %v2489
    %2491 = vmatmul.f32.gmra.mxu0 %v1405
    %v2492 = vpop.f32.mrf.mxu0
    %v2493 = vadd.f32 %v2417, %v2492
    %2494 = vmatmul.f32.gmra.mxu0 %v1408
    %v2495 = vpop.f32.mrf.mxu0
    %v2496 = vadd.f32 %v2417, %v2495
    %2497 = vmatmul.f32.gmra.mxu0 %v1411
    %v2498 = vpop.f32.mrf.mxu0
    %v2499 = vadd.f32 %v2417, %v2498
    %2500 = vmatmul.f32.gmra.mxu0 %v1414
    %v2501 = vpop.f32.mrf.mxu0
    %v2502 = vadd.f32 %v2417, %v2501
    %2503 = vmatmul.f32.gmra.mxu0 %v1417
    %v2504 = vpop.f32.mrf.mxu0
    %v2505 = vadd.f32 %v2417, %v2504
    %2506 = vmatmul.f32.gmra.mxu0 %v1420
    %v2507 = vpop.f32.mrf.mxu0
    %v2508 = vadd.f32 %v2417, %v2507
    %2509 = vmatmul.f32.gmra.mxu0 %v1423
    %v2510 = vpop.f32.mrf.mxu0
    %v2511 = vadd.f32 %v2417, %v2510
    %2512 = vmatmul.f32.gmra.mxu0 %v1426
    %v2513 = vpop.f32.mrf.mxu0
    %v2514 = vadd.f32 %v2417, %v2513
    %2515 = vmatmul.f32.gmra.mxu0 %v1429
    %v2516 = vpop.f32.mrf.mxu0
    %v2517 = vadd.f32 %v2417, %v2516
    %2518 = vmatmul.f32.gmra.mxu0 %v1432
    %v2519 = vpop.f32.mrf.mxu0
    %v2520 = vadd.f32 %v2417, %v2519
    %2521 = vmatmul.f32.gmra.mxu0 %v1435
    %v2522 = vpop.f32.mrf.mxu0
    %v2523 = vadd.f32 %v2417, %v2522
    %2524 = vmatmul.f32.gmra.mxu0 %v1438
    %v2525 = vpop.f32.mrf.mxu0
    %v2526 = vadd.f32 %v2417, %v2525
    %2527 = vmatmul.f32.gmra.mxu0 %v1441
    %v2528 = vpop.f32.mrf.mxu0
    %v2529 = vadd.f32 %v2417, %v2528
    %2530 = vmatmul.f32.gmra.mxu0 %v1444
    %v2531 = vpop.f32.mrf.mxu0
    %v2532 = vadd.f32 %v2417, %v2531
    %2533 = vdwg.mxu0
    %2534 = vmatpush.msra.mxu0 %v2412
    %2535 = vmatpush.msra.mxu0 %v2410
    %2536 = vmatpush.msra.mxu0 %v2408
    %2537 = vmatpush.msra.mxu0 %v2406
    %2538 = vmatpush.msra.mxu0 %v2404
    %2539 = vmatpush.msra.mxu0 %v2402
    %2540 = vmatpush.msra.mxu0 %v2400
    %2541 = vmatpush.msra.mxu0 %v2398
    %2542 = vmatpush.msra.mxu0 %v2396
    %2543 = vmatpush.msra.mxu0 %v2394
    %2544 = vmatpush.msra.mxu0 %v2392
    %2545 = vmatpush.msra.mxu0 %v2390
    %2546 = vmatpush.msra.mxu0 %v2388
    %2547 = vmatpush.msra.mxu0 %v2386
    %2548 = vmatpush.msra.mxu0 %v2384
    %2549 = vmatpush.msra.mxu0 %v2382
    %2550 = vmatmul.f32.gmra.mxu0 %v2255
    %v2551 = vpop.f32.mrf.mxu0
    %v2552 = vadd.f32 %v2439, %v2551
    %2553 = vmatmul.f32.gmra.mxu0 %v2258
    %v2554 = vpop.f32.mrf.mxu0
    %v2555 = vadd.f32 %v2442, %v2554
    %2556 = vmatmul.f32.gmra.mxu0 %v2261
    %v2557 = vpop.f32.mrf.mxu0
    %v2558 = vadd.f32 %v2445, %v2557
    %2559 = vmatmul.f32.gmra.mxu0 %v2264
    %v2560 = vpop.f32.mrf.mxu0
    %v2561 = vadd.f32 %v2448, %v2560
    %2562 = vmatmul.f32.gmra.mxu0 %v2267
    %v2563 = vpop.f32.mrf.mxu0
    %v2564 = vadd.f32 %v2451, %v2563
    %2565 = vmatmul.f32.gmra.mxu0 %v2270
    %v2566 = vpop.f32.mrf.mxu0
    %v2567 = vadd.f32 %v2454, %v2566
    %2568 = vmatmul.f32.gmra.mxu0 %v2273
    %v2569 = vpop.f32.mrf.mxu0
    %v2570 = vadd.f32 %v2457, %v2569
    %2571 = vmatmul.f32.gmra.mxu0 %v2276
    %v2572 = vpop.f32.mrf.mxu0
    %v2573 = vadd.f32 %v2460, %v2572
    %2574 = vmatmul.f32.gmra.mxu0 %v2279
    %v2575 = vpop.f32.mrf.mxu0
    %v2576 = vadd.f32 %v2463, %v2575
    %2577 = vmatmul.f32.gmra.mxu0 %v2282
    %v2578 = vpop.f32.mrf.mxu0
    %v2579 = vadd.f32 %v2466, %v2578
    %2580 = vmatmul.f32.gmra.mxu0 %v2285
    %v2581 = vpop.f32.mrf.mxu0
    %v2582 = vadd.f32 %v2469, %v2581
    %2583 = vmatmul.f32.gmra.mxu0 %v2288
    %v2584 = vpop.f32.mrf.mxu0
    %v2585 = vadd.f32 %v2472, %v2584
    %2586 = vmatmul.f32.gmra.mxu0 %v2291
    %v2587 = vpop.f32.mrf.mxu0
    %v2588 = vadd.f32 %v2475, %v2587
    %2589 = vmatmul.f32.gmra.mxu0 %v2294
    %v2590 = vpop.f32.mrf.mxu0
    %v2591 = vadd.f32 %v2478, %v2590
    %2592 = vmatmul.f32.gmra.mxu0 %v2297
    %v2593 = vpop.f32.mrf.mxu0
    %v2594 = vadd.f32 %v2481, %v2593
    %2595 = vmatmul.f32.gmra.mxu0 %v2300
    %v2596 = vpop.f32.mrf.mxu0
    %v2597 = vadd.f32 %v2484, %v2596
    %2598 = vmatmul.f32.gmra.mxu0 %v2303
    %v2599 = vpop.f32.mrf.mxu0
    %v2600 = vadd.f32 %v2487, %v2599
    %2601 = vmatmul.f32.gmra.mxu0 %v2306
    %v2602 = vpop.f32.mrf.mxu0
    %v2603 = vadd.f32 %v2490, %v2602
    %2604 = vmatmul.f32.gmra.mxu0 %v2309
    %v2605 = vpop.f32.mrf.mxu0
    %v2606 = vadd.f32 %v2493, %v2605
    %2607 = vmatmul.f32.gmra.mxu0 %v2312
    %v2608 = vpop.f32.mrf.mxu0
    %v2609 = vadd.f32 %v2496, %v2608
    %2610 = vmatmul.f32.gmra.mxu0 %v2315
    %v2611 = vpop.f32.mrf.mxu0
    %v2612 = vadd.f32 %v2499, %v2611
    %2613 = vmatmul.f32.gmra.mxu0 %v2318
    %v2614 = vpop.f32.mrf.mxu0
    %v2615 = vadd.f32 %v2502, %v2614
    %2616 = vmatmul.f32.gmra.mxu0 %v2321
    %v2617 = vpop.f32.mrf.mxu0
    %v2618 = vadd.f32 %v2505, %v2617
    %2619 = vmatmul.f32.gmra.mxu0 %v2324
    %v2620 = vpop.f32.mrf.mxu0
    %v2621 = vadd.f32 %v2508, %v2620
    %2622 = vmatmul.f32.gmra.mxu0 %v2327
    %v2623 = vpop.f32.mrf.mxu0
    %v2624 = vadd.f32 %v2511, %v2623
    %2625 = vmatmul.f32.gmra.mxu0 %v2330
    %v2626 = vpop.f32.mrf.mxu0
    %v2627 = vadd.f32 %v2514, %v2626
    %2628 = vmatmul.f32.gmra.mxu0 %v2333
    %v2629 = vpop.f32.mrf.mxu0
    %v2630 = vadd.f32 %v2517, %v2629
    %2631 = vmatmul.f32.gmra.mxu0 %v2336
    %v2632 = vpop.f32.mrf.mxu0
    %v2633 = vadd.f32 %v2520, %v2632
    %2634 = vmatmul.f32.gmra.mxu0 %v2339
    %v2635 = vpop.f32.mrf.mxu0
    %v2636 = vadd.f32 %v2523, %v2635
    %2637 = vmatmul.f32.gmra.mxu0 %v2342
    %v2638 = vpop.f32.mrf.mxu0
    %v2639 = vadd.f32 %v2526, %v2638
    %2640 = vmatmul.f32.gmra.mxu0 %v2345
    %v2641 = vpop.f32.mrf.mxu0
    %v2642 = vadd.f32 %v2529, %v2641
    %2643 = vmatmul.f32.gmra.mxu0 %v2348
    %v2644 = vpop.f32.mrf.mxu0
    %v2645 = vadd.f32 %v2532, %v2644
    %2646 = vdwg.mxu0
    %2647 = vmatpush.msra.mxu0 %v2381
    %2648 = vmatpush.msra.mxu0 %v2379
    %2649 = vmatpush.msra.mxu0 %v2377
    %2650 = vmatpush.msra.mxu0 %v2375
    %2651 = vmatpush.msra.mxu0 %v2373
    %2652 = vmatpush.msra.mxu0 %v2371
    %2653 = vmatpush.msra.mxu0 %v2369
    %2654 = vmatpush.msra.mxu0 %v2367
    %2655 = vmatpush.msra.mxu0 %v2365
    %2656 = vmatpush.msra.mxu0 %v2363
    %2657 = vmatpush.msra.mxu0 %v2361
    %2658 = vmatpush.msra.mxu0 %v2359
    %2659 = vmatpush.msra.mxu0 %v2357
    %2660 = vmatpush.msra.mxu0 %v2355
    %2661 = vmatpush.msra.mxu0 %v2353
    %2662 = vmatpush.msra.mxu0 %v2351
    %2663 = vmatmul.f32.gmra.mxu0 %v1351
    %v2664 = vpop.f32.mrf.mxu0
    %v2665 = vadd.f32 %v2418, %v2664
    %2666 = vmatmul.f32.gmra.mxu0 %v1354
    %v2667 = vpop.f32.mrf.mxu0
    %v2668 = vadd.f32 %v2418, %v2667
    %2669 = vmatmul.f32.gmra.mxu0 %v1357
    %v2670 = vpop.f32.mrf.mxu0
    %v2671 = vadd.f32 %v2418, %v2670
    %2672 = vmatmul.f32.gmra.mxu0 %v1360
    %v2673 = vpop.f32.mrf.mxu0
    %v2674 = vadd.f32 %v2418, %v2673
    %2675 = vmatmul.f32.gmra.mxu0 %v1363
    %v2676 = vpop.f32.mrf.mxu0
    %v2677 = vadd.f32 %v2418, %v2676
    %2678 = vmatmul.f32.gmra.mxu0 %v1366
    %v2679 = vpop.f32.mrf.mxu0
    %v2680 = vadd.f32 %v2418, %v2679
    %2681 = vmatmul.f32.gmra.mxu0 %v1369
    %v2682 = vpop.f32.mrf.mxu0
    %v2683 = vadd.f32 %v2418, %v2682
    %2684 = vmatmul.f32.gmra.mxu0 %v1372
    %v2685 = vpop.f32.mrf.mxu0
    %v2686 = vadd.f32 %v2418, %v2685
    %2687 = vmatmul.f32.gmra.mxu0 %v1375
    %v2688 = vpop.f32.mrf.mxu0
    %v2689 = vadd.f32 %v2418, %v2688
    %2690 = vmatmul.f32.gmra.mxu0 %v1378
    %v2691 = vpop.f32.mrf.mxu0
    %v2692 = vadd.f32 %v2418, %v2691
    %2693 = vmatmul.f32.gmra.mxu0 %v1381
    %v2694 = vpop.f32.mrf.mxu0
    %v2695 = vadd.f32 %v2418, %v2694
    %2696 = vmatmul.f32.gmra.mxu0 %v1384
    %v2697 = vpop.f32.mrf.mxu0
    %v2698 = vadd.f32 %v2418, %v2697
    %2699 = vmatmul.f32.gmra.mxu0 %v1387
    %v2700 = vpop.f32.mrf.mxu0
    %v2701 = vadd.f32 %v2418, %v2700
    %2702 = vmatmul.f32.gmra.mxu0 %v1390
    %v2703 = vpop.f32.mrf.mxu0
    %v2704 = vadd.f32 %v2418, %v2703
    %2705 = vmatmul.f32.gmra.mxu0 %v1393
    %v2706 = vpop.f32.mrf.mxu0
    %v2707 = vadd.f32 %v2418, %v2706
    %2708 = vmatmul.f32.gmra.mxu0 %v1396
    %v2709 = vpop.f32.mrf.mxu0
    %v2710 = vadd.f32 %v2418, %v2709
    %2711 = vmatmul.f32.gmra.mxu0 %v1399
    %v2712 = vpop.f32.mrf.mxu0
    %v2713 = vadd.f32 %v2418, %v2712
    %2714 = vmatmul.f32.gmra.mxu0 %v1402
    %v2715 = vpop.f32.mrf.mxu0
    %v2716 = vadd.f32 %v2418, %v2715
    %2717 = vmatmul.f32.gmra.mxu0 %v1405
    %v2718 = vpop.f32.mrf.mxu0
    %v2719 = vadd.f32 %v2418, %v2718
    %2720 = vmatmul.f32.gmra.mxu0 %v1408
    %v2721 = vpop.f32.mrf.mxu0
    %v2722 = vadd.f32 %v2418, %v2721
    %2723 = vmatmul.f32.gmra.mxu0 %v1411
    %v2724 = vpop.f32.mrf.mxu0
    %v2725 = vadd.f32 %v2418, %v2724
    %2726 = vmatmul.f32.gmra.mxu0 %v1414
    %v2727 = vpop.f32.mrf.mxu0
    %v2728 = vadd.f32 %v2418, %v2727
    %2729 = vmatmul.f32.gmra.mxu0 %v1417
    %v2730 = vpop.f32.mrf.mxu0
    %v2731 = vadd.f32 %v2418, %v2730
    %2732 = vmatmul.f32.gmra.mxu0 %v1420
    %v2733 = vpop.f32.mrf.mxu0
    %v2734 = vadd.f32 %v2418, %v2733
    %2735 = vmatmul.f32.gmra.mxu0 %v1423
    %v2736 = vpop.f32.mrf.mxu0
    %v2737 = vadd.f32 %v2418, %v2736
    %2738 = vmatmul.f32.gmra.mxu0 %v1426
    %v2739 = vpop.f32.mrf.mxu0
    %v2740 = vadd.f32 %v2418, %v2739
    %2741 = vmatmul.f32.gmra.mxu0 %v1429
    %v2742 = vpop.f32.mrf.mxu0
    %v2743 = vadd.f32 %v2418, %v2742
    %2744 = vmatmul.f32.gmra.mxu0 %v1432
    %v2745 = vpop.f32.mrf.mxu0
    %v2746 = vadd.f32 %v2418, %v2745
    %2747 = vmatmul.f32.gmra.mxu0 %v1435
    %v2748 = vpop.f32.mrf.mxu0
    %v2749 = vadd.f32 %v2418, %v2748
    %2750 = vmatmul.f32.gmra.mxu0 %v1438
    %v2751 = vpop.f32.mrf.mxu0
    %v2752 = vadd.f32 %v2418, %v2751
    %2753 = vmatmul.f32.gmra.mxu0 %v1441
    %v2754 = vpop.f32.mrf.mxu0
    %v2755 = vadd.f32 %v2418, %v2754
    %2756 = vmatmul.f32.gmra.mxu0 %v1444
    %v2757 = vpop.f32.mrf.mxu0
    %v2758 = vadd.f32 %v2418, %v2757
    %2759 = vdwg.mxu0
    %2760 = vmatpush.msra.mxu0 %v2413
    %2761 = vmatpush.msra.mxu0 %v2411
    %2762 = vmatpush.msra.mxu0 %v2409
    %2763 = vmatpush.msra.mxu0 %v2407
    %2764 = vmatpush.msra.mxu0 %v2405
    %2765 = vmatpush.msra.mxu0 %v2403
    %2766 = vmatpush.msra.mxu0 %v2401
    %2767 = vmatpush.msra.mxu0 %v2399
    %2768 = vmatpush.msra.mxu0 %v2397
    %2769 = vmatpush.msra.mxu0 %v2395
    %2770 = vmatpush.msra.mxu0 %v2393
    %2771 = vmatpush.msra.mxu0 %v2391
    %2772 = vmatpush.msra.mxu0 %v2389
    %2773 = vmatpush.msra.mxu0 %v2387
    %2774 = vmatpush.msra.mxu0 %v2385
    %2775 = vmatpush.msra.mxu0 %v2383
    %2776 = vmatmul.f32.gmra.mxu0 %v2255
    %v2777 = vpop.f32.mrf.mxu0
    %v2778 = vadd.f32 %v2665, %v2777
    %2779 = vmatmul.f32.gmra.mxu0 %v2258
    %v2780 = vpop.f32.mrf.mxu0
    %v2781 = vadd.f32 %v2668, %v2780
    %2782 = vmatmul.f32.gmra.mxu0 %v2261
    %v2783 = vpop.f32.mrf.mxu0
    %v2784 = vadd.f32 %v2671, %v2783
    %2785 = vmatmul.f32.gmra.mxu0 %v2264
    %v2786 = vpop.f32.mrf.mxu0
    %v2787 = vadd.f32 %v2674, %v2786
    %2788 = vmatmul.f32.gmra.mxu0 %v2267
    %v2789 = vpop.f32.mrf.mxu0
    %v2790 = vadd.f32 %v2677, %v2789
    %2791 = vmatmul.f32.gmra.mxu0 %v2270
    %v2792 = vpop.f32.mrf.mxu0
    %v2793 = vadd.f32 %v2680, %v2792
    %2794 = vmatmul.f32.gmra.mxu0 %v2273
    %v2795 = vpop.f32.mrf.mxu0
    %v2796 = vadd.f32 %v2683, %v2795
    %2797 = vmatmul.f32.gmra.mxu0 %v2276
    %v2798 = vpop.f32.mrf.mxu0
    %v2799 = vadd.f32 %v2686, %v2798
    %2800 = vmatmul.f32.gmra.mxu0 %v2279
    %v2801 = vpop.f32.mrf.mxu0
    %v2802 = vadd.f32 %v2689, %v2801
    %2803 = vmatmul.f32.gmra.mxu0 %v2282
    %v2804 = vpop.f32.mrf.mxu0
    %v2805 = vadd.f32 %v2692, %v2804
    %2806 = vmatmul.f32.gmra.mxu0 %v2285
    %v2807 = vpop.f32.mrf.mxu0
    %v2808 = vadd.f32 %v2695, %v2807
    %2809 = vmatmul.f32.gmra.mxu0 %v2288
    %v2810 = vpop.f32.mrf.mxu0
    %v2811 = vadd.f32 %v2698, %v2810
    %2812 = vmatmul.f32.gmra.mxu0 %v2291
    %v2813 = vpop.f32.mrf.mxu0
    %v2814 = vadd.f32 %v2701, %v2813
    %2815 = vmatmul.f32.gmra.mxu0 %v2294
    %v2816 = vpop.f32.mrf.mxu0
    %v2817 = vadd.f32 %v2704, %v2816
    %2818 = vmatmul.f32.gmra.mxu0 %v2297
    %v2819 = vpop.f32.mrf.mxu0
    %v2820 = vadd.f32 %v2707, %v2819
    %2821 = vmatmul.f32.gmra.mxu0 %v2300
    %v2822 = vpop.f32.mrf.mxu0
    %v2823 = vadd.f32 %v2710, %v2822
    %2824 = vmatmul.f32.gmra.mxu0 %v2303
    %v2825 = vpop.f32.mrf.mxu0
    %v2826 = vadd.f32 %v2713, %v2825
    %2827 = vmatmul.f32.gmra.mxu0 %v2306
    %v2828 = vpop.f32.mrf.mxu0
    %v2829 = vadd.f32 %v2716, %v2828
    %2830 = vmatmul.f32.gmra.mxu0 %v2309
    %v2831 = vpop.f32.mrf.mxu0
    %v2832 = vadd.f32 %v2719, %v2831
    %2833 = vmatmul.f32.gmra.mxu0 %v2312
    %v2834 = vpop.f32.mrf.mxu0
    %v2835 = vadd.f32 %v2722, %v2834
    %2836 = vmatmul.f32.gmra.mxu0 %v2315
    %v2837 = vpop.f32.mrf.mxu0
    %v2838 = vadd.f32 %v2725, %v2837
    %2839 = vmatmul.f32.gmra.mxu0 %v2318
    %v2840 = vpop.f32.mrf.mxu0
    %v2841 = vadd.f32 %v2728, %v2840
    %2842 = vmatmul.f32.gmra.mxu0 %v2321
    %v2843 = vpop.f32.mrf.mxu0
    %v2844 = vadd.f32 %v2731, %v2843
    %2845 = vmatmul.f32.gmra.mxu0 %v2324
    %v2846 = vpop.f32.mrf.mxu0
    %v2847 = vadd.f32 %v2734, %v2846
    %2848 = vmatmul.f32.gmra.mxu0 %v2327
    %v2849 = vpop.f32.mrf.mxu0
    %v2850 = vadd.f32 %v2737, %v2849
    %2851 = vmatmul.f32.gmra.mxu0 %v2330
    %v2852 = vpop.f32.mrf.mxu0
    %v2853 = vadd.f32 %v2740, %v2852
    %2854 = vmatmul.f32.gmra.mxu0 %v2333
    %v2855 = vpop.f32.mrf.mxu0
    %v2856 = vadd.f32 %v2743, %v2855
    %2857 = vmatmul.f32.gmra.mxu0 %v2336
    %v2858 = vpop.f32.mrf.mxu0
    %v2859 = vadd.f32 %v2746, %v2858
    %2860 = vmatmul.f32.gmra.mxu0 %v2339
    %v2861 = vpop.f32.mrf.mxu0
    %v2862 = vadd.f32 %v2749, %v2861
    %2863 = vmatmul.f32.gmra.mxu0 %v2342
    %v2864 = vpop.f32.mrf.mxu0
    %v2865 = vadd.f32 %v2752, %v2864
    %2866 = vmatmul.f32.gmra.mxu0 %v2345
    %v2867 = vpop.f32.mrf.mxu0
    %v2868 = vadd.f32 %v2755, %v2867
    %2869 = vmatmul.f32.gmra.mxu0 %v2348
    %v2870 = vpop.f32.mrf.mxu0
    %v2871 = vadd.f32 %v2758, %v2870
    %2872 = vdwg.mxu0
    %s2873 = scalar_lea.vmem %s5, 2
    %v2874 = vld [vmem:[%s2873] ss:$8 sm:$0x3]
    %s2875 = scalar_lea.vmem %s5, 3
    %v2876 = vld [vmem:[%s2875] ss:$8 sm:$0x3]
    %v2877 = vadd.f32 %v2552, %v2555
    %v2878 = vadd.f32 %v2877, %v2558
    %v2879 = vadd.f32 %v2878, %v2561
    %v2880 = vadd.f32 %v2879, %v2564
    %v2881 = vadd.f32 %v2880, %v2567
    %v2882 = vadd.f32 %v2881, %v2570
    %v2883 = vadd.f32 %v2882, %v2573
    %v2884 = vadd.f32 %v2883, %v2576
    %v2885 = vadd.f32 %v2884, %v2579
    %v2886 = vadd.f32 %v2885, %v2582
    %v2887 = vadd.f32 %v2886, %v2585
    %v2888 = vadd.f32 %v2887, %v2588
    %v2889 = vadd.f32 %v2888, %v2591
    %v2890 = vadd.f32 %v2889, %v2594
    %v2891 = vadd.f32 %v2890, %v2597
    %v2892 = vrot.slane %v2891, 4
    %v2893 = vadd.f32 %v2891, %v2892
    %v2894 = vrot.slane %v2893, 2
    %v2895 = vadd.f32 %v2893, %v2894
    %v2896 = vrot.slane %v2895, 1
    %v2897 = vadd.f32 %v2895, %v2896
    %v2898 = vadd.f32 %v2778, %v2781
    %v2899 = vadd.f32 %v2898, %v2784
    %v2900 = vadd.f32 %v2899, %v2787
    %v2901 = vadd.f32 %v2900, %v2790
    %v2902 = vadd.f32 %v2901, %v2793
    %v2903 = vadd.f32 %v2902, %v2796
    %v2904 = vadd.f32 %v2903, %v2799
    %v2905 = vadd.f32 %v2904, %v2802
    %v2906 = vadd.f32 %v2905, %v2805
    %v2907 = vadd.f32 %v2906, %v2808
    %v2908 = vadd.f32 %v2907, %v2811
    %v2909 = vadd.f32 %v2908, %v2814
    %v2910 = vadd.f32 %v2909, %v2817
    %v2911 = vadd.f32 %v2910, %v2820
    %v2912 = vadd.f32 %v2911, %v2823
    %v2913 = vrot.slane %v2912, 4
    %v2914 = vadd.f32 %v2912, %v2913
    %v2915 = vrot.slane %v2914, 2
    %v2916 = vadd.f32 %v2914, %v2915
    %v2917 = vrot.slane %v2916, 1
    %v2918 = vadd.f32 %v2916, %v2917
    %v2919 = vrcp.pop 128.0
    %v2920 = vmul.f32 128.0, %v2919
    %v2921 = vsub.f32 1.0, %v2920
    %v2922 = vmul.f32 %v2919, %v2921
    %v2923 = vadd.f32 %v2919, %v2922
    %vm2924 = vweird.f32 %v2919
    %v2925 = vsel %vm2924, %v2919, %v2923
    %v2926 = vmul.f32 %v2897, %v2925
    %v2927 = vmul.f32 %v2918, %v2925
    %v2928 = vsub.f32 %v2552, %v2926
    %v2929 = vsub.f32 %v2778, %v2927
    %v2930 = vsub.f32 %v2555, %v2926
    %v2931 = vsub.f32 %v2781, %v2927
    %v2932 = vsub.f32 %v2558, %v2926
    %v2933 = vsub.f32 %v2784, %v2927
    %v2934 = vsub.f32 %v2561, %v2926
    %v2935 = vsub.f32 %v2787, %v2927
    %v2936 = vsub.f32 %v2564, %v2926
    %v2937 = vsub.f32 %v2790, %v2927
    %v2938 = vsub.f32 %v2567, %v2926
    %v2939 = vsub.f32 %v2793, %v2927
    %v2940 = vsub.f32 %v2570, %v2926
    %v2941 = vsub.f32 %v2796, %v2927
    %v2942 = vsub.f32 %v2573, %v2926
    %v2943 = vsub.f32 %v2799, %v2927
    %v2944 = vsub.f32 %v2576, %v2926
    %v2945 = vsub.f32 %v2802, %v2927
    %v2946 = vsub.f32 %v2579, %v2926
    %v2947 = vsub.f32 %v2805, %v2927
    %v2948 = vsub.f32 %v2582, %v2926
    %v2949 = vsub.f32 %v2808, %v2927
    %v2950 = vsub.f32 %v2585, %v2926
    %v2951 = vsub.f32 %v2811, %v2927
    %v2952 = vsub.f32 %v2588, %v2926
    %v2953 = vsub.f32 %v2814, %v2927
    %v2954 = vsub.f32 %v2591, %v2926
    %v2955 = vsub.f32 %v2817, %v2927
    %v2956 = vsub.f32 %v2594, %v2926
    %v2957 = vsub.f32 %v2820, %v2927
    %v2958 = vsub.f32 %v2597, %v2926
    %v2959 = vsub.f32 %v2823, %v2927
    %v2960 = vmul.f32 %v2928, %v2928
    %v2961 = vmul.f32 %v2929, %v2929
    %v2962 = vmul.f32 %v2930, %v2930
    %v2963 = vmul.f32 %v2931, %v2931
    %v2964 = vmul.f32 %v2932, %v2932
    %v2965 = vmul.f32 %v2933, %v2933
    %v2966 = vmul.f32 %v2934, %v2934
    %v2967 = vmul.f32 %v2935, %v2935
    %v2968 = vmul.f32 %v2936, %v2936
    %v2969 = vmul.f32 %v2937, %v2937
    %v2970 = vmul.f32 %v2938, %v2938
    %v2971 = vmul.f32 %v2939, %v2939
    %v2972 = vmul.f32 %v2940, %v2940
    %v2973 = vmul.f32 %v2941, %v2941
    %v2974 = vmul.f32 %v2942, %v2942
    %v2975 = vmul.f32 %v2943, %v2943
    %v2976 = vmul.f32 %v2944, %v2944
    %v2977 = vmul.f32 %v2945, %v2945
    %v2978 = vmul.f32 %v2946, %v2946
    %v2979 = vmul.f32 %v2947, %v2947
    %v2980 = vmul.f32 %v2948, %v2948
    %v2981 = vmul.f32 %v2949, %v2949
    %v2982 = vmul.f32 %v2950, %v2950
    %v2983 = vmul.f32 %v2951, %v2951
    %v2984 = vmul.f32 %v2952, %v2952
    %v2985 = vmul.f32 %v2953, %v2953
    %v2986 = vmul.f32 %v2954, %v2954
    %v2987 = vmul.f32 %v2955, %v2955
    %v2988 = vmul.f32 %v2956, %v2956
    %v2989 = vmul.f32 %v2957, %v2957
    %v2990 = vmul.f32 %v2958, %v2958
    %v2991 = vmul.f32 %v2959, %v2959
    %v2992 = vadd.f32 %v2960, %v2962
    %v2993 = vadd.f32 %v2992, %v2964
    %v2994 = vadd.f32 %v2993, %v2966
    %v2995 = vadd.f32 %v2994, %v2968
    %v2996 = vadd.f32 %v2995, %v2970
    %v2997 = vadd.f32 %v2996, %v2972
    %v2998 = vadd.f32 %v2997, %v2974
    %v2999 = vadd.f32 %v2998, %v2976
    %v3000 = vadd.f32 %v2999, %v2978
    %v3001 = vadd.f32 %v3000, %v2980
    %v3002 = vadd.f32 %v3001, %v2982
    %v3003 = vadd.f32 %v3002, %v2984
    %v3004 = vadd.f32 %v3003, %v2986
    %v3005 = vadd.f32 %v3004, %v2988
    %v3006 = vadd.f32 %v3005, %v2990
    %v3007 = vrot.slane %v3006, 4
    %v3008 = vadd.f32 %v3006, %v3007
    %v3009 = vrot.slane %v3008, 2
    %v3010 = vadd.f32 %v3008, %v3009
    %v3011 = vrot.slane %v3010, 1
    %v3012 = vadd.f32 %v3010, %v3011
    %v3013 = vadd.f32 %v2961, %v2963
    %v3014 = vadd.f32 %v3013, %v2965
    %v3015 = vadd.f32 %v3014, %v2967
    %v3016 = vadd.f32 %v3015, %v2969
    %v3017 = vadd.f32 %v3016, %v2971
    %v3018 = vadd.f32 %v3017, %v2973
    %v3019 = vadd.f32 %v3018, %v2975
    %v3020 = vadd.f32 %v3019, %v2977
    %v3021 = vadd.f32 %v3020, %v2979
    %v3022 = vadd.f32 %v3021, %v2981
    %v3023 = vadd.f32 %v3022, %v2983
    %v3024 = vadd.f32 %v3023, %v2985
    %v3025 = vadd.f32 %v3024, %v2987
    %v3026 = vadd.f32 %v3025, %v2989
    %v3027 = vadd.f32 %v3026, %v2991
    %v3028 = vrot.slane %v3027, 4
    %v3029 = vadd.f32 %v3027, %v3028
    %v3030 = vrot.slane %v3029, 2
    %v3031 = vadd.f32 %v3029, %v3030
    %v3032 = vrot.slane %v3031, 1
    %v3033 = vadd.f32 %v3031, %v3032
    %v3034 = vmul.f32 %v3012, %v2925
    %v3035 = vmul.f32 %v3033, %v2925
    %v3036 = vadd.f32 %v3034, 1e-05
    %v3037 = vadd.f32 %v3035, 1e-05
    %v3038 = vrsqrt.pop %v3036
    %v3039 = vmul.f32 %v3038, %v3036
    %v3040 = vmul.f32 %v3039, %v3038
    %v3041 = vmul.f32 0.5, %v3040
    %v3042 = vsub.f32 1.5, %v3041
    %v3043 = vmul.f32 %v3038, %v3042
    %vm3044 = vweird.f32 %v3036
    %vm3045 = vweird.f32 %v3038
    %vm3046 = vmor %vm3044, %vm3045
    %v3047 = vsel %vm3046, %v3038, %v3043
    %v3048 = vrsqrt.pop %v3037
    %v3049 = vmul.f32 %v3048, %v3037
    %v3050 = vmul.f32 %v3049, %v3048
    %v3051 = vmul.f32 0.5, %v3050
    %v3052 = vsub.f32 1.5, %v3051
    %v3053 = vmul.f32 %v3048, %v3052
    %vm3054 = vweird.f32 %v3037
    %vm3055 = vweird.f32 %v3048
    %vm3056 = vmor %vm3054, %vm3055
    %v3057 = vsel %vm3056, %v3048, %v3053
    %v3058 = vmul.f32 %v2928, %v3047
    %v3059 = vmul.f32 %v2929, %v3057
    %v3060 = vmul.f32 %v2930, %v3047
    %v3061 = vmul.f32 %v2931, %v3057
    %v3062 = vmul.f32 %v2932, %v3047
    %v3063 = vmul.f32 %v2933, %v3057
    %v3064 = vmul.f32 %v2934, %v3047
    %v3065 = vmul.f32 %v2935, %v3057
    %v3066 = vmul.f32 %v2936, %v3047
    %v3067 = vmul.f32 %v2937, %v3057
    %v3068 = vmul.f32 %v2938, %v3047
    %v3069 = vmul.f32 %v2939, %v3057
    %v3070 = vmul.f32 %v2940, %v3047
    %v3071 = vmul.f32 %v2941, %v3057
    %v3072 = vmul.f32 %v2942, %v3047
    %v3073 = vmul.f32 %v2943, %v3057
    %v3074 = vmul.f32 %v2944, %v3047
    %v3075 = vmul.f32 %v2945, %v3057
    %v3076 = vmul.f32 %v2946, %v3047
    %v3077 = vmul.f32 %v2947, %v3057
    %v3078 = vmul.f32 %v2948, %v3047
    %v3079 = vmul.f32 %v2949, %v3057
    %v3080 = vmul.f32 %v2950, %v3047
    %v3081 = vmul.f32 %v2951, %v3057
    %v3082 = vmul.f32 %v2952, %v3047
    %v3083 = vmul.f32 %v2953, %v3057
    %v3084 = vmul.f32 %v2954, %v3047
    %v3085 = vmul.f32 %v2955, %v3057
    %v3086 = vmul.f32 %v2956, %v3047
    %v3087 = vmul.f32 %v2957, %v3057
    %v3088 = vmul.f32 %v2958, %v3047
    %v3089 = vmul.f32 %v2959, %v3057
    %v3090 = vadd.f32 %v2600, %v2603
    %v3091 = vadd.f32 %v3090, %v2606
    %v3092 = vadd.f32 %v3091, %v2609
    %v3093 = vadd.f32 %v3092, %v2612
    %v3094 = vadd.f32 %v3093, %v2615
    %v3095 = vadd.f32 %v3094, %v2618
    %v3096 = vadd.f32 %v3095, %v2621
    %v3097 = vadd.f32 %v3096, %v2624
    %v3098 = vadd.f32 %v3097, %v2627
    %v3099 = vadd.f32 %v3098, %v2630
    %v3100 = vadd.f32 %v3099, %v2633
    %v3101 = vadd.f32 %v3100, %v2636
    %v3102 = vadd.f32 %v3101, %v2639
    %v3103 = vadd.f32 %v3102, %v2642
    %v3104 = vadd.f32 %v3103, %v2645
    %v3105 = vrot.slane %v3104, 4
    %v3106 = vadd.f32 %v3104, %v3105
    %v3107 = vrot.slane %v3106, 2
    %v3108 = vadd.f32 %v3106, %v3107
    %v3109 = vrot.slane %v3108, 1
    %v3110 = vadd.f32 %v3108, %v3109
    %v3111 = vadd.f32 %v2826, %v2829
    %v3112 = vadd.f32 %v3111, %v2832
    %v3113 = vadd.f32 %v3112, %v2835
    %v3114 = vadd.f32 %v3113, %v2838
    %v3115 = vadd.f32 %v3114, %v2841
    %v3116 = vadd.f32 %v3115, %v2844
    %v3117 = vadd.f32 %v3116, %v2847
    %v3118 = vadd.f32 %v3117, %v2850
    %v3119 = vadd.f32 %v3118, %v2853
    %v3120 = vadd.f32 %v3119, %v2856
    %v3121 = vadd.f32 %v3120, %v2859
    %v3122 = vadd.f32 %v3121, %v2862
    %v3123 = vadd.f32 %v3122, %v2865
    %v3124 = vadd.f32 %v3123, %v2868
    %v3125 = vadd.f32 %v3124, %v2871
    %v3126 = vrot.slane %v3125, 4
    %v3127 = vadd.f32 %v3125, %v3126
    %v3128 = vrot.slane %v3127, 2
    %v3129 = vadd.f32 %v3127, %v3128
    %v3130 = vrot.slane %v3129, 1
    %v3131 = vadd.f32 %v3129, %v3130
    %v3132 = vmul.f32 %v3110, %v2925
    %v3133 = vmul.f32 %v3131, %v2925
    %v3134 = vsub.f32 %v2600, %v3132
    %v3135 = vsub.f32 %v2826, %v3133
    %v3136 = vsub.f32 %v2603, %v3132
    %v3137 = vsub.f32 %v2829, %v3133
    %v3138 = vsub.f32 %v2606, %v3132
    %v3139 = vsub.f32 %v2832, %v3133
    %v3140 = vsub.f32 %v2609, %v3132
    %v3141 = vsub.f32 %v2835, %v3133
    %v3142 = vsub.f32 %v2612, %v3132
    %v3143 = vsub.f32 %v2838, %v3133
    %v3144 = vsub.f32 %v2615, %v3132
    %v3145 = vsub.f32 %v2841, %v3133
    %v3146 = vsub.f32 %v2618, %v3132
    %v3147 = vsub.f32 %v2844, %v3133
    %v3148 = vsub.f32 %v2621, %v3132
    %v3149 = vsub.f32 %v2847, %v3133
    %v3150 = vsub.f32 %v2624, %v3132
    %v3151 = vsub.f32 %v2850, %v3133
    %v3152 = vsub.f32 %v2627, %v3132
    %v3153 = vsub.f32 %v2853, %v3133
    %v3154 = vsub.f32 %v2630, %v3132
    %v3155 = vsub.f32 %v2856, %v3133
    %v3156 = vsub.f32 %v2633, %v3132
    %v3157 = vsub.f32 %v2859, %v3133
    %v3158 = vsub.f32 %v2636, %v3132
    %v3159 = vsub.f32 %v2862, %v3133
    %v3160 = vsub.f32 %v2639, %v3132
    %v3161 = vsub.f32 %v2865, %v3133
    %v3162 = vsub.f32 %v2642, %v3132
    %v3163 = vsub.f32 %v2868, %v3133
    %v3164 = vsub.f32 %v2645, %v3132
    %v3165 = vsub.f32 %v2871, %v3133
    %v3166 = vmul.f32 %v3134, %v3134
    %v3167 = vmul.f32 %v3135, %v3135
    %v3168 = vmul.f32 %v3136, %v3136
    %v3169 = vmul.f32 %v3137, %v3137
    %v3170 = vmul.f32 %v3138, %v3138
    %v3171 = vmul.f32 %v3139, %v3139
    %v3172 = vmul.f32 %v3140, %v3140
    %v3173 = vmul.f32 %v3141, %v3141
    %v3174 = vmul.f32 %v3142, %v3142
    %v3175 = vmul.f32 %v3143, %v3143
    %v3176 = vmul.f32 %v3144, %v3144
    %v3177 = vmul.f32 %v3145, %v3145
    %v3178 = vmul.f32 %v3146, %v3146
    %v3179 = vmul.f32 %v3147, %v3147
    %v3180 = vmul.f32 %v3148, %v3148
    %v3181 = vmul.f32 %v3149, %v3149
    %v3182 = vmul.f32 %v3150, %v3150
    %v3183 = vmul.f32 %v3151, %v3151
    %v3184 = vmul.f32 %v3152, %v3152
    %v3185 = vmul.f32 %v3153, %v3153
    %v3186 = vmul.f32 %v3154, %v3154
    %v3187 = vmul.f32 %v3155, %v3155
    %v3188 = vmul.f32 %v3156, %v3156
    %v3189 = vmul.f32 %v3157, %v3157
    %v3190 = vmul.f32 %v3158, %v3158
    %v3191 = vmul.f32 %v3159, %v3159
    %v3192 = vmul.f32 %v3160, %v3160
    %v3193 = vmul.f32 %v3161, %v3161
    %v3194 = vmul.f32 %v3162, %v3162
    %v3195 = vmul.f32 %v3163, %v3163
    %v3196 = vmul.f32 %v3164, %v3164
    %v3197 = vmul.f32 %v3165, %v3165
    %v3198 = vadd.f32 %v3166, %v3168
    %v3199 = vadd.f32 %v3198, %v3170
    %v3200 = vadd.f32 %v3199, %v3172
    %v3201 = vadd.f32 %v3200, %v3174
    %v3202 = vadd.f32 %v3201, %v3176
    %v3203 = vadd.f32 %v3202, %v3178
    %v3204 = vadd.f32 %v3203, %v3180
    %v3205 = vadd.f32 %v3204, %v3182
    %v3206 = vadd.f32 %v3205, %v3184
    %v3207 = vadd.f32 %v3206, %v3186
    %v3208 = vadd.f32 %v3207, %v3188
    %v3209 = vadd.f32 %v3208, %v3190
    %v3210 = vadd.f32 %v3209, %v3192
    %v3211 = vadd.f32 %v3210, %v3194
    %v3212 = vadd.f32 %v3211, %v3196
    %v3213 = vrot.slane %v3212, 4
    %v3214 = vadd.f32 %v3212, %v3213
    %v3215 = vrot.slane %v3214, 2
    %v3216 = vadd.f32 %v3214, %v3215
    %v3217 = vrot.slane %v3216, 1
    %v3218 = vadd.f32 %v3216, %v3217
    %v3219 = vadd.f32 %v3167, %v3169
    %v3220 = vadd.f32 %v3219, %v3171
    %v3221 = vadd.f32 %v3220, %v3173
    %v3222 = vadd.f32 %v3221, %v3175
    %v3223 = vadd.f32 %v3222, %v3177
    %v3224 = vadd.f32 %v3223, %v3179
    %v3225 = vadd.f32 %v3224, %v3181
    %v3226 = vadd.f32 %v3225, %v3183
    %v3227 = vadd.f32 %v3226, %v3185
    %v3228 = vadd.f32 %v3227, %v3187
    %v3229 = vadd.f32 %v3228, %v3189
    %v3230 = vadd.f32 %v3229, %v3191
    %v3231 = vadd.f32 %v3230, %v3193
    %v3232 = vadd.f32 %v3231, %v3195
    %v3233 = vadd.f32 %v3232, %v3197
    %v3234 = vrot.slane %v3233, 4
    %v3235 = vadd.f32 %v3233, %v3234
    %v3236 = vrot.slane %v3235, 2
    %v3237 = vadd.f32 %v3235, %v3236
    %v3238 = vrot.slane %v3237, 1
    %v3239 = vadd.f32 %v3237, %v3238
    %v3240 = vmul.f32 %v3218, %v2925
    %v3241 = vmul.f32 %v3239, %v2925
    %v3242 = vadd.f32 %v3240, 1e-05
    %v3243 = vadd.f32 %v3241, 1e-05
    %v3244 = vrsqrt.pop %v3242
    %v3245 = vmul.f32 %v3244, %v3242
    %v3246 = vmul.f32 %v3245, %v3244
    %v3247 = vmul.f32 0.5, %v3246
    %v3248 = vsub.f32 1.5, %v3247
    %v3249 = vmul.f32 %v3244, %v3248
    %vm3250 = vweird.f32 %v3242
    %vm3251 = vweird.f32 %v3244
    %vm3252 = vmor %vm3250, %vm3251
    %v3253 = vsel %vm3252, %v3244, %v3249
    %v3254 = vrsqrt.pop %v3243
    %v3255 = vmul.f32 %v3254, %v3243
    %v3256 = vmul.f32 %v3255, %v3254
    %v3257 = vmul.f32 0.5, %v3256
    %v3258 = vsub.f32 1.5, %v3257
    %v3259 = vmul.f32 %v3254, %v3258
    %vm3260 = vweird.f32 %v3243
    %vm3261 = vweird.f32 %v3254
    %vm3262 = vmor %vm3260, %vm3261
    %v3263 = vsel %vm3262, %v3254, %v3259
    %v3264 = vmul.f32 %v3134, %v3253
    %v3265 = vmul.f32 %v3135, %v3263
    %v3266 = vmul.f32 %v3136, %v3253
    %v3267 = vmul.f32 %v3137, %v3263
    %v3268 = vmul.f32 %v3138, %v3253
    %v3269 = vmul.f32 %v3139, %v3263
    %v3270 = vmul.f32 %v3140, %v3253
    %v3271 = vmul.f32 %v3141, %v3263
    %v3272 = vmul.f32 %v3142, %v3253
    %v3273 = vmul.f32 %v3143, %v3263
    %v3274 = vmul.f32 %v3144, %v3253
    %v3275 = vmul.f32 %v3145, %v3263
    %v3276 = vmul.f32 %v3146, %v3253
    %v3277 = vmul.f32 %v3147, %v3263
    %v3278 = vmul.f32 %v3148, %v3253
    %v3279 = vmul.f32 %v3149, %v3263
    %v3280 = vmul.f32 %v3150, %v3253
    %v3281 = vmul.f32 %v3151, %v3263
    %v3282 = vmul.f32 %v3152, %v3253
    %v3283 = vmul.f32 %v3153, %v3263
    %v3284 = vmul.f32 %v3154, %v3253
    %v3285 = vmul.f32 %v3155, %v3263
    %v3286 = vmul.f32 %v3156, %v3253
    %v3287 = vmul.f32 %v3157, %v3263
    %v3288 = vmul.f32 %v3158, %v3253
    %v3289 = vmul.f32 %v3159, %v3263
    %v3290 = vmul.f32 %v3160, %v3253
    %v3291 = vmul.f32 %v3161, %v3263
    %v3292 = vmul.f32 %v3162, %v3253
    %v3293 = vmul.f32 %v3163, %v3263
    %v3294 = vmul.f32 %v3164, %v3253
    %v3295 = vmul.f32 %v3165, %v3263
    %v3297 = vperm.slane %v2874, 0
    %v3298 = vperm.slane %v2874, 1
    %v3301 = vmul.f32 %v3058, %v3297
    %v3302 = vmul.f32 %v3059, %v3298
    %v3303 = vmul.f32 %v3060, %v3297
    %v3304 = vmul.f32 %v3061, %v3298
    %v3305 = vmul.f32 %v3062, %v3297
    %v3306 = vmul.f32 %v3063, %v3298
    %v3307 = vmul.f32 %v3064, %v3297
    %v3308 = vmul.f32 %v3065, %v3298
    %v3309 = vmul.f32 %v3066, %v3297
    %v3310 = vmul.f32 %v3067, %v3298
    %v3311 = vmul.f32 %v3068, %v3297
    %v3312 = vmul.f32 %v3069, %v3298
    %v3313 = vmul.f32 %v3070, %v3297
    %v3314 = vmul.f32 %v3071, %v3298
    %v3315 = vmul.f32 %v3072, %v3297
    %v3316 = vmul.f32 %v3073, %v3298
    %v3317 = vmul.f32 %v3074, %v3297
    %v3318 = vmul.f32 %v3075, %v3298
    %v3319 = vmul.f32 %v3076, %v3297
    %v3320 = vmul.f32 %v3077, %v3298
    %v3321 = vmul.f32 %v3078, %v3297
    %v3322 = vmul.f32 %v3079, %v3298
    %v3323 = vmul.f32 %v3080, %v3297
    %v3324 = vmul.f32 %v3081, %v3298
    %v3325 = vmul.f32 %v3082, %v3297
    %v3326 = vmul.f32 %v3083, %v3298
    %v3327 = vmul.f32 %v3084, %v3297
    %v3328 = vmul.f32 %v3085, %v3298
    %v3329 = vmul.f32 %v3086, %v3297
    %v3330 = vmul.f32 %v3087, %v3298
    %v3331 = vmul.f32 %v3088, %v3297
    %v3332 = vmul.f32 %v3089, %v3298
    %v3333 = vmul.f32 %v3264, %v3297
    %v3334 = vmul.f32 %v3265, %v3298
    %v3335 = vmul.f32 %v3266, %v3297
    %v3336 = vmul.f32 %v3267, %v3298
    %v3337 = vmul.f32 %v3268, %v3297
    %v3338 = vmul.f32 %v3269, %v3298
    %v3339 = vmul.f32 %v3270, %v3297
    %v3340 = vmul.f32 %v3271, %v3298
    %v3341 = vmul.f32 %v3272, %v3297
    %v3342 = vmul.f32 %v3273, %v3298
    %v3343 = vmul.f32 %v3274, %v3297
    %v3344 = vmul.f32 %v3275, %v3298
    %v3345 = vmul.f32 %v3276, %v3297
    %v3346 = vmul.f32 %v3277, %v3298
    %v3347 = vmul.f32 %v3278, %v3297
    %v3348 = vmul.f32 %v3279, %v3298
    %v3349 = vmul.f32 %v3280, %v3297
    %v3350 = vmul.f32 %v3281, %v3298
    %v3351 = vmul.f32 %v3282, %v3297
    %v3352 = vmul.f32 %v3283, %v3298
    %v3353 = vmul.f32 %v3284, %v3297
    %v3354 = vmul.f32 %v3285, %v3298
    %v3355 = vmul.f32 %v3286, %v3297
    %v3356 = vmul.f32 %v3287, %v3298
    %v3357 = vmul.f32 %v3288, %v3297
    %v3358 = vmul.f32 %v3289, %v3298
    %v3359 = vmul.f32 %v3290, %v3297
    %v3360 = vmul.f32 %v3291, %v3298
    %v3361 = vmul.f32 %v3292, %v3297
    %v3362 = vmul.f32 %v3293, %v3298
    %v3363 = vmul.f32 %v3294, %v3297
    %v3364 = vmul.f32 %v3295, %v3298
    %v3366 = vperm.slane %v2876, 0
    %v3367 = vperm.slane %v2876, 1
    %v3370 = vadd.f32 %v3301, %v3366
    %v3371 = vadd.f32 %v3302, %v3367
    %v3372 = vadd.f32 %v3303, %v3366
    %v3373 = vadd.f32 %v3304, %v3367
    %v3374 = vadd.f32 %v3305, %v3366
    %v3375 = vadd.f32 %v3306, %v3367
    %v3376 = vadd.f32 %v3307, %v3366
    %v3377 = vadd.f32 %v3308, %v3367
    %v3378 = vadd.f32 %v3309, %v3366
    %v3379 = vadd.f32 %v3310, %v3367
    %v3380 = vadd.f32 %v3311, %v3366
    %v3381 = vadd.f32 %v3312, %v3367
    %v3382 = vadd.f32 %v3313, %v3366
    %v3383 = vadd.f32 %v3314, %v3367
    %v3384 = vadd.f32 %v3315, %v3366
    %v3385 = vadd.f32 %v3316, %v3367
    %v3386 = vadd.f32 %v3317, %v3366
    %v3387 = vadd.f32 %v3318, %v3367
    %v3388 = vadd.f32 %v3319, %v3366
    %v3389 = vadd.f32 %v3320, %v3367
    %v3390 = vadd.f32 %v3321, %v3366
    %v3391 = vadd.f32 %v3322, %v3367
    %v3392 = vadd.f32 %v3323, %v3366
    %v3393 = vadd.f32 %v3324, %v3367
    %v3394 = vadd.f32 %v3325, %v3366
    %v3395 = vadd.f32 %v3326, %v3367
    %v3396 = vadd.f32 %v3327, %v3366
    %v3397 = vadd.f32 %v3328, %v3367
    %v3398 = vadd.f32 %v3329, %v3366
    %v3399 = vadd.f32 %v3330, %v3367
    %v3400 = vadd.f32 %v3331, %v3366
    %v3401 = vadd.f32 %v3332, %v3367
    %v3402 = vadd.f32 %v3333, %v3366
    %v3403 = vadd.f32 %v3334, %v3367
    %v3404 = vadd.f32 %v3335, %v3366
    %v3405 = vadd.f32 %v3336, %v3367
    %v3406 = vadd.f32 %v3337, %v3366
    %v3407 = vadd.f32 %v3338, %v3367
    %v3408 = vadd.f32 %v3339, %v3366
    %v3409 = vadd.f32 %v3340, %v3367
    %v3410 = vadd.f32 %v3341, %v3366
    %v3411 = vadd.f32 %v3342, %v3367
    %v3412 = vadd.f32 %v3343, %v3366
    %v3413 = vadd.f32 %v3344, %v3367
    %v3414 = vadd.f32 %v3345, %v3366
    %v3415 = vadd.f32 %v3346, %v3367
    %v3416 = vadd.f32 %v3347, %v3366
    %v3417 = vadd.f32 %v3348, %v3367
    %v3418 = vadd.f32 %v3349, %v3366
    %v3419 = vadd.f32 %v3350, %v3367
    %v3420 = vadd.f32 %v3351, %v3366
    %v3421 = vadd.f32 %v3352, %v3367
    %v3422 = vadd.f32 %v3353, %v3366
    %v3423 = vadd.f32 %v3354, %v3367
    %v3424 = vadd.f32 %v3355, %v3366
    %v3425 = vadd.f32 %v3356, %v3367
    %v3426 = vadd.f32 %v3357, %v3366
    %v3427 = vadd.f32 %v3358, %v3367
    %v3428 = vadd.f32 %v3359, %v3366
    %v3429 = vadd.f32 %v3360, %v3367
    %v3430 = vadd.f32 %v3361, %v3366
    %v3431 = vadd.f32 %v3362, %v3367
    %v3432 = vadd.f32 %v3363, %v3366
    %v3433 = vadd.f32 %v3364, %v3367
    %v3434 = vmax.f32 %v3370, 0.0
    %v3435 = vmax.f32 %v3371, 0.0
    %v3436 = vmax.f32 %v3372, 0.0
    %v3437 = vmax.f32 %v3373, 0.0
    %v3438 = vmax.f32 %v3374, 0.0
    %v3439 = vmax.f32 %v3375, 0.0
    %v3440 = vmax.f32 %v3376, 0.0
    %v3441 = vmax.f32 %v3377, 0.0
    %v3442 = vmax.f32 %v3378, 0.0
    %v3443 = vmax.f32 %v3379, 0.0
    %v3444 = vmax.f32 %v3380, 0.0
    %v3445 = vmax.f32 %v3381, 0.0
    %v3446 = vmax.f32 %v3382, 0.0
    %v3447 = vmax.f32 %v3383, 0.0
    %v3448 = vmax.f32 %v3384, 0.0
    %v3449 = vmax.f32 %v3385, 0.0
    %v3450 = vmax.f32 %v3386, 0.0
    %v3451 = vmax.f32 %v3387, 0.0
    %v3452 = vmax.f32 %v3388, 0.0
    %v3453 = vmax.f32 %v3389, 0.0
    %v3454 = vmax.f32 %v3390, 0.0
    %v3455 = vmax.f32 %v3391, 0.0
    %v3456 = vmax.f32 %v3392, 0.0
    %v3457 = vmax.f32 %v3393, 0.0
    %v3458 = vmax.f32 %v3394, 0.0
    %v3459 = vmax.f32 %v3395, 0.0
    %v3460 = vmax.f32 %v3396, 0.0
    %v3461 = vmax.f32 %v3397, 0.0
    %v3462 = vmax.f32 %v3398, 0.0
    %v3463 = vmax.f32 %v3399, 0.0
    %v3464 = vmax.f32 %v3400, 0.0
    %v3465 = vmax.f32 %v3401, 0.0
    %v3466 = vmax.f32 %v3402, 0.0
    %v3467 = vmax.f32 %v3403, 0.0
    %v3468 = vmax.f32 %v3404, 0.0
    %v3469 = vmax.f32 %v3405, 0.0
    %v3470 = vmax.f32 %v3406, 0.0
    %v3471 = vmax.f32 %v3407, 0.0
    %v3472 = vmax.f32 %v3408, 0.0
    %v3473 = vmax.f32 %v3409, 0.0
    %v3474 = vmax.f32 %v3410, 0.0
    %v3475 = vmax.f32 %v3411, 0.0
    %v3476 = vmax.f32 %v3412, 0.0
    %v3477 = vmax.f32 %v3413, 0.0
    %v3478 = vmax.f32 %v3414, 0.0
    %v3479 = vmax.f32 %v3415, 0.0
    %v3480 = vmax.f32 %v3416, 0.0
    %v3481 = vmax.f32 %v3417, 0.0
    %v3482 = vmax.f32 %v3418, 0.0
    %v3483 = vmax.f32 %v3419, 0.0
    %v3484 = vmax.f32 %v3420, 0.0
    %v3485 = vmax.f32 %v3421, 0.0
    %v3486 = vmax.f32 %v3422, 0.0
    %v3487 = vmax.f32 %v3423, 0.0
    %v3488 = vmax.f32 %v3424, 0.0
    %v3489 = vmax.f32 %v3425, 0.0
    %v3490 = vmax.f32 %v3426, 0.0
    %v3491 = vmax.f32 %v3427, 0.0
    %v3492 = vmax.f32 %v3428, 0.0
    %v3493 = vmax.f32 %v3429, 0.0
    %v3494 = vmax.f32 %v3430, 0.0
    %v3495 = vmax.f32 %v3431, 0.0
    %v3496 = vmax.f32 %v3432, 0.0
    %v3497 = vmax.f32 %v3433, 0.0
    %v3498 = vld [vmem:[%s3] sm:$0xff]
    %v3499 = vld [vmem:[%s3 + $0x8] sm:$0xff]
    %v3500 = vld [vmem:[%s3 + $0x10] sm:$0xff]
    %v3501 = vld [vmem:[%s3 + $0x18] sm:$0xff]
    %v3502 = vld [vmem:[%s3 + $0x20] sm:$0xff]
    %v3503 = vld [vmem:[%s3 + $0x28] sm:$0xff]
    %v3504 = vld [vmem:[%s3 + $0x30] sm:$0xff]
    %v3505 = vld [vmem:[%s3 + $0x38] sm:$0xff]
    %v3506 = vld [vmem:[%s3 + $0x40] sm:$0xff]
    %v3507 = vld [vmem:[%s3 + $0x48] sm:$0xff]
    %v3508 = vld [vmem:[%s3 + $0x50] sm:$0xff]
    %v3509 = vld [vmem:[%s3 + $0x58] sm:$0xff]
    %v3510 = vld [vmem:[%s3 + $0x60] sm:$0xff]
    %v3511 = vld [vmem:[%s3 + $0x68] sm:$0xff]
    %v3512 = vld [vmem:[%s3 + $0x70] sm:$0xff]
    %v3513 = vld [vmem:[%s3 + $0x78] sm:$0xff]
    %v3514 = vld [vmem:[%s3 + $0x80] sm:$0xff]
    %v3515 = vld [vmem:[%s3 + $0x88] sm:$0xff]
    %v3516 = vld [vmem:[%s3 + $0x90] sm:$0xff]
    %v3517 = vld [vmem:[%s3 + $0x98] sm:$0xff]
    %v3518 = vld [vmem:[%s3 + $0xa0] sm:$0xff]
    %v3519 = vld [vmem:[%s3 + $0xa8] sm:$0xff]
    %v3520 = vld [vmem:[%s3 + $0xb0] sm:$0xff]
    %v3521 = vld [vmem:[%s3 + $0xb8] sm:$0xff]
    %v3522 = vld [vmem:[%s3 + $0xc0] sm:$0xff]
    %v3523 = vld [vmem:[%s3 + $0xc8] sm:$0xff]
    %v3524 = vld [vmem:[%s3 + $0xd0] sm:$0xff]
    %v3525 = vld [vmem:[%s3 + $0xd8] sm:$0xff]
    %v3526 = vld [vmem:[%s3 + $0xe0] sm:$0xff]
    %v3527 = vld [vmem:[%s3 + $0xe8] sm:$0xff]
    %v3528 = vld [vmem:[%s3 + $0xf0] sm:$0xff]
    %v3529 = vld [vmem:[%s3 + $0xf8] sm:$0xff]
    %v3530 = vld [vmem:[%s3 + $0x100] sm:$0xff]
    %v3531 = vld [vmem:[%s3 + $0x108] sm:$0xff]
    %v3532 = vld [vmem:[%s3 + $0x110] sm:$0xff]
    %v3533 = vld [vmem:[%s3 + $0x118] sm:$0xff]
    %v3534 = vld [vmem:[%s3 + $0x120] sm:$0xff]
    %v3535 = vld [vmem:[%s3 + $0x128] sm:$0xff]
    %v3536 = vld [vmem:[%s3 + $0x130] sm:$0xff]
    %v3537 = vld [vmem:[%s3 + $0x138] sm:$0xff]
    %v3538 = vld [vmem:[%s3 + $0x140] sm:$0xff]
    %v3539 = vld [vmem:[%s3 + $0x148] sm:$0xff]
    %v3540 = vld [vmem:[%s3 + $0x150] sm:$0xff]
    %v3541 = vld [vmem:[%s3 + $0x158] sm:$0xff]
    %v3542 = vld [vmem:[%s3 + $0x160] sm:$0xff]
    %v3543 = vld [vmem:[%s3 + $0x168] sm:$0xff]
    %v3544 = vld [vmem:[%s3 + $0x170] sm:$0xff]
    %v3545 = vld [vmem:[%s3 + $0x178] sm:$0xff]
    %v3546 = vld [vmem:[%s3 + $0x180] sm:$0xff]
    %v3547 = vld [vmem:[%s3 + $0x188] sm:$0xff]
    %v3548 = vld [vmem:[%s3 + $0x190] sm:$0xff]
    %v3549 = vld [vmem:[%s3 + $0x198] sm:$0xff]
    %v3550 = vld [vmem:[%s3 + $0x1a0] sm:$0xff]
    %v3551 = vld [vmem:[%s3 + $0x1a8] sm:$0xff]
    %v3552 = vld [vmem:[%s3 + $0x1b0] sm:$0xff]
    %v3553 = vld [vmem:[%s3 + $0x1b8] sm:$0xff]
    %v3554 = vld [vmem:[%s3 + $0x1c0] sm:$0xff]
    %v3555 = vld [vmem:[%s3 + $0x1c8] sm:$0xff]
    %v3556 = vld [vmem:[%s3 + $0x1d0] sm:$0xff]
    %v3557 = vld [vmem:[%s3 + $0x1d8] sm:$0xff]
    %v3558 = vld [vmem:[%s3 + $0x1e0] sm:$0xff]
    %v3559 = vld [vmem:[%s3 + $0x1e8] sm:$0xff]
    %v3560 = vld [vmem:[%s3 + $0x1f0] sm:$0xff]
    %v3561 = vld [vmem:[%s3 + $0x1f8] sm:$0xff]
    %s3562 = scalar_lea.vmem %s5, 4
    %v3563 = vld [vmem:[%s3562] ss:$8 sm:$0x3]
    %v3565 = vperm.slane %v3563, 0
    %v3566 = vperm.slane %v3563, 1
    %3569 = vmatpush.msra.mxu0 %v3528
    %3570 = vmatpush.msra.mxu0 %v3526
    %3571 = vmatpush.msra.mxu0 %v3524
    %3572 = vmatpush.msra.mxu0 %v3522
    %3573 = vmatpush.msra.mxu0 %v3520
    %3574 = vmatpush.msra.mxu0 %v3518
    %3575 = vmatpush.msra.mxu0 %v3516
    %3576 = vmatpush.msra.mxu0 %v3514
    %3577 = vmatpush.msra.mxu0 %v3512
    %3578 = vmatpush.msra.mxu0 %v3510
    %3579 = vmatpush.msra.mxu0 %v3508
    %3580 = vmatpush.msra.mxu0 %v3506
    %3581 = vmatpush.msra.mxu0 %v3504
    %3582 = vmatpush.msra.mxu0 %v3502
    %3583 = vmatpush.msra.mxu0 %v3500
    %3584 = vmatpush.msra.mxu0 %v3498
    %3585 = vmatmul.f32.gmra.mxu0 %v3434
    %v3586 = vpop.f32.mrf.mxu0
    %v3587 = vadd.f32 %v3565, %v3586
    %3588 = vmatmul.f32.gmra.mxu0 %v3436
    %v3589 = vpop.f32.mrf.mxu0
    %v3590 = vadd.f32 %v3565, %v3589
    %3591 = vmatmul.f32.gmra.mxu0 %v3438
    %v3592 = vpop.f32.mrf.mxu0
    %v3593 = vadd.f32 %v3565, %v3592
    %3594 = vmatmul.f32.gmra.mxu0 %v3440
    %v3595 = vpop.f32.mrf.mxu0
    %v3596 = vadd.f32 %v3565, %v3595
    %3597 = vmatmul.f32.gmra.mxu0 %v3442
    %v3598 = vpop.f32.mrf.mxu0
    %v3599 = vadd.f32 %v3565, %v3598
    %3600 = vmatmul.f32.gmra.mxu0 %v3444
    %v3601 = vpop.f32.mrf.mxu0
    %v3602 = vadd.f32 %v3565, %v3601
    %3603 = vmatmul.f32.gmra.mxu0 %v3446
    %v3604 = vpop.f32.mrf.mxu0
    %v3605 = vadd.f32 %v3565, %v3604
    %3606 = vmatmul.f32.gmra.mxu0 %v3448
    %v3607 = vpop.f32.mrf.mxu0
    %v3608 = vadd.f32 %v3565, %v3607
    %3609 = vmatmul.f32.gmra.mxu0 %v3450
    %v3610 = vpop.f32.mrf.mxu0
    %v3611 = vadd.f32 %v3565, %v3610
    %3612 = vmatmul.f32.gmra.mxu0 %v3452
    %v3613 = vpop.f32.mrf.mxu0
    %v3614 = vadd.f32 %v3565, %v3613
    %3615 = vmatmul.f32.gmra.mxu0 %v3454
    %v3616 = vpop.f32.mrf.mxu0
    %v3617 = vadd.f32 %v3565, %v3616
    %3618 = vmatmul.f32.gmra.mxu0 %v3456
    %v3619 = vpop.f32.mrf.mxu0
    %v3620 = vadd.f32 %v3565, %v3619
    %3621 = vmatmul.f32.gmra.mxu0 %v3458
    %v3622 = vpop.f32.mrf.mxu0
    %v3623 = vadd.f32 %v3565, %v3622
    %3624 = vmatmul.f32.gmra.mxu0 %v3460
    %v3625 = vpop.f32.mrf.mxu0
    %v3626 = vadd.f32 %v3565, %v3625
    %3627 = vmatmul.f32.gmra.mxu0 %v3462
    %v3628 = vpop.f32.mrf.mxu0
    %v3629 = vadd.f32 %v3565, %v3628
    %3630 = vmatmul.f32.gmra.mxu0 %v3464
    %v3631 = vpop.f32.mrf.mxu0
    %v3632 = vadd.f32 %v3565, %v3631
    %3633 = vmatmul.f32.gmra.mxu0 %v3466
    %v3634 = vpop.f32.mrf.mxu0
    %v3635 = vadd.f32 %v3565, %v3634
    %3636 = vmatmul.f32.gmra.mxu0 %v3468
    %v3637 = vpop.f32.mrf.mxu0
    %v3638 = vadd.f32 %v3565, %v3637
    %3639 = vmatmul.f32.gmra.mxu0 %v3470
    %v3640 = vpop.f32.mrf.mxu0
    %v3641 = vadd.f32 %v3565, %v3640
    %3642 = vmatmul.f32.gmra.mxu0 %v3472
    %v3643 = vpop.f32.mrf.mxu0
    %v3644 = vadd.f32 %v3565, %v3643
    %3645 = vmatmul.f32.gmra.mxu0 %v3474
    %v3646 = vpop.f32.mrf.mxu0
    %v3647 = vadd.f32 %v3565, %v3646
    %3648 = vmatmul.f32.gmra.mxu0 %v3476
    %v3649 = vpop.f32.mrf.mxu0
    %v3650 = vadd.f32 %v3565, %v3649
    %3651 = vmatmul.f32.gmra.mxu0 %v3478
    %v3652 = vpop.f32.mrf.mxu0
    %v3653 = vadd.f32 %v3565, %v3652
    %3654 = vmatmul.f32.gmra.mxu0 %v3480
    %v3655 = vpop.f32.mrf.mxu0
    %v3656 = vadd.f32 %v3565, %v3655
    %3657 = vmatmul.f32.gmra.mxu0 %v3482
    %v3658 = vpop.f32.mrf.mxu0
    %v3659 = vadd.f32 %v3565, %v3658
    %3660 = vmatmul.f32.gmra.mxu0 %v3484
    %v3661 = vpop.f32.mrf.mxu0
    %v3662 = vadd.f32 %v3565, %v3661
    %3663 = vmatmul.f32.gmra.mxu0 %v3486
    %v3664 = vpop.f32.mrf.mxu0
    %v3665 = vadd.f32 %v3565, %v3664
    %3666 = vmatmul.f32.gmra.mxu0 %v3488
    %v3667 = vpop.f32.mrf.mxu0
    %v3668 = vadd.f32 %v3565, %v3667
    %3669 = vmatmul.f32.gmra.mxu0 %v3490
    %v3670 = vpop.f32.mrf.mxu0
    %v3671 = vadd.f32 %v3565, %v3670
    %3672 = vmatmul.f32.gmra.mxu0 %v3492
    %v3673 = vpop.f32.mrf.mxu0
    %v3674 = vadd.f32 %v3565, %v3673
    %3675 = vmatmul.f32.gmra.mxu0 %v3494
    %v3676 = vpop.f32.mrf.mxu0
    %v3677 = vadd.f32 %v3565, %v3676
    %3678 = vmatmul.f32.gmra.mxu0 %v3496
    %v3679 = vpop.f32.mrf.mxu0
    %v3680 = vadd.f32 %v3565, %v3679
    %3681 = vdwg.mxu0
    %3682 = vmatpush.msra.mxu0 %v3560
    %3683 = vmatpush.msra.mxu0 %v3558
    %3684 = vmatpush.msra.mxu0 %v3556
    %3685 = vmatpush.msra.mxu0 %v3554
    %3686 = vmatpush.msra.mxu0 %v3552
    %3687 = vmatpush.msra.mxu0 %v3550
    %3688 = vmatpush.msra.mxu0 %v3548
    %3689 = vmatpush.msra.mxu0 %v3546
    %3690 = vmatpush.msra.mxu0 %v3544
    %3691 = vmatpush.msra.mxu0 %v3542
    %3692 = vmatpush.msra.mxu0 %v3540
    %3693 = vmatpush.msra.mxu0 %v3538
    %3694 = vmatpush.msra.mxu0 %v3536
    %3695 = vmatpush.msra.mxu0 %v3534
    %3696 = vmatpush.msra.mxu0 %v3532
    %3697 = vmatpush.msra.mxu0 %v3530
    %3698 = vmatmul.f32.gmra.mxu0 %v3435
    %v3699 = vpop.f32.mrf.mxu0
    %v3700 = vadd.f32 %v3587, %v3699
    %3701 = vmatmul.f32.gmra.mxu0 %v3437
    %v3702 = vpop.f32.mrf.mxu0
    %v3703 = vadd.f32 %v3590, %v3702
    %3704 = vmatmul.f32.gmra.mxu0 %v3439
    %v3705 = vpop.f32.mrf.mxu0
    %v3706 = vadd.f32 %v3593, %v3705
    %3707 = vmatmul.f32.gmra.mxu0 %v3441
    %v3708 = vpop.f32.mrf.mxu0
    %v3709 = vadd.f32 %v3596, %v3708
    %3710 = vmatmul.f32.gmra.mxu0 %v3443
    %v3711 = vpop.f32.mrf.mxu0
    %v3712 = vadd.f32 %v3599, %v3711
    %3713 = vmatmul.f32.gmra.mxu0 %v3445
    %v3714 = vpop.f32.mrf.mxu0
    %v3715 = vadd.f32 %v3602, %v3714
    %3716 = vmatmul.f32.gmra.mxu0 %v3447
    %v3717 = vpop.f32.mrf.mxu0
    %v3718 = vadd.f32 %v3605, %v3717
    %3719 = vmatmul.f32.gmra.mxu0 %v3449
    %v3720 = vpop.f32.mrf.mxu0
    %v3721 = vadd.f32 %v3608, %v3720
    %3722 = vmatmul.f32.gmra.mxu0 %v3451
    %v3723 = vpop.f32.mrf.mxu0
    %v3724 = vadd.f32 %v3611, %v3723
    %3725 = vmatmul.f32.gmra.mxu0 %v3453
    %v3726 = vpop.f32.mrf.mxu0
    %v3727 = vadd.f32 %v3614, %v3726
    %3728 = vmatmul.f32.gmra.mxu0 %v3455
    %v3729 = vpop.f32.mrf.mxu0
    %v3730 = vadd.f32 %v3617, %v3729
    %3731 = vmatmul.f32.gmra.mxu0 %v3457
    %v3732 = vpop.f32.mrf.mxu0
    %v3733 = vadd.f32 %v3620, %v3732
    %3734 = vmatmul.f32.gmra.mxu0 %v3459
    %v3735 = vpop.f32.mrf.mxu0
    %v3736 = vadd.f32 %v3623, %v3735
    %3737 = vmatmul.f32.gmra.mxu0 %v3461
    %v3738 = vpop.f32.mrf.mxu0
    %v3739 = vadd.f32 %v3626, %v3738
    %3740 = vmatmul.f32.gmra.mxu0 %v3463
    %v3741 = vpop.f32.mrf.mxu0
    %v3742 = vadd.f32 %v3629, %v3741
    %3743 = vmatmul.f32.gmra.mxu0 %v3465
    %v3744 = vpop.f32.mrf.mxu0
    %v3745 = vadd.f32 %v3632, %v3744
    %3746 = vmatmul.f32.gmra.mxu0 %v3467
    %v3747 = vpop.f32.mrf.mxu0
    %v3748 = vadd.f32 %v3635, %v3747
    %3749 = vmatmul.f32.gmra.mxu0 %v3469
    %v3750 = vpop.f32.mrf.mxu0
    %v3751 = vadd.f32 %v3638, %v3750
    %3752 = vmatmul.f32.gmra.mxu0 %v3471
    %v3753 = vpop.f32.mrf.mxu0
    %v3754 = vadd.f32 %v3641, %v3753
    %3755 = vmatmul.f32.gmra.mxu0 %v3473
    %v3756 = vpop.f32.mrf.mxu0
    %v3757 = vadd.f32 %v3644, %v3756
    %3758 = vmatmul.f32.gmra.mxu0 %v3475
    %v3759 = vpop.f32.mrf.mxu0
    %v3760 = vadd.f32 %v3647, %v3759
    %3761 = vmatmul.f32.gmra.mxu0 %v3477
    %v3762 = vpop.f32.mrf.mxu0
    %v3763 = vadd.f32 %v3650, %v3762
    %3764 = vmatmul.f32.gmra.mxu0 %v3479
    %v3765 = vpop.f32.mrf.mxu0
    %v3766 = vadd.f32 %v3653, %v3765
    %3767 = vmatmul.f32.gmra.mxu0 %v3481
    %v3768 = vpop.f32.mrf.mxu0
    %v3769 = vadd.f32 %v3656, %v3768
    %3770 = vmatmul.f32.gmra.mxu0 %v3483
    %v3771 = vpop.f32.mrf.mxu0
    %v3772 = vadd.f32 %v3659, %v3771
    %3773 = vmatmul.f32.gmra.mxu0 %v3485
    %v3774 = vpop.f32.mrf.mxu0
    %v3775 = vadd.f32 %v3662, %v3774
    %3776 = vmatmul.f32.gmra.mxu0 %v3487
    %v3777 = vpop.f32.mrf.mxu0
    %v3778 = vadd.f32 %v3665, %v3777
    %3779 = vmatmul.f32.gmra.mxu0 %v3489
    %v3780 = vpop.f32.mrf.mxu0
    %v3781 = vadd.f32 %v3668, %v3780
    %3782 = vmatmul.f32.gmra.mxu0 %v3491
    %v3783 = vpop.f32.mrf.mxu0
    %v3784 = vadd.f32 %v3671, %v3783
    %3785 = vmatmul.f32.gmra.mxu0 %v3493
    %v3786 = vpop.f32.mrf.mxu0
    %v3787 = vadd.f32 %v3674, %v3786
    %3788 = vmatmul.f32.gmra.mxu0 %v3495
    %v3789 = vpop.f32.mrf.mxu0
    %v3790 = vadd.f32 %v3677, %v3789
    %3791 = vmatmul.f32.gmra.mxu0 %v3497
    %v3792 = vpop.f32.mrf.mxu0
    %v3793 = vadd.f32 %v3680, %v3792
    %3794 = vdwg.mxu0
    %3795 = vmatpush.msra.mxu0 %v3529
    %3796 = vmatpush.msra.mxu0 %v3527
    %3797 = vmatpush.msra.mxu0 %v3525
    %3798 = vmatpush.msra.mxu0 %v3523
    %3799 = vmatpush.msra.mxu0 %v3521
    %3800 = vmatpush.msra.mxu0 %v3519
    %3801 = vmatpush.msra.mxu0 %v3517
    %3802 = vmatpush.msra.mxu0 %v3515
    %3803 = vmatpush.msra.mxu0 %v3513
    %3804 = vmatpush.msra.mxu0 %v3511
    %3805 = vmatpush.msra.mxu0 %v3509
    %3806 = vmatpush.msra.mxu0 %v3507
    %3807 = vmatpush.msra.mxu0 %v3505
    %3808 = vmatpush.msra.mxu0 %v3503
    %3809 = vmatpush.msra.mxu0 %v3501
    %3810 = vmatpush.msra.mxu0 %v3499
    %3811 = vmatmul.f32.gmra.mxu0 %v3434
    %v3812 = vpop.f32.mrf.mxu0
    %v3813 = vadd.f32 %v3566, %v3812
    %3814 = vmatmul.f32.gmra.mxu0 %v3436
    %v3815 = vpop.f32.mrf.mxu0
    %v3816 = vadd.f32 %v3566, %v3815
    %3817 = vmatmul.f32.gmra.mxu0 %v3438
    %v3818 = vpop.f32.mrf.mxu0
    %v3819 = vadd.f32 %v3566, %v3818
    %3820 = vmatmul.f32.gmra.mxu0 %v3440
    %v3821 = vpop.f32.mrf.mxu0
    %v3822 = vadd.f32 %v3566, %v3821
    %3823 = vmatmul.f32.gmra.mxu0 %v3442
    %v3824 = vpop.f32.mrf.mxu0
    %v3825 = vadd.f32 %v3566, %v3824
    %3826 = vmatmul.f32.gmra.mxu0 %v3444
    %v3827 = vpop.f32.mrf.mxu0
    %v3828 = vadd.f32 %v3566, %v3827
    %3829 = vmatmul.f32.gmra.mxu0 %v3446
    %v3830 = vpop.f32.mrf.mxu0
    %v3831 = vadd.f32 %v3566, %v3830
    %3832 = vmatmul.f32.gmra.mxu0 %v3448
    %v3833 = vpop.f32.mrf.mxu0
    %v3834 = vadd.f32 %v3566, %v3833
    %3835 = vmatmul.f32.gmra.mxu0 %v3450
    %v3836 = vpop.f32.mrf.mxu0
    %v3837 = vadd.f32 %v3566, %v3836
    %3838 = vmatmul.f32.gmra.mxu0 %v3452
    %v3839 = vpop.f32.mrf.mxu0
    %v3840 = vadd.f32 %v3566, %v3839
    %3841 = vmatmul.f32.gmra.mxu0 %v3454
    %v3842 = vpop.f32.mrf.mxu0
    %v3843 = vadd.f32 %v3566, %v3842
    %3844 = vmatmul.f32.gmra.mxu0 %v3456
    %v3845 = vpop.f32.mrf.mxu0
    %v3846 = vadd.f32 %v3566, %v3845
    %3847 = vmatmul.f32.gmra.mxu0 %v3458
    %v3848 = vpop.f32.mrf.mxu0
    %v3849 = vadd.f32 %v3566, %v3848
    %3850 = vmatmul.f32.gmra.mxu0 %v3460
    %v3851 = vpop.f32.mrf.mxu0
    %v3852 = vadd.f32 %v3566, %v3851
    %3853 = vmatmul.f32.gmra.mxu0 %v3462
    %v3854 = vpop.f32.mrf.mxu0
    %v3855 = vadd.f32 %v3566, %v3854
    %3856 = vmatmul.f32.gmra.mxu0 %v3464
    %v3857 = vpop.f32.mrf.mxu0
    %v3858 = vadd.f32 %v3566, %v3857
    %3859 = vmatmul.f32.gmra.mxu0 %v3466
    %v3860 = vpop.f32.mrf.mxu0
    %v3861 = vadd.f32 %v3566, %v3860
    %3862 = vmatmul.f32.gmra.mxu0 %v3468
    %v3863 = vpop.f32.mrf.mxu0
    %v3864 = vadd.f32 %v3566, %v3863
    %3865 = vmatmul.f32.gmra.mxu0 %v3470
    %v3866 = vpop.f32.mrf.mxu0
    %v3867 = vadd.f32 %v3566, %v3866
    %3868 = vmatmul.f32.gmra.mxu0 %v3472
    %v3869 = vpop.f32.mrf.mxu0
    %v3870 = vadd.f32 %v3566, %v3869
    %3871 = vmatmul.f32.gmra.mxu0 %v3474
    %v3872 = vpop.f32.mrf.mxu0
    %v3873 = vadd.f32 %v3566, %v3872
    %3874 = vmatmul.f32.gmra.mxu0 %v3476
    %v3875 = vpop.f32.mrf.mxu0
    %v3876 = vadd.f32 %v3566, %v3875
    %3877 = vmatmul.f32.gmra.mxu0 %v3478
    %v3878 = vpop.f32.mrf.mxu0
    %v3879 = vadd.f32 %v3566, %v3878
    %3880 = vmatmul.f32.gmra.mxu0 %v3480
    %v3881 = vpop.f32.mrf.mxu0
    %v3882 = vadd.f32 %v3566, %v3881
    %3883 = vmatmul.f32.gmra.mxu0 %v3482
    %v3884 = vpop.f32.mrf.mxu0
    %v3885 = vadd.f32 %v3566, %v3884
    %3886 = vmatmul.f32.gmra.mxu0 %v3484
    %v3887 = vpop.f32.mrf.mxu0
    %v3888 = vadd.f32 %v3566, %v3887
    %3889 = vmatmul.f32.gmra.mxu0 %v3486
    %v3890 = vpop.f32.mrf.mxu0
    %v3891 = vadd.f32 %v3566, %v3890
    %3892 = vmatmul.f32.gmra.mxu0 %v3488
    %v3893 = vpop.f32.mrf.mxu0
    %v3894 = vadd.f32 %v3566, %v3893
    %3895 = vmatmul.f32.gmra.mxu0 %v3490
    %v3896 = vpop.f32.mrf.mxu0
    %v3897 = vadd.f32 %v3566, %v3896
    %3898 = vmatmul.f32.gmra.mxu0 %v3492
    %v3899 = vpop.f32.mrf.mxu0
    %v3900 = vadd.f32 %v3566, %v3899
    %3901 = vmatmul.f32.gmra.mxu0 %v3494
    %v3902 = vpop.f32.mrf.mxu0
    %v3903 = vadd.f32 %v3566, %v3902
    %3904 = vmatmul.f32.gmra.mxu0 %v3496
    %v3905 = vpop.f32.mrf.mxu0
    %v3906 = vadd.f32 %v3566, %v3905
    %3907 = vdwg.mxu0
    %3908 = vmatpush.msra.mxu0 %v3561
    %3909 = vmatpush.msra.mxu0 %v3559
    %3910 = vmatpush.msra.mxu0 %v3557
    %3911 = vmatpush.msra.mxu0 %v3555
    %3912 = vmatpush.msra.mxu0 %v3553
    %3913 = vmatpush.msra.mxu0 %v3551
    %3914 = vmatpush.msra.mxu0 %v3549
    %3915 = vmatpush.msra.mxu0 %v3547
    %3916 = vmatpush.msra.mxu0 %v3545
    %3917 = vmatpush.msra.mxu0 %v3543
    %3918 = vmatpush.msra.mxu0 %v3541
    %3919 = vmatpush.msra.mxu0 %v3539
    %3920 = vmatpush.msra.mxu0 %v3537
    %3921 = vmatpush.msra.mxu0 %v3535
    %3922 = vmatpush.msra.mxu0 %v3533
    %3923 = vmatpush.msra.mxu0 %v3531
    %3924 = vmatmul.f32.gmra.mxu0 %v3435
    %v3925 = vpop.f32.mrf.mxu0
    %v3926 = vadd.f32 %v3813, %v3925
    %3927 = vmatmul.f32.gmra.mxu0 %v3437
    %v3928 = vpop.f32.mrf.mxu0
    %v3929 = vadd.f32 %v3816, %v3928
    %3930 = vmatmul.f32.gmra.mxu0 %v3439
    %v3931 = vpop.f32.mrf.mxu0
    %v3932 = vadd.f32 %v3819, %v3931
    %3933 = vmatmul.f32.gmra.mxu0 %v3441
    %v3934 = vpop.f32.mrf.mxu0
    %v3935 = vadd.f32 %v3822, %v3934
    %3936 = vmatmul.f32.gmra.mxu0 %v3443
    %v3937 = vpop.f32.mrf.mxu0
    %v3938 = vadd.f32 %v3825, %v3937
    %3939 = vmatmul.f32.gmra.mxu0 %v3445
    %v3940 = vpop.f32.mrf.mxu0
    %v3941 = vadd.f32 %v3828, %v3940
    %3942 = vmatmul.f32.gmra.mxu0 %v3447
    %v3943 = vpop.f32.mrf.mxu0
    %v3944 = vadd.f32 %v3831, %v3943
    %3945 = vmatmul.f32.gmra.mxu0 %v3449
    %v3946 = vpop.f32.mrf.mxu0
    %v3947 = vadd.f32 %v3834, %v3946
    %3948 = vmatmul.f32.gmra.mxu0 %v3451
    %v3949 = vpop.f32.mrf.mxu0
    %v3950 = vadd.f32 %v3837, %v3949
    %3951 = vmatmul.f32.gmra.mxu0 %v3453
    %v3952 = vpop.f32.mrf.mxu0
    %v3953 = vadd.f32 %v3840, %v3952
    %3954 = vmatmul.f32.gmra.mxu0 %v3455
    %v3955 = vpop.f32.mrf.mxu0
    %v3956 = vadd.f32 %v3843, %v3955
    %3957 = vmatmul.f32.gmra.mxu0 %v3457
    %v3958 = vpop.f32.mrf.mxu0
    %v3959 = vadd.f32 %v3846, %v3958
    %3960 = vmatmul.f32.gmra.mxu0 %v3459
    %v3961 = vpop.f32.mrf.mxu0
    %v3962 = vadd.f32 %v3849, %v3961
    %3963 = vmatmul.f32.gmra.mxu0 %v3461
    %v3964 = vpop.f32.mrf.mxu0
    %v3965 = vadd.f32 %v3852, %v3964
    %3966 = vmatmul.f32.gmra.mxu0 %v3463
    %v3967 = vpop.f32.mrf.mxu0
    %v3968 = vadd.f32 %v3855, %v3967
    %3969 = vmatmul.f32.gmra.mxu0 %v3465
    %v3970 = vpop.f32.mrf.mxu0
    %v3971 = vadd.f32 %v3858, %v3970
    %3972 = vmatmul.f32.gmra.mxu0 %v3467
    %v3973 = vpop.f32.mrf.mxu0
    %v3974 = vadd.f32 %v3861, %v3973
    %3975 = vmatmul.f32.gmra.mxu0 %v3469
    %v3976 = vpop.f32.mrf.mxu0
    %v3977 = vadd.f32 %v3864, %v3976
    %3978 = vmatmul.f32.gmra.mxu0 %v3471
    %v3979 = vpop.f32.mrf.mxu0
    %v3980 = vadd.f32 %v3867, %v3979
    %3981 = vmatmul.f32.gmra.mxu0 %v3473
    %v3982 = vpop.f32.mrf.mxu0
    %v3983 = vadd.f32 %v3870, %v3982
    %3984 = vmatmul.f32.gmra.mxu0 %v3475
    %v3985 = vpop.f32.mrf.mxu0
    %v3986 = vadd.f32 %v3873, %v3985
    %3987 = vmatmul.f32.gmra.mxu0 %v3477
    %v3988 = vpop.f32.mrf.mxu0
    %v3989 = vadd.f32 %v3876, %v3988
    %3990 = vmatmul.f32.gmra.mxu0 %v3479
    %v3991 = vpop.f32.mrf.mxu0
    %v3992 = vadd.f32 %v3879, %v3991
    %3993 = vmatmul.f32.gmra.mxu0 %v3481
    %v3994 = vpop.f32.mrf.mxu0
    %v3995 = vadd.f32 %v3882, %v3994
    %3996 = vmatmul.f32.gmra.mxu0 %v3483
    %v3997 = vpop.f32.mrf.mxu0
    %v3998 = vadd.f32 %v3885, %v3997
    %3999 = vmatmul.f32.gmra.mxu0 %v3485
    %v4000 = vpop.f32.mrf.mxu0
    %v4001 = vadd.f32 %v3888, %v4000
    %4002 = vmatmul.f32.gmra.mxu0 %v3487
    %v4003 = vpop.f32.mrf.mxu0
    %v4004 = vadd.f32 %v3891, %v4003
    %4005 = vmatmul.f32.gmra.mxu0 %v3489
    %v4006 = vpop.f32.mrf.mxu0
    %v4007 = vadd.f32 %v3894, %v4006
    %4008 = vmatmul.f32.gmra.mxu0 %v3491
    %v4009 = vpop.f32.mrf.mxu0
    %v4010 = vadd.f32 %v3897, %v4009
    %4011 = vmatmul.f32.gmra.mxu0 %v3493
    %v4012 = vpop.f32.mrf.mxu0
    %v4013 = vadd.f32 %v3900, %v4012
    %4014 = vmatmul.f32.gmra.mxu0 %v3495
    %v4015 = vpop.f32.mrf.mxu0
    %v4016 = vadd.f32 %v3903, %v4015
    %4017 = vmatmul.f32.gmra.mxu0 %v3497
    %v4018 = vpop.f32.mrf.mxu0
    %v4019 = vadd.f32 %v3906, %v4018
    %4020 = vdwg.mxu0
    %s4021 = scalar_lea.vmem %s5, 5
    %v4022 = vld [vmem:[%s4021] ss:$8 sm:$0x3]
    %s4023 = scalar_lea.vmem %s5, 6
    %v4024 = vld [vmem:[%s4023] ss:$8 sm:$0x3]
    %v4025 = vadd.f32 %v3700, %v3703
    %v4026 = vadd.f32 %v4025, %v3706
    %v4027 = vadd.f32 %v4026, %v3709
    %v4028 = vadd.f32 %v4027, %v3712
    %v4029 = vadd.f32 %v4028, %v3715
    %v4030 = vadd.f32 %v4029, %v3718
    %v4031 = vadd.f32 %v4030, %v3721
    %v4032 = vadd.f32 %v4031, %v3724
    %v4033 = vadd.f32 %v4032, %v3727
    %v4034 = vadd.f32 %v4033, %v3730
    %v4035 = vadd.f32 %v4034, %v3733
    %v4036 = vadd.f32 %v4035, %v3736
    %v4037 = vadd.f32 %v4036, %v3739
    %v4038 = vadd.f32 %v4037, %v3742
    %v4039 = vadd.f32 %v4038, %v3745
    %v4040 = vrot.slane %v4039, 4
    %v4041 = vadd.f32 %v4039, %v4040
    %v4042 = vrot.slane %v4041, 2
    %v4043 = vadd.f32 %v4041, %v4042
    %v4044 = vrot.slane %v4043, 1
    %v4045 = vadd.f32 %v4043, %v4044
    %v4046 = vadd.f32 %v3926, %v3929
    %v4047 = vadd.f32 %v4046, %v3932
    %v4048 = vadd.f32 %v4047, %v3935
    %v4049 = vadd.f32 %v4048, %v3938
    %v4050 = vadd.f32 %v4049, %v3941
    %v4051 = vadd.f32 %v4050, %v3944
    %v4052 = vadd.f32 %v4051, %v3947
    %v4053 = vadd.f32 %v4052, %v3950
    %v4054 = vadd.f32 %v4053, %v3953
    %v4055 = vadd.f32 %v4054, %v3956
    %v4056 = vadd.f32 %v4055, %v3959
    %v4057 = vadd.f32 %v4056, %v3962
    %v4058 = vadd.f32 %v4057, %v3965
    %v4059 = vadd.f32 %v4058, %v3968
    %v4060 = vadd.f32 %v4059, %v3971
    %v4061 = vrot.slane %v4060, 4
    %v4062 = vadd.f32 %v4060, %v4061
    %v4063 = vrot.slane %v4062, 2
    %v4064 = vadd.f32 %v4062, %v4063
    %v4065 = vrot.slane %v4064, 1
    %v4066 = vadd.f32 %v4064, %v4065
    %v4067 = vmul.f32 %v4045, %v2925
    %v4068 = vmul.f32 %v4066, %v2925
    %v4069 = vsub.f32 %v3700, %v4067
    %v4070 = vsub.f32 %v3926, %v4068
    %v4071 = vsub.f32 %v3703, %v4067
    %v4072 = vsub.f32 %v3929, %v4068
    %v4073 = vsub.f32 %v3706, %v4067
    %v4074 = vsub.f32 %v3932, %v4068
    %v4075 = vsub.f32 %v3709, %v4067
    %v4076 = vsub.f32 %v3935, %v4068
    %v4077 = vsub.f32 %v3712, %v4067
    %v4078 = vsub.f32 %v3938, %v4068
    %v4079 = vsub.f32 %v3715, %v4067
    %v4080 = vsub.f32 %v3941, %v4068
    %v4081 = vsub.f32 %v3718, %v4067
    %v4082 = vsub.f32 %v3944, %v4068
    %v4083 = vsub.f32 %v3721, %v4067
    %v4084 = vsub.f32 %v3947, %v4068
    %v4085 = vsub.f32 %v3724, %v4067
    %v4086 = vsub.f32 %v3950, %v4068
    %v4087 = vsub.f32 %v3727, %v4067
    %v4088 = vsub.f32 %v3953, %v4068
    %v4089 = vsub.f32 %v3730, %v4067
    %v4090 = vsub.f32 %v3956, %v4068
    %v4091 = vsub.f32 %v3733, %v4067
    %v4092 = vsub.f32 %v3959, %v4068
    %v4093 = vsub.f32 %v3736, %v4067
    %v4094 = vsub.f32 %v3962, %v4068
    %v4095 = vsub.f32 %v3739, %v4067
    %v4096 = vsub.f32 %v3965, %v4068
    %v4097 = vsub.f32 %v3742, %v4067
    %v4098 = vsub.f32 %v3968, %v4068
    %v4099 = vsub.f32 %v3745, %v4067
    %v4100 = vsub.f32 %v3971, %v4068
    %v4101 = vmul.f32 %v4069, %v4069
    %v4102 = vmul.f32 %v4070, %v4070
    %v4103 = vmul.f32 %v4071, %v4071
    %v4104 = vmul.f32 %v4072, %v4072
    %v4105 = vmul.f32 %v4073, %v4073
    %v4106 = vmul.f32 %v4074, %v4074
    %v4107 = vmul.f32 %v4075, %v4075
    %v4108 = vmul.f32 %v4076, %v4076
    %v4109 = vmul.f32 %v4077, %v4077
    %v4110 = vmul.f32 %v4078, %v4078
    %v4111 = vmul.f32 %v4079, %v4079
    %v4112 = vmul.f32 %v4080, %v4080
    %v4113 = vmul.f32 %v4081, %v4081
    %v4114 = vmul.f32 %v4082, %v4082
    %v4115 = vmul.f32 %v4083, %v4083
    %v4116 = vmul.f32 %v4084, %v4084
    %v4117 = vmul.f32 %v4085, %v4085
    %v4118 = vmul.f32 %v4086, %v4086
    %v4119 = vmul.f32 %v4087, %v4087
    %v4120 = vmul.f32 %v4088, %v4088
    %v4121 = vmul.f32 %v4089, %v4089
    %v4122 = vmul.f32 %v4090, %v4090
    %v4123 = vmul.f32 %v4091, %v4091
    %v4124 = vmul.f32 %v4092, %v4092
    %v4125 = vmul.f32 %v4093, %v4093
    %v4126 = vmul.f32 %v4094, %v4094
    %v4127 = vmul.f32 %v4095, %v4095
    %v4128 = vmul.f32 %v4096, %v4096
    %v4129 = vmul.f32 %v4097, %v4097
    %v4130 = vmul.f32 %v4098, %v4098
    %v4131 = vmul.f32 %v4099, %v4099
    %v4132 = vmul.f32 %v4100, %v4100
    %v4133 = vadd.f32 %v4101, %v4103
    %v4134 = vadd.f32 %v4133, %v4105
    %v4135 = vadd.f32 %v4134, %v4107
    %v4136 = vadd.f32 %v4135, %v4109
    %v4137 = vadd.f32 %v4136, %v4111
    %v4138 = vadd.f32 %v4137, %v4113
    %v4139 = vadd.f32 %v4138, %v4115
    %v4140 = vadd.f32 %v4139, %v4117
    %v4141 = vadd.f32 %v4140, %v4119
    %v4142 = vadd.f32 %v4141, %v4121
    %v4143 = vadd.f32 %v4142, %v4123
    %v4144 = vadd.f32 %v4143, %v4125
    %v4145 = vadd.f32 %v4144, %v4127
    %v4146 = vadd.f32 %v4145, %v4129
    %v4147 = vadd.f32 %v4146, %v4131
    %v4148 = vrot.slane %v4147, 4
    %v4149 = vadd.f32 %v4147, %v4148
    %v4150 = vrot.slane %v4149, 2
    %v4151 = vadd.f32 %v4149, %v4150
    %v4152 = vrot.slane %v4151, 1
    %v4153 = vadd.f32 %v4151, %v4152
    %v4154 = vadd.f32 %v4102, %v4104
    %v4155 = vadd.f32 %v4154, %v4106
    %v4156 = vadd.f32 %v4155, %v4108
    %v4157 = vadd.f32 %v4156, %v4110
    %v4158 = vadd.f32 %v4157, %v4112
    %v4159 = vadd.f32 %v4158, %v4114
    %v4160 = vadd.f32 %v4159, %v4116
    %v4161 = vadd.f32 %v4160, %v4118
    %v4162 = vadd.f32 %v4161, %v4120
    %v4163 = vadd.f32 %v4162, %v4122
    %v4164 = vadd.f32 %v4163, %v4124
    %v4165 = vadd.f32 %v4164, %v4126
    %v4166 = vadd.f32 %v4165, %v4128
    %v4167 = vadd.f32 %v4166, %v4130
    %v4168 = vadd.f32 %v4167, %v4132
    %v4169 = vrot.slane %v4168, 4
    %v4170 = vadd.f32 %v4168, %v4169
    %v4171 = vrot.slane %v4170, 2
    %v4172 = vadd.f32 %v4170, %v4171
    %v4173 = vrot.slane %v4172, 1
    %v4174 = vadd.f32 %v4172, %v4173
    %v4175 = vmul.f32 %v4153, %v2925
    %v4176 = vmul.f32 %v4174, %v2925
    %v4177 = vadd.f32 %v4175, 1e-05
    %v4178 = vadd.f32 %v4176, 1e-05
    %v4179 = vrsqrt.pop %v4177
    %v4180 = vmul.f32 %v4179, %v4177
    %v4181 = vmul.f32 %v4180, %v4179
    %v4182 = vmul.f32 0.5, %v4181
    %v4183 = vsub.f32 1.5, %v4182
    %v4184 = vmul.f32 %v4179, %v4183
    %vm4185 = vweird.f32 %v4177
    %vm4186 = vweird.f32 %v4179
    %vm4187 = vmor %vm4185, %vm4186
    %v4188 = vsel %vm4187, %v4179, %v4184
    %v4189 = vrsqrt.pop %v4178
    %v4190 = vmul.f32 %v4189, %v4178
    %v4191 = vmul.f32 %v4190, %v4189
    %v4192 = vmul.f32 0.5, %v4191
    %v4193 = vsub.f32 1.5, %v4192
    %v4194 = vmul.f32 %v4189, %v4193
    %vm4195 = vweird.f32 %v4178
    %vm4196 = vweird.f32 %v4189
    %vm4197 = vmor %vm4195, %vm4196
    %v4198 = vsel %vm4197, %v4189, %v4194
    %v4199 = vmul.f32 %v4069, %v4188
    %v4200 = vmul.f32 %v4070, %v4198
    %v4201 = vmul.f32 %v4071, %v4188
    %v4202 = vmul.f32 %v4072, %v4198
    %v4203 = vmul.f32 %v4073, %v4188
    %v4204 = vmul.f32 %v4074, %v4198
    %v4205 = vmul.f32 %v4075, %v4188
    %v4206 = vmul.f32 %v4076, %v4198
    %v4207 = vmul.f32 %v4077, %v4188
    %v4208 = vmul.f32 %v4078, %v4198
    %v4209 = vmul.f32 %v4079, %v4188
    %v4210 = vmul.f32 %v4080, %v4198
    %v4211 = vmul.f32 %v4081, %v4188
    %v4212 = vmul.f32 %v4082, %v4198
    %v4213 = vmul.f32 %v4083, %v4188
    %v4214 = vmul.f32 %v4084, %v4198
    %v4215 = vmul.f32 %v4085, %v4188
    %v4216 = vmul.f32 %v4086, %v4198
    %v4217 = vmul.f32 %v4087, %v4188
    %v4218 = vmul.f32 %v4088, %v4198
    %v4219 = vmul.f32 %v4089, %v4188
    %v4220 = vmul.f32 %v4090, %v4198
    %v4221 = vmul.f32 %v4091, %v4188
    %v4222 = vmul.f32 %v4092, %v4198
    %v4223 = vmul.f32 %v4093, %v4188
    %v4224 = vmul.f32 %v4094, %v4198
    %v4225 = vmul.f32 %v4095, %v4188
    %v4226 = vmul.f32 %v4096, %v4198
    %v4227 = vmul.f32 %v4097, %v4188
    %v4228 = vmul.f32 %v4098, %v4198
    %v4229 = vmul.f32 %v4099, %v4188
    %v4230 = vmul.f32 %v4100, %v4198
    %v4231 = vadd.f32 %v3748, %v3751
    %v4232 = vadd.f32 %v4231, %v3754
    %v4233 = vadd.f32 %v4232, %v3757
    %v4234 = vadd.f32 %v4233, %v3760
    %v4235 = vadd.f32 %v4234, %v3763
    %v4236 = vadd.f32 %v4235, %v3766
    %v4237 = vadd.f32 %v4236, %v3769
    %v4238 = vadd.f32 %v4237, %v3772
    %v4239 = vadd.f32 %v4238, %v3775
    %v4240 = vadd.f32 %v4239, %v3778
    %v4241 = vadd.f32 %v4240, %v3781
    %v4242 = vadd.f32 %v4241, %v3784
    %v4243 = vadd.f32 %v4242, %v3787
    %v4244 = vadd.f32 %v4243, %v3790
    %v4245 = vadd.f32 %v4244, %v3793
    %v4246 = vrot.slane %v4245, 4
    %v4247 = vadd.f32 %v4245, %v4246
    %v4248 = vrot.slane %v4247, 2
    %v4249 = vadd.f32 %v4247, %v4248
    %v4250 = vrot.slane %v4249, 1
    %v4251 = vadd.f32 %v4249, %v4250
    %v4252 = vadd.f32 %v3974, %v3977
    %v4253 = vadd.f32 %v4252, %v3980
    %v4254 = vadd.f32 %v4253, %v3983
    %v4255 = vadd.f32 %v4254, %v3986
    %v4256 = vadd.f32 %v4255, %v3989
    %v4257 = vadd.f32 %v4256, %v3992
    %v4258 = vadd.f32 %v4257, %v3995
    %v4259 = vadd.f32 %v4258, %v3998
    %v4260 = vadd.f32 %v4259, %v4001
    %v4261 = vadd.f32 %v4260, %v4004
    %v4262 = vadd.f32 %v4261, %v4007
    %v4263 = vadd.f32 %v4262, %v4010
    %v4264 = vadd.f32 %v4263, %v4013
    %v4265 = vadd.f32 %v4264, %v4016
    %v4266 = vadd.f32 %v4265, %v4019
    %v4267 = vrot.slane %v4266, 4
    %v4268 = vadd.f32 %v4266, %v4267
    %v4269 = vrot.slane %v4268, 2
    %v4270 = vadd.f32 %v4268, %v4269
    %v4271 = vrot.slane %v4270, 1
    %v4272 = vadd.f32 %v4270, %v4271
    %v4273 = vmul.f32 %v4251, %v2925
    %v4274 = vmul.f32 %v4272, %v2925
    %v4275 = vsub.f32 %v3748, %v4273
    %v4276 = vsub.f32 %v3974, %v4274
    %v4277 = vsub.f32 %v3751, %v4273
    %v4278 = vsub.f32 %v3977, %v4274
    %v4279 = vsub.f32 %v3754, %v4273
    %v4280 = vsub.f32 %v3980, %v4274
    %v4281 = vsub.f32 %v3757, %v4273
    %v4282 = vsub.f32 %v3983, %v4274
    %v4283 = vsub.f32 %v3760, %v4273
    %v4284 = vsub.f32 %v3986, %v4274
    %v4285 = vsub.f32 %v3763, %v4273
    %v4286 = vsub.f32 %v3989, %v4274
    %v4287 = vsub.f32 %v3766, %v4273
    %v4288 = vsub.f32 %v3992, %v4274
    %v4289 = vsub.f32 %v3769, %v4273
    %v4290 = vsub.f32 %v3995, %v4274
    %v4291 = vsub.f32 %v3772, %v4273
    %v4292 = vsub.f32 %v3998, %v4274
    %v4293 = vsub.f32 %v3775, %v4273
    %v4294 = vsub.f32 %v4001, %v4274
    %v4295 = vsub.f32 %v3778, %v4273
    %v4296 = vsub.f32 %v4004, %v4274
    %v4297 = vsub.f32 %v3781, %v4273
    %v4298 = vsub.f32 %v4007, %v4274
    %v4299 = vsub.f32 %v3784, %v4273
    %v4300 = vsub.f32 %v4010, %v4274
    %v4301 = vsub.f32 %v3787, %v4273
    %v4302 = vsub.f32 %v4013, %v4274
    %v4303 = vsub.f32 %v3790, %v4273
    %v4304 = vsub.f32 %v4016, %v4274
    %v4305 = vsub.f32 %v3793, %v4273
    %v4306 = vsub.f32 %v4019, %v4274
    %v4307 = vmul.f32 %v4275, %v4275
    %v4308 = vmul.f32 %v4276, %v4276
    %v4309 = vmul.f32 %v4277, %v4277
    %v4310 = vmul.f32 %v4278, %v4278
    %v4311 = vmul.f32 %v4279, %v4279
    %v4312 = vmul.f32 %v4280, %v4280
    %v4313 = vmul.f32 %v4281, %v4281
    %v4314 = vmul.f32 %v4282, %v4282
    %v4315 = vmul.f32 %v4283, %v4283
    %v4316 = vmul.f32 %v4284, %v4284
    %v4317 = vmul.f32 %v4285, %v4285
    %v4318 = vmul.f32 %v4286, %v4286
    %v4319 = vmul.f32 %v4287, %v4287
    %v4320 = vmul.f32 %v4288, %v4288
    %v4321 = vmul.f32 %v4289, %v4289
    %v4322 = vmul.f32 %v4290, %v4290
    %v4323 = vmul.f32 %v4291, %v4291
    %v4324 = vmul.f32 %v4292, %v4292
    %v4325 = vmul.f32 %v4293, %v4293
    %v4326 = vmul.f32 %v4294, %v4294
    %v4327 = vmul.f32 %v4295, %v4295
    %v4328 = vmul.f32 %v4296, %v4296
    %v4329 = vmul.f32 %v4297, %v4297
    %v4330 = vmul.f32 %v4298, %v4298
    %v4331 = vmul.f32 %v4299, %v4299
    %v4332 = vmul.f32 %v4300, %v4300
    %v4333 = vmul.f32 %v4301, %v4301
    %v4334 = vmul.f32 %v4302, %v4302
    %v4335 = vmul.f32 %v4303, %v4303
    %v4336 = vmul.f32 %v4304, %v4304
    %v4337 = vmul.f32 %v4305, %v4305
    %v4338 = vmul.f32 %v4306, %v4306
    %v4339 = vadd.f32 %v4307, %v4309
    %v4340 = vadd.f32 %v4339, %v4311
    %v4341 = vadd.f32 %v4340, %v4313
    %v4342 = vadd.f32 %v4341, %v4315
    %v4343 = vadd.f32 %v4342, %v4317
    %v4344 = vadd.f32 %v4343, %v4319
    %v4345 = vadd.f32 %v4344, %v4321
    %v4346 = vadd.f32 %v4345, %v4323
    %v4347 = vadd.f32 %v4346, %v4325
    %v4348 = vadd.f32 %v4347, %v4327
    %v4349 = vadd.f32 %v4348, %v4329
    %v4350 = vadd.f32 %v4349, %v4331
    %v4351 = vadd.f32 %v4350, %v4333
    %v4352 = vadd.f32 %v4351, %v4335
    %v4353 = vadd.f32 %v4352, %v4337
    %v4354 = vrot.slane %v4353, 4
    %v4355 = vadd.f32 %v4353, %v4354
    %v4356 = vrot.slane %v4355, 2
    %v4357 = vadd.f32 %v4355, %v4356
    %v4358 = vrot.slane %v4357, 1
    %v4359 = vadd.f32 %v4357, %v4358
    %v4360 = vadd.f32 %v4308, %v4310
    %v4361 = vadd.f32 %v4360, %v4312
    %v4362 = vadd.f32 %v4361, %v4314
    %v4363 = vadd.f32 %v4362, %v4316
    %v4364 = vadd.f32 %v4363, %v4318
    %v4365 = vadd.f32 %v4364, %v4320
    %v4366 = vadd.f32 %v4365, %v4322
    %v4367 = vadd.f32 %v4366, %v4324
    %v4368 = vadd.f32 %v4367, %v4326
    %v4369 = vadd.f32 %v4368, %v4328
    %v4370 = vadd.f32 %v4369, %v4330
    %v4371 = vadd.f32 %v4370, %v4332
    %v4372 = vadd.f32 %v4371, %v4334
    %v4373 = vadd.f32 %v4372, %v4336
    %v4374 = vadd.f32 %v4373, %v4338
    %v4375 = vrot.slane %v4374, 4
    %v4376 = vadd.f32 %v4374, %v4375
    %v4377 = vrot.slane %v4376, 2
    %v4378 = vadd.f32 %v4376, %v4377
    %v4379 = vrot.slane %v4378, 1
    %v4380 = vadd.f32 %v4378, %v4379
    %v4381 = vmul.f32 %v4359, %v2925
    %v4382 = vmul.f32 %v4380, %v2925
    %v4383 = vadd.f32 %v4381, 1e-05
    %v4384 = vadd.f32 %v4382, 1e-05
    %v4385 = vrsqrt.pop %v4383
    %v4386 = vmul.f32 %v4385, %v4383
    %v4387 = vmul.f32 %v4386, %v4385
    %v4388 = vmul.f32 0.5, %v4387
    %v4389 = vsub.f32 1.5, %v4388
    %v4390 = vmul.f32 %v4385, %v4389
    %vm4391 = vweird.f32 %v4383
    %vm4392 = vweird.f32 %v4385
    %vm4393 = vmor %vm4391, %vm4392
    %v4394 = vsel %vm4393, %v4385, %v4390
    %v4395 = vrsqrt.pop %v4384
    %v4396 = vmul.f32 %v4395, %v4384
    %v4397 = vmul.f32 %v4396, %v4395
    %v4398 = vmul.f32 0.5, %v4397
    %v4399 = vsub.f32 1.5, %v4398
    %v4400 = vmul.f32 %v4395, %v4399
    %vm4401 = vweird.f32 %v4384
    %vm4402 = vweird.f32 %v4395
    %vm4403 = vmor %vm4401, %vm4402
    %v4404 = vsel %vm4403, %v4395, %v4400
    %v4405 = vmul.f32 %v4275, %v4394
    %v4406 = vmul.f32 %v4276, %v4404
    %v4407 = vmul.f32 %v4277, %v4394
    %v4408 = vmul.f32 %v4278, %v4404
    %v4409 = vmul.f32 %v4279, %v4394
    %v4410 = vmul.f32 %v4280, %v4404
    %v4411 = vmul.f32 %v4281, %v4394
    %v4412 = vmul.f32 %v4282, %v4404
    %v4413 = vmul.f32 %v4283, %v4394
    %v4414 = vmul.f32 %v4284, %v4404
    %v4415 = vmul.f32 %v4285, %v4394
    %v4416 = vmul.f32 %v4286, %v4404
    %v4417 = vmul.f32 %v4287, %v4394
    %v4418 = vmul.f32 %v4288, %v4404
    %v4419 = vmul.f32 %v4289, %v4394
    %v4420 = vmul.f32 %v4290, %v4404
    %v4421 = vmul.f32 %v4291, %v4394
    %v4422 = vmul.f32 %v4292, %v4404
    %v4423 = vmul.f32 %v4293, %v4394
    %v4424 = vmul.f32 %v4294, %v4404
    %v4425 = vmul.f32 %v4295, %v4394
    %v4426 = vmul.f32 %v4296, %v4404
    %v4427 = vmul.f32 %v4297, %v4394
    %v4428 = vmul.f32 %v4298, %v4404
    %v4429 = vmul.f32 %v4299, %v4394
    %v4430 = vmul.f32 %v4300, %v4404
    %v4431 = vmul.f32 %v4301, %v4394
    %v4432 = vmul.f32 %v4302, %v4404
    %v4433 = vmul.f32 %v4303, %v4394
    %v4434 = vmul.f32 %v4304, %v4404
    %v4435 = vmul.f32 %v4305, %v4394
    %v4436 = vmul.f32 %v4306, %v4404
    %v4438 = vperm.slane %v4022, 0
    %v4439 = vperm.slane %v4022, 1
    %v4442 = vmul.f32 %v4199, %v4438
    %v4443 = vmul.f32 %v4200, %v4439
    %v4444 = vmul.f32 %v4201, %v4438
    %v4445 = vmul.f32 %v4202, %v4439
    %v4446 = vmul.f32 %v4203, %v4438
    %v4447 = vmul.f32 %v4204, %v4439
    %v4448 = vmul.f32 %v4205, %v4438
    %v4449 = vmul.f32 %v4206, %v4439
    %v4450 = vmul.f32 %v4207, %v4438
    %v4451 = vmul.f32 %v4208, %v4439
    %v4452 = vmul.f32 %v4209, %v4438
    %v4453 = vmul.f32 %v4210, %v4439
    %v4454 = vmul.f32 %v4211, %v4438
    %v4455 = vmul.f32 %v4212, %v4439
    %v4456 = vmul.f32 %v4213, %v4438
    %v4457 = vmul.f32 %v4214, %v4439
    %v4458 = vmul.f32 %v4215, %v4438
    %v4459 = vmul.f32 %v4216, %v4439
    %v4460 = vmul.f32 %v4217, %v4438
    %v4461 = vmul.f32 %v4218, %v4439
    %v4462 = vmul.f32 %v4219, %v4438
    %v4463 = vmul.f32 %v4220, %v4439
    %v4464 = vmul.f32 %v4221, %v4438
    %v4465 = vmul.f32 %v4222, %v4439
    %v4466 = vmul.f32 %v4223, %v4438
    %v4467 = vmul.f32 %v4224, %v4439
    %v4468 = vmul.f32 %v4225, %v4438
    %v4469 = vmul.f32 %v4226, %v4439
    %v4470 = vmul.f32 %v4227, %v4438
    %v4471 = vmul.f32 %v4228, %v4439
    %v4472 = vmul.f32 %v4229, %v4438
    %v4473 = vmul.f32 %v4230, %v4439
    %v4474 = vmul.f32 %v4405, %v4438
    %v4475 = vmul.f32 %v4406, %v4439
    %v4476 = vmul.f32 %v4407, %v4438
    %v4477 = vmul.f32 %v4408, %v4439
    %v4478 = vmul.f32 %v4409, %v4438
    %v4479 = vmul.f32 %v4410, %v4439
    %v4480 = vmul.f32 %v4411, %v4438
    %v4481 = vmul.f32 %v4412, %v4439
    %v4482 = vmul.f32 %v4413, %v4438
    %v4483 = vmul.f32 %v4414, %v4439
    %v4484 = vmul.f32 %v4415, %v4438
    %v4485 = vmul.f32 %v4416, %v4439
    %v4486 = vmul.f32 %v4417, %v4438
    %v4487 = vmul.f32 %v4418, %v4439
    %v4488 = vmul.f32 %v4419, %v4438
    %v4489 = vmul.f32 %v4420, %v4439
    %v4490 = vmul.f32 %v4421, %v4438
    %v4491 = vmul.f32 %v4422, %v4439
    %v4492 = vmul.f32 %v4423, %v4438
    %v4493 = vmul.f32 %v4424, %v4439
    %v4494 = vmul.f32 %v4425, %v4438
    %v4495 = vmul.f32 %v4426, %v4439
    %v4496 = vmul.f32 %v4427, %v4438
    %v4497 = vmul.f32 %v4428, %v4439
    %v4498 = vmul.f32 %v4429, %v4438
    %v4499 = vmul.f32 %v4430, %v4439
    %v4500 = vmul.f32 %v4431, %v4438
    %v4501 = vmul.f32 %v4432, %v4439
    %v4502 = vmul.f32 %v4433, %v4438
    %v4503 = vmul.f32 %v4434, %v4439
    %v4504 = vmul.f32 %v4435, %v4438
    %v4505 = vmul.f32 %v4436, %v4439
    %v4507 = vperm.slane %v4024, 0
    %v4508 = vperm.slane %v4024, 1
    %v4511 = vadd.f32 %v4442, %v4507
    %v4512 = vadd.f32 %v4443, %v4508
    %v4513 = vadd.f32 %v4444, %v4507
    %v4514 = vadd.f32 %v4445, %v4508
    %v4515 = vadd.f32 %v4446, %v4507
    %v4516 = vadd.f32 %v4447, %v4508
    %v4517 = vadd.f32 %v4448, %v4507
    %v4518 = vadd.f32 %v4449, %v4508
    %v4519 = vadd.f32 %v4450, %v4507
    %v4520 = vadd.f32 %v4451, %v4508
    %v4521 = vadd.f32 %v4452, %v4507
    %v4522 = vadd.f32 %v4453, %v4508
    %v4523 = vadd.f32 %v4454, %v4507
    %v4524 = vadd.f32 %v4455, %v4508
    %v4525 = vadd.f32 %v4456, %v4507
    %v4526 = vadd.f32 %v4457, %v4508
    %v4527 = vadd.f32 %v4458, %v4507
    %v4528 = vadd.f32 %v4459, %v4508
    %v4529 = vadd.f32 %v4460, %v4507
    %v4530 = vadd.f32 %v4461, %v4508
    %v4531 = vadd.f32 %v4462, %v4507
    %v4532 = vadd.f32 %v4463, %v4508
    %v4533 = vadd.f32 %v4464, %v4507
    %v4534 = vadd.f32 %v4465, %v4508
    %v4535 = vadd.f32 %v4466, %v4507
    %v4536 = vadd.f32 %v4467, %v4508
    %v4537 = vadd.f32 %v4468, %v4507
    %v4538 = vadd.f32 %v4469, %v4508
    %v4539 = vadd.f32 %v4470, %v4507
    %v4540 = vadd.f32 %v4471, %v4508
    %v4541 = vadd.f32 %v4472, %v4507
    %v4542 = vadd.f32 %v4473, %v4508
    %v4543 = vadd.f32 %v4474, %v4507
    %v4544 = vadd.f32 %v4475, %v4508
    %v4545 = vadd.f32 %v4476, %v4507
    %v4546 = vadd.f32 %v4477, %v4508
    %v4547 = vadd.f32 %v4478, %v4507
    %v4548 = vadd.f32 %v4479, %v4508
    %v4549 = vadd.f32 %v4480, %v4507
    %v4550 = vadd.f32 %v4481, %v4508
    %v4551 = vadd.f32 %v4482, %v4507
    %v4552 = vadd.f32 %v4483, %v4508
    %v4553 = vadd.f32 %v4484, %v4507
    %v4554 = vadd.f32 %v4485, %v4508
    %v4555 = vadd.f32 %v4486, %v4507
    %v4556 = vadd.f32 %v4487, %v4508
    %v4557 = vadd.f32 %v4488, %v4507
    %v4558 = vadd.f32 %v4489, %v4508
    %v4559 = vadd.f32 %v4490, %v4507
    %v4560 = vadd.f32 %v4491, %v4508
    %v4561 = vadd.f32 %v4492, %v4507
    %v4562 = vadd.f32 %v4493, %v4508
    %v4563 = vadd.f32 %v4494, %v4507
    %v4564 = vadd.f32 %v4495, %v4508
    %v4565 = vadd.f32 %v4496, %v4507
    %v4566 = vadd.f32 %v4497, %v4508
    %v4567 = vadd.f32 %v4498, %v4507
    %v4568 = vadd.f32 %v4499, %v4508
    %v4569 = vadd.f32 %v4500, %v4507
    %v4570 = vadd.f32 %v4501, %v4508
    %v4571 = vadd.f32 %v4502, %v4507
    %v4572 = vadd.f32 %v4503, %v4508
    %v4573 = vadd.f32 %v4504, %v4507
    %v4574 = vadd.f32 %v4505, %v4508
    %v4575 = vmax.f32 %v4511, 0.0
    %v4576 = vmax.f32 %v4512, 0.0
    %v4577 = vmax.f32 %v4513, 0.0
    %v4578 = vmax.f32 %v4514, 0.0
    %v4579 = vmax.f32 %v4515, 0.0
    %v4580 = vmax.f32 %v4516, 0.0
    %v4581 = vmax.f32 %v4517, 0.0
    %v4582 = vmax.f32 %v4518, 0.0
    %v4583 = vmax.f32 %v4519, 0.0
    %v4584 = vmax.f32 %v4520, 0.0
    %v4585 = vmax.f32 %v4521, 0.0
    %v4586 = vmax.f32 %v4522, 0.0
    %v4587 = vmax.f32 %v4523, 0.0
    %v4588 = vmax.f32 %v4524, 0.0
    %v4589 = vmax.f32 %v4525, 0.0
    %v4590 = vmax.f32 %v4526, 0.0
    %v4591 = vmax.f32 %v4527, 0.0
    %v4592 = vmax.f32 %v4528, 0.0
    %v4593 = vmax.f32 %v4529, 0.0
    %v4594 = vmax.f32 %v4530, 0.0
    %v4595 = vmax.f32 %v4531, 0.0
    %v4596 = vmax.f32 %v4532, 0.0
    %v4597 = vmax.f32 %v4533, 0.0
    %v4598 = vmax.f32 %v4534, 0.0
    %v4599 = vmax.f32 %v4535, 0.0
    %v4600 = vmax.f32 %v4536, 0.0
    %v4601 = vmax.f32 %v4537, 0.0
    %v4602 = vmax.f32 %v4538, 0.0
    %v4603 = vmax.f32 %v4539, 0.0
    %v4604 = vmax.f32 %v4540, 0.0
    %v4605 = vmax.f32 %v4541, 0.0
    %v4606 = vmax.f32 %v4542, 0.0
    %v4607 = vmax.f32 %v4543, 0.0
    %v4608 = vmax.f32 %v4544, 0.0
    %v4609 = vmax.f32 %v4545, 0.0
    %v4610 = vmax.f32 %v4546, 0.0
    %v4611 = vmax.f32 %v4547, 0.0
    %v4612 = vmax.f32 %v4548, 0.0
    %v4613 = vmax.f32 %v4549, 0.0
    %v4614 = vmax.f32 %v4550, 0.0
    %v4615 = vmax.f32 %v4551, 0.0
    %v4616 = vmax.f32 %v4552, 0.0
    %v4617 = vmax.f32 %v4553, 0.0
    %v4618 = vmax.f32 %v4554, 0.0
    %v4619 = vmax.f32 %v4555, 0.0
    %v4620 = vmax.f32 %v4556, 0.0
    %v4621 = vmax.f32 %v4557, 0.0
    %v4622 = vmax.f32 %v4558, 0.0
    %v4623 = vmax.f32 %v4559, 0.0
    %v4624 = vmax.f32 %v4560, 0.0
    %v4625 = vmax.f32 %v4561, 0.0
    %v4626 = vmax.f32 %v4562, 0.0
    %v4627 = vmax.f32 %v4563, 0.0
    %v4628 = vmax.f32 %v4564, 0.0
    %v4629 = vmax.f32 %v4565, 0.0
    %v4630 = vmax.f32 %v4566, 0.0
    %v4631 = vmax.f32 %v4567, 0.0
    %v4632 = vmax.f32 %v4568, 0.0
    %v4633 = vmax.f32 %v4569, 0.0
    %v4634 = vmax.f32 %v4570, 0.0
    %v4635 = vmax.f32 %v4571, 0.0
    %v4636 = vmax.f32 %v4572, 0.0
    %v4637 = vmax.f32 %v4573, 0.0
    %v4638 = vmax.f32 %v4574, 0.0
    %v4639 = vld [vmem:[%s4] sm:$0xff]
    %v4640 = vld [vmem:[%s4 + $0x8] sm:$0xff]
    %v4641 = vld [vmem:[%s4 + $0x10] sm:$0xff]
    %v4642 = vld [vmem:[%s4 + $0x18] sm:$0xff]
    %v4643 = vld [vmem:[%s4 + $0x20] sm:$0xff]
    %v4644 = vld [vmem:[%s4 + $0x28] sm:$0xff]
    %v4645 = vld [vmem:[%s4 + $0x30] sm:$0xff]
    %v4646 = vld [vmem:[%s4 + $0x38] sm:$0xff]
    %v4647 = vld [vmem:[%s4 + $0x40] sm:$0xff]
    %v4648 = vld [vmem:[%s4 + $0x48] sm:$0xff]
    %v4649 = vld [vmem:[%s4 + $0x50] sm:$0xff]
    %v4650 = vld [vmem:[%s4 + $0x58] sm:$0xff]
    %v4651 = vld [vmem:[%s4 + $0x60] sm:$0xff]
    %v4652 = vld [vmem:[%s4 + $0x68] sm:$0xff]
    %v4653 = vld [vmem:[%s4 + $0x70] sm:$0xff]
    %v4654 = vld [vmem:[%s4 + $0x78] sm:$0xff]
    %v4655 = vld [vmem:[%s4 + $0x80] sm:$0xff]
    %v4656 = vld [vmem:[%s4 + $0x88] sm:$0xff]
    %v4657 = vld [vmem:[%s4 + $0x90] sm:$0xff]
    %v4658 = vld [vmem:[%s4 + $0x98] sm:$0xff]
    %v4659 = vld [vmem:[%s4 + $0xa0] sm:$0xff]
    %v4660 = vld [vmem:[%s4 + $0xa8] sm:$0xff]
    %v4661 = vld [vmem:[%s4 + $0xb0] sm:$0xff]
    %v4662 = vld [vmem:[%s4 + $0xb8] sm:$0xff]
    %v4663 = vld [vmem:[%s4 + $0xc0] sm:$0xff]
    %v4664 = vld [vmem:[%s4 + $0xc8] sm:$0xff]
    %v4665 = vld [vmem:[%s4 + $0xd0] sm:$0xff]
    %v4666 = vld [vmem:[%s4 + $0xd8] sm:$0xff]
    %v4667 = vld [vmem:[%s4 + $0xe0] sm:$0xff]
    %v4668 = vld [vmem:[%s4 + $0xe8] sm:$0xff]
    %v4669 = vld [vmem:[%s4 + $0xf0] sm:$0xff]
    %v4670 = vld [vmem:[%s4 + $0xf8] sm:$0xff]
    %v4671 = vld [vmem:[%s4 + $0x100] sm:$0xff]
    %v4672 = vld [vmem:[%s4 + $0x108] sm:$0xff]
    %v4673 = vld [vmem:[%s4 + $0x110] sm:$0xff]
    %v4674 = vld [vmem:[%s4 + $0x118] sm:$0xff]
    %v4675 = vld [vmem:[%s4 + $0x120] sm:$0xff]
    %v4676 = vld [vmem:[%s4 + $0x128] sm:$0xff]
    %v4677 = vld [vmem:[%s4 + $0x130] sm:$0xff]
    %v4678 = vld [vmem:[%s4 + $0x138] sm:$0xff]
    %v4679 = vld [vmem:[%s4 + $0x140] sm:$0xff]
    %v4680 = vld [vmem:[%s4 + $0x148] sm:$0xff]
    %v4681 = vld [vmem:[%s4 + $0x150] sm:$0xff]
    %v4682 = vld [vmem:[%s4 + $0x158] sm:$0xff]
    %v4683 = vld [vmem:[%s4 + $0x160] sm:$0xff]
    %v4684 = vld [vmem:[%s4 + $0x168] sm:$0xff]
    %v4685 = vld [vmem:[%s4 + $0x170] sm:$0xff]
    %v4686 = vld [vmem:[%s4 + $0x178] sm:$0xff]
    %v4687 = vld [vmem:[%s4 + $0x180] sm:$0xff]
    %v4688 = vld [vmem:[%s4 + $0x188] sm:$0xff]
    %v4689 = vld [vmem:[%s4 + $0x190] sm:$0xff]
    %v4690 = vld [vmem:[%s4 + $0x198] sm:$0xff]
    %v4691 = vld [vmem:[%s4 + $0x1a0] sm:$0xff]
    %v4692 = vld [vmem:[%s4 + $0x1a8] sm:$0xff]
    %v4693 = vld [vmem:[%s4 + $0x1b0] sm:$0xff]
    %v4694 = vld [vmem:[%s4 + $0x1b8] sm:$0xff]
    %v4695 = vld [vmem:[%s4 + $0x1c0] sm:$0xff]
    %v4696 = vld [vmem:[%s4 + $0x1c8] sm:$0xff]
    %v4697 = vld [vmem:[%s4 + $0x1d0] sm:$0xff]
    %v4698 = vld [vmem:[%s4 + $0x1d8] sm:$0xff]
    %v4699 = vld [vmem:[%s4 + $0x1e0] sm:$0xff]
    %v4700 = vld [vmem:[%s4 + $0x1e8] sm:$0xff]
    %v4701 = vld [vmem:[%s4 + $0x1f0] sm:$0xff]
    %v4702 = vld [vmem:[%s4 + $0x1f8] sm:$0xff]
    %4703 = vmatpush.msra.mxu0 %v4669
    %4704 = vmatpush.msra.mxu0 %v4667
    %4705 = vmatpush.msra.mxu0 %v4665
    %4706 = vmatpush.msra.mxu0 %v4663
    %4707 = vmatpush.msra.mxu0 %v4661
    %4708 = vmatpush.msra.mxu0 %v4659
    %4709 = vmatpush.msra.mxu0 %v4657
    %4710 = vmatpush.msra.mxu0 %v4655
    %4711 = vmatpush.msra.mxu0 %v4653
    %4712 = vmatpush.msra.mxu0 %v4651
    %4713 = vmatpush.msra.mxu0 %v4649
    %4714 = vmatpush.msra.mxu0 %v4647
    %4715 = vmatpush.msra.mxu0 %v4645
    %4716 = vmatpush.msra.mxu0 %v4643
    %4717 = vmatpush.msra.mxu0 %v4641
    %4718 = vmatpush.msra.mxu0 %v4639
    %4719 = vmatmul.f32.gmra.mxu0 %v4575
    %v4720 = vpop.f32.mrf.mxu0
    %v4721 = vadd.f32 0.0, %v4720
    %4722 = vmatmul.f32.gmra.mxu0 %v4577
    %v4723 = vpop.f32.mrf.mxu0
    %v4724 = vadd.f32 0.0, %v4723
    %4725 = vmatmul.f32.gmra.mxu0 %v4579
    %v4726 = vpop.f32.mrf.mxu0
    %v4727 = vadd.f32 0.0, %v4726
    %4728 = vmatmul.f32.gmra.mxu0 %v4581
    %v4729 = vpop.f32.mrf.mxu0
    %v4730 = vadd.f32 0.0, %v4729
    %4731 = vmatmul.f32.gmra.mxu0 %v4583
    %v4732 = vpop.f32.mrf.mxu0
    %v4733 = vadd.f32 0.0, %v4732
    %4734 = vmatmul.f32.gmra.mxu0 %v4585
    %v4735 = vpop.f32.mrf.mxu0
    %v4736 = vadd.f32 0.0, %v4735
    %4737 = vmatmul.f32.gmra.mxu0 %v4587
    %v4738 = vpop.f32.mrf.mxu0
    %v4739 = vadd.f32 0.0, %v4738
    %4740 = vmatmul.f32.gmra.mxu0 %v4589
    %v4741 = vpop.f32.mrf.mxu0
    %v4742 = vadd.f32 0.0, %v4741
    %4743 = vmatmul.f32.gmra.mxu0 %v4591
    %v4744 = vpop.f32.mrf.mxu0
    %v4745 = vadd.f32 0.0, %v4744
    %4746 = vmatmul.f32.gmra.mxu0 %v4593
    %v4747 = vpop.f32.mrf.mxu0
    %v4748 = vadd.f32 0.0, %v4747
    %4749 = vmatmul.f32.gmra.mxu0 %v4595
    %v4750 = vpop.f32.mrf.mxu0
    %v4751 = vadd.f32 0.0, %v4750
    %4752 = vmatmul.f32.gmra.mxu0 %v4597
    %v4753 = vpop.f32.mrf.mxu0
    %v4754 = vadd.f32 0.0, %v4753
    %4755 = vmatmul.f32.gmra.mxu0 %v4599
    %v4756 = vpop.f32.mrf.mxu0
    %v4757 = vadd.f32 0.0, %v4756
    %4758 = vmatmul.f32.gmra.mxu0 %v4601
    %v4759 = vpop.f32.mrf.mxu0
    %v4760 = vadd.f32 0.0, %v4759
    %4761 = vmatmul.f32.gmra.mxu0 %v4603
    %v4762 = vpop.f32.mrf.mxu0
    %v4763 = vadd.f32 0.0, %v4762
    %4764 = vmatmul.f32.gmra.mxu0 %v4605
    %v4765 = vpop.f32.mrf.mxu0
    %v4766 = vadd.f32 0.0, %v4765
    %4767 = vmatmul.f32.gmra.mxu0 %v4607
    %v4768 = vpop.f32.mrf.mxu0
    %v4769 = vadd.f32 0.0, %v4768
    %4770 = vmatmul.f32.gmra.mxu0 %v4609
    %v4771 = vpop.f32.mrf.mxu0
    %v4772 = vadd.f32 0.0, %v4771
    %4773 = vmatmul.f32.gmra.mxu0 %v4611
    %v4774 = vpop.f32.mrf.mxu0
    %v4775 = vadd.f32 0.0, %v4774
    %4776 = vmatmul.f32.gmra.mxu0 %v4613
    %v4777 = vpop.f32.mrf.mxu0
    %v4778 = vadd.f32 0.0, %v4777
    %4779 = vmatmul.f32.gmra.mxu0 %v4615
    %v4780 = vpop.f32.mrf.mxu0
    %v4781 = vadd.f32 0.0, %v4780
    %4782 = vmatmul.f32.gmra.mxu0 %v4617
    %v4783 = vpop.f32.mrf.mxu0
    %v4784 = vadd.f32 0.0, %v4783
    %4785 = vmatmul.f32.gmra.mxu0 %v4619
    %v4786 = vpop.f32.mrf.mxu0
    %v4787 = vadd.f32 0.0, %v4786
    %4788 = vmatmul.f32.gmra.mxu0 %v4621
    %v4789 = vpop.f32.mrf.mxu0
    %v4790 = vadd.f32 0.0, %v4789
    %4791 = vmatmul.f32.gmra.mxu0 %v4623
    %v4792 = vpop.f32.mrf.mxu0
    %v4793 = vadd.f32 0.0, %v4792
    %4794 = vmatmul.f32.gmra.mxu0 %v4625
    %v4795 = vpop.f32.mrf.mxu0
    %v4796 = vadd.f32 0.0, %v4795
    %4797 = vmatmul.f32.gmra.mxu0 %v4627
    %v4798 = vpop.f32.mrf.mxu0
    %v4799 = vadd.f32 0.0, %v4798
    %4800 = vmatmul.f32.gmra.mxu0 %v4629
    %v4801 = vpop.f32.mrf.mxu0
    %v4802 = vadd.f32 0.0, %v4801
    %4803 = vmatmul.f32.gmra.mxu0 %v4631
    %v4804 = vpop.f32.mrf.mxu0
    %v4805 = vadd.f32 0.0, %v4804
    %4806 = vmatmul.f32.gmra.mxu0 %v4633
    %v4807 = vpop.f32.mrf.mxu0
    %v4808 = vadd.f32 0.0, %v4807
    %4809 = vmatmul.f32.gmra.mxu0 %v4635
    %v4810 = vpop.f32.mrf.mxu0
    %v4811 = vadd.f32 0.0, %v4810
    %4812 = vmatmul.f32.gmra.mxu0 %v4637
    %v4813 = vpop.f32.mrf.mxu0
    %v4814 = vadd.f32 0.0, %v4813
    %4815 = vdwg.mxu0
    %4816 = vmatpush.msra.mxu0 %v4701
    %4817 = vmatpush.msra.mxu0 %v4699
    %4818 = vmatpush.msra.mxu0 %v4697
    %4819 = vmatpush.msra.mxu0 %v4695
    %4820 = vmatpush.msra.mxu0 %v4693
    %4821 = vmatpush.msra.mxu0 %v4691
    %4822 = vmatpush.msra.mxu0 %v4689
    %4823 = vmatpush.msra.mxu0 %v4687
    %4824 = vmatpush.msra.mxu0 %v4685
    %4825 = vmatpush.msra.mxu0 %v4683
    %4826 = vmatpush.msra.mxu0 %v4681
    %4827 = vmatpush.msra.mxu0 %v4679
    %4828 = vmatpush.msra.mxu0 %v4677
    %4829 = vmatpush.msra.mxu0 %v4675
    %4830 = vmatpush.msra.mxu0 %v4673
    %4831 = vmatpush.msra.mxu0 %v4671
    %4832 = vmatmul.f32.gmra.mxu0 %v4576
    %v4833 = vpop.f32.mrf.mxu0
    %v4834 = vadd.f32 %v4721, %v4833
    %4835 = vmatmul.f32.gmra.mxu0 %v4578
    %v4836 = vpop.f32.mrf.mxu0
    %v4837 = vadd.f32 %v4724, %v4836
    %4838 = vmatmul.f32.gmra.mxu0 %v4580
    %v4839 = vpop.f32.mrf.mxu0
    %v4840 = vadd.f32 %v4727, %v4839
    %4841 = vmatmul.f32.gmra.mxu0 %v4582
    %v4842 = vpop.f32.mrf.mxu0
    %v4843 = vadd.f32 %v4730, %v4842
    %4844 = vmatmul.f32.gmra.mxu0 %v4584
    %v4845 = vpop.f32.mrf.mxu0
    %v4846 = vadd.f32 %v4733, %v4845
    %4847 = vmatmul.f32.gmra.mxu0 %v4586
    %v4848 = vpop.f32.mrf.mxu0
    %v4849 = vadd.f32 %v4736, %v4848
    %4850 = vmatmul.f32.gmra.mxu0 %v4588
    %v4851 = vpop.f32.mrf.mxu0
    %v4852 = vadd.f32 %v4739, %v4851
    %4853 = vmatmul.f32.gmra.mxu0 %v4590
    %v4854 = vpop.f32.mrf.mxu0
    %v4855 = vadd.f32 %v4742, %v4854
    %4856 = vmatmul.f32.gmra.mxu0 %v4592
    %v4857 = vpop.f32.mrf.mxu0
    %v4858 = vadd.f32 %v4745, %v4857
    %4859 = vmatmul.f32.gmra.mxu0 %v4594
    %v4860 = vpop.f32.mrf.mxu0
    %v4861 = vadd.f32 %v4748, %v4860
    %4862 = vmatmul.f32.gmra.mxu0 %v4596
    %v4863 = vpop.f32.mrf.mxu0
    %v4864 = vadd.f32 %v4751, %v4863
    %4865 = vmatmul.f32.gmra.mxu0 %v4598
    %v4866 = vpop.f32.mrf.mxu0
    %v4867 = vadd.f32 %v4754, %v4866
    %4868 = vmatmul.f32.gmra.mxu0 %v4600
    %v4869 = vpop.f32.mrf.mxu0
    %v4870 = vadd.f32 %v4757, %v4869
    %4871 = vmatmul.f32.gmra.mxu0 %v4602
    %v4872 = vpop.f32.mrf.mxu0
    %v4873 = vadd.f32 %v4760, %v4872
    %4874 = vmatmul.f32.gmra.mxu0 %v4604
    %v4875 = vpop.f32.mrf.mxu0
    %v4876 = vadd.f32 %v4763, %v4875
    %4877 = vmatmul.f32.gmra.mxu0 %v4606
    %v4878 = vpop.f32.mrf.mxu0
    %v4879 = vadd.f32 %v4766, %v4878
    %4880 = vmatmul.f32.gmra.mxu0 %v4608
    %v4881 = vpop.f32.mrf.mxu0
    %v4882 = vadd.f32 %v4769, %v4881
    %4883 = vmatmul.f32.gmra.mxu0 %v4610
    %v4884 = vpop.f32.mrf.mxu0
    %v4885 = vadd.f32 %v4772, %v4884
    %4886 = vmatmul.f32.gmra.mxu0 %v4612
    %v4887 = vpop.f32.mrf.mxu0
    %v4888 = vadd.f32 %v4775, %v4887
    %4889 = vmatmul.f32.gmra.mxu0 %v4614
    %v4890 = vpop.f32.mrf.mxu0
    %v4891 = vadd.f32 %v4778, %v4890
    %4892 = vmatmul.f32.gmra.mxu0 %v4616
    %v4893 = vpop.f32.mrf.mxu0
    %v4894 = vadd.f32 %v4781, %v4893
    %4895 = vmatmul.f32.gmra.mxu0 %v4618
    %v4896 = vpop.f32.mrf.mxu0
    %v4897 = vadd.f32 %v4784, %v4896
    %4898 = vmatmul.f32.gmra.mxu0 %v4620
    %v4899 = vpop.f32.mrf.mxu0
    %v4900 = vadd.f32 %v4787, %v4899
    %4901 = vmatmul.f32.gmra.mxu0 %v4622
    %v4902 = vpop.f32.mrf.mxu0
    %v4903 = vadd.f32 %v4790, %v4902
    %4904 = vmatmul.f32.gmra.mxu0 %v4624
    %v4905 = vpop.f32.mrf.mxu0
    %v4906 = vadd.f32 %v4793, %v4905
    %4907 = vmatmul.f32.gmra.mxu0 %v4626
    %v4908 = vpop.f32.mrf.mxu0
    %v4909 = vadd.f32 %v4796, %v4908
    %4910 = vmatmul.f32.gmra.mxu0 %v4628
    %v4911 = vpop.f32.mrf.mxu0
    %v4912 = vadd.f32 %v4799, %v4911
    %4913 = vmatmul.f32.gmra.mxu0 %v4630
    %v4914 = vpop.f32.mrf.mxu0
    %v4915 = vadd.f32 %v4802, %v4914
    %4916 = vmatmul.f32.gmra.mxu0 %v4632
    %v4917 = vpop.f32.mrf.mxu0
    %v4918 = vadd.f32 %v4805, %v4917
    %4919 = vmatmul.f32.gmra.mxu0 %v4634
    %v4920 = vpop.f32.mrf.mxu0
    %v4921 = vadd.f32 %v4808, %v4920
    %4922 = vmatmul.f32.gmra.mxu0 %v4636
    %v4923 = vpop.f32.mrf.mxu0
    %v4924 = vadd.f32 %v4811, %v4923
    %4925 = vmatmul.f32.gmra.mxu0 %v4638
    %v4926 = vpop.f32.mrf.mxu0
    %v4927 = vadd.f32 %v4814, %v4926
    %4928 = vdwg.mxu0
    %4929 = vmatpush.msra.mxu0 %v4670
    %4930 = vmatpush.msra.mxu0 %v4668
    %4931 = vmatpush.msra.mxu0 %v4666
    %4932 = vmatpush.msra.mxu0 %v4664
    %4933 = vmatpush.msra.mxu0 %v4662
    %4934 = vmatpush.msra.mxu0 %v4660
    %4935 = vmatpush.msra.mxu0 %v4658
    %4936 = vmatpush.msra.mxu0 %v4656
    %4937 = vmatpush.msra.mxu0 %v4654
    %4938 = vmatpush.msra.mxu0 %v4652
    %4939 = vmatpush.msra.mxu0 %v4650
    %4940 = vmatpush.msra.mxu0 %v4648
    %4941 = vmatpush.msra.mxu0 %v4646
    %4942 = vmatpush.msra.mxu0 %v4644
    %4943 = vmatpush.msra.mxu0 %v4642
    %4944 = vmatpush.msra.mxu0 %v4640
    %4945 = vmatmul.f32.gmra.mxu0 %v4575
    %v4946 = vpop.f32.mrf.mxu0
    %v4947 = vadd.f32 0.0, %v4946
    %4948 = vmatmul.f32.gmra.mxu0 %v4577
    %v4949 = vpop.f32.mrf.mxu0
    %v4950 = vadd.f32 0.0, %v4949
    %4951 = vmatmul.f32.gmra.mxu0 %v4579
    %v4952 = vpop.f32.mrf.mxu0
    %v4953 = vadd.f32 0.0, %v4952
    %4954 = vmatmul.f32.gmra.mxu0 %v4581
    %v4955 = vpop.f32.mrf.mxu0
    %v4956 = vadd.f32 0.0, %v4955
    %4957 = vmatmul.f32.gmra.mxu0 %v4583
    %v4958 = vpop.f32.mrf.mxu0
    %v4959 = vadd.f32 0.0, %v4958
    %4960 = vmatmul.f32.gmra.mxu0 %v4585
    %v4961 = vpop.f32.mrf.mxu0
    %v4962 = vadd.f32 0.0, %v4961
    %4963 = vmatmul.f32.gmra.mxu0 %v4587
    %v4964 = vpop.f32.mrf.mxu0
    %v4965 = vadd.f32 0.0, %v4964
    %4966 = vmatmul.f32.gmra.mxu0 %v4589
    %v4967 = vpop.f32.mrf.mxu0
    %v4968 = vadd.f32 0.0, %v4967
    %4969 = vmatmul.f32.gmra.mxu0 %v4591
    %v4970 = vpop.f32.mrf.mxu0
    %v4971 = vadd.f32 0.0, %v4970
    %4972 = vmatmul.f32.gmra.mxu0 %v4593
    %v4973 = vpop.f32.mrf.mxu0
    %v4974 = vadd.f32 0.0, %v4973
    %4975 = vmatmul.f32.gmra.mxu0 %v4595
    %v4976 = vpop.f32.mrf.mxu0
    %v4977 = vadd.f32 0.0, %v4976
    %4978 = vmatmul.f32.gmra.mxu0 %v4597
    %v4979 = vpop.f32.mrf.mxu0
    %v4980 = vadd.f32 0.0, %v4979
    %4981 = vmatmul.f32.gmra.mxu0 %v4599
    %v4982 = vpop.f32.mrf.mxu0
    %v4983 = vadd.f32 0.0, %v4982
    %4984 = vmatmul.f32.gmra.mxu0 %v4601
    %v4985 = vpop.f32.mrf.mxu0
    %v4986 = vadd.f32 0.0, %v4985
    %4987 = vmatmul.f32.gmra.mxu0 %v4603
    %v4988 = vpop.f32.mrf.mxu0
    %v4989 = vadd.f32 0.0, %v4988
    %4990 = vmatmul.f32.gmra.mxu0 %v4605
    %v4991 = vpop.f32.mrf.mxu0
    %v4992 = vadd.f32 0.0, %v4991
    %4993 = vmatmul.f32.gmra.mxu0 %v4607
    %v4994 = vpop.f32.mrf.mxu0
    %v4995 = vadd.f32 0.0, %v4994
    %4996 = vmatmul.f32.gmra.mxu0 %v4609
    %v4997 = vpop.f32.mrf.mxu0
    %v4998 = vadd.f32 0.0, %v4997
    %4999 = vmatmul.f32.gmra.mxu0 %v4611
    %v5000 = vpop.f32.mrf.mxu0
    %v5001 = vadd.f32 0.0, %v5000
    %5002 = vmatmul.f32.gmra.mxu0 %v4613
    %v5003 = vpop.f32.mrf.mxu0
    %v5004 = vadd.f32 0.0, %v5003
    %5005 = vmatmul.f32.gmra.mxu0 %v4615
    %v5006 = vpop.f32.mrf.mxu0
    %v5007 = vadd.f32 0.0, %v5006
    %5008 = vmatmul.f32.gmra.mxu0 %v4617
    %v5009 = vpop.f32.mrf.mxu0
    %v5010 = vadd.f32 0.0, %v5009
    %5011 = vmatmul.f32.gmra.mxu0 %v4619
    %v5012 = vpop.f32.mrf.mxu0
    %v5013 = vadd.f32 0.0, %v5012
    %5014 = vmatmul.f32.gmra.mxu0 %v4621
    %v5015 = vpop.f32.mrf.mxu0
    %v5016 = vadd.f32 0.0, %v5015
    %5017 = vmatmul.f32.gmra.mxu0 %v4623
    %v5018 = vpop.f32.mrf.mxu0
    %v5019 = vadd.f32 0.0, %v5018
    %5020 = vmatmul.f32.gmra.mxu0 %v4625
    %v5021 = vpop.f32.mrf.mxu0
    %v5022 = vadd.f32 0.0, %v5021
    %5023 = vmatmul.f32.gmra.mxu0 %v4627
    %v5024 = vpop.f32.mrf.mxu0
    %v5025 = vadd.f32 0.0, %v5024
    %5026 = vmatmul.f32.gmra.mxu0 %v4629
    %v5027 = vpop.f32.mrf.mxu0
    %v5028 = vadd.f32 0.0, %v5027
    %5029 = vmatmul.f32.gmra.mxu0 %v4631
    %v5030 = vpop.f32.mrf.mxu0
    %v5031 = vadd.f32 0.0, %v5030
    %5032 = vmatmul.f32.gmra.mxu0 %v4633
    %v5033 = vpop.f32.mrf.mxu0
    %v5034 = vadd.f32 0.0, %v5033
    %5035 = vmatmul.f32.gmra.mxu0 %v4635
    %v5036 = vpop.f32.mrf.mxu0
    %v5037 = vadd.f32 0.0, %v5036
    %5038 = vmatmul.f32.gmra.mxu0 %v4637
    %v5039 = vpop.f32.mrf.mxu0
    %v5040 = vadd.f32 0.0, %v5039
    %5041 = vdwg.mxu0
    %5042 = vmatpush.msra.mxu0 %v4702
    %5043 = vmatpush.msra.mxu0 %v4700
    %5044 = vmatpush.msra.mxu0 %v4698
    %5045 = vmatpush.msra.mxu0 %v4696
    %5046 = vmatpush.msra.mxu0 %v4694
    %5047 = vmatpush.msra.mxu0 %v4692
    %5048 = vmatpush.msra.mxu0 %v4690
    %5049 = vmatpush.msra.mxu0 %v4688
    %5050 = vmatpush.msra.mxu0 %v4686
    %5051 = vmatpush.msra.mxu0 %v4684
    %5052 = vmatpush.msra.mxu0 %v4682
    %5053 = vmatpush.msra.mxu0 %v4680
    %5054 = vmatpush.msra.mxu0 %v4678
    %5055 = vmatpush.msra.mxu0 %v4676
    %5056 = vmatpush.msra.mxu0 %v4674
    %5057 = vmatpush.msra.mxu0 %v4672
    %5058 = vmatmul.f32.gmra.mxu0 %v4576
    %v5059 = vpop.f32.mrf.mxu0
    %v5060 = vadd.f32 %v4947, %v5059
    %5061 = vmatmul.f32.gmra.mxu0 %v4578
    %v5062 = vpop.f32.mrf.mxu0
    %v5063 = vadd.f32 %v4950, %v5062
    %5064 = vmatmul.f32.gmra.mxu0 %v4580
    %v5065 = vpop.f32.mrf.mxu0
    %v5066 = vadd.f32 %v4953, %v5065
    %5067 = vmatmul.f32.gmra.mxu0 %v4582
    %v5068 = vpop.f32.mrf.mxu0
    %v5069 = vadd.f32 %v4956, %v5068
    %5070 = vmatmul.f32.gmra.mxu0 %v4584
    %v5071 = vpop.f32.mrf.mxu0
    %v5072 = vadd.f32 %v4959, %v5071
    %5073 = vmatmul.f32.gmra.mxu0 %v4586
    %v5074 = vpop.f32.mrf.mxu0
    %v5075 = vadd.f32 %v4962, %v5074
    %5076 = vmatmul.f32.gmra.mxu0 %v4588
    %v5077 = vpop.f32.mrf.mxu0
    %v5078 = vadd.f32 %v4965, %v5077
    %5079 = vmatmul.f32.gmra.mxu0 %v4590
    %v5080 = vpop.f32.mrf.mxu0
    %v5081 = vadd.f32 %v4968, %v5080
    %5082 = vmatmul.f32.gmra.mxu0 %v4592
    %v5083 = vpop.f32.mrf.mxu0
    %v5084 = vadd.f32 %v4971, %v5083
    %5085 = vmatmul.f32.gmra.mxu0 %v4594
    %v5086 = vpop.f32.mrf.mxu0
    %v5087 = vadd.f32 %v4974, %v5086
    %5088 = vmatmul.f32.gmra.mxu0 %v4596
    %v5089 = vpop.f32.mrf.mxu0
    %v5090 = vadd.f32 %v4977, %v5089
    %5091 = vmatmul.f32.gmra.mxu0 %v4598
    %v5092 = vpop.f32.mrf.mxu0
    %v5093 = vadd.f32 %v4980, %v5092
    %5094 = vmatmul.f32.gmra.mxu0 %v4600
    %v5095 = vpop.f32.mrf.mxu0
    %v5096 = vadd.f32 %v4983, %v5095
    %5097 = vmatmul.f32.gmra.mxu0 %v4602
    %v5098 = vpop.f32.mrf.mxu0
    %v5099 = vadd.f32 %v4986, %v5098
    %5100 = vmatmul.f32.gmra.mxu0 %v4604
    %v5101 = vpop.f32.mrf.mxu0
    %v5102 = vadd.f32 %v4989, %v5101
    %5103 = vmatmul.f32.gmra.mxu0 %v4606
    %v5104 = vpop.f32.mrf.mxu0
    %v5105 = vadd.f32 %v4992, %v5104
    %5106 = vmatmul.f32.gmra.mxu0 %v4608
    %v5107 = vpop.f32.mrf.mxu0
    %v5108 = vadd.f32 %v4995, %v5107
    %5109 = vmatmul.f32.gmra.mxu0 %v4610
    %v5110 = vpop.f32.mrf.mxu0
    %v5111 = vadd.f32 %v4998, %v5110
    %5112 = vmatmul.f32.gmra.mxu0 %v4612
    %v5113 = vpop.f32.mrf.mxu0
    %v5114 = vadd.f32 %v5001, %v5113
    %5115 = vmatmul.f32.gmra.mxu0 %v4614
    %v5116 = vpop.f32.mrf.mxu0
    %v5117 = vadd.f32 %v5004, %v5116
    %5118 = vmatmul.f32.gmra.mxu0 %v4616
    %v5119 = vpop.f32.mrf.mxu0
    %v5120 = vadd.f32 %v5007, %v5119
    %5121 = vmatmul.f32.gmra.mxu0 %v4618
    %v5122 = vpop.f32.mrf.mxu0
    %v5123 = vadd.f32 %v5010, %v5122
    %5124 = vmatmul.f32.gmra.mxu0 %v4620
    %v5125 = vpop.f32.mrf.mxu0
    %v5126 = vadd.f32 %v5013, %v5125
    %5127 = vmatmul.f32.gmra.mxu0 %v4622
    %v5128 = vpop.f32.mrf.mxu0
    %v5129 = vadd.f32 %v5016, %v5128
    %5130 = vmatmul.f32.gmra.mxu0 %v4624
    %v5131 = vpop.f32.mrf.mxu0
    %v5132 = vadd.f32 %v5019, %v5131
    %5133 = vmatmul.f32.gmra.mxu0 %v4626
    %v5134 = vpop.f32.mrf.mxu0
    %v5135 = vadd.f32 %v5022, %v5134
    %5136 = vmatmul.f32.gmra.mxu0 %v4628
    %v5137 = vpop.f32.mrf.mxu0
    %v5138 = vadd.f32 %v5025, %v5137
    %5139 = vmatmul.f32.gmra.mxu0 %v4630
    %v5140 = vpop.f32.mrf.mxu0
    %v5141 = vadd.f32 %v5028, %v5140
    %5142 = vmatmul.f32.gmra.mxu0 %v4632
    %v5143 = vpop.f32.mrf.mxu0
    %v5144 = vadd.f32 %v5031, %v5143
    %5145 = vmatmul.f32.gmra.mxu0 %v4634
    %v5146 = vpop.f32.mrf.mxu0
    %v5147 = vadd.f32 %v5034, %v5146
    %5148 = vmatmul.f32.gmra.mxu0 %v4636
    %v5149 = vpop.f32.mrf.mxu0
    %v5150 = vadd.f32 %v5037, %v5149
    %5151 = vmatmul.f32.gmra.mxu0 %v4638
    %v5152 = vpop.f32.mrf.mxu0
    %v5153 = vadd.f32 %v5040, %v5152
    %5154 = vdwg.mxu0
    %v5155 = vsub.f32 %v4834, %v4882
    %v5156 = vsub.f32 %v5060, %v5108
    %v5157 = vsub.f32 %v4837, %v4885
    %v5158 = vsub.f32 %v5063, %v5111
    %v5159 = vsub.f32 %v4840, %v4888
    %v5160 = vsub.f32 %v5066, %v5114
    %v5161 = vsub.f32 %v4843, %v4891
    %v5162 = vsub.f32 %v5069, %v5117
    %v5163 = vsub.f32 %v4846, %v4894
    %v5164 = vsub.f32 %v5072, %v5120
    %v5165 = vsub.f32 %v4849, %v4897
    %v5166 = vsub.f32 %v5075, %v5123
    %v5167 = vsub.f32 %v4852, %v4900
    %v5168 = vsub.f32 %v5078, %v5126
    %v5169 = vsub.f32 %v4855, %v4903
    %v5170 = vsub.f32 %v5081, %v5129
    %v5171 = vsub.f32 %v4858, %v4906
    %v5172 = vsub.f32 %v5084, %v5132
    %v5173 = vsub.f32 %v4861, %v4909
    %v5174 = vsub.f32 %v5087, %v5135
    %v5175 = vsub.f32 %v4864, %v4912
    %v5176 = vsub.f32 %v5090, %v5138
    %v5177 = vsub.f32 %v4867, %v4915
    %v5178 = vsub.f32 %v5093, %v5141
    %v5179 = vsub.f32 %v4870, %v4918
    %v5180 = vsub.f32 %v5096, %v5144
    %v5181 = vsub.f32 %v4873, %v4921
    %v5182 = vsub.f32 %v5099, %v5147
    %v5183 = vsub.f32 %v4876, %v4924
    %v5184 = vsub.f32 %v5102, %v5150
    %v5185 = vsub.f32 %v4879, %v4927
    %v5186 = vsub.f32 %v5105, %v5153
    %v5187 = vmul.f32 %v5155, %v5155
    %v5188 = vmul.f32 %v5156, %v5156
    %v5189 = vmul.f32 %v5157, %v5157
    %v5190 = vmul.f32 %v5158, %v5158
    %v5191 = vmul.f32 %v5159, %v5159
    %v5192 = vmul.f32 %v5160, %v5160
    %v5193 = vmul.f32 %v5161, %v5161
    %v5194 = vmul.f32 %v5162, %v5162
    %v5195 = vmul.f32 %v5163, %v5163
    %v5196 = vmul.f32 %v5164, %v5164
    %v5197 = vmul.f32 %v5165, %v5165
    %v5198 = vmul.f32 %v5166, %v5166
    %v5199 = vmul.f32 %v5167, %v5167
    %v5200 = vmul.f32 %v5168, %v5168
    %v5201 = vmul.f32 %v5169, %v5169
    %v5202 = vmul.f32 %v5170, %v5170
    %v5203 = vmul.f32 %v5171, %v5171
    %v5204 = vmul.f32 %v5172, %v5172
    %v5205 = vmul.f32 %v5173, %v5173
    %v5206 = vmul.f32 %v5174, %v5174
    %v5207 = vmul.f32 %v5175, %v5175
    %v5208 = vmul.f32 %v5176, %v5176
    %v5209 = vmul.f32 %v5177, %v5177
    %v5210 = vmul.f32 %v5178, %v5178
    %v5211 = vmul.f32 %v5179, %v5179
    %v5212 = vmul.f32 %v5180, %v5180
    %v5213 = vmul.f32 %v5181, %v5181
    %v5214 = vmul.f32 %v5182, %v5182
    %v5215 = vmul.f32 %v5183, %v5183
    %v5216 = vmul.f32 %v5184, %v5184
    %v5217 = vmul.f32 %v5185, %v5185
    %v5218 = vmul.f32 %v5186, %v5186
    %v5219 = vadd.f32 %v5187, %v5188
    %v5220 = vadd.f32 %v5219, %v5189
    %v5221 = vadd.f32 %v5220, %v5190
    %v5222 = vadd.f32 %v5221, %v5191
    %v5223 = vadd.f32 %v5222, %v5192
    %v5224 = vadd.f32 %v5223, %v5193
    %v5225 = vadd.f32 %v5224, %v5194
    %v5226 = vadd.f32 %v5225, %v5195
    %v5227 = vadd.f32 %v5226, %v5196
    %v5228 = vadd.f32 %v5227, %v5197
    %v5229 = vadd.f32 %v5228, %v5198
    %v5230 = vadd.f32 %v5229, %v5199
    %v5231 = vadd.f32 %v5230, %v5200
    %v5232 = vadd.f32 %v5231, %v5201
    %v5233 = vadd.f32 %v5232, %v5202
    %v5234 = vadd.f32 %v5233, %v5203
    %v5235 = vadd.f32 %v5234, %v5204
    %v5236 = vadd.f32 %v5235, %v5205
    %v5237 = vadd.f32 %v5236, %v5206
    %v5238 = vadd.f32 %v5237, %v5207
    %v5239 = vadd.f32 %v5238, %v5208
    %v5240 = vadd.f32 %v5239, %v5209
    %v5241 = vadd.f32 %v5240, %v5210
    %v5242 = vadd.f32 %v5241, %v5211
    %v5243 = vadd.f32 %v5242, %v5212
    %v5244 = vadd.f32 %v5243, %v5213
    %v5245 = vadd.f32 %v5244, %v5214
    %v5246 = vadd.f32 %v5245, %v5215
    %v5247 = vadd.f32 %v5246, %v5216
    %v5248 = vadd.f32 %v5247, %v5217
    %v5249 = vadd.f32 %v5248, %v5218
    %5250 = vadd.xlane.f32.xlu0 %v5249
    %v5251 = vpop.xlane.xlu0 %5250
    %v5252 = vrot.slane %v5251, 4
    %v5253 = vadd.f32 %v5251, %v5252
    %v5254 = vrot.slane %v5253, 2
    %v5255 = vadd.f32 %v5253, %v5254
    %v5256 = vrot.slane %v5255, 1
    %v5257 = vadd.f32 %v5255, %v5256
    %s5258 = vtos %v5257
    %v5259 = vrcp.pop 32768.0
    %v5260 = vmul.f32 32768.0, %v5259
    %v5261 = vsub.f32 1.0, %v5260
    %v5262 = vmul.f32 %v5259, %v5261
    %v5263 = vadd.f32 %v5259, %v5262
    %vm5264 = vweird.f32 %v5259
    %v5265 = vsel %vm5264, %v5259, %v5263
    %s5266 = vtos %v5265
    %s5267 = smul.f32 %s5258, %s5266
    %v5268 = vadd.f32 %v4834, %v4837
    %v5269 = vadd.f32 %v5268, %v4840
    %v5270 = vadd.f32 %v5269, %v4843
    %v5271 = vadd.f32 %v5270, %v4846
    %v5272 = vadd.f32 %v5271, %v4849
    %v5273 = vadd.f32 %v5272, %v4852
    %v5274 = vadd.f32 %v5273, %v4855
    %v5275 = vadd.f32 %v5274, %v4858
    %v5276 = vadd.f32 %v5275, %v4861
    %v5277 = vadd.f32 %v5276, %v4864
    %v5278 = vadd.f32 %v5277, %v4867
    %v5279 = vadd.f32 %v5278, %v4870
    %v5280 = vadd.f32 %v5279, %v4873
    %v5281 = vadd.f32 %v5280, %v4876
    %v5282 = vadd.f32 %v5281, %v4879
    %v5283 = vrot.slane %v5282, 4
    %v5284 = vadd.f32 %v5282, %v5283
    %v5285 = vrot.slane %v5284, 2
    %v5286 = vadd.f32 %v5284, %v5285
    %v5287 = vrot.slane %v5286, 1
    %v5288 = vadd.f32 %v5286, %v5287
    %v5289 = vadd.f32 %v5060, %v5063
    %v5290 = vadd.f32 %v5289, %v5066
    %v5291 = vadd.f32 %v5290, %v5069
    %v5292 = vadd.f32 %v5291, %v5072
    %v5293 = vadd.f32 %v5292, %v5075
    %v5294 = vadd.f32 %v5293, %v5078
    %v5295 = vadd.f32 %v5294, %v5081
    %v5296 = vadd.f32 %v5295, %v5084
    %v5297 = vadd.f32 %v5296, %v5087
    %v5298 = vadd.f32 %v5297, %v5090
    %v5299 = vadd.f32 %v5298, %v5093
    %v5300 = vadd.f32 %v5299, %v5096
    %v5301 = vadd.f32 %v5300, %v5099
    %v5302 = vadd.f32 %v5301, %v5102
    %v5303 = vadd.f32 %v5302, %v5105
    %v5304 = vrot.slane %v5303, 4
    %v5305 = vadd.f32 %v5303, %v5304
    %v5306 = vrot.slane %v5305, 2
    %v5307 = vadd.f32 %v5305, %v5306
    %v5308 = vrot.slane %v5307, 1
    %v5309 = vadd.f32 %v5307, %v5308
    %v5310 = vmul.f32 %v5288, %v2925
    %v5311 = vmul.f32 %v5309, %v2925
    %v5312 = vsub.f32 %v4834, %v5310
    %v5313 = vsub.f32 %v5060, %v5311
    %v5314 = vsub.f32 %v4837, %v5310
    %v5315 = vsub.f32 %v5063, %v5311
    %v5316 = vsub.f32 %v4840, %v5310
    %v5317 = vsub.f32 %v5066, %v5311
    %v5318 = vsub.f32 %v4843, %v5310
    %v5319 = vsub.f32 %v5069, %v5311
    %v5320 = vsub.f32 %v4846, %v5310
    %v5321 = vsub.f32 %v5072, %v5311
    %v5322 = vsub.f32 %v4849, %v5310
    %v5323 = vsub.f32 %v5075, %v5311
    %v5324 = vsub.f32 %v4852, %v5310
    %v5325 = vsub.f32 %v5078, %v5311
    %v5326 = vsub.f32 %v4855, %v5310
    %v5327 = vsub.f32 %v5081, %v5311
    %v5328 = vsub.f32 %v4858, %v5310
    %v5329 = vsub.f32 %v5084, %v5311
    %v5330 = vsub.f32 %v4861, %v5310
    %v5331 = vsub.f32 %v5087, %v5311
    %v5332 = vsub.f32 %v4864, %v5310
    %v5333 = vsub.f32 %v5090, %v5311
    %v5334 = vsub.f32 %v4867, %v5310
    %v5335 = vsub.f32 %v5093, %v5311
    %v5336 = vsub.f32 %v4870, %v5310
    %v5337 = vsub.f32 %v5096, %v5311
    %v5338 = vsub.f32 %v4873, %v5310
    %v5339 = vsub.f32 %v5099, %v5311
    %v5340 = vsub.f32 %v4876, %v5310
    %v5341 = vsub.f32 %v5102, %v5311
    %v5342 = vsub.f32 %v4879, %v5310
    %v5343 = vsub.f32 %v5105, %v5311
    %v5344 = vadd.f32 %v4882, %v4885
    %v5345 = vadd.f32 %v5344, %v4888
    %v5346 = vadd.f32 %v5345, %v4891
    %v5347 = vadd.f32 %v5346, %v4894
    %v5348 = vadd.f32 %v5347, %v4897
    %v5349 = vadd.f32 %v5348, %v4900
    %v5350 = vadd.f32 %v5349, %v4903
    %v5351 = vadd.f32 %v5350, %v4906
    %v5352 = vadd.f32 %v5351, %v4909
    %v5353 = vadd.f32 %v5352, %v4912
    %v5354 = vadd.f32 %v5353, %v4915
    %v5355 = vadd.f32 %v5354, %v4918
    %v5356 = vadd.f32 %v5355, %v4921
    %v5357 = vadd.f32 %v5356, %v4924
    %v5358 = vadd.f32 %v5357, %v4927
    %v5359 = vrot.slane %v5358, 4
    %v5360 = vadd.f32 %v5358, %v5359
    %v5361 = vrot.slane %v5360, 2
    %v5362 = vadd.f32 %v5360, %v5361
    %v5363 = vrot.slane %v5362, 1
    %v5364 = vadd.f32 %v5362, %v5363
    %v5365 = vadd.f32 %v5108, %v5111
    %v5366 = vadd.f32 %v5365, %v5114
    %v5367 = vadd.f32 %v5366, %v5117
    %v5368 = vadd.f32 %v5367, %v5120
    %v5369 = vadd.f32 %v5368, %v5123
    %v5370 = vadd.f32 %v5369, %v5126
    %v5371 = vadd.f32 %v5370, %v5129
    %v5372 = vadd.f32 %v5371, %v5132
    %v5373 = vadd.f32 %v5372, %v5135
    %v5374 = vadd.f32 %v5373, %v5138
    %v5375 = vadd.f32 %v5374, %v5141
    %v5376 = vadd.f32 %v5375, %v5144
    %v5377 = vadd.f32 %v5376, %v5147
    %v5378 = vadd.f32 %v5377, %v5150
    %v5379 = vadd.f32 %v5378, %v5153
    %v5380 = vrot.slane %v5379, 4
    %v5381 = vadd.f32 %v5379, %v5380
    %v5382 = vrot.slane %v5381, 2
    %v5383 = vadd.f32 %v5381, %v5382
    %v5384 = vrot.slane %v5383, 1
    %v5385 = vadd.f32 %v5383, %v5384
    %v5386 = vmul.f32 %v5364, %v2925
    %v5387 = vmul.f32 %v5385, %v2925
    %v5388 = vsub.f32 %v4882, %v5386
    %v5389 = vsub.f32 %v5108, %v5387
    %v5390 = vsub.f32 %v4885, %v5386
    %v5391 = vsub.f32 %v5111, %v5387
    %v5392 = vsub.f32 %v4888, %v5386
    %v5393 = vsub.f32 %v5114, %v5387
    %v5394 = vsub.f32 %v4891, %v5386
    %v5395 = vsub.f32 %v5117, %v5387
    %v5396 = vsub.f32 %v4894, %v5386
    %v5397 = vsub.f32 %v5120, %v5387
    %v5398 = vsub.f32 %v4897, %v5386
    %v5399 = vsub.f32 %v5123, %v5387
    %v5400 = vsub.f32 %v4900, %v5386
    %v5401 = vsub.f32 %v5126, %v5387
    %v5402 = vsub.f32 %v4903, %v5386
    %v5403 = vsub.f32 %v5129, %v5387
    %v5404 = vsub.f32 %v4906, %v5386
    %v5405 = vsub.f32 %v5132, %v5387
    %v5406 = vsub.f32 %v4909, %v5386
    %v5407 = vsub.f32 %v5135, %v5387
    %v5408 = vsub.f32 %v4912, %v5386
    %v5409 = vsub.f32 %v5138, %v5387
    %v5410 = vsub.f32 %v4915, %v5386
    %v5411 = vsub.f32 %v5141, %v5387
    %v5412 = vsub.f32 %v4918, %v5386
    %v5413 = vsub.f32 %v5144, %v5387
    %v5414 = vsub.f32 %v4921, %v5386
    %v5415 = vsub.f32 %v5147, %v5387
    %v5416 = vsub.f32 %v4924, %v5386
    %v5417 = vsub.f32 %v5150, %v5387
    %v5418 = vsub.f32 %v4927, %v5386
    %v5419 = vsub.f32 %v5153, %v5387
    %v5420 = vmul.f32 %v5312, %v5312
    %v5421 = vmul.f32 %v5313, %v5313
    %v5422 = vmul.f32 %v5314, %v5314
    %v5423 = vmul.f32 %v5315, %v5315
    %v5424 = vmul.f32 %v5316, %v5316
    %v5425 = vmul.f32 %v5317, %v5317
    %v5426 = vmul.f32 %v5318, %v5318
    %v5427 = vmul.f32 %v5319, %v5319
    %v5428 = vmul.f32 %v5320, %v5320
    %v5429 = vmul.f32 %v5321, %v5321
    %v5430 = vmul.f32 %v5322, %v5322
    %v5431 = vmul.f32 %v5323, %v5323
    %v5432 = vmul.f32 %v5324, %v5324
    %v5433 = vmul.f32 %v5325, %v5325
    %v5434 = vmul.f32 %v5326, %v5326
    %v5435 = vmul.f32 %v5327, %v5327
    %v5436 = vmul.f32 %v5328, %v5328
    %v5437 = vmul.f32 %v5329, %v5329
    %v5438 = vmul.f32 %v5330, %v5330
    %v5439 = vmul.f32 %v5331, %v5331
    %v5440 = vmul.f32 %v5332, %v5332
    %v5441 = vmul.f32 %v5333, %v5333
    %v5442 = vmul.f32 %v5334, %v5334
    %v5443 = vmul.f32 %v5335, %v5335
    %v5444 = vmul.f32 %v5336, %v5336
    %v5445 = vmul.f32 %v5337, %v5337
    %v5446 = vmul.f32 %v5338, %v5338
    %v5447 = vmul.f32 %v5339, %v5339
    %v5448 = vmul.f32 %v5340, %v5340
    %v5449 = vmul.f32 %v5341, %v5341
    %v5450 = vmul.f32 %v5342, %v5342
    %v5451 = vmul.f32 %v5343, %v5343
    %v5452 = vadd.f32 %v5420, %v5422
    %v5453 = vadd.f32 %v5452, %v5424
    %v5454 = vadd.f32 %v5453, %v5426
    %v5455 = vadd.f32 %v5454, %v5428
    %v5456 = vadd.f32 %v5455, %v5430
    %v5457 = vadd.f32 %v5456, %v5432
    %v5458 = vadd.f32 %v5457, %v5434
    %v5459 = vadd.f32 %v5458, %v5436
    %v5460 = vadd.f32 %v5459, %v5438
    %v5461 = vadd.f32 %v5460, %v5440
    %v5462 = vadd.f32 %v5461, %v5442
    %v5463 = vadd.f32 %v5462, %v5444
    %v5464 = vadd.f32 %v5463, %v5446
    %v5465 = vadd.f32 %v5464, %v5448
    %v5466 = vadd.f32 %v5465, %v5450
    %v5467 = vrot.slane %v5466, 4
    %v5468 = vadd.f32 %v5466, %v5467
    %v5469 = vrot.slane %v5468, 2
    %v5470 = vadd.f32 %v5468, %v5469
    %v5471 = vrot.slane %v5470, 1
    %v5472 = vadd.f32 %v5470, %v5471
    %v5473 = vadd.f32 %v5421, %v5423
    %v5474 = vadd.f32 %v5473, %v5425
    %v5475 = vadd.f32 %v5474, %v5427
    %v5476 = vadd.f32 %v5475, %v5429
    %v5477 = vadd.f32 %v5476, %v5431
    %v5478 = vadd.f32 %v5477, %v5433
    %v5479 = vadd.f32 %v5478, %v5435
    %v5480 = vadd.f32 %v5479, %v5437
    %v5481 = vadd.f32 %v5480, %v5439
    %v5482 = vadd.f32 %v5481, %v5441
    %v5483 = vadd.f32 %v5482, %v5443
    %v5484 = vadd.f32 %v5483, %v5445
    %v5485 = vadd.f32 %v5484, %v5447
    %v5486 = vadd.f32 %v5485, %v5449
    %v5487 = vadd.f32 %v5486, %v5451
    %v5488 = vrot.slane %v5487, 4
    %v5489 = vadd.f32 %v5487, %v5488
    %v5490 = vrot.slane %v5489, 2
    %v5491 = vadd.f32 %v5489, %v5490
    %v5492 = vrot.slane %v5491, 1
    %v5493 = vadd.f32 %v5491, %v5492
    %v5494 = vrcp.pop 127.0
    %v5495 = vmul.f32 127.0, %v5494
    %v5496 = vsub.f32 1.0, %v5495
    %v5497 = vmul.f32 %v5494, %v5496
    %v5498 = vadd.f32 %v5494, %v5497
    %vm5499 = vweird.f32 %v5494
    %v5500 = vsel %vm5499, %v5494, %v5498
    %v5501 = vmul.f32 %v5472, %v5500
    %v5502 = vmul.f32 %v5493, %v5500
    %v5503 = vmul.f32 %v5388, %v5388
    %v5504 = vmul.f32 %v5389, %v5389
    %v5505 = vmul.f32 %v5390, %v5390
    %v5506 = vmul.f32 %v5391, %v5391
    %v5507 = vmul.f32 %v5392, %v5392
    %v5508 = vmul.f32 %v5393, %v5393
    %v5509 = vmul.f32 %v5394, %v5394
    %v5510 = vmul.f32 %v5395, %v5395
    %v5511 = vmul.f32 %v5396, %v5396
    %v5512 = vmul.f32 %v5397, %v5397
    %v5513 = vmul.f32 %v5398, %v5398
    %v5514 = vmul.f32 %v5399, %v5399
    %v5515 = vmul.f32 %v5400, %v5400
    %v5516 = vmul.f32 %v5401, %v5401
    %v5517 = vmul.f32 %v5402, %v5402
    %v5518 = vmul.f32 %v5403, %v5403
    %v5519 = vmul.f32 %v5404, %v5404
    %v5520 = vmul.f32 %v5405, %v5405
    %v5521 = vmul.f32 %v5406, %v5406
    %v5522 = vmul.f32 %v5407, %v5407
    %v5523 = vmul.f32 %v5408, %v5408
    %v5524 = vmul.f32 %v5409, %v5409
    %v5525 = vmul.f32 %v5410, %v5410
    %v5526 = vmul.f32 %v5411, %v5411
    %v5527 = vmul.f32 %v5412, %v5412
    %v5528 = vmul.f32 %v5413, %v5413
    %v5529 = vmul.f32 %v5414, %v5414
    %v5530 = vmul.f32 %v5415, %v5415
    %v5531 = vmul.f32 %v5416, %v5416
    %v5532 = vmul.f32 %v5417, %v5417
    %v5533 = vmul.f32 %v5418, %v5418
    %v5534 = vmul.f32 %v5419, %v5419
    %v5535 = vadd.f32 %v5503, %v5505
    %v5536 = vadd.f32 %v5535, %v5507
    %v5537 = vadd.f32 %v5536, %v5509
    %v5538 = vadd.f32 %v5537, %v5511
    %v5539 = vadd.f32 %v5538, %v5513
    %v5540 = vadd.f32 %v5539, %v5515
    %v5541 = vadd.f32 %v5540, %v5517
    %v5542 = vadd.f32 %v5541, %v5519
    %v5543 = vadd.f32 %v5542, %v5521
    %v5544 = vadd.f32 %v5543, %v5523
    %v5545 = vadd.f32 %v5544, %v5525
    %v5546 = vadd.f32 %v5545, %v5527
    %v5547 = vadd.f32 %v5546, %v5529
    %v5548 = vadd.f32 %v5547, %v5531
    %v5549 = vadd.f32 %v5548, %v5533
    %v5550 = vrot.slane %v5549, 4
    %v5551 = vadd.f32 %v5549, %v5550
    %v5552 = vrot.slane %v5551, 2
    %v5553 = vadd.f32 %v5551, %v5552
    %v5554 = vrot.slane %v5553, 1
    %v5555 = vadd.f32 %v5553, %v5554
    %v5556 = vadd.f32 %v5504, %v5506
    %v5557 = vadd.f32 %v5556, %v5508
    %v5558 = vadd.f32 %v5557, %v5510
    %v5559 = vadd.f32 %v5558, %v5512
    %v5560 = vadd.f32 %v5559, %v5514
    %v5561 = vadd.f32 %v5560, %v5516
    %v5562 = vadd.f32 %v5561, %v5518
    %v5563 = vadd.f32 %v5562, %v5520
    %v5564 = vadd.f32 %v5563, %v5522
    %v5565 = vadd.f32 %v5564, %v5524
    %v5566 = vadd.f32 %v5565, %v5526
    %v5567 = vadd.f32 %v5566, %v5528
    %v5568 = vadd.f32 %v5567, %v5530
    %v5569 = vadd.f32 %v5568, %v5532
    %v5570 = vadd.f32 %v5569, %v5534
    %v5571 = vrot.slane %v5570, 4
    %v5572 = vadd.f32 %v5570, %v5571
    %v5573 = vrot.slane %v5572, 2
    %v5574 = vadd.f32 %v5572, %v5573
    %v5575 = vrot.slane %v5574, 1
    %v5576 = vadd.f32 %v5574, %v5575
    %v5577 = vmul.f32 %v5555, %v5500
    %v5578 = vmul.f32 %v5576, %v5500
    %v5579 = vadd.f32 %v5501, 0.0001
    %v5580 = vadd.f32 %v5502, 0.0001
    %v5581 = vrsqrt.pop %v5579
    %v5582 = vmul.f32 %v5581, %v5579
    %v5583 = vmul.f32 %v5582, %v5581
    %v5584 = vmul.f32 0.5, %v5583
    %v5585 = vsub.f32 1.5, %v5584
    %v5586 = vmul.f32 %v5581, %v5585
    %v5587 = vmul.f32 %v5579, %v5586
    %vm5588 = vcmp.eq.f32.partialorder %v5579, inf
    %v5589 = vsel %vm5588, %v5579, %v5587
    %vm5590 = vcmp.eq.f32.partialorder %v5579, 0.0
    %v5591 = vand.u32 %v5579, 2147483648
    %v5592 = vsel %vm5590, %v5591, %v5589
    %v5593 = vrsqrt.pop %v5580
    %v5594 = vmul.f32 %v5593, %v5580
    %v5595 = vmul.f32 %v5594, %v5593
    %v5596 = vmul.f32 0.5, %v5595
    %v5597 = vsub.f32 1.5, %v5596
    %v5598 = vmul.f32 %v5593, %v5597
    %v5599 = vmul.f32 %v5580, %v5598
    %vm5600 = vcmp.eq.f32.partialorder %v5580, inf
    %v5601 = vsel %vm5600, %v5580, %v5599
    %vm5602 = vcmp.eq.f32.partialorder %v5580, 0.0
    %v5603 = vand.u32 %v5580, 2147483648
    %v5604 = vsel %vm5602, %v5603, %v5601
    %v5605 = vadd.f32 %v5577, 0.0001
    %v5606 = vadd.f32 %v5578, 0.0001
    %v5607 = vrsqrt.pop %v5605
    %v5608 = vmul.f32 %v5607, %v5605
    %v5609 = vmul.f32 %v5608, %v5607
    %v5610 = vmul.f32 0.5, %v5609
    %v5611 = vsub.f32 1.5, %v5610
    %v5612 = vmul.f32 %v5607, %v5611
    %v5613 = vmul.f32 %v5605, %v5612
    %vm5614 = vcmp.eq.f32.partialorder %v5605, inf
    %v5615 = vsel %vm5614, %v5605, %v5613
    %vm5616 = vcmp.eq.f32.partialorder %v5605, 0.0
    %v5617 = vand.u32 %v5605, 2147483648
    %v5618 = vsel %vm5616, %v5617, %v5615
    %v5619 = vrsqrt.pop %v5606
    %v5620 = vmul.f32 %v5619, %v5606
    %v5621 = vmul.f32 %v5620, %v5619
    %v5622 = vmul.f32 0.5, %v5621
    %v5623 = vsub.f32 1.5, %v5622
    %v5624 = vmul.f32 %v5619, %v5623
    %v5625 = vmul.f32 %v5606, %v5624
    %vm5626 = vcmp.eq.f32.partialorder %v5606, inf
    %v5627 = vsel %vm5626, %v5606, %v5625
    %vm5628 = vcmp.eq.f32.partialorder %v5606, 0.0
    %v5629 = vand.u32 %v5606, 2147483648
    %v5630 = vsel %vm5628, %v5629, %v5627
    %v5631 = vsub.f32 1.0, %v5592
    %v5632 = vsub.f32 1.0, %v5604
    %v5633 = vmax.f32 %v5631, 0.0
    %v5634 = vmax.f32 %v5632, 0.0
    %vm5635 = vcmask 1040384
    %v5636 = vsel %vm5635, %v5633, 0.0
    %v5637 = vsel %vm5635, %v5634, 0.0
    %v5638 = vadd.f32 %v5636, %v5637
    %5639 = vadd.xlane.f32.xlu0 %v5638
    %v5640 = vpop.xlane.xlu0 %5639
    %v5641 = vrot.slane %v5640, 4
    %v5642 = vadd.f32 %v5640, %v5641
    %v5643 = vrot.slane %v5642, 2
    %v5644 = vadd.f32 %v5642, %v5643
    %v5645 = vrot.slane %v5644, 1
    %v5646 = vadd.f32 %v5644, %v5645
    %s5647 = vtos %v5646
    %v5648 = vrcp.pop 256.0
    %v5649 = vmul.f32 256.0, %v5648
    %v5650 = vsub.f32 1.0, %v5649
    %v5651 = vmul.f32 %v5648, %v5650
    %v5652 = vadd.f32 %v5648, %v5651
    %vm5653 = vweird.f32 %v5648
    %v5654 = vsel %vm5653, %v5648, %v5652
    %s5655 = vtos %v5654
    %s5656 = smul.f32 %s5647, %s5655
    %v5657 = vrcp.pop 2.0
    %v5658 = vmul.f32 2.0, %v5657
    %v5659 = vsub.f32 1.0, %v5658
    %v5660 = vmul.f32 %v5657, %v5659
    %v5661 = vadd.f32 %v5657, %v5660
    %vm5662 = vweird.f32 %v5657
    %v5663 = vsel %vm5662, %v5657, %v5661
    %s5664 = vtos %v5663
    %s5665 = smul.f32 %s5656, %s5664
    %v5666 = vsub.f32 1.0, %v5618
    %v5667 = vsub.f32 1.0, %v5630
    %v5668 = vmax.f32 %v5666, 0.0
    %v5669 = vmax.f32 %v5667, 0.0
    %v5670 = vsel %vm5635, %v5668, 0.0
    %v5671 = vsel %vm5635, %v5669, 0.0
    %v5672 = vadd.f32 %v5670, %v5671
    %5673 = vadd.xlane.f32.xlu0 %v5672
    %v5674 = vpop.xlane.xlu0 %5673
    %v5675 = vrot.slane %v5674, 4
    %v5676 = vadd.f32 %v5674, %v5675
    %v5677 = vrot.slane %v5676, 2
    %v5678 = vadd.f32 %v5676, %v5677
    %v5679 = vrot.slane %v5678, 1
    %v5680 = vadd.f32 %v5678, %v5679
    %s5681 = vtos %v5680
    %v5682 = vrcp.pop 256.0
    %v5683 = vmul.f32 256.0, %v5682
    %v5684 = vsub.f32 1.0, %v5683
    %v5685 = vmul.f32 %v5682, %v5684
    %v5686 = vadd.f32 %v5682, %v5685
    %vm5687 = vweird.f32 %v5682
    %v5688 = vsel %vm5687, %v5682, %v5686
    %s5689 = vtos %v5688
    %s5690 = smul.f32 %s5681, %s5689
    %v5691 = vrcp.pop 2.0
    %v5692 = vmul.f32 2.0, %v5691
    %v5693 = vsub.f32 1.0, %v5692
    %v5694 = vmul.f32 %v5691, %v5693
    %v5695 = vadd.f32 %v5691, %v5694
    %vm5696 = vweird.f32 %v5691
    %v5697 = vsel %vm5696, %v5691, %v5695
    %s5698 = vtos %v5697
    %s5699 = smul.f32 %s5690, %s5698
    %s5700 = sadd.f32 %s5665, %s5699
    %5701 = vxpose.xlu0.b32.start [1/16] %v5312, 128
    %5702 = vxpose.xlu0.b32.cont [2/16] %v5314, 128
    %5703 = vxpose.xlu0.b32.cont [3/16] %v5316, 128
    %5704 = vxpose.xlu0.b32.cont [4/16] %v5318, 128
    %5705 = vxpose.xlu0.b32.cont [5/16] %v5320, 128
    %5706 = vxpose.xlu0.b32.cont [6/16] %v5322, 128
    %5707 = vxpose.xlu0.b32.cont [7/16] %v5324, 128
    %5708 = vxpose.xlu0.b32.cont [8/16] %v5326, 128
    %5709 = vxpose.xlu0.b32.cont [9/16] %v5328, 128
    %5710 = vxpose.xlu0.b32.cont [10/16] %v5330, 128
    %5711 = vxpose.xlu0.b32.cont [11/16] %v5332, 128
    %5712 = vxpose.xlu0.b32.cont [12/16] %v5334, 128
    %5713 = vxpose.xlu0.b32.cont [13/16] %v5336, 128
    %5714 = vxpose.xlu0.b32.cont [14/16] %v5338, 128
    %5715 = vxpose.xlu0.b32.cont [15/16] %v5340, 128
    %5716 = vxpose.xlu0.b32.end [16/16] %v5342, 128
    %v5717 = vpop.trf.xlu0
    %v5718 = vpop.trf.xlu0
    %v5719 = vpop.trf.xlu0
    %v5720 = vpop.trf.xlu0
    %v5721 = vpop.trf.xlu0
    %v5722 = vpop.trf.xlu0
    %v5723 = vpop.trf.xlu0
    %v5724 = vpop.trf.xlu0
    %v5725 = vpop.trf.xlu0
    %v5726 = vpop.trf.xlu0
    %v5727 = vpop.trf.xlu0
    %v5728 = vpop.trf.xlu0
    %v5729 = vpop.trf.xlu0
    %v5730 = vpop.trf.xlu0
    %v5731 = vpop.trf.xlu0
    %v5732 = vpop.trf.xlu0
    %5733 = vxpose.xlu0.b32.start [1/16] %v5313, 128
    %5734 = vxpose.xlu0.b32.cont [2/16] %v5315, 128
    %5735 = vxpose.xlu0.b32.cont [3/16] %v5317, 128
    %5736 = vxpose.xlu0.b32.cont [4/16] %v5319, 128
    %5737 = vxpose.xlu0.b32.cont [5/16] %v5321, 128
    %5738 = vxpose.xlu0.b32.cont [6/16] %v5323, 128
    %5739 = vxpose.xlu0.b32.cont [7/16] %v5325, 128
    %5740 = vxpose.xlu0.b32.cont [8/16] %v5327, 128
    %5741 = vxpose.xlu0.b32.cont [9/16] %v5329, 128
    %5742 = vxpose.xlu0.b32.cont [10/16] %v5331, 128
    %5743 = vxpose.xlu0.b32.cont [11/16] %v5333, 128
    %5744 = vxpose.xlu0.b32.cont [12/16] %v5335, 128
    %5745 = vxpose.xlu0.b32.cont [13/16] %v5337, 128
    %5746 = vxpose.xlu0.b32.cont [14/16] %v5339, 128
    %5747 = vxpose.xlu0.b32.cont [15/16] %v5341, 128
    %5748 = vxpose.xlu0.b32.end [16/16] %v5343, 128
    %v5749 = vpop.trf.xlu0
    %v5750 = vpop.trf.xlu0
    %v5751 = vpop.trf.xlu0
    %v5752 = vpop.trf.xlu0
    %v5753 = vpop.trf.xlu0
    %v5754 = vpop.trf.xlu0
    %v5755 = vpop.trf.xlu0
    %v5756 = vpop.trf.xlu0
    %v5757 = vpop.trf.xlu0
    %v5758 = vpop.trf.xlu0
    %v5759 = vpop.trf.xlu0
    %v5760 = vpop.trf.xlu0
    %v5761 = vpop.trf.xlu0
    %v5762 = vpop.trf.xlu0
    %v5763 = vpop.trf.xlu0
    %v5764 = vpop.trf.xlu0
    %5765 = vmatpush.msra.mxu0 %v5342
    %5766 = vmatpush.msra.mxu0 %v5340
    %5767 = vmatpush.msra.mxu0 %v5338
    %5768 = vmatpush.msra.mxu0 %v5336
    %5769 = vmatpush.msra.mxu0 %v5334
    %5770 = vmatpush.msra.mxu0 %v5332
    %5771 = vmatpush.msra.mxu0 %v5330
    %5772 = vmatpush.msra.mxu0 %v5328
    %5773 = vmatpush.msra.mxu0 %v5326
    %5774 = vmatpush.msra.mxu0 %v5324
    %5775 = vmatpush.msra.mxu0 %v5322
    %5776 = vmatpush.msra.mxu0 %v5320
    %5777 = vmatpush.msra.mxu0 %v5318
    %5778 = vmatpush.msra.mxu0 %v5316
    %5779 = vmatpush.msra.mxu0 %v5314
    %5780 = vmatpush.msra.mxu0 %v5312
    %5781 = vmatmul.f32.gmra.mxu0 %v5717
    %v5782 = vpop.f32.mrf.mxu0
    %v5783 = vadd.f32 0.0, %v5782
    %5784 = vmatmul.f32.gmra.mxu0 %v5718
    %v5785 = vpop.f32.mrf.mxu0
    %v5786 = vadd.f32 0.0, %v5785
    %5787 = vmatmul.f32.gmra.mxu0 %v5719
    %v5788 = vpop.f32.mrf.mxu0
    %v5789 = vadd.f32 0.0, %v5788
    %5790 = vmatmul.f32.gmra.mxu0 %v5720
    %v5791 = vpop.f32.mrf.mxu0
    %v5792 = vadd.f32 0.0, %v5791
    %5793 = vmatmul.f32.gmra.mxu0 %v5721
    %v5794 = vpop.f32.mrf.mxu0
    %v5795 = vadd.f32 0.0, %v5794
    %5796 = vmatmul.f32.gmra.mxu0 %v5722
    %v5797 = vpop.f32.mrf.mxu0
    %v5798 = vadd.f32 0.0, %v5797
    %5799 = vmatmul.f32.gmra.mxu0 %v5723
    %v5800 = vpop.f32.mrf.mxu0
    %v5801 = vadd.f32 0.0, %v5800
    %5802 = vmatmul.f32.gmra.mxu0 %v5724
    %v5803 = vpop.f32.mrf.mxu0
    %v5804 = vadd.f32 0.0, %v5803
    %5805 = vmatmul.f32.gmra.mxu0 %v5725
    %v5806 = vpop.f32.mrf.mxu0
    %v5807 = vadd.f32 0.0, %v5806
    %5808 = vmatmul.f32.gmra.mxu0 %v5726
    %v5809 = vpop.f32.mrf.mxu0
    %v5810 = vadd.f32 0.0, %v5809
    %5811 = vmatmul.f32.gmra.mxu0 %v5727
    %v5812 = vpop.f32.mrf.mxu0
    %v5813 = vadd.f32 0.0, %v5812
    %5814 = vmatmul.f32.gmra.mxu0 %v5728
    %v5815 = vpop.f32.mrf.mxu0
    %v5816 = vadd.f32 0.0, %v5815
    %5817 = vmatmul.f32.gmra.mxu0 %v5729
    %v5818 = vpop.f32.mrf.mxu0
    %v5819 = vadd.f32 0.0, %v5818
    %5820 = vmatmul.f32.gmra.mxu0 %v5730
    %v5821 = vpop.f32.mrf.mxu0
    %v5822 = vadd.f32 0.0, %v5821
    %5823 = vmatmul.f32.gmra.mxu0 %v5731
    %v5824 = vpop.f32.mrf.mxu0
    %v5825 = vadd.f32 0.0, %v5824
    %5826 = vmatmul.f32.gmra.mxu0 %v5732
    %v5827 = vpop.f32.mrf.mxu0
    %v5828 = vadd.f32 0.0, %v5827
    %5829 = vmatmul.f32.gmra.mxu0 %v5749
    %v5830 = vpop.f32.mrf.mxu0
    %v5831 = vadd.f32 0.0, %v5830
    %5832 = vmatmul.f32.gmra.mxu0 %v5750
    %v5833 = vpop.f32.mrf.mxu0
    %v5834 = vadd.f32 0.0, %v5833
    %5835 = vmatmul.f32.gmra.mxu0 %v5751
    %v5836 = vpop.f32.mrf.mxu0
    %v5837 = vadd.f32 0.0, %v5836
    %5838 = vmatmul.f32.gmra.mxu0 %v5752
    %v5839 = vpop.f32.mrf.mxu0
    %v5840 = vadd.f32 0.0, %v5839
    %5841 = vmatmul.f32.gmra.mxu0 %v5753
    %v5842 = vpop.f32.mrf.mxu0
    %v5843 = vadd.f32 0.0, %v5842
    %5844 = vmatmul.f32.gmra.mxu0 %v5754
    %v5845 = vpop.f32.mrf.mxu0
    %v5846 = vadd.f32 0.0, %v5845
    %5847 = vmatmul.f32.gmra.mxu0 %v5755
    %v5848 = vpop.f32.mrf.mxu0
    %v5849 = vadd.f32 0.0, %v5848
    %5850 = vmatmul.f32.gmra.mxu0 %v5756
    %v5851 = vpop.f32.mrf.mxu0
    %v5852 = vadd.f32 0.0, %v5851
    %5853 = vmatmul.f32.gmra.mxu0 %v5757
    %v5854 = vpop.f32.mrf.mxu0
    %v5855 = vadd.f32 0.0, %v5854
    %5856 = vmatmul.f32.gmra.mxu0 %v5758
    %v5857 = vpop.f32.mrf.mxu0
    %v5858 = vadd.f32 0.0, %v5857
    %5859 = vmatmul.f32.gmra.mxu0 %v5759
    %v5860 = vpop.f32.mrf.mxu0
    %v5861 = vadd.f32 0.0, %v5860
    %5862 = vmatmul.f32.gmra.mxu0 %v5760
    %v5863 = vpop.f32.mrf.mxu0
    %v5864 = vadd.f32 0.0, %v5863
    %5865 = vmatmul.f32.gmra.mxu0 %v5761
    %v5866 = vpop.f32.mrf.mxu0
    %v5867 = vadd.f32 0.0, %v5866
    %5868 = vmatmul.f32.gmra.mxu0 %v5762
    %v5869 = vpop.f32.mrf.mxu0
    %v5870 = vadd.f32 0.0, %v5869
    %5871 = vmatmul.f32.gmra.mxu0 %v5763
    %v5872 = vpop.f32.mrf.mxu0
    %v5873 = vadd.f32 0.0, %v5872
    %5874 = vmatmul.f32.gmra.mxu0 %v5764
    %v5875 = vpop.f32.mrf.mxu0
    %v5876 = vadd.f32 0.0, %v5875
    %5877 = vdwg.mxu0
    %5878 = vmatpush.msra.mxu0 %v5343
    %5879 = vmatpush.msra.mxu0 %v5341
    %5880 = vmatpush.msra.mxu0 %v5339
    %5881 = vmatpush.msra.mxu0 %v5337
    %5882 = vmatpush.msra.mxu0 %v5335
    %5883 = vmatpush.msra.mxu0 %v5333
    %5884 = vmatpush.msra.mxu0 %v5331
    %5885 = vmatpush.msra.mxu0 %v5329
    %5886 = vmatpush.msra.mxu0 %v5327
    %5887 = vmatpush.msra.mxu0 %v5325
    %5888 = vmatpush.msra.mxu0 %v5323
    %5889 = vmatpush.msra.mxu0 %v5321
    %5890 = vmatpush.msra.mxu0 %v5319
    %5891 = vmatpush.msra.mxu0 %v5317
    %5892 = vmatpush.msra.mxu0 %v5315
    %5893 = vmatpush.msra.mxu0 %v5313
    %5894 = vmatmul.f32.gmra.mxu0 %v5717
    %v5895 = vpop.f32.mrf.mxu0
    %v5896 = vadd.f32 0.0, %v5895
    %5897 = vmatmul.f32.gmra.mxu0 %v5718
    %v5898 = vpop.f32.mrf.mxu0
    %v5899 = vadd.f32 0.0, %v5898
    %5900 = vmatmul.f32.gmra.mxu0 %v5719
    %v5901 = vpop.f32.mrf.mxu0
    %v5902 = vadd.f32 0.0, %v5901
    %5903 = vmatmul.f32.gmra.mxu0 %v5720
    %v5904 = vpop.f32.mrf.mxu0
    %v5905 = vadd.f32 0.0, %v5904
    %5906 = vmatmul.f32.gmra.mxu0 %v5721
    %v5907 = vpop.f32.mrf.mxu0
    %v5908 = vadd.f32 0.0, %v5907
    %5909 = vmatmul.f32.gmra.mxu0 %v5722
    %v5910 = vpop.f32.mrf.mxu0
    %v5911 = vadd.f32 0.0, %v5910
    %5912 = vmatmul.f32.gmra.mxu0 %v5723
    %v5913 = vpop.f32.mrf.mxu0
    %v5914 = vadd.f32 0.0, %v5913
    %5915 = vmatmul.f32.gmra.mxu0 %v5724
    %v5916 = vpop.f32.mrf.mxu0
    %v5917 = vadd.f32 0.0, %v5916
    %5918 = vmatmul.f32.gmra.mxu0 %v5725
    %v5919 = vpop.f32.mrf.mxu0
    %v5920 = vadd.f32 0.0, %v5919
    %5921 = vmatmul.f32.gmra.mxu0 %v5726
    %v5922 = vpop.f32.mrf.mxu0
    %v5923 = vadd.f32 0.0, %v5922
    %5924 = vmatmul.f32.gmra.mxu0 %v5727
    %v5925 = vpop.f32.mrf.mxu0
    %v5926 = vadd.f32 0.0, %v5925
    %5927 = vmatmul.f32.gmra.mxu0 %v5728
    %v5928 = vpop.f32.mrf.mxu0
    %v5929 = vadd.f32 0.0, %v5928
    %5930 = vmatmul.f32.gmra.mxu0 %v5729
    %v5931 = vpop.f32.mrf.mxu0
    %v5932 = vadd.f32 0.0, %v5931
    %5933 = vmatmul.f32.gmra.mxu0 %v5730
    %v5934 = vpop.f32.mrf.mxu0
    %v5935 = vadd.f32 0.0, %v5934
    %5936 = vmatmul.f32.gmra.mxu0 %v5731
    %v5937 = vpop.f32.mrf.mxu0
    %v5938 = vadd.f32 0.0, %v5937
    %5939 = vmatmul.f32.gmra.mxu0 %v5732
    %v5940 = vpop.f32.mrf.mxu0
    %v5941 = vadd.f32 0.0, %v5940
    %5942 = vmatmul.f32.gmra.mxu0 %v5749
    %v5943 = vpop.f32.mrf.mxu0
    %v5944 = vadd.f32 0.0, %v5943
    %5945 = vmatmul.f32.gmra.mxu0 %v5750
    %v5946 = vpop.f32.mrf.mxu0
    %v5947 = vadd.f32 0.0, %v5946
    %5948 = vmatmul.f32.gmra.mxu0 %v5751
    %v5949 = vpop.f32.mrf.mxu0
    %v5950 = vadd.f32 0.0, %v5949
    %5951 = vmatmul.f32.gmra.mxu0 %v5752
    %v5952 = vpop.f32.mrf.mxu0
    %v5953 = vadd.f32 0.0, %v5952
    %5954 = vmatmul.f32.gmra.mxu0 %v5753
    %v5955 = vpop.f32.mrf.mxu0
    %v5956 = vadd.f32 0.0, %v5955
    %5957 = vmatmul.f32.gmra.mxu0 %v5754
    %v5958 = vpop.f32.mrf.mxu0
    %v5959 = vadd.f32 0.0, %v5958
    %5960 = vmatmul.f32.gmra.mxu0 %v5755
    %v5961 = vpop.f32.mrf.mxu0
    %v5962 = vadd.f32 0.0, %v5961
    %5963 = vmatmul.f32.gmra.mxu0 %v5756
    %v5964 = vpop.f32.mrf.mxu0
    %v5965 = vadd.f32 0.0, %v5964
    %5966 = vmatmul.f32.gmra.mxu0 %v5757
    %v5967 = vpop.f32.mrf.mxu0
    %v5968 = vadd.f32 0.0, %v5967
    %5969 = vmatmul.f32.gmra.mxu0 %v5758
    %v5970 = vpop.f32.mrf.mxu0
    %v5971 = vadd.f32 0.0, %v5970
    %5972 = vmatmul.f32.gmra.mxu0 %v5759
    %v5973 = vpop.f32.mrf.mxu0
    %v5974 = vadd.f32 0.0, %v5973
    %5975 = vmatmul.f32.gmra.mxu0 %v5760
    %v5976 = vpop.f32.mrf.mxu0
    %v5977 = vadd.f32 0.0, %v5976
    %5978 = vmatmul.f32.gmra.mxu0 %v5761
    %v5979 = vpop.f32.mrf.mxu0
    %v5980 = vadd.f32 0.0, %v5979
    %5981 = vmatmul.f32.gmra.mxu0 %v5762
    %v5982 = vpop.f32.mrf.mxu0
    %v5983 = vadd.f32 0.0, %v5982
    %5984 = vmatmul.f32.gmra.mxu0 %v5763
    %v5985 = vpop.f32.mrf.mxu0
    %v5986 = vadd.f32 0.0, %v5985
    %5987 = vmatmul.f32.gmra.mxu0 %v5764
    %v5988 = vpop.f32.mrf.mxu0
    %v5989 = vadd.f32 0.0, %v5988
    %5990 = vdwg.mxu0
    %v5991 = vmul.f32 %v5783, %v5500
    %v5992 = vmul.f32 %v5896, %v5500
    %v5993 = vmul.f32 %v5786, %v5500
    %v5994 = vmul.f32 %v5899, %v5500
    %v5995 = vmul.f32 %v5789, %v5500
    %v5996 = vmul.f32 %v5902, %v5500
    %v5997 = vmul.f32 %v5792, %v5500
    %v5998 = vmul.f32 %v5905, %v5500
    %v5999 = vmul.f32 %v5795, %v5500
    %v6000 = vmul.f32 %v5908, %v5500
    %v6001 = vmul.f32 %v5798, %v5500
    %v6002 = vmul.f32 %v5911, %v5500
    %v6003 = vmul.f32 %v5801, %v5500
    %v6004 = vmul.f32 %v5914, %v5500
    %v6005 = vmul.f32 %v5804, %v5500
    %v6006 = vmul.f32 %v5917, %v5500
    %v6007 = vmul.f32 %v5807, %v5500
    %v6008 = vmul.f32 %v5920, %v5500
    %v6009 = vmul.f32 %v5810, %v5500
    %v6010 = vmul.f32 %v5923, %v5500
    %v6011 = vmul.f32 %v5813, %v5500
    %v6012 = vmul.f32 %v5926, %v5500
    %v6013 = vmul.f32 %v5816, %v5500
    %v6014 = vmul.f32 %v5929, %v5500
    %v6015 = vmul.f32 %v5819, %v5500
    %v6016 = vmul.f32 %v5932, %v5500
    %v6017 = vmul.f32 %v5822, %v5500
    %v6018 = vmul.f32 %v5935, %v5500
    %v6019 = vmul.f32 %v5825, %v5500
    %v6020 = vmul.f32 %v5938, %v5500
    %v6021 = vmul.f32 %v5828, %v5500
    %v6022 = vmul.f32 %v5941, %v5500
    %v6023 = vmul.f32 %v5831, %v5500
    %v6024 = vmul.f32 %v5944, %v5500
    %v6025 = vmul.f32 %v5834, %v5500
    %v6026 = vmul.f32 %v5947, %v5500
    %v6027 = vmul.f32 %v5837, %v5500
    %v6028 = vmul.f32 %v5950, %v5500
    %v6029 = vmul.f32 %v5840, %v5500
    %v6030 = vmul.f32 %v5953, %v5500
    %v6031 = vmul.f32 %v5843, %v5500
    %v6032 = vmul.f32 %v5956, %v5500
    %v6033 = vmul.f32 %v5846, %v5500
    %v6034 = vmul.f32 %v5959, %v5500
    %v6035 = vmul.f32 %v5849, %v5500
    %v6036 = vmul.f32 %v5962, %v5500
    %v6037 = vmul.f32 %v5852, %v5500
    %v6038 = vmul.f32 %v5965, %v5500
    %v6039 = vmul.f32 %v5855, %v5500
    %v6040 = vmul.f32 %v5968, %v5500
    %v6041 = vmul.f32 %v5858, %v5500
    %v6042 = vmul.f32 %v5971, %v5500
    %v6043 = vmul.f32 %v5861, %v5500
    %v6044 = vmul.f32 %v5974, %v5500
    %v6045 = vmul.f32 %v5864, %v5500
    %v6046 = vmul.f32 %v5977, %v5500
    %v6047 = vmul.f32 %v5867, %v5500
    %v6048 = vmul.f32 %v5980, %v5500
    %v6049 = vmul.f32 %v5870, %v5500
    %v6050 = vmul.f32 %v5983, %v5500
    %v6051 = vmul.f32 %v5873, %v5500
    %v6052 = vmul.f32 %v5986, %v5500
    %v6053 = vmul.f32 %v5876, %v5500
    %v6054 = vmul.f32 %v5989, %v5500
    %6055 = vxpose.xlu0.b32.start [1/16] %v5388, 128
    %6056 = vxpose.xlu0.b32.cont [2/16] %v5390, 128
    %6057 = vxpose.xlu0.b32.cont [3/16] %v5392, 128
    %6058 = vxpose.xlu0.b32.cont [4/16] %v5394, 128
    %6059 = vxpose.xlu0.b32.cont [5/16] %v5396, 128
    %6060 = vxpose.xlu0.b32.cont [6/16] %v5398, 128
    %6061 = vxpose.xlu0.b32.cont [7/16] %v5400, 128
    %6062 = vxpose.xlu0.b32.cont [8/16] %v5402, 128
    %6063 = vxpose.xlu0.b32.cont [9/16] %v5404, 128
    %6064 = vxpose.xlu0.b32.cont [10/16] %v5406, 128
    %6065 = vxpose.xlu0.b32.cont [11/16] %v5408, 128
    %6066 = vxpose.xlu0.b32.cont [12/16] %v5410, 128
    %6067 = vxpose.xlu0.b32.cont [13/16] %v5412, 128
    %6068 = vxpose.xlu0.b32.cont [14/16] %v5414, 128
    %6069 = vxpose.xlu0.b32.cont [15/16] %v5416, 128
    %6070 = vxpose.xlu0.b32.end [16/16] %v5418, 128
    %v6071 = vpop.trf.xlu0
    %v6072 = vpop.trf.xlu0
    %v6073 = vpop.trf.xlu0
    %v6074 = vpop.trf.xlu0
    %v6075 = vpop.trf.xlu0
    %v6076 = vpop.trf.xlu0
    %v6077 = vpop.trf.xlu0
    %v6078 = vpop.trf.xlu0
    %v6079 = vpop.trf.xlu0
    %v6080 = vpop.trf.xlu0
    %v6081 = vpop.trf.xlu0
    %v6082 = vpop.trf.xlu0
    %v6083 = vpop.trf.xlu0
    %v6084 = vpop.trf.xlu0
    %v6085 = vpop.trf.xlu0
    %v6086 = vpop.trf.xlu0
    %6087 = vxpose.xlu0.b32.start [1/16] %v5389, 128
    %6088 = vxpose.xlu0.b32.cont [2/16] %v5391, 128
    %6089 = vxpose.xlu0.b32.cont [3/16] %v5393, 128
    %6090 = vxpose.xlu0.b32.cont [4/16] %v5395, 128
    %6091 = vxpose.xlu0.b32.cont [5/16] %v5397, 128
    %6092 = vxpose.xlu0.b32.cont [6/16] %v5399, 128
    %6093 = vxpose.xlu0.b32.cont [7/16] %v5401, 128
    %6094 = vxpose.xlu0.b32.cont [8/16] %v5403, 128
    %6095 = vxpose.xlu0.b32.cont [9/16] %v5405, 128
    %6096 = vxpose.xlu0.b32.cont [10/16] %v5407, 128
    %6097 = vxpose.xlu0.b32.cont [11/16] %v5409, 128
    %6098 = vxpose.xlu0.b32.cont [12/16] %v5411, 128
    %6099 = vxpose.xlu0.b32.cont [13/16] %v5413, 128
    %6100 = vxpose.xlu0.b32.cont [14/16] %v5415, 128
    %6101 = vxpose.xlu0.b32.cont [15/16] %v5417, 128
    %6102 = vxpose.xlu0.b32.end [16/16] %v5419, 128
    %v6103 = vpop.trf.xlu0
    %v6104 = vpop.trf.xlu0
    %v6105 = vpop.trf.xlu0
    %v6106 = vpop.trf.xlu0
    %v6107 = vpop.trf.xlu0
    %v6108 = vpop.trf.xlu0
    %v6109 = vpop.trf.xlu0
    %v6110 = vpop.trf.xlu0
    %v6111 = vpop.trf.xlu0
    %v6112 = vpop.trf.xlu0
    %v6113 = vpop.trf.xlu0
    %v6114 = vpop.trf.xlu0
    %v6115 = vpop.trf.xlu0
    %v6116 = vpop.trf.xlu0
    %v6117 = vpop.trf.xlu0
    %v6118 = vpop.trf.xlu0
    %6119 = vmatpush.msra.mxu0 %v5418
    %6120 = vmatpush.msra.mxu0 %v5416
    %6121 = vmatpush.msra.mxu0 %v5414
    %6122 = vmatpush.msra.mxu0 %v5412
    %6123 = vmatpush.msra.mxu0 %v5410
    %6124 = vmatpush.msra.mxu0 %v5408
    %6125 = vmatpush.msra.mxu0 %v5406
    %6126 = vmatpush.msra.mxu0 %v5404
    %6127 = vmatpush.msra.mxu0 %v5402
    %6128 = vmatpush.msra.mxu0 %v5400
    %6129 = vmatpush.msra.mxu0 %v5398
    %6130 = vmatpush.msra.mxu0 %v5396
    %6131 = vmatpush.msra.mxu0 %v5394
    %6132 = vmatpush.msra.mxu0 %v5392
    %6133 = vmatpush.msra.mxu0 %v5390
    %6134 = vmatpush.msra.mxu0 %v5388
    %6135 = vmatmul.f32.gmra.mxu0 %v6071
    %v6136 = vpop.f32.mrf.mxu0
    %v6137 = vadd.f32 0.0, %v6136
    %6138 = vmatmul.f32.gmra.mxu0 %v6072
    %v6139 = vpop.f32.mrf.mxu0
    %v6140 = vadd.f32 0.0, %v6139
    %6141 = vmatmul.f32.gmra.mxu0 %v6073
    %v6142 = vpop.f32.mrf.mxu0
    %v6143 = vadd.f32 0.0, %v6142
    %6144 = vmatmul.f32.gmra.mxu0 %v6074
    %v6145 = vpop.f32.mrf.mxu0
    %v6146 = vadd.f32 0.0, %v6145
    %6147 = vmatmul.f32.gmra.mxu0 %v6075
    %v6148 = vpop.f32.mrf.mxu0
    %v6149 = vadd.f32 0.0, %v6148
    %6150 = vmatmul.f32.gmra.mxu0 %v6076
    %v6151 = vpop.f32.mrf.mxu0
    %v6152 = vadd.f32 0.0, %v6151
    %6153 = vmatmul.f32.gmra.mxu0 %v6077
    %v6154 = vpop.f32.mrf.mxu0
    %v6155 = vadd.f32 0.0, %v6154
    %6156 = vmatmul.f32.gmra.mxu0 %v6078
    %v6157 = vpop.f32.mrf.mxu0
    %v6158 = vadd.f32 0.0, %v6157
    %6159 = vmatmul.f32.gmra.mxu0 %v6079
    %v6160 = vpop.f32.mrf.mxu0
    %v6161 = vadd.f32 0.0, %v6160
    %6162 = vmatmul.f32.gmra.mxu0 %v6080
    %v6163 = vpop.f32.mrf.mxu0
    %v6164 = vadd.f32 0.0, %v6163
    %6165 = vmatmul.f32.gmra.mxu0 %v6081
    %v6166 = vpop.f32.mrf.mxu0
    %v6167 = vadd.f32 0.0, %v6166
    %6168 = vmatmul.f32.gmra.mxu0 %v6082
    %v6169 = vpop.f32.mrf.mxu0
    %v6170 = vadd.f32 0.0, %v6169
    %6171 = vmatmul.f32.gmra.mxu0 %v6083
    %v6172 = vpop.f32.mrf.mxu0
    %v6173 = vadd.f32 0.0, %v6172
    %6174 = vmatmul.f32.gmra.mxu0 %v6084
    %v6175 = vpop.f32.mrf.mxu0
    %v6176 = vadd.f32 0.0, %v6175
    %6177 = vmatmul.f32.gmra.mxu0 %v6085
    %v6178 = vpop.f32.mrf.mxu0
    %v6179 = vadd.f32 0.0, %v6178
    %6180 = vmatmul.f32.gmra.mxu0 %v6086
    %v6181 = vpop.f32.mrf.mxu0
    %v6182 = vadd.f32 0.0, %v6181
    %6183 = vmatmul.f32.gmra.mxu0 %v6103
    %v6184 = vpop.f32.mrf.mxu0
    %v6185 = vadd.f32 0.0, %v6184
    %6186 = vmatmul.f32.gmra.mxu0 %v6104
    %v6187 = vpop.f32.mrf.mxu0
    %v6188 = vadd.f32 0.0, %v6187
    %6189 = vmatmul.f32.gmra.mxu0 %v6105
    %v6190 = vpop.f32.mrf.mxu0
    %v6191 = vadd.f32 0.0, %v6190
    %6192 = vmatmul.f32.gmra.mxu0 %v6106
    %v6193 = vpop.f32.mrf.mxu0
    %v6194 = vadd.f32 0.0, %v6193
    %6195 = vmatmul.f32.gmra.mxu0 %v6107
    %v6196 = vpop.f32.mrf.mxu0
    %v6197 = vadd.f32 0.0, %v6196
    %6198 = vmatmul.f32.gmra.mxu0 %v6108
    %v6199 = vpop.f32.mrf.mxu0
    %v6200 = vadd.f32 0.0, %v6199
    %6201 = vmatmul.f32.gmra.mxu0 %v6109
    %v6202 = vpop.f32.mrf.mxu0
    %v6203 = vadd.f32 0.0, %v6202
    %6204 = vmatmul.f32.gmra.mxu0 %v6110
    %v6205 = vpop.f32.mrf.mxu0
    %v6206 = vadd.f32 0.0, %v6205
    %6207 = vmatmul.f32.gmra.mxu0 %v6111
    %v6208 = vpop.f32.mrf.mxu0
    %v6209 = vadd.f32 0.0, %v6208
    %6210 = vmatmul.f32.gmra.mxu0 %v6112
    %v6211 = vpop.f32.mrf.mxu0
    %v6212 = vadd.f32 0.0, %v6211
    %6213 = vmatmul.f32.gmra.mxu0 %v6113
    %v6214 = vpop.f32.mrf.mxu0
    %v6215 = vadd.f32 0.0, %v6214
    %6216 = vmatmul.f32.gmra.mxu0 %v6114
    %v6217 = vpop.f32.mrf.mxu0
    %v6218 = vadd.f32 0.0, %v6217
    %6219 = vmatmul.f32.gmra.mxu0 %v6115
    %v6220 = vpop.f32.mrf.mxu0
    %v6221 = vadd.f32 0.0, %v6220
    %6222 = vmatmul.f32.gmra.mxu0 %v6116
    %v6223 = vpop.f32.mrf.mxu0
    %v6224 = vadd.f32 0.0, %v6223
    %6225 = vmatmul.f32.gmra.mxu0 %v6117
    %v6226 = vpop.f32.mrf.mxu0
    %v6227 = vadd.f32 0.0, %v6226
    %6228 = vmatmul.f32.gmra.mxu0 %v6118
    %v6229 = vpop.f32.mrf.mxu0
    %v6230 = vadd.f32 0.0, %v6229
    %6231 = vdwg.mxu0
    %6232 = vmatpush.msra.mxu0 %v5419
    %6233 = vmatpush.msra.mxu0 %v5417
    %6234 = vmatpush.msra.mxu0 %v5415
    %6235 = vmatpush.msra.mxu0 %v5413
    %6236 = vmatpush.msra.mxu0 %v5411
    %6237 = vmatpush.msra.mxu0 %v5409
    %6238 = vmatpush.msra.mxu0 %v5407
    %6239 = vmatpush.msra.mxu0 %v5405
    %6240 = vmatpush.msra.mxu0 %v5403
    %6241 = vmatpush.msra.mxu0 %v5401
    %6242 = vmatpush.msra.mxu0 %v5399
    %6243 = vmatpush.msra.mxu0 %v5397
    %6244 = vmatpush.msra.mxu0 %v5395
    %6245 = vmatpush.msra.mxu0 %v5393
    %6246 = vmatpush.msra.mxu0 %v5391
    %6247 = vmatpush.msra.mxu0 %v5389
    %6248 = vmatmul.f32.gmra.mxu0 %v6071
    %v6249 = vpop.f32.mrf.mxu0
    %v6250 = vadd.f32 0.0, %v6249
    %6251 = vmatmul.f32.gmra.mxu0 %v6072
    %v6252 = vpop.f32.mrf.mxu0
    %v6253 = vadd.f32 0.0, %v6252
    %6254 = vmatmul.f32.gmra.mxu0 %v6073
    %v6255 = vpop.f32.mrf.mxu0
    %v6256 = vadd.f32 0.0, %v6255
    %6257 = vmatmul.f32.gmra.mxu0 %v6074
    %v6258 = vpop.f32.mrf.mxu0
    %v6259 = vadd.f32 0.0, %v6258
    %6260 = vmatmul.f32.gmra.mxu0 %v6075
    %v6261 = vpop.f32.mrf.mxu0
    %v6262 = vadd.f32 0.0, %v6261
    %6263 = vmatmul.f32.gmra.mxu0 %v6076
    %v6264 = vpop.f32.mrf.mxu0
    %v6265 = vadd.f32 0.0, %v6264
    %6266 = vmatmul.f32.gmra.mxu0 %v6077
    %v6267 = vpop.f32.mrf.mxu0
    %v6268 = vadd.f32 0.0, %v6267
    %6269 = vmatmul.f32.gmra.mxu0 %v6078
    %v6270 = vpop.f32.mrf.mxu0
    %v6271 = vadd.f32 0.0, %v6270
    %6272 = vmatmul.f32.gmra.mxu0 %v6079
    %v6273 = vpop.f32.mrf.mxu0
    %v6274 = vadd.f32 0.0, %v6273
    %6275 = vmatmul.f32.gmra.mxu0 %v6080
    %v6276 = vpop.f32.mrf.mxu0
    %v6277 = vadd.f32 0.0, %v6276
    %6278 = vmatmul.f32.gmra.mxu0 %v6081
    %v6279 = vpop.f32.mrf.mxu0
    %v6280 = vadd.f32 0.0, %v6279
    %6281 = vmatmul.f32.gmra.mxu0 %v6082
    %v6282 = vpop.f32.mrf.mxu0
    %v6283 = vadd.f32 0.0, %v6282
    %6284 = vmatmul.f32.gmra.mxu0 %v6083
    %v6285 = vpop.f32.mrf.mxu0
    %v6286 = vadd.f32 0.0, %v6285
    %6287 = vmatmul.f32.gmra.mxu0 %v6084
    %v6288 = vpop.f32.mrf.mxu0
    %v6289 = vadd.f32 0.0, %v6288
    %6290 = vmatmul.f32.gmra.mxu0 %v6085
    %v6291 = vpop.f32.mrf.mxu0
    %v6292 = vadd.f32 0.0, %v6291
    %6293 = vmatmul.f32.gmra.mxu0 %v6086
    %v6294 = vpop.f32.mrf.mxu0
    %v6295 = vadd.f32 0.0, %v6294
    %6296 = vmatmul.f32.gmra.mxu0 %v6103
    %v6297 = vpop.f32.mrf.mxu0
    %v6298 = vadd.f32 0.0, %v6297
    %6299 = vmatmul.f32.gmra.mxu0 %v6104
    %v6300 = vpop.f32.mrf.mxu0
    %v6301 = vadd.f32 0.0, %v6300
    %6302 = vmatmul.f32.gmra.mxu0 %v6105
    %v6303 = vpop.f32.mrf.mxu0
    %v6304 = vadd.f32 0.0, %v6303
    %6305 = vmatmul.f32.gmra.mxu0 %v6106
    %v6306 = vpop.f32.mrf.mxu0
    %v6307 = vadd.f32 0.0, %v6306
    %6308 = vmatmul.f32.gmra.mxu0 %v6107
    %v6309 = vpop.f32.mrf.mxu0
    %v6310 = vadd.f32 0.0, %v6309
    %6311 = vmatmul.f32.gmra.mxu0 %v6108
    %v6312 = vpop.f32.mrf.mxu0
    %v6313 = vadd.f32 0.0, %v6312
    %6314 = vmatmul.f32.gmra.mxu0 %v6109
    %v6315 = vpop.f32.mrf.mxu0
    %v6316 = vadd.f32 0.0, %v6315
    %6317 = vmatmul.f32.gmra.mxu0 %v6110
    %v6318 = vpop.f32.mrf.mxu0
    %v6319 = vadd.f32 0.0, %v6318
    %6320 = vmatmul.f32.gmra.mxu0 %v6111
    %v6321 = vpop.f32.mrf.mxu0
    %v6322 = vadd.f32 0.0, %v6321
    %6323 = vmatmul.f32.gmra.mxu0 %v6112
    %v6324 = vpop.f32.mrf.mxu0
    %v6325 = vadd.f32 0.0, %v6324
    %6326 = vmatmul.f32.gmra.mxu0 %v6113
    %v6327 = vpop.f32.mrf.mxu0
    %v6328 = vadd.f32 0.0, %v6327
    %6329 = vmatmul.f32.gmra.mxu0 %v6114
    %v6330 = vpop.f32.mrf.mxu0
    %v6331 = vadd.f32 0.0, %v6330
    %6332 = vmatmul.f32.gmra.mxu0 %v6115
    %v6333 = vpop.f32.mrf.mxu0
    %v6334 = vadd.f32 0.0, %v6333
    %6335 = vmatmul.f32.gmra.mxu0 %v6116
    %v6336 = vpop.f32.mrf.mxu0
    %v6337 = vadd.f32 0.0, %v6336
    %6338 = vmatmul.f32.gmra.mxu0 %v6117
    %v6339 = vpop.f32.mrf.mxu0
    %v6340 = vadd.f32 0.0, %v6339
    %6341 = vmatmul.f32.gmra.mxu0 %v6118
    %v6342 = vpop.f32.mrf.mxu0
    %v6343 = vadd.f32 0.0, %v6342
    %6344 = vdwg.mxu0
    %v6345 = vmul.f32 %v6137, %v5500
    %v6346 = vmul.f32 %v6250, %v5500
    %v6347 = vmul.f32 %v6140, %v5500
    %v6348 = vmul.f32 %v6253, %v5500
    %v6349 = vmul.f32 %v6143, %v5500
    %v6350 = vmul.f32 %v6256, %v5500
    %v6351 = vmul.f32 %v6146, %v5500
    %v6352 = vmul.f32 %v6259, %v5500
    %v6353 = vmul.f32 %v6149, %v5500
    %v6354 = vmul.f32 %v6262, %v5500
    %v6355 = vmul.f32 %v6152, %v5500
    %v6356 = vmul.f32 %v6265, %v5500
    %v6357 = vmul.f32 %v6155, %v5500
    %v6358 = vmul.f32 %v6268, %v5500
    %v6359 = vmul.f32 %v6158, %v5500
    %v6360 = vmul.f32 %v6271, %v5500
    %v6361 = vmul.f32 %v6161, %v5500
    %v6362 = vmul.f32 %v6274, %v5500
    %v6363 = vmul.f32 %v6164, %v5500
    %v6364 = vmul.f32 %v6277, %v5500
    %v6365 = vmul.f32 %v6167, %v5500
    %v6366 = vmul.f32 %v6280, %v5500
    %v6367 = vmul.f32 %v6170, %v5500
    %v6368 = vmul.f32 %v6283, %v5500
    %v6369 = vmul.f32 %v6173, %v5500
    %v6370 = vmul.f32 %v6286, %v5500
    %v6371 = vmul.f32 %v6176, %v5500
    %v6372 = vmul.f32 %v6289, %v5500
    %v6373 = vmul.f32 %v6179, %v5500
    %v6374 = vmul.f32 %v6292, %v5500
    %v6375 = vmul.f32 %v6182, %v5500
    %v6376 = vmul.f32 %v6295, %v5500
    %v6377 = vmul.f32 %v6185, %v5500
    %v6378 = vmul.f32 %v6298, %v5500
    %v6379 = vmul.f32 %v6188, %v5500
    %v6380 = vmul.f32 %v6301, %v5500
    %v6381 = vmul.f32 %v6191, %v5500
    %v6382 = vmul.f32 %v6304, %v5500
    %v6383 = vmul.f32 %v6194, %v5500
    %v6384 = vmul.f32 %v6307, %v5500
    %v6385 = vmul.f32 %v6197, %v5500
    %v6386 = vmul.f32 %v6310, %v5500
    %v6387 = vmul.f32 %v6200, %v5500
    %v6388 = vmul.f32 %v6313, %v5500
    %v6389 = vmul.f32 %v6203, %v5500
    %v6390 = vmul.f32 %v6316, %v5500
    %v6391 = vmul.f32 %v6206, %v5500
    %v6392 = vmul.f32 %v6319, %v5500
    %v6393 = vmul.f32 %v6209, %v5500
    %v6394 = vmul.f32 %v6322, %v5500
    %v6395 = vmul.f32 %v6212, %v5500
    %v6396 = vmul.f32 %v6325, %v5500
    %v6397 = vmul.f32 %v6215, %v5500
    %v6398 = vmul.f32 %v6328, %v5500
    %v6399 = vmul.f32 %v6218, %v5500
    %v6400 = vmul.f32 %v6331, %v5500
    %v6401 = vmul.f32 %v6221, %v5500
    %v6402 = vmul.f32 %v6334, %v5500
    %v6403 = vmul.f32 %v6224, %v5500
    %v6404 = vmul.f32 %v6337, %v5500
    %v6405 = vmul.f32 %v6227, %v5500
    %v6406 = vmul.f32 %v6340, %v5500
    %v6407 = vmul.f32 %v6230, %v5500
    %v6408 = vmul.f32 %v6343, %v5500
    %v6409 = vmul.f32 %v5991, %v5991
    %v6410 = vmul.f32 %v5992, %v5992
    %v6411 = vmul.f32 %v5993, %v5993
    %v6412 = vmul.f32 %v5994, %v5994
    %v6413 = vmul.f32 %v5995, %v5995
    %v6414 = vmul.f32 %v5996, %v5996
    %v6415 = vmul.f32 %v5997, %v5997
    %v6416 = vmul.f32 %v5998, %v5998
    %v6417 = vmul.f32 %v5999, %v5999
    %v6418 = vmul.f32 %v6000, %v6000
    %v6419 = vmul.f32 %v6001, %v6001
    %v6420 = vmul.f32 %v6002, %v6002
    %v6421 = vmul.f32 %v6003, %v6003
    %v6422 = vmul.f32 %v6004, %v6004
    %v6423 = vmul.f32 %v6005, %v6005
    %v6424 = vmul.f32 %v6006, %v6006
    %v6425 = vmul.f32 %v6007, %v6007
    %v6426 = vmul.f32 %v6008, %v6008
    %v6427 = vmul.f32 %v6009, %v6009
    %v6428 = vmul.f32 %v6010, %v6010
    %v6429 = vmul.f32 %v6011, %v6011
    %v6430 = vmul.f32 %v6012, %v6012
    %v6431 = vmul.f32 %v6013, %v6013
    %v6432 = vmul.f32 %v6014, %v6014
    %v6433 = vmul.f32 %v6015, %v6015
    %v6434 = vmul.f32 %v6016, %v6016
    %v6435 = vmul.f32 %v6017, %v6017
    %v6436 = vmul.f32 %v6018, %v6018
    %v6437 = vmul.f32 %v6019, %v6019
    %v6438 = vmul.f32 %v6020, %v6020
    %v6439 = vmul.f32 %v6021, %v6021
    %v6440 = vmul.f32 %v6022, %v6022
    %v6441 = vmul.f32 %v6023, %v6023
    %v6442 = vmul.f32 %v6024, %v6024
    %v6443 = vmul.f32 %v6025, %v6025
    %v6444 = vmul.f32 %v6026, %v6026
    %v6445 = vmul.f32 %v6027, %v6027
    %v6446 = vmul.f32 %v6028, %v6028
    %v6447 = vmul.f32 %v6029, %v6029
    %v6448 = vmul.f32 %v6030, %v6030
    %v6449 = vmul.f32 %v6031, %v6031
    %v6450 = vmul.f32 %v6032, %v6032
    %v6451 = vmul.f32 %v6033, %v6033
    %v6452 = vmul.f32 %v6034, %v6034
    %v6453 = vmul.f32 %v6035, %v6035
    %v6454 = vmul.f32 %v6036, %v6036
    %v6455 = vmul.f32 %v6037, %v6037
    %v6456 = vmul.f32 %v6038, %v6038
    %v6457 = vmul.f32 %v6039, %v6039
    %v6458 = vmul.f32 %v6040, %v6040
    %v6459 = vmul.f32 %v6041, %v6041
    %v6460 = vmul.f32 %v6042, %v6042
    %v6461 = vmul.f32 %v6043, %v6043
    %v6462 = vmul.f32 %v6044, %v6044
    %v6463 = vmul.f32 %v6045, %v6045
    %v6464 = vmul.f32 %v6046, %v6046
    %v6465 = vmul.f32 %v6047, %v6047
    %v6466 = vmul.f32 %v6048, %v6048
    %v6467 = vmul.f32 %v6049, %v6049
    %v6468 = vmul.f32 %v6050, %v6050
    %v6469 = vmul.f32 %v6051, %v6051
    %v6470 = vmul.f32 %v6052, %v6052
    %v6471 = vmul.f32 %v6053, %v6053
    %v6472 = vmul.f32 %v6054, %v6054
    %v6473 = vadd.f32 %v6409, %v6410
    %v6474 = vadd.f32 %v6473, %v6411
    %v6475 = vadd.f32 %v6474, %v6412
    %v6476 = vadd.f32 %v6475, %v6413
    %v6477 = vadd.f32 %v6476, %v6414
    %v6478 = vadd.f32 %v6477, %v6415
    %v6479 = vadd.f32 %v6478, %v6416
    %v6480 = vadd.f32 %v6479, %v6417
    %v6481 = vadd.f32 %v6480, %v6418
    %v6482 = vadd.f32 %v6481, %v6419
    %v6483 = vadd.f32 %v6482, %v6420
    %v6484 = vadd.f32 %v6483, %v6421
    %v6485 = vadd.f32 %v6484, %v6422
    %v6486 = vadd.f32 %v6485, %v6423
    %v6487 = vadd.f32 %v6486, %v6424
    %v6488 = vadd.f32 %v6487, %v6425
    %v6489 = vadd.f32 %v6488, %v6426
    %v6490 = vadd.f32 %v6489, %v6427
    %v6491 = vadd.f32 %v6490, %v6428
    %v6492 = vadd.f32 %v6491, %v6429
    %v6493 = vadd.f32 %v6492, %v6430
    %v6494 = vadd.f32 %v6493, %v6431
    %v6495 = vadd.f32 %v6494, %v6432
    %v6496 = vadd.f32 %v6495, %v6433
    %v6497 = vadd.f32 %v6496, %v6434
    %v6498 = vadd.f32 %v6497, %v6435
    %v6499 = vadd.f32 %v6498, %v6436
    %v6500 = vadd.f32 %v6499, %v6437
    %v6501 = vadd.f32 %v6500, %v6438
    %v6502 = vadd.f32 %v6501, %v6439
    %v6503 = vadd.f32 %v6502, %v6440
    %v6504 = vadd.f32 %v6503, %v6441
    %v6505 = vadd.f32 %v6504, %v6442
    %v6506 = vadd.f32 %v6505, %v6443
    %v6507 = vadd.f32 %v6506, %v6444
    %v6508 = vadd.f32 %v6507, %v6445
    %v6509 = vadd.f32 %v6508, %v6446
    %v6510 = vadd.f32 %v6509, %v6447
    %v6511 = vadd.f32 %v6510, %v6448
    %v6512 = vadd.f32 %v6511, %v6449
    %v6513 = vadd.f32 %v6512, %v6450
    %v6514 = vadd.f32 %v6513, %v6451
    %v6515 = vadd.f32 %v6514, %v6452
    %v6516 = vadd.f32 %v6515, %v6453
    %v6517 = vadd.f32 %v6516, %v6454
    %v6518 = vadd.f32 %v6517, %v6455
    %v6519 = vadd.f32 %v6518, %v6456
    %v6520 = vadd.f32 %v6519, %v6457
    %v6521 = vadd.f32 %v6520, %v6458
    %v6522 = vadd.f32 %v6521, %v6459
    %v6523 = vadd.f32 %v6522, %v6460
    %v6524 = vadd.f32 %v6523, %v6461
    %v6525 = vadd.f32 %v6524, %v6462
    %v6526 = vadd.f32 %v6525, %v6463
    %v6527 = vadd.f32 %v6526, %v6464
    %v6528 = vadd.f32 %v6527, %v6465
    %v6529 = vadd.f32 %v6528, %v6466
    %v6530 = vadd.f32 %v6529, %v6467
    %v6531 = vadd.f32 %v6530, %v6468
    %v6532 = vadd.f32 %v6531, %v6469
    %v6533 = vadd.f32 %v6532, %v6470
    %v6534 = vadd.f32 %v6533, %v6471
    %v6535 = vadd.f32 %v6534, %v6472
    %6536 = vadd.xlane.f32.xlu0 %v6535
    %v6537 = vpop.xlane.xlu0 %6536
    %v6538 = vrot.slane %v6537, 4
    %v6539 = vadd.f32 %v6537, %v6538
    %v6540 = vrot.slane %v6539, 2
    %v6541 = vadd.f32 %v6539, %v6540
    %v6542 = vrot.slane %v6541, 1
    %v6543 = vadd.f32 %v6541, %v6542
    %s6544 = vtos %v6543
    %v6545 = vmul.f32 %v5501, %v5501
    %v6546 = vmul.f32 %v5502, %v5502
    %v6547 = vsel %vm5635, %v6545, 0.0
    %v6548 = vsel %vm5635, %v6546, 0.0
    %v6549 = vadd.f32 %v6547, %v6548
    %6550 = vadd.xlane.f32.xlu0 %v6549
    %v6551 = vpop.xlane.xlu0 %6550
    %v6552 = vrot.slane %v6551, 4
    %v6553 = vadd.f32 %v6551, %v6552
    %v6554 = vrot.slane %v6553, 2
    %v6555 = vadd.f32 %v6553, %v6554
    %v6556 = vrot.slane %v6555, 1
    %v6557 = vadd.f32 %v6555, %v6556
    %s6558 = vtos %v6557
    %s6559 = ssub.f32 %s6544, %s6558
    %v6560 = vmul.f32 %v6345, %v6345
    %v6561 = vmul.f32 %v6346, %v6346
    %v6562 = vmul.f32 %v6347, %v6347
    %v6563 = vmul.f32 %v6348, %v6348
    %v6564 = vmul.f32 %v6349, %v6349
    %v6565 = vmul.f32 %v6350, %v6350
    %v6566 = vmul.f32 %v6351, %v6351
    %v6567 = vmul.f32 %v6352, %v6352
    %v6568 = vmul.f32 %v6353, %v6353
    %v6569 = vmul.f32 %v6354, %v6354
    %v6570 = vmul.f32 %v6355, %v6355
    %v6571 = vmul.f32 %v6356, %v6356
    %v6572 = vmul.f32 %v6357, %v6357
    %v6573 = vmul.f32 %v6358, %v6358
    %v6574 = vmul.f32 %v6359, %v6359
    %v6575 = vmul.f32 %v6360, %v6360
    %v6576 = vmul.f32 %v6361, %v6361
    %v6577 = vmul.f32 %v6362, %v6362
    %v6578 = vmul.f32 %v6363, %v6363
    %v6579 = vmul.f32 %v6364, %v6364
    %v6580 = vmul.f32 %v6365, %v6365
    %v6581 = vmul.f32 %v6366, %v6366
    %v6582 = vmul.f32 %v6367, %v6367
    %v6583 = vmul.f32 %v6368, %v6368
    %v6584 = vmul.f32 %v6369, %v6369
    %v6585 = vmul.f32 %v6370, %v6370
    %v6586 = vmul.f32 %v6371, %v6371
    %v6587 = vmul.f32 %v6372, %v6372
    %v6588 = vmul.f32 %v6373, %v6373
    %v6589 = vmul.f32 %v6374, %v6374
    %v6590 = vmul.f32 %v6375, %v6375
    %v6591 = vmul.f32 %v6376, %v6376
    %v6592 = vmul.f32 %v6377, %v6377
    %v6593 = vmul.f32 %v6378, %v6378
    %v6594 = vmul.f32 %v6379, %v6379
    %v6595 = vmul.f32 %v6380, %v6380
    %v6596 = vmul.f32 %v6381, %v6381
    %v6597 = vmul.f32 %v6382, %v6382
    %v6598 = vmul.f32 %v6383, %v6383
    %v6599 = vmul.f32 %v6384, %v6384
    %v6600 = vmul.f32 %v6385, %v6385
    %v6601 = vmul.f32 %v6386, %v6386
    %v6602 = vmul.f32 %v6387, %v6387
    %v6603 = vmul.f32 %v6388, %v6388
    %v6604 = vmul.f32 %v6389, %v6389
    %v6605 = vmul.f32 %v6390, %v6390
    %v6606 = vmul.f32 %v6391, %v6391
    %v6607 = vmul.f32 %v6392, %v6392
    %v6608 = vmul.f32 %v6393, %v6393
    %v6609 = vmul.f32 %v6394, %v6394
    %v6610 = vmul.f32 %v6395, %v6395
    %v6611 = vmul.f32 %v6396, %v6396
    %v6612 = vmul.f32 %v6397, %v6397
    %v6613 = vmul.f32 %v6398, %v6398
    %v6614 = vmul.f32 %v6399, %v6399
    %v6615 = vmul.f32 %v6400, %v6400
    %v6616 = vmul.f32 %v6401, %v6401
    %v6617 = vmul.f32 %v6402, %v6402
    %v6618 = vmul.f32 %v6403, %v6403
    %v6619 = vmul.f32 %v6404, %v6404
    %v6620 = vmul.f32 %v6405, %v6405
    %v6621 = vmul.f32 %v6406, %v6406
    %v6622 = vmul.f32 %v6407, %v6407
    %v6623 = vmul.f32 %v6408, %v6408
    %v6624 = vadd.f32 %v6560, %v6561
    %v6625 = vadd.f32 %v6624, %v6562
    %v6626 = vadd.f32 %v6625, %v6563
    %v6627 = vadd.f32 %v6626, %v6564
    %v6628 = vadd.f32 %v6627, %v6565
    %v6629 = vadd.f32 %v6628, %v6566
    %v6630 = vadd.f32 %v6629, %v6567
    %v6631 = vadd.f32 %v6630, %v6568
    %v6632 = vadd.f32 %v6631, %v6569
    %v6633 = vadd.f32 %v6632, %v6570
    %v6634 = vadd.f32 %v6633, %v6571
    %v6635 = vadd.f32 %v6634, %v6572
    %v6636 = vadd.f32 %v6635, %v6573
    %v6637 = vadd.f32 %v6636, %v6574
    %v6638 = vadd.f32 %v6637, %v6575
    %v6639 = vadd.f32 %v6638, %v6576
    %v6640 = vadd.f32 %v6639, %v6577
    %v6641 = vadd.f32 %v6640, %v6578
    %v6642 = vadd.f32 %v6641, %v6579
    %v6643 = vadd.f32 %v6642, %v6580
    %v6644 = vadd.f32 %v6643, %v6581
    %v6645 = vadd.f32 %v6644, %v6582
    %v6646 = vadd.f32 %v6645, %v6583
    %v6647 = vadd.f32 %v6646, %v6584
    %v6648 = vadd.f32 %v6647, %v6585
    %v6649 = vadd.f32 %v6648, %v6586
    %v6650 = vadd.f32 %v6649, %v6587
    %v6651 = vadd.f32 %v6650, %v6588
    %v6652 = vadd.f32 %v6651, %v6589
    %v6653 = vadd.f32 %v6652, %v6590
    %v6654 = vadd.f32 %v6653, %v6591
    %v6655 = vadd.f32 %v6654, %v6592
    %v6656 = vadd.f32 %v6655, %v6593
    %v6657 = vadd.f32 %v6656, %v6594
    %v6658 = vadd.f32 %v6657, %v6595
    %v6659 = vadd.f32 %v6658, %v6596
    %v6660 = vadd.f32 %v6659, %v6597
    %v6661 = vadd.f32 %v6660, %v6598
    %v6662 = vadd.f32 %v6661, %v6599
    %v6663 = vadd.f32 %v6662, %v6600
    %v6664 = vadd.f32 %v6663, %v6601
    %v6665 = vadd.f32 %v6664, %v6602
    %v6666 = vadd.f32 %v6665, %v6603
    %v6667 = vadd.f32 %v6666, %v6604
    %v6668 = vadd.f32 %v6667, %v6605
    %v6669 = vadd.f32 %v6668, %v6606
    %v6670 = vadd.f32 %v6669, %v6607
    %v6671 = vadd.f32 %v6670, %v6608
    %v6672 = vadd.f32 %v6671, %v6609
    %v6673 = vadd.f32 %v6672, %v6610
    %v6674 = vadd.f32 %v6673, %v6611
    %v6675 = vadd.f32 %v6674, %v6612
    %v6676 = vadd.f32 %v6675, %v6613
    %v6677 = vadd.f32 %v6676, %v6614
    %v6678 = vadd.f32 %v6677, %v6615
    %v6679 = vadd.f32 %v6678, %v6616
    %v6680 = vadd.f32 %v6679, %v6617
    %v6681 = vadd.f32 %v6680, %v6618
    %v6682 = vadd.f32 %v6681, %v6619
    %v6683 = vadd.f32 %v6682, %v6620
    %v6684 = vadd.f32 %v6683, %v6621
    %v6685 = vadd.f32 %v6684, %v6622
    %v6686 = vadd.f32 %v6685, %v6623
    %6687 = vadd.xlane.f32.xlu0 %v6686
    %v6688 = vpop.xlane.xlu0 %6687
    %v6689 = vrot.slane %v6688, 4
    %v6690 = vadd.f32 %v6688, %v6689
    %v6691 = vrot.slane %v6690, 2
    %v6692 = vadd.f32 %v6690, %v6691
    %v6693 = vrot.slane %v6692, 1
    %v6694 = vadd.f32 %v6692, %v6693
    %s6695 = vtos %v6694
    %s6696 = sadd.f32 %s6559, %s6695
    %v6697 = vmul.f32 %v5577, %v5577
    %v6698 = vmul.f32 %v5578, %v5578
    %v6699 = vsel %vm5635, %v6697, 0.0
    %v6700 = vsel %vm5635, %v6698, 0.0
    %v6701 = vadd.f32 %v6699, %v6700
    %6702 = vadd.xlane.f32.xlu0 %v6701
    %v6703 = vpop.xlane.xlu0 %6702
    %v6704 = vrot.slane %v6703, 4
    %v6705 = vadd.f32 %v6703, %v6704
    %v6706 = vrot.slane %v6705, 2
    %v6707 = vadd.f32 %v6705, %v6706
    %v6708 = vrot.slane %v6707, 1
    %v6709 = vadd.f32 %v6707, %v6708
    %s6710 = vtos %v6709
    %s6711 = ssub.f32 %s6696, %s6710
    %v6712 = vrcp.pop 256.0
    %v6713 = vmul.f32 256.0, %v6712
    %v6714 = vsub.f32 1.0, %v6713
    %v6715 = vmul.f32 %v6712, %v6714
    %v6716 = vadd.f32 %v6712, %v6715
    %vm6717 = vweird.f32 %v6712
    %v6718 = vsel %vm6717, %v6712, %v6716
    %s6719 = vtos %v6718
    %s6720 = smul.f32 %s6711, %s6719
    %s6721 = smul.f32 %s5267, 25.0
    %s6722 = smul.f32 %s5700, 25.0
    %s6723 = sadd.f32 %s6721, %s6722
    %s6724 = sadd.f32 %s6723, %s6720
    %s6725 = scalar_lea.smem [#allocation2], 0
    %6726 = sst [smem:[%s6725]] %s6724
    // Predicated region
    $region26: #{vicreg_forward.1} parent=1 // pred_check
      _
    $region27: #{vicreg_forward.1} parent=1 // pred_check_branch
      %6728 = sbr.rel (0) target = $region29
    $region28: #{vicreg_forward.1} parent=1 // pred_region
      %6730 = vsyncadd [#allocation3], 0
      %s6732 = sshll.u32 %s6, 4
      %s6733 = int_to_ptr.hbm [resolvable:$true] %s6732
      %6735 = dma.smem_to_hbm [#allocation2], 16, %s6733, [#allocation3]
    $region29: #{vicreg_forward.1} parent=1 // pred_fallthru
      _
    // Predicated region
    $region30: #{vicreg_forward.1} parent=1 // pred_check
      _
    $region31: #{vicreg_forward.1} parent=1 // pred_check_branch
      %6737 = sbr.rel (0) target = $region33
    $region32: #{vicreg_forward.1} parent=1 // pred_region
      %6739 = dma.done [#allocation3], 16
    $region33: #{vicreg_forward.1} parent=1 // pred_fallthru
      _
    %6740 = sfence
    %6741 = vsyncpa [#allocation3], 1

</llo_original>
